<compile_context>
chip_gen: v7x
topology: tpu7x:2x2x1
jax: 0.10.0
libtpu: 0.0.40
codegen_flags: <defaults>
</compile_context>

<pallas_src>
import functools
import math

import jax
import jax.numpy as jnp
from jax.experimental import pallas as pl
from jax.experimental.pallas import tpu as pltpu


def _conv_block_kernel(x_ref, w1_ref, b1_ref, w2_ref, b2_ref, o_ref,
                       xpad_ref, a1_ref, *,
                       k1, k2, p1, p2, h, w, ho1, wo1, ho2, wo2,
                       slope, eps, pixel_norm):
    """One image per grid step: pad -> conv1 -> PN -> LReLU -> conv2 -> PN -> LReLU."""
    cin = x_ref.shape[-1]
    cmid = w1_ref.shape[-1]
    cout = w2_ref.shape[-1]

    # ---------------- stage 0: fused zero-halo of the input tile ----------------
    if p1 > 0:
        # Full zero each step keeps the halo correct on every core/grid split.
        xpad_ref[...] = jnp.zeros_like(xpad_ref)
    xpad_ref[p1:p1 + h, p1:p1 + w, :] = x_ref[0].astype(xpad_ref.dtype)

    # ---------------- stage 1: EqualConv2d (+PixelNorm) + LeakyReLU ----------------
    m1 = ho1 * wo1
    acc = jnp.zeros((m1, cmid), jnp.float32)
    for dy in range(k1):
        for dx in range(k1):
            tap = xpad_ref[dy:dy + ho1, dx:dx + wo1, :].reshape(m1, cin)  # bf16
            acc = acc + jnp.dot(tap, w1_ref[dy * k1 + dx],
                                preferred_element_type=jnp.float32)
    y = acc + b1_ref[...]                                                 # (m1, cmid) f32
    if pixel_norm:
        y = y * jax.lax.rsqrt(jnp.mean(y * y, axis=-1, keepdims=True) + eps)
    y = jnp.maximum(y, slope * y)                                         # LeakyReLU(0.1)

    # Stage-1 activation stays resident in VMEM, zero-halo'd for the 2nd conv.
    if p2 > 0:
        a1_ref[...] = jnp.zeros_like(a1_ref)
    a1_ref[p2:p2 + ho1, p2:p2 + wo1, :] = y.reshape(ho1, wo1, cmid).astype(a1_ref.dtype)

    # ---------------- stage 2: EqualConv2d (+PixelNorm) + LeakyReLU ----------------
    m2 = ho2 * wo2
    acc2 = jnp.zeros((m2, cout), jnp.float32)
    for dy in range(k2):
        for dx in range(k2):
            tap = a1_ref[dy:dy + ho2, dx:dx + wo2, :].reshape(m2, cmid)   # bf16
            acc2 = acc2 + jnp.dot(tap, w2_ref[dy * k2 + dx],
                                  preferred_element_type=jnp.float32)
    y2 = acc2 + b2_ref[...]
    if pixel_norm:
        y2 = y2 * jax.lax.rsqrt(jnp.mean(y2 * y2, axis=-1, keepdims=True) + eps)
    y2 = jnp.maximum(y2, slope * y2)
    o_ref[0] = y2.reshape(ho2, wo2, cout).astype(o_ref.dtype)


def conv_block_forward(x_nchw, params, kernel1, pad1, kernel2, pad2,
                       pixel_norm=True, compute_dtype=jnp.bfloat16):
    """ConvBlock.forward with PyTorch NCHW in/out semantics."""
    w1, b1, w2, b2 = params
    n, cin, h, w = x_nchw.shape
    cmid = w1.shape[0]
    cout = w2.shape[0]
    k1, k2, p1, p2 = kernel1, kernel2, pad1, pad2
    ho1 = h + 2 * p1 - k1 + 1
    wo1 = w + 2 * p1 - k1 + 1
    ho2 = ho1 + 2 * p2 - k2 + 1
    wo2 = wo1 + 2 * p2 - k2 + 1

    # NHWC layout so channels sit on the lane axis inside the kernel.
    x_nhwc = jnp.transpose(x_nchw, (0, 2, 3, 1))

    # Fold EqualLR scale into weights; tap-major (k*k, Cin, Cout); bf16 for the MXU.
    s1 = math.sqrt(2.0 / (cin * k1 * k1))
    s2 = math.sqrt(2.0 / (cmid * k2 * k2))
    w1_t = (jnp.transpose(w1, (2, 3, 1, 0)) * s1).reshape(k1 * k1, cin, cmid).astype(compute_dtype)
    w2_t = (jnp.transpose(w2, (2, 3, 1, 0)) * s2).reshape(k2 * k2, cmid, cout).astype(compute_dtype)
    b1_r = b1.reshape(1, cmid).astype(jnp.float32)
    b2_r = b2.reshape(1, cout).astype(jnp.float32)

    kernel = functools.partial(
        _conv_block_kernel, k1=k1, k2=k2, p1=p1, p2=p2, h=h, w=w,
        ho1=ho1, wo1=wo1, ho2=ho2, wo2=wo2,
        slope=0.1, eps=1e-8, pixel_norm=pixel_norm)

    # Advisory scheduler hint.
    bpe = jnp.dtype(compute_dtype).itemsize
    out_bpe = jnp.dtype(x_nchw.dtype).itemsize
    flops = 2 * n * (ho1 * wo1 * cin * cmid * k1 * k1 + ho2 * wo2 * cmid * cout * k2 * k2)
    transcendentals = n * (ho1 * wo1 + ho2 * wo2) if pixel_norm else 0
    bytes_accessed = (x_nhwc.size * x_nhwc.dtype.itemsize
                      + (w1_t.size + w2_t.size) * bpe
                      + (b1_r.size + b2_r.size) * 4
                      + n * ho2 * wo2 * cout * out_bpe)

    out = pl.pallas_call(
        kernel,
        out_shape=jax.ShapeDtypeStruct((n, ho2, wo2, cout), x_nchw.dtype),
        grid_spec=pltpu.PrefetchScalarGridSpec(
            num_scalar_prefetch=0,
            grid=(n,),
            in_specs=[
                pl.BlockSpec((1, h, w, cin), lambda i: (i, 0, 0, 0)),       # raw input image
                pl.BlockSpec((k1 * k1, cin, cmid), lambda i: (0, 0, 0)),    # conv1 weight (taps)
                pl.BlockSpec((1, cmid), lambda i: (0, 0)),                  # conv1 bias
                pl.BlockSpec((k2 * k2, cmid, cout), lambda i: (0, 0, 0)),   # conv2 weight (taps)
                pl.BlockSpec((1, cout), lambda i: (0, 0)),                  # conv2 bias
            ],
            out_specs=pl.BlockSpec((1, ho2, wo2, cout), lambda i: (i, 0, 0, 0)),
            scratch_shapes=[
                # zero-halo'd copy of the input tile (fuses jnp.pad into the kernel)
                pltpu.VMEM((h + 2 * p1, w + 2 * p1, cin), compute_dtype),
                # stage-1 activation, zero-halo'd for stage 2, kept in VMEM
                pltpu.VMEM((ho1 + 2 * p2, wo1 + 2 * p2, cmid), compute_dtype),
            ],
        ),
        compiler_params=pltpu.CompilerParams(dimension_semantics=("parallel",)),
        cost_estimate=pl.CostEstimate(flops=flops, transcendentals=transcendentals,
                                      bytes_accessed=bytes_accessed),
    )(x_nhwc, w1_t, b1_r, w2_t, b2_r)
    return jnp.transpose(out, (0, 3, 1, 2))  # back to NCHW


def _ref_forward(x_nchw, params, k1, p1, k2, p2, pixel_norm=True):
    """Pure-JAX f32 reference matching PyTorch ConvBlock semantics."""
    def stage(x, w, b, k, pad):
        scale = math.sqrt(2.0 / (w.shape[1] * k * k))
        y = jax.lax.conv_general_dilated(
            x, w * scale, window_strides=(1, 1),
            padding=[(pad, pad), (pad, pad)],
            dimension_numbers=("NCHW", "OIHW", "NCHW"),
            precision=jax.lax.Precision.HIGHEST,
        )
        y = y + b[None, :, None, None]
        if pixel_norm:
            y = y / jnp.sqrt(jnp.mean(y * y, axis=1, keepdims=True) + 1e-8)
        return jnp.where(y >= 0, y, 0.1 * y)

    w1, b1, w2, b2 = params
    y = stage(x_nchw, w1, b1, k1, p1)
    return stage(y, w2, b2, k2, p2)


if __name__ == "__main__":
    # ConvBlock(in_channel=4, out_channel=8, kernel_size=3, padding=1)
    n, cin, h, w = 2, 4, 16, 16
    cout = 8
    k1, p1 = 3, 1
    k2, p2 = 3, 1

    key = jax.random.PRNGKey(0)
    kx, kw1, kw2 = jax.random.split(key, 3)
    x = jax.random.normal(kx, (n, cin, h, w), jnp.float32)
    # EqualConv2d init: weight ~ N(0,1), bias = 0.
    w1 = jax.random.normal(kw1, (cout, cin, k1, k1), jnp.float32)
    b1 = jnp.zeros((cout,), jnp.float32)
    w2 = jax.random.normal(kw2, (cout, cout, k2, k2), jnp.float32)
    b2 = jnp.zeros((cout,), jnp.float32)
    params = (w1, b1, w2, b2)

    out = conv_block_forward(x, params, k1, p1, k2, p2, pixel_norm=True)
    out = jax.block_until_ready(out)
    assert out.shape == (n, cout, h, w), out.shape

    ref = _ref_forward(x, params, k1, p1, k2, p2, pixel_norm=True)
    ref = jax.block_until_ready(ref)
    assert jnp.all(jnp.isfinite(out))
    # bf16 MXU operands (per v6e/v7x guidance) -> slightly looser tolerance vs f32 ref.
    assert jnp.allclose(out, ref, atol=5e-2, rtol=5e-2), float(jnp.max(jnp.abs(out - ref)))

    print("KERNEL_OK")
</pallas_src>

<mosaic_0001>
module attributes {stable_mosaic.version = 11 : i64} {
  func.func @_conv_block_kernel(%arg0: i32, %arg1: memref<1x16x16x4xf32, #tpu.memory_space<vmem>>, %arg2: memref<9x4x8xbf16, #tpu.memory_space<vmem>>, %arg3: memref<1x8xf32, #tpu.memory_space<vmem>>, %arg4: memref<9x8x8xbf16, #tpu.memory_space<vmem>>, %arg5: memref<1x8xf32, #tpu.memory_space<vmem>>, %arg6: memref<1x16x16x8xf32, #tpu.memory_space<vmem>>, %arg7: memref<18x18x4xbf16, #tpu.memory_space<vmem>>, %arg8: memref<18x18x8xbf16, #tpu.memory_space<vmem>>) attributes {dimension_semantics = [#tpu.dimension_semantics<parallel>], iteration_bounds = array<i64: 2>, scalar_prefetch = 0 : i64, scratch_operands = 2 : i64, tpu.core_type = #tpu.core_type<tc>, window_params = [{transform_indices = @transform_0, window_bounds = array<i64: 1, 16, 16, 4>}, {pipeline_mode = #tpu.pipeline_mode<synchronous>, transform_indices = @transform_1, window_bounds = array<i64: 9, 4, 8>}, {pipeline_mode = #tpu.pipeline_mode<synchronous>, transform_indices = @transform_2, window_bounds = array<i64: 1, 8>}, {pipeline_mode = #tpu.pipeline_mode<synchronous>, transform_indices = @transform_3, window_bounds = array<i64: 9, 8, 8>}, {pipeline_mode = #tpu.pipeline_mode<synchronous>, transform_indices = @transform_4, window_bounds = array<i64: 1, 8>}, {transform_indices = @transform_5, window_bounds = array<i64: 1, 16, 16, 8>}]} {
    %cst = arith.constant 0.000000e+00 : bf16
    %0 = vector.broadcast %cst : bf16 to vector<18x18x4xbf16>
    %c0 = arith.constant 0 : index
    %c0_0 = arith.constant 0 : index
    %c0_1 = arith.constant 0 : index
    %1 = vector.load %arg7[%c0, %c0_0, %c0_1] : memref<18x18x4xbf16, #tpu.memory_space<vmem>>, vector<18x18x4xbf16>
    tpu.vector_store %arg7[%c0, %c0_0, %c0_1], %0 {strides = array<i32>} : memref<18x18x4xbf16, #tpu.memory_space<vmem>>, vector<18x18x4xbf16>,
    %c0_2 = arith.constant 0 : index
    %c0_3 = arith.constant 0 : index
    %c0_4 = arith.constant 0 : index
    %c0_5 = arith.constant 0 : index
    %2 = vector.load %arg1[%c0_2, %c0_3, %c0_4, %c0_5] : memref<1x16x16x4xf32, #tpu.memory_space<vmem>>, vector<1x16x16x4xf32>
    %3 = vector.shape_cast %2 : vector<1x16x16x4xf32> to vector<16x16x4xf32>
    %4 = arith.truncf %3 : vector<16x16x4xf32> to vector<16x16x4xbf16>
    %c1 = arith.constant 1 : index
    %c1_6 = arith.constant 1 : index
    %c0_7 = arith.constant 0 : index
    %5 = vector.load %arg7[%c1, %c1_6, %c0_7] : memref<18x18x4xbf16, #tpu.memory_space<vmem>>, vector<16x16x4xbf16>
    tpu.vector_store %arg7[%c1, %c1_6, %c0_7], %4 {strides = array<i32>} : memref<18x18x4xbf16, #tpu.memory_space<vmem>>, vector<16x16x4xbf16>,
    %cst_8 = arith.constant 0.000000e+00 : f32
    %6 = vector.broadcast %cst_8 : f32 to vector<256x8xf32>
    %c0_9 = arith.constant 0 : index
    %c0_10 = arith.constant 0 : index
    %c0_11 = arith.constant 0 : index
    %7 = vector.load %arg7[%c0_9, %c0_10, %c0_11] : memref<18x18x4xbf16, #tpu.memory_space<vmem>>, vector<16x16x4xbf16>
    %8 = vector.shape_cast %7 : vector<16x16x4xbf16> to vector<256x4xbf16>
    %c0_12 = arith.constant 0 : index
    %c0_13 = arith.constant 0 : index
    %c0_14 = arith.constant 0 : index
    %9 = vector.load %arg2[%c0_12, %c0_13, %c0_14] : memref<9x4x8xbf16, #tpu.memory_space<vmem>>, vector<1x4x8xbf16>
    %10 = vector.shape_cast %9 : vector<1x4x8xbf16> to vector<4x8xbf16>
    %cst_15 = arith.constant dense<0.000000e+00> : vector<256x8xf32>
    %11 = tpu.matmul %8, %10, %cst_15 {dimension_numbers = #tpu.dot_dimension_numbers<[1], [0], [0], [1], [0, 0, 1, 1], [], []>} : vector<256x4xbf16>, vector<4x8xbf16>, vector<256x8xf32> -> vector<256x8xf32>
    %12 = arith.addf %6, %11 : vector<256x8xf32>
    %c0_16 = arith.constant 0 : index
    %c1_17 = arith.constant 1 : index
    %c0_18 = arith.constant 0 : index
    %13 = vector.load %arg7[%c0_16, %c1_17, %c0_18] : memref<18x18x4xbf16, #tpu.memory_space<vmem>>, vector<16x16x4xbf16>
    %14 = vector.shape_cast %13 : vector<16x16x4xbf16> to vector<256x4xbf16>
    %c1_19 = arith.constant 1 : index
    %c0_20 = arith.constant 0 : index
    %c0_21 = arith.constant 0 : index
    %15 = vector.load %arg2[%c1_19, %c0_20, %c0_21] : memref<9x4x8xbf16, #tpu.memory_space<vmem>>, vector<1x4x8xbf16>
    %16 = vector.shape_cast %15 : vector<1x4x8xbf16> to vector<4x8xbf16>
    %cst_22 = arith.constant dense<0.000000e+00> : vector<256x8xf32>
    %17 = tpu.matmul %14, %16, %cst_22 {dimension_numbers = #tpu.dot_dimension_numbers<[1], [0], [0], [1], [0, 0, 1, 1], [], []>} : vector<256x4xbf16>, vector<4x8xbf16>, vector<256x8xf32> -> vector<256x8xf32>
    %18 = arith.addf %12, %17 : vector<256x8xf32>
    %c0_23 = arith.constant 0 : index
    %c2 = arith.constant 2 : index
    %c0_24 = arith.constant 0 : index
    %19 = vector.load %arg7[%c0_23, %c2, %c0_24] : memref<18x18x4xbf16, #tpu.memory_space<vmem>>, vector<16x16x4xbf16>
    %20 = vector.shape_cast %19 : vector<16x16x4xbf16> to vector<256x4xbf16>
    %c2_25 = arith.constant 2 : index
    %c0_26 = arith.constant 0 : index
    %c0_27 = arith.constant 0 : index
    %21 = vector.load %arg2[%c2_25, %c0_26, %c0_27] : memref<9x4x8xbf16, #tpu.memory_space<vmem>>, vector<1x4x8xbf16>
    %22 = vector.shape_cast %21 : vector<1x4x8xbf16> to vector<4x8xbf16>
    %cst_28 = arith.constant dense<0.000000e+00> : vector<256x8xf32>
    %23 = tpu.matmul %20, %22, %cst_28 {dimension_numbers = #tpu.dot_dimension_numbers<[1], [0], [0], [1], [0, 0, 1, 1], [], []>} : vector<256x4xbf16>, vector<4x8xbf16>, vector<256x8xf32> -> vector<256x8xf32>
    %24 = arith.addf %18, %23 : vector<256x8xf32>
    %c1_29 = arith.constant 1 : index
    %c0_30 = arith.constant 0 : index
    %c0_31 = arith.constant 0 : index
    %25 = vector.load %arg7[%c1_29, %c0_30, %c0_31] : memref<18x18x4xbf16, #tpu.memory_space<vmem>>, vector<16x16x4xbf16>
    %26 = vector.shape_cast %25 : vector<16x16x4xbf16> to vector<256x4xbf16>
    %c3 = arith.constant 3 : index
    %c0_32 = arith.constant 0 : index
    %c0_33 = arith.constant 0 : index
    %27 = vector.load %arg2[%c3, %c0_32, %c0_33] : memref<9x4x8xbf16, #tpu.memory_space<vmem>>, vector<1x4x8xbf16>
    %28 = vector.shape_cast %27 : vector<1x4x8xbf16> to vector<4x8xbf16>
    %cst_34 = arith.constant dense<0.000000e+00> : vector<256x8xf32>
    %29 = tpu.matmul %26, %28, %cst_34 {dimension_numbers = #tpu.dot_dimension_numbers<[1], [0], [0], [1], [0, 0, 1, 1], [], []>} : vector<256x4xbf16>, vector<4x8xbf16>, vector<256x8xf32> -> vector<256x8xf32>
    %30 = arith.addf %24, %29 : vector<256x8xf32>
    %c1_35 = arith.constant 1 : index
    %c1_36 = arith.constant 1 : index
    %c0_37 = arith.constant 0 : index
    %31 = vector.load %arg7[%c1_35, %c1_36, %c0_37] : memref<18x18x4xbf16, #tpu.memory_space<vmem>>, vector<16x16x4xbf16>
    %32 = vector.shape_cast %31 : vector<16x16x4xbf16> to vector<256x4xbf16>
    %c4 = arith.constant 4 : index
    %c0_38 = arith.constant 0 : index
    %c0_39 = arith.constant 0 : index
    %33 = vector.load %arg2[%c4, %c0_38, %c0_39] : memref<9x4x8xbf16, #tpu.memory_space<vmem>>, vector<1x4x8xbf16>
    %34 = vector.shape_cast %33 : vector<1x4x8xbf16> to vector<4x8xbf16>
    %cst_40 = arith.constant dense<0.000000e+00> : vector<256x8xf32>
    %35 = tpu.matmul %32, %34, %cst_40 {dimension_numbers = #tpu.dot_dimension_numbers<[1], [0], [0], [1], [0, 0, 1, 1], [], []>} : vector<256x4xbf16>, vector<4x8xbf16>, vector<256x8xf32> -> vector<256x8xf32>
    %36 = arith.addf %30, %35 : vector<256x8xf32>
    %c1_41 = arith.constant 1 : index
    %c2_42 = arith.constant 2 : index
    %c0_43 = arith.constant 0 : index
    %37 = vector.load %arg7[%c1_41, %c2_42, %c0_43] : memref<18x18x4xbf16, #tpu.memory_space<vmem>>, vector<16x16x4xbf16>
    %38 = vector.shape_cast %37 : vector<16x16x4xbf16> to vector<256x4xbf16>
    %c5 = arith.constant 5 : index
    %c0_44 = arith.constant 0 : index
    %c0_45 = arith.constant 0 : index
    %39 = vector.load %arg2[%c5, %c0_44, %c0_45] : memref<9x4x8xbf16, #tpu.memory_space<vmem>>, vector<1x4x8xbf16>
    %40 = vector.shape_cast %39 : vector<1x4x8xbf16> to vector<4x8xbf16>
    %cst_46 = arith.constant dense<0.000000e+00> : vector<256x8xf32>
    %41 = tpu.matmul %38, %40, %cst_46 {dimension_numbers = #tpu.dot_dimension_numbers<[1], [0], [0], [1], [0, 0, 1, 1], [], []>} : vector<256x4xbf16>, vector<4x8xbf16>, vector<256x8xf32> -> vector<256x8xf32>
    %42 = arith.addf %36, %41 : vector<256x8xf32>
    %c2_47 = arith.constant 2 : index
    %c0_48 = arith.constant 0 : index
    %c0_49 = arith.constant 0 : index
    %43 = vector.load %arg7[%c2_47, %c0_48, %c0_49] : memref<18x18x4xbf16, #tpu.memory_space<vmem>>, vector<16x16x4xbf16>
    %44 = vector.shape_cast %43 : vector<16x16x4xbf16> to vector<256x4xbf16>
    %c6 = arith.constant 6 : index
    %c0_50 = arith.constant 0 : index
    %c0_51 = arith.constant 0 : index
    %45 = vector.load %arg2[%c6, %c0_50, %c0_51] : memref<9x4x8xbf16, #tpu.memory_space<vmem>>, vector<1x4x8xbf16>
    %46 = vector.shape_cast %45 : vector<1x4x8xbf16> to vector<4x8xbf16>
    %cst_52 = arith.constant dense<0.000000e+00> : vector<256x8xf32>
    %47 = tpu.matmul %44, %46, %cst_52 {dimension_numbers = #tpu.dot_dimension_numbers<[1], [0], [0], [1], [0, 0, 1, 1], [], []>} : vector<256x4xbf16>, vector<4x8xbf16>, vector<256x8xf32> -> vector<256x8xf32>
    %48 = arith.addf %42, %47 : vector<256x8xf32>
    %c2_53 = arith.constant 2 : index
    %c1_54 = arith.constant 1 : index
    %c0_55 = arith.constant 0 : index
    %49 = vector.load %arg7[%c2_53, %c1_54, %c0_55] : memref<18x18x4xbf16, #tpu.memory_space<vmem>>, vector<16x16x4xbf16>
    %50 = vector.shape_cast %49 : vector<16x16x4xbf16> to vector<256x4xbf16>
    %c7 = arith.constant 7 : index
    %c0_56 = arith.constant 0 : index
    %c0_57 = arith.constant 0 : index
    %51 = vector.load %arg2[%c7, %c0_56, %c0_57] : memref<9x4x8xbf16, #tpu.memory_space<vmem>>, vector<1x4x8xbf16>
    %52 = vector.shape_cast %51 : vector<1x4x8xbf16> to vector<4x8xbf16>
    %cst_58 = arith.constant dense<0.000000e+00> : vector<256x8xf32>
    %53 = tpu.matmul %50, %52, %cst_58 {dimension_numbers = #tpu.dot_dimension_numbers<[1], [0], [0], [1], [0, 0, 1, 1], [], []>} : vector<256x4xbf16>, vector<4x8xbf16>, vector<256x8xf32> -> vector<256x8xf32>
    %54 = arith.addf %48, %53 : vector<256x8xf32>
    %c2_59 = arith.constant 2 : index
    %c2_60 = arith.constant 2 : index
    %c0_61 = arith.constant 0 : index
    %55 = vector.load %arg7[%c2_59, %c2_60, %c0_61] : memref<18x18x4xbf16, #tpu.memory_space<vmem>>, vector<16x16x4xbf16>
    %56 = vector.shape_cast %55 : vector<16x16x4xbf16> to vector<256x4xbf16>
    %c8 = arith.constant 8 : index
    %c0_62 = arith.constant 0 : index
    %c0_63 = arith.constant 0 : index
    %57 = vector.load %arg2[%c8, %c0_62, %c0_63] : memref<9x4x8xbf16, #tpu.memory_space<vmem>>, vector<1x4x8xbf16>
    %58 = vector.shape_cast %57 : vector<1x4x8xbf16> to vector<4x8xbf16>
    %cst_64 = arith.constant dense<0.000000e+00> : vector<256x8xf32>
    %59 = tpu.matmul %56, %58, %cst_64 {dimension_numbers = #tpu.dot_dimension_numbers<[1], [0], [0], [1], [0, 0, 1, 1], [], []>} : vector<256x4xbf16>, vector<4x8xbf16>, vector<256x8xf32> -> vector<256x8xf32>
    %60 = arith.addf %54, %59 : vector<256x8xf32>
    %c0_65 = arith.constant 0 : index
    %c0_66 = arith.constant 0 : index
    %61 = vector.load %arg3[%c0_65, %c0_66] : memref<1x8xf32, #tpu.memory_space<vmem>>, vector<1x8xf32>
    %62 = vector.broadcast %61 : vector<1x8xf32> to vector<256x8xf32>
    %63 = arith.addf %60, %62 : vector<256x8xf32>
    %64 = arith.mulf %63, %63 : vector<256x8xf32>
    %cst_67 = arith.constant dense<0.000000e+00> : vector<256xf32>
    %65 = vector.multi_reduction <add>, %64, %cst_67 [1] : vector<256x8xf32> to vector<256xf32>
    %66 = vector.shape_cast %65 : vector<256xf32> to vector<256x1xf32>
    %cst_68 = arith.constant 8.000000e+00 : f32
    %67 = vector.broadcast %cst_68 : f32 to vector<256x1xf32>
    %68 = arith.divf %66, %67 : vector<256x1xf32>
    %cst_69 = arith.constant 9.99999993E-9 : f32
    %69 = vector.broadcast %cst_69 : f32 to vector<256x1xf32>
    %70 = arith.addf %68, %69 : vector<256x1xf32>
    %71 = math.rsqrt %70 : vector<256x1xf32>
    %72 = vector.broadcast %71 : vector<256x1xf32> to vector<256x8xf32>
    %73 = arith.mulf %63, %72 : vector<256x8xf32>
    %cst_70 = arith.constant 1.000000e-01 : f32
    %74 = vector.broadcast %cst_70 : f32 to vector<256x8xf32>
    %75 = arith.mulf %74, %73 : vector<256x8xf32>
    %76 = arith.maximumf %73, %75 : vector<256x8xf32>
    %cst_71 = arith.constant 0.000000e+00 : bf16
    %77 = vector.broadcast %cst_71 : bf16 to vector<18x18x8xbf16>
    %c0_72 = arith.constant 0 : index
    %c0_73 = arith.constant 0 : index
    %c0_74 = arith.constant 0 : index
    %78 = vector.load %arg8[%c0_72, %c0_73, %c0_74] : memref<18x18x8xbf16, #tpu.memory_space<vmem>>, vector<18x18x8xbf16>
    tpu.vector_store %arg8[%c0_72, %c0_73, %c0_74], %77 {strides = array<i32>} : memref<18x18x8xbf16, #tpu.memory_space<vmem>>, vector<18x18x8xbf16>,
    %79 = vector.shape_cast %76 : vector<256x8xf32> to vector<16x16x8xf32>
    %80 = arith.truncf %79 : vector<16x16x8xf32> to vector<16x16x8xbf16>
    %c1_75 = arith.constant 1 : index
    %c1_76 = arith.constant 1 : index
    %c0_77 = arith.constant 0 : index
    %81 = vector.load %arg8[%c1_75, %c1_76, %c0_77] : memref<18x18x8xbf16, #tpu.memory_space<vmem>>, vector<16x16x8xbf16>
    tpu.vector_store %arg8[%c1_75, %c1_76, %c0_77], %80 {strides = array<i32>} : memref<18x18x8xbf16, #tpu.memory_space<vmem>>, vector<16x16x8xbf16>,
    %cst_78 = arith.constant 0.000000e+00 : f32
    %82 = vector.broadcast %cst_78 : f32 to vector<256x8xf32>
    %c0_79 = arith.constant 0 : index
    %c0_80 = arith.constant 0 : index
    %c0_81 = arith.constant 0 : index
    %83 = vector.load %arg8[%c0_79, %c0_80, %c0_81] : memref<18x18x8xbf16, #tpu.memory_space<vmem>>, vector<16x16x8xbf16>
    %84 = vector.shape_cast %83 : vector<16x16x8xbf16> to vector<256x8xbf16>
    %c0_82 = arith.constant 0 : index
    %c0_83 = arith.constant 0 : index
    %c0_84 = arith.constant 0 : index
    %85 = vector.load %arg4[%c0_82, %c0_83, %c0_84] : memref<9x8x8xbf16, #tpu.memory_space<vmem>>, vector<1x8x8xbf16>
    %86 = vector.shape_cast %85 : vector<1x8x8xbf16> to vector<8x8xbf16>
    %cst_85 = arith.constant dense<0.000000e+00> : vector<256x8xf32>
    %87 = tpu.matmul %84, %86, %cst_85 {dimension_numbers = #tpu.dot_dimension_numbers<[1], [0], [0], [1], [0, 0, 1, 1], [], []>} : vector<256x8xbf16>, vector<8x8xbf16>, vector<256x8xf32> -> vector<256x8xf32>
    %88 = arith.addf %82, %87 : vector<256x8xf32>
    %c0_86 = arith.constant 0 : index
    %c1_87 = arith.constant 1 : index
    %c0_88 = arith.constant 0 : index
    %89 = vector.load %arg8[%c0_86, %c1_87, %c0_88] : memref<18x18x8xbf16, #tpu.memory_space<vmem>>, vector<16x16x8xbf16>
    %90 = vector.shape_cast %89 : vector<16x16x8xbf16> to vector<256x8xbf16>
    %c1_89 = arith.constant 1 : index
    %c0_90 = arith.constant 0 : index
    %c0_91 = arith.constant 0 : index
    %91 = vector.load %arg4[%c1_89, %c0_90, %c0_91] : memref<9x8x8xbf16, #tpu.memory_space<vmem>>, vector<1x8x8xbf16>
    %92 = vector.shape_cast %91 : vector<1x8x8xbf16> to vector<8x8xbf16>
    %cst_92 = arith.constant dense<0.000000e+00> : vector<256x8xf32>
    %93 = tpu.matmul %90, %92, %cst_92 {dimension_numbers = #tpu.dot_dimension_numbers<[1], [0], [0], [1], [0, 0, 1, 1], [], []>} : vector<256x8xbf16>, vector<8x8xbf16>, vector<256x8xf32> -> vector<256x8xf32>
    %94 = arith.addf %88, %93 : vector<256x8xf32>
    %c0_93 = arith.constant 0 : index
    %c2_94 = arith.constant 2 : index
    %c0_95 = arith.constant 0 : index
    %95 = vector.load %arg8[%c0_93, %c2_94, %c0_95] : memref<18x18x8xbf16, #tpu.memory_space<vmem>>, vector<16x16x8xbf16>
    %96 = vector.shape_cast %95 : vector<16x16x8xbf16> to vector<256x8xbf16>
    %c2_96 = arith.constant 2 : index
    %c0_97 = arith.constant 0 : index
    %c0_98 = arith.constant 0 : index
    %97 = vector.load %arg4[%c2_96, %c0_97, %c0_98] : memref<9x8x8xbf16, #tpu.memory_space<vmem>>, vector<1x8x8xbf16>
    %98 = vector.shape_cast %97 : vector<1x8x8xbf16> to vector<8x8xbf16>
    %cst_99 = arith.constant dense<0.000000e+00> : vector<256x8xf32>
    %99 = tpu.matmul %96, %98, %cst_99 {dimension_numbers = #tpu.dot_dimension_numbers<[1], [0], [0], [1], [0, 0, 1, 1], [], []>} : vector<256x8xbf16>, vector<8x8xbf16>, vector<256x8xf32> -> vector<256x8xf32>
    %100 = arith.addf %94, %99 : vector<256x8xf32>
    %c1_100 = arith.constant 1 : index
    %c0_101 = arith.constant 0 : index
    %c0_102 = arith.constant 0 : index
    %101 = vector.load %arg8[%c1_100, %c0_101, %c0_102] : memref<18x18x8xbf16, #tpu.memory_space<vmem>>, vector<16x16x8xbf16>
    %102 = vector.shape_cast %101 : vector<16x16x8xbf16> to vector<256x8xbf16>
    %c3_103 = arith.constant 3 : index
    %c0_104 = arith.constant 0 : index
    %c0_105 = arith.constant 0 : index
    %103 = vector.load %arg4[%c3_103, %c0_104, %c0_105] : memref<9x8x8xbf16, #tpu.memory_space<vmem>>, vector<1x8x8xbf16>
    %104 = vector.shape_cast %103 : vector<1x8x8xbf16> to vector<8x8xbf16>
    %cst_106 = arith.constant dense<0.000000e+00> : vector<256x8xf32>
    %105 = tpu.matmul %102, %104, %cst_106 {dimension_numbers = #tpu.dot_dimension_numbers<[1], [0], [0], [1], [0, 0, 1, 1], [], []>} : vector<256x8xbf16>, vector<8x8xbf16>, vector<256x8xf32> -> vector<256x8xf32>
    %106 = arith.addf %100, %105 : vector<256x8xf32>
    %c1_107 = arith.constant 1 : index
    %c1_108 = arith.constant 1 : index
    %c0_109 = arith.constant 0 : index
    %107 = vector.load %arg8[%c1_107, %c1_108, %c0_109] : memref<18x18x8xbf16, #tpu.memory_space<vmem>>, vector<16x16x8xbf16>
    %108 = vector.shape_cast %107 : vector<16x16x8xbf16> to vector<256x8xbf16>
    %c4_110 = arith.constant 4 : index
    %c0_111 = arith.constant 0 : index
    %c0_112 = arith.constant 0 : index
    %109 = vector.load %arg4[%c4_110, %c0_111, %c0_112] : memref<9x8x8xbf16, #tpu.memory_space<vmem>>, vector<1x8x8xbf16>
    %110 = vector.shape_cast %109 : vector<1x8x8xbf16> to vector<8x8xbf16>
    %cst_113 = arith.constant dense<0.000000e+00> : vector<256x8xf32>
    %111 = tpu.matmul %108, %110, %cst_113 {dimension_numbers = #tpu.dot_dimension_numbers<[1], [0], [0], [1], [0, 0, 1, 1], [], []>} : vector<256x8xbf16>, vector<8x8xbf16>, vector<256x8xf32> -> vector<256x8xf32>
    %112 = arith.addf %106, %111 : vector<256x8xf32>
    %c1_114 = arith.constant 1 : index
    %c2_115 = arith.constant 2 : index
    %c0_116 = arith.constant 0 : index
    %113 = vector.load %arg8[%c1_114, %c2_115, %c0_116] : memref<18x18x8xbf16, #tpu.memory_space<vmem>>, vector<16x16x8xbf16>
    %114 = vector.shape_cast %113 : vector<16x16x8xbf16> to vector<256x8xbf16>
    %c5_117 = arith.constant 5 : index
    %c0_118 = arith.constant 0 : index
    %c0_119 = arith.constant 0 : index
    %115 = vector.load %arg4[%c5_117, %c0_118, %c0_119] : memref<9x8x8xbf16, #tpu.memory_space<vmem>>, vector<1x8x8xbf16>
    %116 = vector.shape_cast %115 : vector<1x8x8xbf16> to vector<8x8xbf16>
    %cst_120 = arith.constant dense<0.000000e+00> : vector<256x8xf32>
    %117 = tpu.matmul %114, %116, %cst_120 {dimension_numbers = #tpu.dot_dimension_numbers<[1], [0], [0], [1], [0, 0, 1, 1], [], []>} : vector<256x8xbf16>, vector<8x8xbf16>, vector<256x8xf32> -> vector<256x8xf32>
    %118 = arith.addf %112, %117 : vector<256x8xf32>
    %c2_121 = arith.constant 2 : index
    %c0_122 = arith.constant 0 : index
    %c0_123 = arith.constant 0 : index
    %119 = vector.load %arg8[%c2_121, %c0_122, %c0_123] : memref<18x18x8xbf16, #tpu.memory_space<vmem>>, vector<16x16x8xbf16>
    %120 = vector.shape_cast %119 : vector<16x16x8xbf16> to vector<256x8xbf16>
    %c6_124 = arith.constant 6 : index
    %c0_125 = arith.constant 0 : index
    %c0_126 = arith.constant 0 : index
    %121 = vector.load %arg4[%c6_124, %c0_125, %c0_126] : memref<9x8x8xbf16, #tpu.memory_space<vmem>>, vector<1x8x8xbf16>
    %122 = vector.shape_cast %121 : vector<1x8x8xbf16> to vector<8x8xbf16>
    %cst_127 = arith.constant dense<0.000000e+00> : vector<256x8xf32>
    %123 = tpu.matmul %120, %122, %cst_127 {dimension_numbers = #tpu.dot_dimension_numbers<[1], [0], [0], [1], [0, 0, 1, 1], [], []>} : vector<256x8xbf16>, vector<8x8xbf16>, vector<256x8xf32> -> vector<256x8xf32>
    %124 = arith.addf %118, %123 : vector<256x8xf32>
    %c2_128 = arith.constant 2 : index
    %c1_129 = arith.constant 1 : index
    %c0_130 = arith.constant 0 : index
    %125 = vector.load %arg8[%c2_128, %c1_129, %c0_130] : memref<18x18x8xbf16, #tpu.memory_space<vmem>>, vector<16x16x8xbf16>
    %126 = vector.shape_cast %125 : vector<16x16x8xbf16> to vector<256x8xbf16>
    %c7_131 = arith.constant 7 : index
    %c0_132 = arith.constant 0 : index
    %c0_133 = arith.constant 0 : index
    %127 = vector.load %arg4[%c7_131, %c0_132, %c0_133] : memref<9x8x8xbf16, #tpu.memory_space<vmem>>, vector<1x8x8xbf16>
    %128 = vector.shape_cast %127 : vector<1x8x8xbf16> to vector<8x8xbf16>
    %cst_134 = arith.constant dense<0.000000e+00> : vector<256x8xf32>
    %129 = tpu.matmul %126, %128, %cst_134 {dimension_numbers = #tpu.dot_dimension_numbers<[1], [0], [0], [1], [0, 0, 1, 1], [], []>} : vector<256x8xbf16>, vector<8x8xbf16>, vector<256x8xf32> -> vector<256x8xf32>
    %130 = arith.addf %124, %129 : vector<256x8xf32>
    %c2_135 = arith.constant 2 : index
    %c2_136 = arith.constant 2 : index
    %c0_137 = arith.constant 0 : index
    %131 = vector.load %arg8[%c2_135, %c2_136, %c0_137] : memref<18x18x8xbf16, #tpu.memory_space<vmem>>, vector<16x16x8xbf16>
    %132 = vector.shape_cast %131 : vector<16x16x8xbf16> to vector<256x8xbf16>
    %c8_138 = arith.constant 8 : index
    %c0_139 = arith.constant 0 : index
    %c0_140 = arith.constant 0 : index
    %133 = vector.load %arg4[%c8_138, %c0_139, %c0_140] : memref<9x8x8xbf16, #tpu.memory_space<vmem>>, vector<1x8x8xbf16>
    %134 = vector.shape_cast %133 : vector<1x8x8xbf16> to vector<8x8xbf16>
    %cst_141 = arith.constant dense<0.000000e+00> : vector<256x8xf32>
    %135 = tpu.matmul %132, %134, %cst_141 {dimension_numbers = #tpu.dot_dimension_numbers<[1], [0], [0], [1], [0, 0, 1, 1], [], []>} : vector<256x8xbf16>, vector<8x8xbf16>, vector<256x8xf32> -> vector<256x8xf32>
    %136 = arith.addf %130, %135 : vector<256x8xf32>
    %c0_142 = arith.constant 0 : index
    %c0_143 = arith.constant 0 : index
    %137 = vector.load %arg5[%c0_142, %c0_143] : memref<1x8xf32, #tpu.memory_space<vmem>>, vector<1x8xf32>
    %138 = vector.broadcast %137 : vector<1x8xf32> to vector<256x8xf32>
    %139 = arith.addf %136, %138 : vector<256x8xf32>
    %140 = arith.mulf %139, %139 : vector<256x8xf32>
    %cst_144 = arith.constant dense<0.000000e+00> : vector<256xf32>
    %141 = vector.multi_reduction <add>, %140, %cst_144 [1] : vector<256x8xf32> to vector<256xf32>
    %142 = vector.shape_cast %141 : vector<256xf32> to vector<256x1xf32>
    %cst_145 = arith.constant 8.000000e+00 : f32
    %143 = vector.broadcast %cst_145 : f32 to vector<256x1xf32>
    %144 = arith.divf %142, %143 : vector<256x1xf32>
    %cst_146 = arith.constant 9.99999993E-9 : f32
    %145 = vector.broadcast %cst_146 : f32 to vector<256x1xf32>
    %146 = arith.addf %144, %145 : vector<256x1xf32>
    %147 = math.rsqrt %146 : vector<256x1xf32>
    %148 = vector.broadcast %147 : vector<256x1xf32> to vector<256x8xf32>
    %149 = arith.mulf %139, %148 : vector<256x8xf32>
    %cst_147 = arith.constant 1.000000e-01 : f32
    %150 = vector.broadcast %cst_147 : f32 to vector<256x8xf32>
    %151 = arith.mulf %150, %149 : vector<256x8xf32>
    %152 = arith.maximumf %149, %151 : vector<256x8xf32>
    %153 = vector.shape_cast %152 : vector<256x8xf32> to vector<16x16x8xf32>
    %c0_148 = arith.constant 0 : index
    %c0_149 = arith.constant 0 : index
    %c0_150 = arith.constant 0 : index
    %c0_151 = arith.constant 0 : index
    %154 = vector.load %arg6[%c0_148, %c0_149, %c0_150, %c0_151] : memref<1x16x16x8xf32, #tpu.memory_space<vmem>>, vector<1x16x16x8xf32>
    %155 = vector.shape_cast %154 : vector<1x16x16x8xf32> to vector<16x16x8xf32>
    %156 = vector.shape_cast %153 : vector<16x16x8xf32> to vector<1x16x16x8xf32>
    tpu.vector_store %arg6[%c0_148, %c0_149, %c0_150, %c0_151], %156 {strides = array<i32>} : memref<1x16x16x8xf32, #tpu.memory_space<vmem>>, vector<1x16x16x8xf32>,
    return
  }
  func.func @transform_0(%arg0: i32) -> (i32, i32, i32, i32) {
    %c0_i32 = arith.constant 0 : i32
    %c0_i32_0 = arith.constant 0 : i32
    %c0_i32_1 = arith.constant 0 : i32
    %c0_i32_2 = arith.constant 0 : i32
    return %arg0, %c0_i32, %c0_i32_0, %c0_i32_1 : i32, i32, i32, i32
  }
  func.func @transform_1(%arg0: i32) -> (i32, i32, i32) {
    %c0_i32 = arith.constant 0 : i32
    %c0_i32_0 = arith.constant 0 : i32
    %c0_i32_1 = arith.constant 0 : i32
    %c0_i32_2 = arith.constant 0 : i32
    return %c0_i32, %c0_i32_0, %c0_i32_1 : i32, i32, i32
  }
  func.func @transform_2(%arg0: i32) -> (i32, i32) {
    %c0_i32 = arith.constant 0 : i32
    %c0_i32_0 = arith.constant 0 : i32
    %c0_i32_1 = arith.constant 0 : i32
    return %c0_i32, %c0_i32_0 : i32, i32
  }
  func.func @transform_3(%arg0: i32) -> (i32, i32, i32) {
    %c0_i32 = arith.constant 0 : i32
    %c0_i32_0 = arith.constant 0 : i32
    %c0_i32_1 = arith.constant 0 : i32
    %c0_i32_2 = arith.constant 0 : i32
    return %c0_i32, %c0_i32_0, %c0_i32_1 : i32, i32, i32
  }
  func.func @transform_4(%arg0: i32) -> (i32, i32) {
    %c0_i32 = arith.constant 0 : i32
    %c0_i32_0 = arith.constant 0 : i32
    %c0_i32_1 = arith.constant 0 : i32
    return %c0_i32, %c0_i32_0 : i32, i32
  }
  func.func @transform_5(%arg0: i32) -> (i32, i32, i32, i32) {
    %c0_i32 = arith.constant 0 : i32
    %c0_i32_0 = arith.constant 0 : i32
    %c0_i32_1 = arith.constant 0 : i32
    %c0_i32_2 = arith.constant 0 : i32
    return %arg0, %c0_i32, %c0_i32_0, %c0_i32_1 : i32, i32, i32, i32
  }
}

</mosaic_0001>

<llo_original>
// kernel: tpu_custom_call.1
$region0: #{tpu_custom_call.1}
  #allocation0 [shape = 'u32[]', space=smem, size = 0x4, offset = 0x4, fixed_abs, tag = 'smem constant byte address 0x4 - core index']
  #allocation1 [shape = 'u32[144,128]{1,0:T(1,128)}', space=vmem, size = 0x12000, scoped, tag = 'internal scratch']
  #allocation2 [shape = 'bf16[18,18,4]{2,1,0:T(8,128)(2,1)}', space=vmem, size = 0x1b000, scoped, tag = 'scratch operand']
  #allocation3 [shape = 'bf16[18,18,8]{2,1,0:T(8,128)(2,1)}', space=vmem, size = 0x1b000, scoped, tag = 'scratch operand']
  %s0 = inlined_call_operand.vmem [shape: f32[2,16,16,4], index: 0, kind: input, shape index: {}]
  %s1 = inlined_call_operand.vmem [shape: bf16[9,4,8], index: 1, kind: input, shape index: {}]
  %s2 = inlined_call_operand.vmem [shape: f32[1,8], index: 2, kind: input, shape index: {}]
  %s3 = inlined_call_operand.vmem [shape: bf16[9,8,8], index: 3, kind: input, shape index: {}]
  %s4 = inlined_call_operand.vmem [shape: f32[1,8], index: 4, kind: input, shape index: {}]
  %s5 = inlined_call_operand.vmem [shape: f32[2,16,16,8], index: 5, kind: output, shape index: {}]
  %s6 = sld [smem:[#allocation0]]
  $region53: #{tpu_custom_call.1} parent=0
    _
  %s8 = ssub.s32 1, %s6
  %s9 = scalar_select 0, %s8, %s6
  loop: start=0, step=1, limit=4
  $region2: #{tpu_custom_call.1} parent=0 // loop_pre_header
    _
  $region3: #{tpu_custom_call.1} parent=0 // loop_header
    %s11 = sphi 0, %s15
    %p12 = scmp.ge.s32.totalorder %s11, 4
    %s21 = sphi 0, %s23
    %s24 = sphi 0, %s21
    %s25 = sphi 0, %s24
    %s41 = sphi 0, %s25
    %s45 = sphi 0, %s45
    %s47 = sphi 0, %s45
    %s48 = sphi 0, %s47
    %s62 = sphi 0, %s48
    %s66 = sphi 0, %s66
    %s68 = sphi 0, %s66
    %s69 = sphi 0, %s68
    %s83 = sphi 0, %s69
    %s87 = sphi 0, %s87
    %s89 = sphi 0, %s87
    %s90 = sphi 0, %s89
    %s104 = sphi 0, %s90
    %s108 = sphi 0, %s108
    %s110 = sphi 0, %s108
    %s111 = sphi 0, %s110
    %s125 = sphi 0, %s111
    %s131 = sphi 0, %s133
    %s134 = sphi 0, %s131
    %s135 = sphi 0, %s134
    %s151 = sphi 0, %s135
  $region4: #{tpu_custom_call.1} parent=0 // loop_header_branch
    %14 = sbr.rel (%p12) target = $region8
  $region5: #{tpu_custom_call.1} parent=0 // loop_body
    %s16 = ssub.s32 %s11, 1
    %s17 = ssub.s32 %s11, 2
    %s18 = sadd.s32 %s11, 1
    %s19 = ssub.s32 %s11, %s18
    %p20 = scmp.eq.s32.totalorder %s19, 0
    %s22 = sadd.s32 %s21, 1
    %s23 = scalar_select %p20, %s21, %s22
    %p26 = pneg %p20
    %p27 = scmp.eq.s32.totalorder %s11, 1
    %p28 = por %p26, %p27
    %p29 = scmp.ne.s32.totalorder %s21, %s24
    %p30 = scmp.eq.s32.totalorder %s11, 0
    %p31 = por %p29, %p30
    %p32 = scmp.ne.s32.totalorder %s21, %s24
    %p33 = scmp.eq.s32.totalorder %s16, 1
    %p34 = por %p32, %p33
    %p35 = scmp.ne.s32.totalorder %s24, %s25
    %p36 = scmp.eq.s32.totalorder %s16, 0
    %p37 = por %p35, %p36
    %p38 = scmp.ne.s32.totalorder %s24, %s25
    %p39 = scmp.eq.s32.totalorder %s17, 1
    %p40 = por %p38, %p39
    %p42 = scmp.ne.s32.totalorder %s25, %s41
    %p43 = scmp.eq.s32.totalorder %s17, 0
    %p44 = por %p42, %p43
    %s46 = sadd.s32 %s45, 1
    %p49 = scmp.eq.s32.totalorder %s11, 1
    %p50 = scmp.ne.s32.totalorder %s45, %s47
    %p51 = scmp.eq.s32.totalorder %s11, 0
    %p52 = por %p50, %p51
    %p53 = scmp.ne.s32.totalorder %s45, %s47
    %p54 = scmp.eq.s32.totalorder %s16, 1
    %p55 = por %p53, %p54
    %p56 = scmp.ne.s32.totalorder %s47, %s48
    %p57 = scmp.eq.s32.totalorder %s16, 0
    %p58 = por %p56, %p57
    %p59 = scmp.ne.s32.totalorder %s47, %s48
    %p60 = scmp.eq.s32.totalorder %s17, 1
    %p61 = por %p59, %p60
    %p63 = scmp.ne.s32.totalorder %s48, %s62
    %p64 = scmp.eq.s32.totalorder %s17, 0
    %p65 = por %p63, %p64
    %s67 = sadd.s32 %s66, 1
    %p70 = scmp.eq.s32.totalorder %s11, 1
    %p71 = scmp.ne.s32.totalorder %s66, %s68
    %p72 = scmp.eq.s32.totalorder %s11, 0
    %p73 = por %p71, %p72
    %p74 = scmp.ne.s32.totalorder %s66, %s68
    %p75 = scmp.eq.s32.totalorder %s16, 1
    %p76 = por %p74, %p75
    %p77 = scmp.ne.s32.totalorder %s68, %s69
    %p78 = scmp.eq.s32.totalorder %s16, 0
    %p79 = por %p77, %p78
    %p80 = scmp.ne.s32.totalorder %s68, %s69
    %p81 = scmp.eq.s32.totalorder %s17, 1
    %p82 = por %p80, %p81
    %p84 = scmp.ne.s32.totalorder %s69, %s83
    %p85 = scmp.eq.s32.totalorder %s17, 0
    %p86 = por %p84, %p85
    %s88 = sadd.s32 %s87, 1
    %p91 = scmp.eq.s32.totalorder %s11, 1
    %p92 = scmp.ne.s32.totalorder %s87, %s89
    %p93 = scmp.eq.s32.totalorder %s11, 0
    %p94 = por %p92, %p93
    %p95 = scmp.ne.s32.totalorder %s87, %s89
    %p96 = scmp.eq.s32.totalorder %s16, 1
    %p97 = por %p95, %p96
    %p98 = scmp.ne.s32.totalorder %s89, %s90
    %p99 = scmp.eq.s32.totalorder %s16, 0
    %p100 = por %p98, %p99
    %p101 = scmp.ne.s32.totalorder %s89, %s90
    %p102 = scmp.eq.s32.totalorder %s17, 1
    %p103 = por %p101, %p102
    %p105 = scmp.ne.s32.totalorder %s90, %s104
    %p106 = scmp.eq.s32.totalorder %s17, 0
    %p107 = por %p105, %p106
    %s109 = sadd.s32 %s108, 1
    %p112 = scmp.eq.s32.totalorder %s11, 1
    %p113 = scmp.ne.s32.totalorder %s108, %s110
    %p114 = scmp.eq.s32.totalorder %s11, 0
    %p115 = por %p113, %p114
    %p116 = scmp.ne.s32.totalorder %s108, %s110
    %p117 = scmp.eq.s32.totalorder %s16, 1
    %p118 = por %p116, %p117
    %p119 = scmp.ne.s32.totalorder %s110, %s111
    %p120 = scmp.eq.s32.totalorder %s16, 0
    %p121 = por %p119, %p120
    %p122 = scmp.ne.s32.totalorder %s110, %s111
    %p123 = scmp.eq.s32.totalorder %s17, 1
    %p124 = por %p122, %p123
    %p126 = scmp.ne.s32.totalorder %s111, %s125
    %p127 = scmp.eq.s32.totalorder %s17, 0
    %p128 = por %p126, %p127
    %s129 = ssub.s32 %s11, %s18
    %p130 = scmp.eq.s32.totalorder %s129, 0
    %s132 = sadd.s32 %s131, 1
    %s133 = scalar_select %p130, %s131, %s132
    %p136 = pneg %p130
    %p137 = scmp.eq.s32.totalorder %s11, 1
    %p138 = por %p136, %p137
    %p139 = scmp.ne.s32.totalorder %s131, %s134
    %p140 = scmp.eq.s32.totalorder %s11, 0
    %p141 = por %p139, %p140
    %p142 = scmp.ne.s32.totalorder %s131, %s134
    %p143 = scmp.eq.s32.totalorder %s16, 1
    %p144 = por %p142, %p143
    %p145 = scmp.ne.s32.totalorder %s134, %s135
    %p146 = scmp.eq.s32.totalorder %s16, 0
    %p147 = por %p145, %p146
    %p148 = scmp.ne.s32.totalorder %s134, %s135
    %p149 = scmp.eq.s32.totalorder %s17, 1
    %p150 = por %p148, %p149
    %p152 = scmp.ne.s32.totalorder %s135, %s151
    %p153 = scmp.eq.s32.totalorder %s17, 0
    %p154 = por %p152, %p153
    %p155 = scmp.le.s32.totalorder 1, %s11
    %p156 = scmp.lt.s32.totalorder %s11, 3
    %p157 = pnand %p155, %p156
    %p158 = pneg %p157
    // Predicated region
    $region9: #{tpu_custom_call.1} parent=5 // pred_check
      _
    $region10: #{tpu_custom_call.1} parent=5 // pred_check_branch
      %160 = sbr.rel (%p157) target = $region12
    $region11: #{tpu_custom_call.1} parent=5 // pred_region
      %s161 = ssub.s32 %s11, 1
      // Predicated region
      $region13: #{tpu_custom_call.1} parent=11 // pred_check
        %p162 = pneg %p58
      $region14: #{tpu_custom_call.1} parent=11 // pred_check_branch
        %164 = sbr.rel (%p162) target = $region16
      $region15: #{tpu_custom_call.1} parent=11 // pred_region
        _
      $region16: #{tpu_custom_call.1} parent=11 // pred_fallthru
        _
      // Predicated region
      $region17: #{tpu_custom_call.1} parent=11 // pred_check
        %p165 = pneg %p79
      $region18: #{tpu_custom_call.1} parent=11 // pred_check_branch
        %167 = sbr.rel (%p165) target = $region20
      $region19: #{tpu_custom_call.1} parent=11 // pred_region
        _
      $region20: #{tpu_custom_call.1} parent=11 // pred_fallthru
        _
      // Predicated region
      $region21: #{tpu_custom_call.1} parent=11 // pred_check
        %p168 = pneg %p100
      $region22: #{tpu_custom_call.1} parent=11 // pred_check_branch
        %170 = sbr.rel (%p168) target = $region24
      $region23: #{tpu_custom_call.1} parent=11 // pred_region
        _
      $region24: #{tpu_custom_call.1} parent=11 // pred_fallthru
        _
      // Predicated region
      $region25: #{tpu_custom_call.1} parent=11 // pred_check
        %p171 = pneg %p121
      $region26: #{tpu_custom_call.1} parent=11 // pred_check_branch
        %173 = sbr.rel (%p171) target = $region28
      $region27: #{tpu_custom_call.1} parent=11 // pred_region
        _
      $region28: #{tpu_custom_call.1} parent=11 // pred_fallthru
        _
    $region12: #{tpu_custom_call.1} parent=5 // pred_fallthru
      _
    %p174 = scmp.lt.s32.totalorder %s11, 2
    // Predicated region
    $region29: #{tpu_custom_call.1} parent=5 // pred_check
      %p175 = pneg %p174
    $region30: #{tpu_custom_call.1} parent=5 // pred_check_branch
      %177 = sbr.rel (%p175) target = $region32
    $region31: #{tpu_custom_call.1} parent=5 // pred_region
      // Predicated region
      $region33: #{tpu_custom_call.1} parent=31 // pred_check
        %p178 = pneg %p31
      $region34: #{tpu_custom_call.1} parent=31 // pred_check_branch
        %180 = sbr.rel (%p178) target = $region36
      $region35: #{tpu_custom_call.1} parent=31 // pred_region
        %p181 = scmp.lt.s32.totalorder %s11, 1
        %s182 = scalar_select %p181, %s11, 1
        %s183 = smul.addr %s182, 32
        %s184 = smul.addr %s183, 8
        %s185 = scalar_lea.vmem %s0, %s184
      $region36: #{tpu_custom_call.1} parent=31 // pred_fallthru
        _
    $region32: #{tpu_custom_call.1} parent=5 // pred_fallthru
      _
    %p186 = scmp.le.s32.totalorder 1, %s11
    %p187 = scmp.lt.s32.totalorder %s11, 3
    %p188 = pnand %p186, %p187
    %p189 = pneg %p188
    // Predicated region
    $region37: #{tpu_custom_call.1} parent=5 // pred_check
      _
    $region38: #{tpu_custom_call.1} parent=5 // pred_check_branch
      %191 = sbr.rel (%p188) target = $region40
    $region39: #{tpu_custom_call.1} parent=5 // pred_region
      %s192 = ssub.s32 %s11, 1
      %p193 = scmp.lt.s32.totalorder %s16, 1
      %s194 = scalar_select %p193, %s16, 1
      %s195 = smul.addr %s194, 32
      %s196 = smul.addr %s195, 8
      %s197 = scalar_lea.vmem %s0, %s196
      %p198 = pneg %p37
      %p199 = pneg %p34
      %p200 = pneg %p58
      %p201 = pneg %p55
      %p202 = pneg %p79
      %p203 = pneg %p76
      %p204 = pneg %p100
      %p205 = pneg %p97
      %p206 = pneg %p121
      %p207 = pneg %p118
      %p208 = pneg %p147
      %p209 = pneg %p144
      %p210 = scmp.lt.s32.totalorder %s16, 1
      %s211 = scalar_select %p210, %s16, 1
      %s212 = smul.addr %s211, 32
      %s213 = smul.addr %s212, 8
      %s214 = scalar_lea.vmem %s5, %s213
      %p215 = scmp.lt.s32.totalorder %s16, 1
      %s216 = scalar_select %p215, %s16, 1
      %s217 = smul.addr %s216, 32
      %s218 = smul.addr %s217, 8
      %s219 = scalar_lea.vmem %s0, %s218
      %p220 = scmp.lt.s32.totalorder %s16, 1
      %s221 = scalar_select %p220, %s16, 1
      %s222 = smul.addr %s221, 32
      %s223 = smul.addr %s222, 8
      %s224 = scalar_lea.vmem %s5, %s223
      %vm226 = vcmask 27648
      %227 = vst.msk [vmem:[#allocation2] sm:$0xf] %vm226, 0
      %228 = vst.msk [vmem:[#allocation2 + $0x4] sm:$0xf] %vm226, 0
      %vm229 = vcmask 24576
      %230 = vst.msk [vmem:[#allocation2 + $0x8] sm:$0x1] %vm229, 0
      %231 = vst.msk [vmem:[#allocation2 + $0xc] sm:$0xf] %vm226, 0
      %232 = vst.msk [vmem:[#allocation2 + $0x10] sm:$0xf] %vm226, 0
      %233 = vst.msk [vmem:[#allocation2 + $0x14] sm:$0x1] %vm229, 0
      %234 = vst.msk [vmem:[#allocation2 + $0x18] sm:$0xf] %vm226, 0
      %235 = vst.msk [vmem:[#allocation2 + $0x1c] sm:$0xf] %vm226, 0
      %236 = vst.msk [vmem:[#allocation2 + $0x20] sm:$0x1] %vm229, 0
      %237 = vst.msk [vmem:[#allocation2 + $0x24] sm:$0xf] %vm226, 0
      %238 = vst.msk [vmem:[#allocation2 + $0x28] sm:$0xf] %vm226, 0
      %239 = vst.msk [vmem:[#allocation2 + $0x2c] sm:$0x1] %vm229, 0
      %240 = vst.msk [vmem:[#allocation2 + $0x30] sm:$0xf] %vm226, 0
      %241 = vst.msk [vmem:[#allocation2 + $0x34] sm:$0xf] %vm226, 0
      %242 = vst.msk [vmem:[#allocation2 + $0x38] sm:$0x1] %vm229, 0
      %243 = vst.msk [vmem:[#allocation2 + $0x3c] sm:$0xf] %vm226, 0
      %244 = vst.msk [vmem:[#allocation2 + $0x40] sm:$0xf] %vm226, 0
      %245 = vst.msk [vmem:[#allocation2 + $0x44] sm:$0x1] %vm229, 0
      %246 = vst.msk [vmem:[#allocation2 + $0x48] sm:$0xf] %vm226, 0
      %247 = vst.msk [vmem:[#allocation2 + $0x4c] sm:$0xf] %vm226, 0
      %248 = vst.msk [vmem:[#allocation2 + $0x50] sm:$0x1] %vm229, 0
      %249 = vst.msk [vmem:[#allocation2 + $0x54] sm:$0xf] %vm226, 0
      %250 = vst.msk [vmem:[#allocation2 + $0x58] sm:$0xf] %vm226, 0
      %251 = vst.msk [vmem:[#allocation2 + $0x5c] sm:$0x1] %vm229, 0
      %252 = vst.msk [vmem:[#allocation2 + $0x60] sm:$0xf] %vm226, 0
      %253 = vst.msk [vmem:[#allocation2 + $0x64] sm:$0xf] %vm226, 0
      %254 = vst.msk [vmem:[#allocation2 + $0x68] sm:$0x1] %vm229, 0
      %255 = vst.msk [vmem:[#allocation2 + $0x6c] sm:$0xf] %vm226, 0
      %256 = vst.msk [vmem:[#allocation2 + $0x70] sm:$0xf] %vm226, 0
      %257 = vst.msk [vmem:[#allocation2 + $0x74] sm:$0x1] %vm229, 0
      %258 = vst.msk [vmem:[#allocation2 + $0x78] sm:$0xf] %vm226, 0
      %259 = vst.msk [vmem:[#allocation2 + $0x7c] sm:$0xf] %vm226, 0
      %260 = vst.msk [vmem:[#allocation2 + $0x80] sm:$0x1] %vm229, 0
      %261 = vst.msk [vmem:[#allocation2 + $0x84] sm:$0xf] %vm226, 0
      %262 = vst.msk [vmem:[#allocation2 + $0x88] sm:$0xf] %vm226, 0
      %263 = vst.msk [vmem:[#allocation2 + $0x8c] sm:$0x1] %vm229, 0
      %264 = vst.msk [vmem:[#allocation2 + $0x90] sm:$0xf] %vm226, 0
      %265 = vst.msk [vmem:[#allocation2 + $0x94] sm:$0xf] %vm226, 0
      %266 = vst.msk [vmem:[#allocation2 + $0x98] sm:$0x1] %vm229, 0
      %267 = vst.msk [vmem:[#allocation2 + $0x9c] sm:$0xf] %vm226, 0
      %268 = vst.msk [vmem:[#allocation2 + $0xa0] sm:$0xf] %vm226, 0
      %269 = vst.msk [vmem:[#allocation2 + $0xa4] sm:$0x1] %vm229, 0
      %270 = vst.msk [vmem:[#allocation2 + $0xa8] sm:$0xf] %vm226, 0
      %271 = vst.msk [vmem:[#allocation2 + $0xac] sm:$0xf] %vm226, 0
      %272 = vst.msk [vmem:[#allocation2 + $0xb0] sm:$0x1] %vm229, 0
      %273 = vst.msk [vmem:[#allocation2 + $0xb4] sm:$0xf] %vm226, 0
      %274 = vst.msk [vmem:[#allocation2 + $0xb8] sm:$0xf] %vm226, 0
      %275 = vst.msk [vmem:[#allocation2 + $0xbc] sm:$0x1] %vm229, 0
      %276 = vst.msk [vmem:[#allocation2 + $0xc0] sm:$0xf] %vm226, 0
      %277 = vst.msk [vmem:[#allocation2 + $0xc4] sm:$0xf] %vm226, 0
      %278 = vst.msk [vmem:[#allocation2 + $0xc8] sm:$0x1] %vm229, 0
      %279 = vst.msk [vmem:[#allocation2 + $0xcc] sm:$0xf] %vm226, 0
      %280 = vst.msk [vmem:[#allocation2 + $0xd0] sm:$0xf] %vm226, 0
      %281 = vst.msk [vmem:[#allocation2 + $0xd4] sm:$0x1] %vm229, 0
      %v282 = vld [vmem:[%s219] sm:$0xff]
      %v283 = vld [vmem:[%s219 + $0x8] sm:$0xff]
      %v284 = vld [vmem:[%s219 + $0x10] sm:$0xff]
      %v285 = vld [vmem:[%s219 + $0x18] sm:$0xff]
      %v286 = vld [vmem:[%s219 + $0x20] sm:$0xff]
      %v287 = vld [vmem:[%s219 + $0x28] sm:$0xff]
      %v288 = vld [vmem:[%s219 + $0x30] sm:$0xff]
      %v289 = vld [vmem:[%s219 + $0x38] sm:$0xff]
      %v290 = vld [vmem:[%s219 + $0x40] sm:$0xff]
      %v291 = vld [vmem:[%s219 + $0x48] sm:$0xff]
      %v292 = vld [vmem:[%s219 + $0x50] sm:$0xff]
      %v293 = vld [vmem:[%s219 + $0x58] sm:$0xff]
      %v294 = vld [vmem:[%s219 + $0x60] sm:$0xff]
      %v295 = vld [vmem:[%s219 + $0x68] sm:$0xff]
      %v296 = vld [vmem:[%s219 + $0x70] sm:$0xff]
      %v297 = vld [vmem:[%s219 + $0x78] sm:$0xff]
      %v298 = vld [vmem:[%s219 + $0x80] sm:$0xff]
      %v299 = vld [vmem:[%s219 + $0x88] sm:$0xff]
      %v300 = vld [vmem:[%s219 + $0x90] sm:$0xff]
      %v301 = vld [vmem:[%s219 + $0x98] sm:$0xff]
      %v302 = vld [vmem:[%s219 + $0xa0] sm:$0xff]
      %v303 = vld [vmem:[%s219 + $0xa8] sm:$0xff]
      %v304 = vld [vmem:[%s219 + $0xb0] sm:$0xff]
      %v305 = vld [vmem:[%s219 + $0xb8] sm:$0xff]
      %v306 = vld [vmem:[%s219 + $0xc0] sm:$0xff]
      %v307 = vld [vmem:[%s219 + $0xc8] sm:$0xff]
      %v308 = vld [vmem:[%s219 + $0xd0] sm:$0xff]
      %v309 = vld [vmem:[%s219 + $0xd8] sm:$0xff]
      %v310 = vld [vmem:[%s219 + $0xe0] sm:$0xff]
      %v311 = vld [vmem:[%s219 + $0xe8] sm:$0xff]
      %v312 = vld [vmem:[%s219 + $0xf0] sm:$0xff]
      %v313 = vld [vmem:[%s219 + $0xf8] sm:$0xff]
      %v314 = vpack.c.bf16 %v283, %v282
      %v315 = vpack.c.bf16 %v285, %v284
      %v316 = vpack.c.bf16 %v287, %v286
      %v317 = vpack.c.bf16 %v289, %v288
      %v318 = vpack.c.bf16 %v291, %v290
      %v319 = vpack.c.bf16 %v293, %v292
      %v320 = vpack.c.bf16 %v295, %v294
      %v321 = vpack.c.bf16 %v297, %v296
      %v322 = vpack.c.bf16 %v299, %v298
      %v323 = vpack.c.bf16 %v301, %v300
      %v324 = vpack.c.bf16 %v303, %v302
      %v325 = vpack.c.bf16 %v305, %v304
      %v326 = vpack.c.bf16 %v307, %v306
      %v327 = vpack.c.bf16 %v309, %v308
      %v328 = vpack.c.bf16 %v311, %v310
      %v329 = vpack.c.bf16 %v313, %v312
      %v346 = vunpack.c.l.b16 %v314
      %v347 = vunpack.c.h.b16 %v314
      %v348 = vunpack.c.l.b16 %v315
      %v349 = vunpack.c.h.b16 %v315
      %v350 = vunpack.c.l.b16 %v316
      %v351 = vunpack.c.h.b16 %v316
      %v352 = vunpack.c.l.b16 %v317
      %v353 = vunpack.c.h.b16 %v317
      %v354 = vunpack.c.l.b16 %v318
      %v355 = vunpack.c.h.b16 %v318
      %v356 = vunpack.c.l.b16 %v319
      %v357 = vunpack.c.h.b16 %v319
      %v358 = vunpack.c.l.b16 %v320
      %v359 = vunpack.c.h.b16 %v320
      %v360 = vunpack.c.l.b16 %v321
      %v361 = vunpack.c.h.b16 %v321
      %v362 = vunpack.c.l.b16 %v322
      %v363 = vunpack.c.h.b16 %v322
      %v364 = vunpack.c.l.b16 %v323
      %v365 = vunpack.c.h.b16 %v323
      %v366 = vunpack.c.l.b16 %v324
      %v367 = vunpack.c.h.b16 %v324
      %v368 = vunpack.c.l.b16 %v325
      %v369 = vunpack.c.h.b16 %v325
      %v370 = vunpack.c.l.b16 %v326
      %v371 = vunpack.c.h.b16 %v326
      %v372 = vunpack.c.l.b16 %v327
      %v373 = vunpack.c.h.b16 %v327
      %v374 = vunpack.c.l.b16 %v328
      %v375 = vunpack.c.h.b16 %v328
      %v376 = vunpack.c.l.b16 %v329
      %v377 = vunpack.c.h.b16 %v329
      %v378 = vpack.c.b16 %v346, %v346
      %v379 = vpack.c.b16 %v347, %v347
      %v380 = vpack.c.b16 %v348, %v348
      %v381 = vpack.c.b16 %v349, %v349
      %v382 = vpack.c.b16 %v350, %v350
      %v383 = vpack.c.b16 %v351, %v351
      %v384 = vpack.c.b16 %v352, %v352
      %v385 = vpack.c.b16 %v353, %v353
      %v386 = vpack.c.b16 %v354, %v354
      %v387 = vpack.c.b16 %v355, %v355
      %v388 = vpack.c.b16 %v356, %v356
      %v389 = vpack.c.b16 %v357, %v357
      %v390 = vpack.c.b16 %v358, %v358
      %v391 = vpack.c.b16 %v359, %v359
      %v392 = vpack.c.b16 %v360, %v360
      %v393 = vpack.c.b16 %v361, %v361
      %v394 = vpack.c.b16 %v362, %v362
      %v395 = vpack.c.b16 %v363, %v363
      %v396 = vpack.c.b16 %v364, %v364
      %v397 = vpack.c.b16 %v365, %v365
      %v398 = vpack.c.b16 %v366, %v366
      %v399 = vpack.c.b16 %v367, %v367
      %v400 = vpack.c.b16 %v368, %v368
      %v401 = vpack.c.b16 %v369, %v369
      %v402 = vpack.c.b16 %v370, %v370
      %v403 = vpack.c.b16 %v371, %v371
      %v404 = vpack.c.b16 %v372, %v372
      %v405 = vpack.c.b16 %v373, %v373
      %v406 = vpack.c.b16 %v374, %v374
      %v407 = vpack.c.b16 %v375, %v375
      %v408 = vpack.c.b16 %v376, %v376
      %v409 = vpack.c.b16 %v377, %v377
      %vm410 = vsmask.f32 256
      %vm411 = vsmask.f32 4368
      %vm412 = vmor %vm410, %vm411
      %v414 = vshrl.u32 %v378, 16
      %v416 = vrot.slane %v414, 7
      %v417 = vshll.u32 %v378, 16
      %v419 = vor.u32 %v416, %v417
      %v420 = vrot.slane %v416, 4
      %v422 = vshrl.u32 %v379, 16
      %v424 = vrot.slane %v422, 7
      %v425 = vshll.u32 %v379, 16
      %v427 = vor.u32 %v424, %v425
      %v428 = vsel %vm412, %v420, %v427
      %v429 = vrot.slane %v424, 4
      %v431 = vshrl.u32 %v380, 16
      %v433 = vrot.slane %v431, 7
      %v434 = vshll.u32 %v380, 16
      %v436 = vor.u32 %v433, %v434
      %v437 = vrot.slane %v433, 4
      %v439 = vshrl.u32 %v381, 16
      %v441 = vrot.slane %v439, 7
      %v442 = vshll.u32 %v381, 16
      %v444 = vor.u32 %v441, %v442
      %v445 = vsel %vm412, %v437, %v444
      %v446 = vrot.slane %v441, 4
      %v448 = vshrl.u32 %v382, 16
      %v450 = vrot.slane %v448, 7
      %v451 = vshll.u32 %v382, 16
      %v453 = vor.u32 %v450, %v451
      %v454 = vrot.slane %v450, 4
      %v456 = vshrl.u32 %v383, 16
      %v458 = vrot.slane %v456, 7
      %v459 = vshll.u32 %v383, 16
      %v461 = vor.u32 %v458, %v459
      %v462 = vsel %vm412, %v454, %v461
      %v463 = vrot.slane %v458, 4
      %v465 = vshrl.u32 %v384, 16
      %v467 = vrot.slane %v465, 7
      %v468 = vshll.u32 %v384, 16
      %v470 = vor.u32 %v467, %v468
      %v471 = vrot.slane %v467, 4
      %v473 = vshrl.u32 %v385, 16
      %v475 = vrot.slane %v473, 7
      %v476 = vshll.u32 %v385, 16
      %v478 = vor.u32 %v475, %v476
      %v479 = vsel %vm412, %v471, %v478
      %v480 = vrot.slane %v475, 4
      %v482 = vshrl.u32 %v386, 16
      %v484 = vrot.slane %v482, 7
      %v485 = vshll.u32 %v386, 16
      %v487 = vor.u32 %v484, %v485
      %v488 = vrot.slane %v484, 4
      %v490 = vshrl.u32 %v387, 16
      %v492 = vrot.slane %v490, 7
      %v493 = vshll.u32 %v387, 16
      %v495 = vor.u32 %v492, %v493
      %v496 = vsel %vm412, %v488, %v495
      %v497 = vrot.slane %v492, 4
      %v499 = vshrl.u32 %v388, 16
      %v501 = vrot.slane %v499, 7
      %v502 = vshll.u32 %v388, 16
      %v504 = vor.u32 %v501, %v502
      %v505 = vrot.slane %v501, 4
      %v507 = vshrl.u32 %v389, 16
      %v509 = vrot.slane %v507, 7
      %v510 = vshll.u32 %v389, 16
      %v512 = vor.u32 %v509, %v510
      %v513 = vsel %vm412, %v505, %v512
      %v514 = vrot.slane %v509, 4
      %v516 = vshrl.u32 %v390, 16
      %v518 = vrot.slane %v516, 7
      %v519 = vshll.u32 %v390, 16
      %v521 = vor.u32 %v518, %v519
      %v522 = vrot.slane %v518, 4
      %v524 = vshrl.u32 %v391, 16
      %v526 = vrot.slane %v524, 7
      %v527 = vshll.u32 %v391, 16
      %v529 = vor.u32 %v526, %v527
      %v530 = vsel %vm412, %v522, %v529
      %v531 = vrot.slane %v526, 4
      %v533 = vshrl.u32 %v392, 16
      %v535 = vrot.slane %v533, 7
      %v536 = vshll.u32 %v392, 16
      %v538 = vor.u32 %v535, %v536
      %v539 = vrot.slane %v535, 4
      %v541 = vshrl.u32 %v393, 16
      %v543 = vrot.slane %v541, 7
      %v544 = vshll.u32 %v393, 16
      %v546 = vor.u32 %v543, %v544
      %v547 = vsel %vm412, %v539, %v546
      %v548 = vrot.slane %v543, 4
      %v550 = vshrl.u32 %v394, 16
      %v552 = vrot.slane %v550, 7
      %v553 = vshll.u32 %v394, 16
      %v555 = vor.u32 %v552, %v553
      %v556 = vrot.slane %v552, 4
      %v558 = vshrl.u32 %v395, 16
      %v560 = vrot.slane %v558, 7
      %v561 = vshll.u32 %v395, 16
      %v563 = vor.u32 %v560, %v561
      %v564 = vsel %vm412, %v556, %v563
      %v565 = vrot.slane %v560, 4
      %v567 = vshrl.u32 %v396, 16
      %v569 = vrot.slane %v567, 7
      %v570 = vshll.u32 %v396, 16
      %v572 = vor.u32 %v569, %v570
      %v573 = vrot.slane %v569, 4
      %v575 = vshrl.u32 %v397, 16
      %v577 = vrot.slane %v575, 7
      %v578 = vshll.u32 %v397, 16
      %v580 = vor.u32 %v577, %v578
      %v581 = vsel %vm412, %v573, %v580
      %v582 = vrot.slane %v577, 4
      %v584 = vshrl.u32 %v398, 16
      %v586 = vrot.slane %v584, 7
      %v587 = vshll.u32 %v398, 16
      %v589 = vor.u32 %v586, %v587
      %v590 = vrot.slane %v586, 4
      %v592 = vshrl.u32 %v399, 16
      %v594 = vrot.slane %v592, 7
      %v595 = vshll.u32 %v399, 16
      %v597 = vor.u32 %v594, %v595
      %v598 = vsel %vm412, %v590, %v597
      %v599 = vrot.slane %v594, 4
      %v601 = vshrl.u32 %v400, 16
      %v603 = vrot.slane %v601, 7
      %v604 = vshll.u32 %v400, 16
      %v606 = vor.u32 %v603, %v604
      %v607 = vrot.slane %v603, 4
      %v609 = vshrl.u32 %v401, 16
      %v611 = vrot.slane %v609, 7
      %v612 = vshll.u32 %v401, 16
      %v614 = vor.u32 %v611, %v612
      %v615 = vsel %vm412, %v607, %v614
      %v616 = vrot.slane %v611, 4
      %v618 = vshrl.u32 %v402, 16
      %v620 = vrot.slane %v618, 7
      %v621 = vshll.u32 %v402, 16
      %v623 = vor.u32 %v620, %v621
      %v624 = vrot.slane %v620, 4
      %v626 = vshrl.u32 %v403, 16
      %v628 = vrot.slane %v626, 7
      %v629 = vshll.u32 %v403, 16
      %v631 = vor.u32 %v628, %v629
      %v632 = vsel %vm412, %v624, %v631
      %v633 = vrot.slane %v628, 4
      %v635 = vshrl.u32 %v404, 16
      %v637 = vrot.slane %v635, 7
      %v638 = vshll.u32 %v404, 16
      %v640 = vor.u32 %v637, %v638
      %v641 = vrot.slane %v637, 4
      %v643 = vshrl.u32 %v405, 16
      %v645 = vrot.slane %v643, 7
      %v646 = vshll.u32 %v405, 16
      %v648 = vor.u32 %v645, %v646
      %v649 = vsel %vm412, %v641, %v648
      %v650 = vrot.slane %v645, 4
      %v652 = vshrl.u32 %v406, 16
      %v654 = vrot.slane %v652, 7
      %v655 = vshll.u32 %v406, 16
      %v657 = vor.u32 %v654, %v655
      %v658 = vrot.slane %v654, 4
      %v660 = vshrl.u32 %v407, 16
      %v662 = vrot.slane %v660, 7
      %v663 = vshll.u32 %v407, 16
      %v665 = vor.u32 %v662, %v663
      %v666 = vsel %vm412, %v658, %v665
      %v667 = vrot.slane %v662, 4
      %v669 = vshrl.u32 %v408, 16
      %v671 = vrot.slane %v669, 7
      %v672 = vshll.u32 %v408, 16
      %v674 = vor.u32 %v671, %v672
      %v675 = vrot.slane %v671, 4
      %v677 = vshrl.u32 %v409, 16
      %v679 = vrot.slane %v677, 7
      %v680 = vshll.u32 %v409, 16
      %v682 = vor.u32 %v679, %v680
      %v683 = vsel %vm412, %v675, %v682
      %v684 = vrot.slane %v679, 4
      %s733 = scalar_lea.vmem [#allocation2], 12
      %vm734 = vcmask 27648
      %vm735 = vsmask.f32 7938
      %vm736 = vmand %vm734, %vm735
      %v737 = vld [vmem:[%s733] sm:$0xf]
      %v738 = vsel %vm736, %v419, %v737
      %739 = vst [vmem:[%s733] sm:$0xf] %v738
      %740 = vst.msk [vmem:[%s733 + $0x4] sm:$0xf] %vm226, %v428
      %vm741 = vcmask 24576
      %vm742 = vmand %vm741, %vm410
      %v743 = vld [vmem:[%s733 + $0x8] sm:$0x1]
      %v744 = vsel %vm742, %v429, %v743
      %745 = vst [vmem:[%s733 + $0x8] sm:$0x1] %v744
      %v746 = vld [vmem:[%s733 + $0xc] sm:$0xf]
      %v747 = vsel %vm736, %v436, %v746
      %748 = vst [vmem:[%s733 + $0xc] sm:$0xf] %v747
      %749 = vst.msk [vmem:[%s733 + $0x10] sm:$0xf] %vm226, %v445
      %v750 = vld [vmem:[%s733 + $0x14] sm:$0x1]
      %v751 = vsel %vm742, %v446, %v750
      %752 = vst [vmem:[%s733 + $0x14] sm:$0x1] %v751
      %v753 = vld [vmem:[%s733 + $0x18] sm:$0xf]
      %v754 = vsel %vm736, %v453, %v753
      %755 = vst [vmem:[%s733 + $0x18] sm:$0xf] %v754
      %756 = vst.msk [vmem:[%s733 + $0x1c] sm:$0xf] %vm226, %v462
      %v757 = vld [vmem:[%s733 + $0x20] sm:$0x1]
      %v758 = vsel %vm742, %v463, %v757
      %759 = vst [vmem:[%s733 + $0x20] sm:$0x1] %v758
      %v760 = vld [vmem:[%s733 + $0x24] sm:$0xf]
      %v761 = vsel %vm736, %v470, %v760
      %762 = vst [vmem:[%s733 + $0x24] sm:$0xf] %v761
      %763 = vst.msk [vmem:[%s733 + $0x28] sm:$0xf] %vm226, %v479
      %v764 = vld [vmem:[%s733 + $0x2c] sm:$0x1]
      %v765 = vsel %vm742, %v480, %v764
      %766 = vst [vmem:[%s733 + $0x2c] sm:$0x1] %v765
      %v767 = vld [vmem:[%s733 + $0x30] sm:$0xf]
      %v768 = vsel %vm736, %v487, %v767
      %769 = vst [vmem:[%s733 + $0x30] sm:$0xf] %v768
      %770 = vst.msk [vmem:[%s733 + $0x34] sm:$0xf] %vm226, %v496
      %v771 = vld [vmem:[%s733 + $0x38] sm:$0x1]
      %v772 = vsel %vm742, %v497, %v771
      %773 = vst [vmem:[%s733 + $0x38] sm:$0x1] %v772
      %v774 = vld [vmem:[%s733 + $0x3c] sm:$0xf]
      %v775 = vsel %vm736, %v504, %v774
      %776 = vst [vmem:[%s733 + $0x3c] sm:$0xf] %v775
      %777 = vst.msk [vmem:[%s733 + $0x40] sm:$0xf] %vm226, %v513
      %v778 = vld [vmem:[%s733 + $0x44] sm:$0x1]
      %v779 = vsel %vm742, %v514, %v778
      %780 = vst [vmem:[%s733 + $0x44] sm:$0x1] %v779
      %v781 = vld [vmem:[%s733 + $0x48] sm:$0xf]
      %v782 = vsel %vm736, %v521, %v781
      %783 = vst [vmem:[%s733 + $0x48] sm:$0xf] %v782
      %784 = vst.msk [vmem:[%s733 + $0x4c] sm:$0xf] %vm226, %v530
      %v785 = vld [vmem:[%s733 + $0x50] sm:$0x1]
      %v786 = vsel %vm742, %v531, %v785
      %787 = vst [vmem:[%s733 + $0x50] sm:$0x1] %v786
      %v788 = vld [vmem:[%s733 + $0x54] sm:$0xf]
      %v789 = vsel %vm736, %v538, %v788
      %790 = vst [vmem:[%s733 + $0x54] sm:$0xf] %v789
      %791 = vst.msk [vmem:[%s733 + $0x58] sm:$0xf] %vm226, %v547
      %v792 = vld [vmem:[%s733 + $0x5c] sm:$0x1]
      %v793 = vsel %vm742, %v548, %v792
      %794 = vst [vmem:[%s733 + $0x5c] sm:$0x1] %v793
      %v795 = vld [vmem:[%s733 + $0x60] sm:$0xf]
      %v796 = vsel %vm736, %v555, %v795
      %797 = vst [vmem:[%s733 + $0x60] sm:$0xf] %v796
      %798 = vst.msk [vmem:[%s733 + $0x64] sm:$0xf] %vm226, %v564
      %v799 = vld [vmem:[%s733 + $0x68] sm:$0x1]
      %v800 = vsel %vm742, %v565, %v799
      %801 = vst [vmem:[%s733 + $0x68] sm:$0x1] %v800
      %v802 = vld [vmem:[%s733 + $0x6c] sm:$0xf]
      %v803 = vsel %vm736, %v572, %v802
      %804 = vst [vmem:[%s733 + $0x6c] sm:$0xf] %v803
      %805 = vst.msk [vmem:[%s733 + $0x70] sm:$0xf] %vm226, %v581
      %v806 = vld [vmem:[%s733 + $0x74] sm:$0x1]
      %v807 = vsel %vm742, %v582, %v806
      %808 = vst [vmem:[%s733 + $0x74] sm:$0x1] %v807
      %v809 = vld [vmem:[%s733 + $0x78] sm:$0xf]
      %v810 = vsel %vm736, %v589, %v809
      %811 = vst [vmem:[%s733 + $0x78] sm:$0xf] %v810
      %812 = vst.msk [vmem:[%s733 + $0x7c] sm:$0xf] %vm226, %v598
      %v813 = vld [vmem:[%s733 + $0x80] sm:$0x1]
      %v814 = vsel %vm742, %v599, %v813
      %815 = vst [vmem:[%s733 + $0x80] sm:$0x1] %v814
      %v816 = vld [vmem:[%s733 + $0x84] sm:$0xf]
      %v817 = vsel %vm736, %v606, %v816
      %818 = vst [vmem:[%s733 + $0x84] sm:$0xf] %v817
      %819 = vst.msk [vmem:[%s733 + $0x88] sm:$0xf] %vm226, %v615
      %v820 = vld [vmem:[%s733 + $0x8c] sm:$0x1]
      %v821 = vsel %vm742, %v616, %v820
      %822 = vst [vmem:[%s733 + $0x8c] sm:$0x1] %v821
      %v823 = vld [vmem:[%s733 + $0x90] sm:$0xf]
      %v824 = vsel %vm736, %v623, %v823
      %825 = vst [vmem:[%s733 + $0x90] sm:$0xf] %v824
      %826 = vst.msk [vmem:[%s733 + $0x94] sm:$0xf] %vm226, %v632
      %v827 = vld [vmem:[%s733 + $0x98] sm:$0x1]
      %v828 = vsel %vm742, %v633, %v827
      %829 = vst [vmem:[%s733 + $0x98] sm:$0x1] %v828
      %v830 = vld [vmem:[%s733 + $0x9c] sm:$0xf]
      %v831 = vsel %vm736, %v640, %v830
      %832 = vst [vmem:[%s733 + $0x9c] sm:$0xf] %v831
      %833 = vst.msk [vmem:[%s733 + $0xa0] sm:$0xf] %vm226, %v649
      %v834 = vld [vmem:[%s733 + $0xa4] sm:$0x1]
      %v835 = vsel %vm742, %v650, %v834
      %836 = vst [vmem:[%s733 + $0xa4] sm:$0x1] %v835
      %v837 = vld [vmem:[%s733 + $0xa8] sm:$0xf]
      %v838 = vsel %vm736, %v657, %v837
      %839 = vst [vmem:[%s733 + $0xa8] sm:$0xf] %v838
      %840 = vst.msk [vmem:[%s733 + $0xac] sm:$0xf] %vm226, %v666
      %v841 = vld [vmem:[%s733 + $0xb0] sm:$0x1]
      %v842 = vsel %vm742, %v667, %v841
      %843 = vst [vmem:[%s733 + $0xb0] sm:$0x1] %v842
      %v844 = vld [vmem:[%s733 + $0xb4] sm:$0xf]
      %v845 = vsel %vm736, %v674, %v844
      %846 = vst [vmem:[%s733 + $0xb4] sm:$0xf] %v845
      %847 = vst.msk [vmem:[%s733 + $0xb8] sm:$0xf] %vm226, %v683
      %v848 = vld [vmem:[%s733 + $0xbc] sm:$0x1]
      %v849 = vsel %vm742, %v684, %v848
      %850 = vst [vmem:[%s733 + $0xbc] sm:$0x1] %v849
      %v851 = vld [vmem:[#allocation2] sm:$0xf]
      %v852 = vld [vmem:[#allocation2 + $0x4] sm:$0xf]
      %v853 = vld [vmem:[#allocation2 + $0xc] sm:$0xf]
      %v854 = vld [vmem:[#allocation2 + $0x10] sm:$0xf]
      %v855 = vld [vmem:[#allocation2 + $0x18] sm:$0xf]
      %v856 = vld [vmem:[#allocation2 + $0x1c] sm:$0xf]
      %v857 = vld [vmem:[#allocation2 + $0x24] sm:$0xf]
      %v858 = vld [vmem:[#allocation2 + $0x28] sm:$0xf]
      %v859 = vld [vmem:[#allocation2 + $0x30] sm:$0xf]
      %v860 = vld [vmem:[#allocation2 + $0x34] sm:$0xf]
      %v861 = vld [vmem:[#allocation2 + $0x3c] sm:$0xf]
      %v862 = vld [vmem:[#allocation2 + $0x40] sm:$0xf]
      %v863 = vld [vmem:[#allocation2 + $0x48] sm:$0xf]
      %v864 = vld [vmem:[#allocation2 + $0x4c] sm:$0xf]
      %v865 = vld [vmem:[#allocation2 + $0x54] sm:$0xf]
      %v866 = vld [vmem:[#allocation2 + $0x58] sm:$0xf]
      %v867 = vld [vmem:[#allocation2 + $0x60] sm:$0xf]
      %v868 = vld [vmem:[#allocation2 + $0x64] sm:$0xf]
      %v869 = vld [vmem:[#allocation2 + $0x6c] sm:$0xf]
      %v870 = vld [vmem:[#allocation2 + $0x70] sm:$0xf]
      %v871 = vld [vmem:[#allocation2 + $0x78] sm:$0xf]
      %v872 = vld [vmem:[#allocation2 + $0x7c] sm:$0xf]
      %v873 = vld [vmem:[#allocation2 + $0x84] sm:$0xf]
      %v874 = vld [vmem:[#allocation2 + $0x88] sm:$0xf]
      %v875 = vld [vmem:[#allocation2 + $0x90] sm:$0xf]
      %v876 = vld [vmem:[#allocation2 + $0x94] sm:$0xf]
      %v877 = vld [vmem:[#allocation2 + $0x9c] sm:$0xf]
      %v878 = vld [vmem:[#allocation2 + $0xa0] sm:$0xf]
      %v879 = vld [vmem:[#allocation2 + $0xa8] sm:$0xf]
      %v880 = vld [vmem:[#allocation2 + $0xac] sm:$0xf]
      %v881 = vld [vmem:[#allocation2 + $0xb4] sm:$0xf]
      %v882 = vld [vmem:[#allocation2 + $0xb8] sm:$0xf]
      %v883 = vld [vmem:[%s1] sm:$0x3]
      %v884 = vld [vmem:[#allocation2 + $0x8] sm:$0x1]
      %v885 = vld [vmem:[#allocation2 + $0x14] sm:$0x1]
      %v886 = vld [vmem:[#allocation2 + $0x20] sm:$0x1]
      %v887 = vld [vmem:[#allocation2 + $0x2c] sm:$0x1]
      %v888 = vld [vmem:[#allocation2 + $0x38] sm:$0x1]
      %v889 = vld [vmem:[#allocation2 + $0x44] sm:$0x1]
      %v890 = vld [vmem:[#allocation2 + $0x50] sm:$0x1]
      %v891 = vld [vmem:[#allocation2 + $0x5c] sm:$0x1]
      %v892 = vld [vmem:[#allocation2 + $0x68] sm:$0x1]
      %v893 = vld [vmem:[#allocation2 + $0x74] sm:$0x1]
      %v894 = vld [vmem:[#allocation2 + $0x80] sm:$0x1]
      %v895 = vld [vmem:[#allocation2 + $0x8c] sm:$0x1]
      %v896 = vld [vmem:[#allocation2 + $0x98] sm:$0x1]
      %v897 = vld [vmem:[#allocation2 + $0xa4] sm:$0x1]
      %v898 = vld [vmem:[#allocation2 + $0xb0] sm:$0x1]
      %v899 = vld [vmem:[#allocation2 + $0xbc] sm:$0x1]
      %vm900 = vsmask.f32 3328
      %vm901 = vsmask.f32 7440
      %vm902 = vmor %vm900, %vm901
      %v904 = vshrl.u32 %v851, 16
      %v906 = vrot.slane %v904, 4
      %v907 = vshll.u32 %v851, 16
      %v909 = vrot.slane %v907, 5
      %v910 = vor.u32 %v906, %v909
      %v911 = vrot.slane %v910, 4
      %v913 = vshll.u32 %v852, 16
      %v915 = vrot.slane %v913, 5
      %v916 = vsel %vm902, %v911, %v915
      %v917 = vshrl.u32 %v852, 16
      %v919 = vrot.slane %v917, 4
      %v920 = vor.u32 %v919, %v915
      %v921 = vrot.slane %v920, 4
      %v923 = vshll.u32 %v884, 16
      %v925 = vrot.slane %v923, 5
      %v926 = vsel %vm902, %v921, %v925
      %v928 = vshrl.u32 %v853, 16
      %v930 = vrot.slane %v928, 4
      %v931 = vshll.u32 %v853, 16
      %v933 = vrot.slane %v931, 5
      %v934 = vor.u32 %v930, %v933
      %v935 = vrot.slane %v934, 4
      %v937 = vshll.u32 %v854, 16
      %v939 = vrot.slane %v937, 5
      %v940 = vsel %vm902, %v935, %v939
      %v941 = vshrl.u32 %v854, 16
      %v943 = vrot.slane %v941, 4
      %v944 = vor.u32 %v943, %v939
      %v945 = vrot.slane %v944, 4
      %v947 = vshll.u32 %v885, 16
      %v949 = vrot.slane %v947, 5
      %v950 = vsel %vm902, %v945, %v949
      %v952 = vshrl.u32 %v855, 16
      %v954 = vrot.slane %v952, 4
      %v955 = vshll.u32 %v855, 16
      %v957 = vrot.slane %v955, 5
      %v958 = vor.u32 %v954, %v957
      %v959 = vrot.slane %v958, 4
      %v961 = vshll.u32 %v856, 16
      %v963 = vrot.slane %v961, 5
      %v964 = vsel %vm902, %v959, %v963
      %v965 = vshrl.u32 %v856, 16
      %v967 = vrot.slane %v965, 4
      %v968 = vor.u32 %v967, %v963
      %v969 = vrot.slane %v968, 4
      %v971 = vshll.u32 %v886, 16
      %v973 = vrot.slane %v971, 5
      %v974 = vsel %vm902, %v969, %v973
      %v976 = vshrl.u32 %v857, 16
      %v978 = vrot.slane %v976, 4
      %v979 = vshll.u32 %v857, 16
      %v981 = vrot.slane %v979, 5
      %v982 = vor.u32 %v978, %v981
      %v983 = vrot.slane %v982, 4
      %v985 = vshll.u32 %v858, 16
      %v987 = vrot.slane %v985, 5
      %v988 = vsel %vm902, %v983, %v987
      %v989 = vshrl.u32 %v858, 16
      %v991 = vrot.slane %v989, 4
      %v992 = vor.u32 %v991, %v987
      %v993 = vrot.slane %v992, 4
      %v995 = vshll.u32 %v887, 16
      %v997 = vrot.slane %v995, 5
      %v998 = vsel %vm902, %v993, %v997
      %v1000 = vshrl.u32 %v859, 16
      %v1002 = vrot.slane %v1000, 4
      %v1003 = vshll.u32 %v859, 16
      %v1005 = vrot.slane %v1003, 5
      %v1006 = vor.u32 %v1002, %v1005
      %v1007 = vrot.slane %v1006, 4
      %v1009 = vshll.u32 %v860, 16
      %v1011 = vrot.slane %v1009, 5
      %v1012 = vsel %vm902, %v1007, %v1011
      %v1013 = vshrl.u32 %v860, 16
      %v1015 = vrot.slane %v1013, 4
      %v1016 = vor.u32 %v1015, %v1011
      %v1017 = vrot.slane %v1016, 4
      %v1019 = vshll.u32 %v888, 16
      %v1021 = vrot.slane %v1019, 5
      %v1022 = vsel %vm902, %v1017, %v1021
      %v1024 = vshrl.u32 %v861, 16
      %v1026 = vrot.slane %v1024, 4
      %v1027 = vshll.u32 %v861, 16
      %v1029 = vrot.slane %v1027, 5
      %v1030 = vor.u32 %v1026, %v1029
      %v1031 = vrot.slane %v1030, 4
      %v1033 = vshll.u32 %v862, 16
      %v1035 = vrot.slane %v1033, 5
      %v1036 = vsel %vm902, %v1031, %v1035
      %v1037 = vshrl.u32 %v862, 16
      %v1039 = vrot.slane %v1037, 4
      %v1040 = vor.u32 %v1039, %v1035
      %v1041 = vrot.slane %v1040, 4
      %v1043 = vshll.u32 %v889, 16
      %v1045 = vrot.slane %v1043, 5
      %v1046 = vsel %vm902, %v1041, %v1045
      %v1048 = vshrl.u32 %v863, 16
      %v1050 = vrot.slane %v1048, 4
      %v1051 = vshll.u32 %v863, 16
      %v1053 = vrot.slane %v1051, 5
      %v1054 = vor.u32 %v1050, %v1053
      %v1055 = vrot.slane %v1054, 4
      %v1057 = vshll.u32 %v864, 16
      %v1059 = vrot.slane %v1057, 5
      %v1060 = vsel %vm902, %v1055, %v1059
      %v1061 = vshrl.u32 %v864, 16
      %v1063 = vrot.slane %v1061, 4
      %v1064 = vor.u32 %v1063, %v1059
      %v1065 = vrot.slane %v1064, 4
      %v1067 = vshll.u32 %v890, 16
      %v1069 = vrot.slane %v1067, 5
      %v1070 = vsel %vm902, %v1065, %v1069
      %v1072 = vshrl.u32 %v865, 16
      %v1074 = vrot.slane %v1072, 4
      %v1075 = vshll.u32 %v865, 16
      %v1077 = vrot.slane %v1075, 5
      %v1078 = vor.u32 %v1074, %v1077
      %v1079 = vrot.slane %v1078, 4
      %v1081 = vshll.u32 %v866, 16
      %v1083 = vrot.slane %v1081, 5
      %v1084 = vsel %vm902, %v1079, %v1083
      %v1085 = vshrl.u32 %v866, 16
      %v1087 = vrot.slane %v1085, 4
      %v1088 = vor.u32 %v1087, %v1083
      %v1089 = vrot.slane %v1088, 4
      %v1091 = vshll.u32 %v891, 16
      %v1093 = vrot.slane %v1091, 5
      %v1094 = vsel %vm902, %v1089, %v1093
      %v1096 = vshrl.u32 %v867, 16
      %v1098 = vrot.slane %v1096, 4
      %v1099 = vshll.u32 %v867, 16
      %v1101 = vrot.slane %v1099, 5
      %v1102 = vor.u32 %v1098, %v1101
      %v1103 = vrot.slane %v1102, 4
      %v1105 = vshll.u32 %v868, 16
      %v1107 = vrot.slane %v1105, 5
      %v1108 = vsel %vm902, %v1103, %v1107
      %v1109 = vshrl.u32 %v868, 16
      %v1111 = vrot.slane %v1109, 4
      %v1112 = vor.u32 %v1111, %v1107
      %v1113 = vrot.slane %v1112, 4
      %v1115 = vshll.u32 %v892, 16
      %v1117 = vrot.slane %v1115, 5
      %v1118 = vsel %vm902, %v1113, %v1117
      %v1120 = vshrl.u32 %v869, 16
      %v1122 = vrot.slane %v1120, 4
      %v1123 = vshll.u32 %v869, 16
      %v1125 = vrot.slane %v1123, 5
      %v1126 = vor.u32 %v1122, %v1125
      %v1127 = vrot.slane %v1126, 4
      %v1129 = vshll.u32 %v870, 16
      %v1131 = vrot.slane %v1129, 5
      %v1132 = vsel %vm902, %v1127, %v1131
      %v1133 = vshrl.u32 %v870, 16
      %v1135 = vrot.slane %v1133, 4
      %v1136 = vor.u32 %v1135, %v1131
      %v1137 = vrot.slane %v1136, 4
      %v1139 = vshll.u32 %v893, 16
      %v1141 = vrot.slane %v1139, 5
      %v1142 = vsel %vm902, %v1137, %v1141
      %v1144 = vshrl.u32 %v871, 16
      %v1146 = vrot.slane %v1144, 4
      %v1147 = vshll.u32 %v871, 16
      %v1149 = vrot.slane %v1147, 5
      %v1150 = vor.u32 %v1146, %v1149
      %v1151 = vrot.slane %v1150, 4
      %v1153 = vshll.u32 %v872, 16
      %v1155 = vrot.slane %v1153, 5
      %v1156 = vsel %vm902, %v1151, %v1155
      %v1157 = vshrl.u32 %v872, 16
      %v1159 = vrot.slane %v1157, 4
      %v1160 = vor.u32 %v1159, %v1155
      %v1161 = vrot.slane %v1160, 4
      %v1163 = vshll.u32 %v894, 16
      %v1165 = vrot.slane %v1163, 5
      %v1166 = vsel %vm902, %v1161, %v1165
      %v1168 = vshrl.u32 %v873, 16
      %v1170 = vrot.slane %v1168, 4
      %v1171 = vshll.u32 %v873, 16
      %v1173 = vrot.slane %v1171, 5
      %v1174 = vor.u32 %v1170, %v1173
      %v1175 = vrot.slane %v1174, 4
      %v1177 = vshll.u32 %v874, 16
      %v1179 = vrot.slane %v1177, 5
      %v1180 = vsel %vm902, %v1175, %v1179
      %v1181 = vshrl.u32 %v874, 16
      %v1183 = vrot.slane %v1181, 4
      %v1184 = vor.u32 %v1183, %v1179
      %v1185 = vrot.slane %v1184, 4
      %v1187 = vshll.u32 %v895, 16
      %v1189 = vrot.slane %v1187, 5
      %v1190 = vsel %vm902, %v1185, %v1189
      %v1192 = vshrl.u32 %v875, 16
      %v1194 = vrot.slane %v1192, 4
      %v1195 = vshll.u32 %v875, 16
      %v1197 = vrot.slane %v1195, 5
      %v1198 = vor.u32 %v1194, %v1197
      %v1199 = vrot.slane %v1198, 4
      %v1201 = vshll.u32 %v876, 16
      %v1203 = vrot.slane %v1201, 5
      %v1204 = vsel %vm902, %v1199, %v1203
      %v1205 = vshrl.u32 %v876, 16
      %v1207 = vrot.slane %v1205, 4
      %v1208 = vor.u32 %v1207, %v1203
      %v1209 = vrot.slane %v1208, 4
      %v1211 = vshll.u32 %v896, 16
      %v1213 = vrot.slane %v1211, 5
      %v1214 = vsel %vm902, %v1209, %v1213
      %v1216 = vshrl.u32 %v877, 16
      %v1218 = vrot.slane %v1216, 4
      %v1219 = vshll.u32 %v877, 16
      %v1221 = vrot.slane %v1219, 5
      %v1222 = vor.u32 %v1218, %v1221
      %v1223 = vrot.slane %v1222, 4
      %v1225 = vshll.u32 %v878, 16
      %v1227 = vrot.slane %v1225, 5
      %v1228 = vsel %vm902, %v1223, %v1227
      %v1229 = vshrl.u32 %v878, 16
      %v1231 = vrot.slane %v1229, 4
      %v1232 = vor.u32 %v1231, %v1227
      %v1233 = vrot.slane %v1232, 4
      %v1235 = vshll.u32 %v897, 16
      %v1237 = vrot.slane %v1235, 5
      %v1238 = vsel %vm902, %v1233, %v1237
      %v1240 = vshrl.u32 %v879, 16
      %v1242 = vrot.slane %v1240, 4
      %v1243 = vshll.u32 %v879, 16
      %v1245 = vrot.slane %v1243, 5
      %v1246 = vor.u32 %v1242, %v1245
      %v1247 = vrot.slane %v1246, 4
      %v1249 = vshll.u32 %v880, 16
      %v1251 = vrot.slane %v1249, 5
      %v1252 = vsel %vm902, %v1247, %v1251
      %v1253 = vshrl.u32 %v880, 16
      %v1255 = vrot.slane %v1253, 4
      %v1256 = vor.u32 %v1255, %v1251
      %v1257 = vrot.slane %v1256, 4
      %v1259 = vshll.u32 %v898, 16
      %v1261 = vrot.slane %v1259, 5
      %v1262 = vsel %vm902, %v1257, %v1261
      %v1264 = vshrl.u32 %v881, 16
      %v1266 = vrot.slane %v1264, 4
      %v1267 = vshll.u32 %v881, 16
      %v1269 = vrot.slane %v1267, 5
      %v1270 = vor.u32 %v1266, %v1269
      %v1271 = vrot.slane %v1270, 4
      %v1273 = vshll.u32 %v882, 16
      %v1275 = vrot.slane %v1273, 5
      %v1276 = vsel %vm902, %v1271, %v1275
      %v1277 = vshrl.u32 %v882, 16
      %v1279 = vrot.slane %v1277, 4
      %v1280 = vor.u32 %v1279, %v1275
      %v1281 = vrot.slane %v1280, 4
      %v1283 = vshll.u32 %v899, 16
      %v1285 = vrot.slane %v1283, 5
      %v1286 = vsel %vm902, %v1281, %v1285
      %s1287 = scalar_lea.vmem %s1, 2
      %v1288 = vld [vmem:[%s1287] sm:$0x3]
      %v1289 = vunpack.c.l.b16 %v916
      %v1290 = vunpack.c.l.b16 %v926
      %v1291 = vunpack.c.l.b16 %v940
      %v1292 = vunpack.c.l.b16 %v950
      %v1293 = vunpack.c.l.b16 %v964
      %v1294 = vunpack.c.l.b16 %v974
      %v1295 = vunpack.c.l.b16 %v988
      %v1296 = vunpack.c.l.b16 %v998
      %v1297 = vunpack.c.l.b16 %v1012
      %v1298 = vunpack.c.l.b16 %v1022
      %v1299 = vunpack.c.l.b16 %v1036
      %v1300 = vunpack.c.l.b16 %v1046
      %v1301 = vunpack.c.l.b16 %v1060
      %v1302 = vunpack.c.l.b16 %v1070
      %v1303 = vunpack.c.l.b16 %v1084
      %v1304 = vunpack.c.l.b16 %v1094
      %v1305 = vunpack.c.l.b16 %v1108
      %v1306 = vunpack.c.l.b16 %v1118
      %v1307 = vunpack.c.l.b16 %v1132
      %v1308 = vunpack.c.l.b16 %v1142
      %v1309 = vunpack.c.l.b16 %v1156
      %v1310 = vunpack.c.l.b16 %v1166
      %v1311 = vunpack.c.l.b16 %v1180
      %v1312 = vunpack.c.l.b16 %v1190
      %v1313 = vunpack.c.l.b16 %v1204
      %v1314 = vunpack.c.l.b16 %v1214
      %v1315 = vunpack.c.l.b16 %v1228
      %v1316 = vunpack.c.l.b16 %v1238
      %v1317 = vunpack.c.l.b16 %v1252
      %v1318 = vunpack.c.l.b16 %v1262
      %v1319 = vunpack.c.l.b16 %v1276
      %v1320 = vunpack.c.l.b16 %v1286
      %v1321 = vpack.c.b16 %v1290, %v1289
      %v1322 = vpack.c.b16 %v1292, %v1291
      %v1323 = vpack.c.b16 %v1294, %v1293
      %v1324 = vpack.c.b16 %v1296, %v1295
      %v1325 = vpack.c.b16 %v1298, %v1297
      %v1326 = vpack.c.b16 %v1300, %v1299
      %v1327 = vpack.c.b16 %v1302, %v1301
      %v1328 = vpack.c.b16 %v1304, %v1303
      %v1329 = vpack.c.b16 %v1306, %v1305
      %v1330 = vpack.c.b16 %v1308, %v1307
      %v1331 = vpack.c.b16 %v1310, %v1309
      %v1332 = vpack.c.b16 %v1312, %v1311
      %v1333 = vpack.c.b16 %v1314, %v1313
      %v1334 = vpack.c.b16 %v1316, %v1315
      %v1335 = vpack.c.b16 %v1318, %v1317
      %v1336 = vpack.c.b16 %v1320, %v1319
      %vm1337 = vcmask 31744
      %v1339 = vsel %vm1337, %v1321, 0
      %v1342 = vsel %vm1337, %v1322, 0
      %v1345 = vsel %vm1337, %v1323, 0
      %v1348 = vsel %vm1337, %v1324, 0
      %v1351 = vsel %vm1337, %v1325, 0
      %v1354 = vsel %vm1337, %v1326, 0
      %v1357 = vsel %vm1337, %v1327, 0
      %v1360 = vsel %vm1337, %v1328, 0
      %v1363 = vsel %vm1337, %v1329, 0
      %v1366 = vsel %vm1337, %v1330, 0
      %v1369 = vsel %vm1337, %v1331, 0
      %v1372 = vsel %vm1337, %v1332, 0
      %v1375 = vsel %vm1337, %v1333, 0
      %v1378 = vsel %vm1337, %v1334, 0
      %v1381 = vsel %vm1337, %v1335, 0
      %v1384 = vsel %vm1337, %v1336, 0
      %vm1386 = vcmask 1041408
      %v1388 = vsel %vm1386, %v1288, 0
      %1390 = vmatprep.subr.bf16.mxu0 0
      %1391 = vmatpush1.bf16.msra.mxu0 %v1388
      %1392 = vmatprep.subr.bf16.mxu0 0
      %1393 = vmatpush1.bf16.msra.mxu0 0
      %1394 = vmatprep.subr.bf16.mxu0 0
      %1395 = vmatpush1.bf16.msra.mxu0 0
      %1396 = vmatprep.subr.bf16.mxu0 0
      %1397 = vmatpush1.bf16.msra.mxu0 0
      %1398 = vmatprep.subr.bf16.mxu0 0
      %1399 = vmatpush1.bf16.msra.mxu0 0
      %1400 = vmatprep.subr.bf16.mxu0 0
      %1401 = vmatpush1.bf16.msra.mxu0 0
      %1402 = vmatprep.subr.bf16.mxu0 0
      %1403 = vmatpush1.bf16.msra.mxu0 0
      %1404 = vmatprep.subr.bf16.mxu0 0
      %1405 = vmatpush1.bf16.msra.mxu0 0
      %1406 = vmatprep.subr.bf16.mxu0 0
      %1407 = vmatpush1.bf16.msra.mxu0 0
      %1408 = vmatprep.subr.bf16.mxu0 0
      %1409 = vmatpush1.bf16.msra.mxu0 0
      %1410 = vmatprep.subr.bf16.mxu0 0
      %1411 = vmatpush1.bf16.msra.mxu0 0
      %1412 = vmatprep.subr.bf16.mxu0 0
      %1413 = vmatpush1.bf16.msra.mxu0 0
      %1414 = vmatprep.subr.bf16.mxu0 0
      %1415 = vmatpush1.bf16.msra.mxu0 0
      %1416 = vmatprep.subr.bf16.mxu0 0
      %1417 = vmatpush1.bf16.msra.mxu0 0
      %1418 = vmatprep.subr.bf16.mxu0 0
      %1419 = vmatpush1.bf16.msra.mxu0 0
      %1420 = vmatprep.subr.bf16.mxu0 0
      %1421 = vmatpush1.bf16.msra.mxu0 0
      %1422 = vmatprep.mubr.bf16.mxu0 0
      %1423 = vmatmul.mubr.bf16.gmra.mrb[0].mxu0 %v1339
      %v1424 = vpop.f32.mrb[0].mxu0
      %v1425 = vadd.f32 0.0, %v1424
      %v1426 = vpop.f32.mrb[0].mxu0
      %v1427 = vpop.f32.mrb[0].mxu0
      %v1428 = vadd.f32 0.0, %v1427
      %v1429 = vpop.f32.mrb[0].mxu0
      %1430 = vmatprep.mubr.bf16.mxu0 0
      %1431 = vmatmul.mubr.bf16.gmra.mrb[0].mxu0 %v1342
      %v1432 = vpop.f32.mrb[0].mxu0
      %v1433 = vadd.f32 0.0, %v1432
      %v1434 = vpop.f32.mrb[0].mxu0
      %v1435 = vpop.f32.mrb[0].mxu0
      %v1436 = vadd.f32 0.0, %v1435
      %v1437 = vpop.f32.mrb[0].mxu0
      %1438 = vmatprep.mubr.bf16.mxu0 0
      %1439 = vmatmul.mubr.bf16.gmra.mrb[0].mxu0 %v1345
      %v1440 = vpop.f32.mrb[0].mxu0
      %v1441 = vadd.f32 0.0, %v1440
      %v1442 = vpop.f32.mrb[0].mxu0
      %v1443 = vpop.f32.mrb[0].mxu0
      %v1444 = vadd.f32 0.0, %v1443
      %v1445 = vpop.f32.mrb[0].mxu0
      %1446 = vmatprep.mubr.bf16.mxu0 0
      %1447 = vmatmul.mubr.bf16.gmra.mrb[0].mxu0 %v1348
      %v1448 = vpop.f32.mrb[0].mxu0
      %v1449 = vadd.f32 0.0, %v1448
      %v1450 = vpop.f32.mrb[0].mxu0
      %v1451 = vpop.f32.mrb[0].mxu0
      %v1452 = vadd.f32 0.0, %v1451
      %v1453 = vpop.f32.mrb[0].mxu0
      %1454 = vmatprep.mubr.bf16.mxu0 0
      %1455 = vmatmul.mubr.bf16.gmra.mrb[0].mxu0 %v1351
      %v1456 = vpop.f32.mrb[0].mxu0
      %v1457 = vadd.f32 0.0, %v1456
      %v1458 = vpop.f32.mrb[0].mxu0
      %v1459 = vpop.f32.mrb[0].mxu0
      %v1460 = vadd.f32 0.0, %v1459
      %v1461 = vpop.f32.mrb[0].mxu0
      %1462 = vmatprep.mubr.bf16.mxu0 0
      %1463 = vmatmul.mubr.bf16.gmra.mrb[0].mxu0 %v1354
      %v1464 = vpop.f32.mrb[0].mxu0
      %v1465 = vadd.f32 0.0, %v1464
      %v1466 = vpop.f32.mrb[0].mxu0
      %v1467 = vpop.f32.mrb[0].mxu0
      %v1468 = vadd.f32 0.0, %v1467
      %v1469 = vpop.f32.mrb[0].mxu0
      %1470 = vmatprep.mubr.bf16.mxu0 0
      %1471 = vmatmul.mubr.bf16.gmra.mrb[0].mxu0 %v1357
      %v1472 = vpop.f32.mrb[0].mxu0
      %v1473 = vadd.f32 0.0, %v1472
      %v1474 = vpop.f32.mrb[0].mxu0
      %v1475 = vpop.f32.mrb[0].mxu0
      %v1476 = vadd.f32 0.0, %v1475
      %v1477 = vpop.f32.mrb[0].mxu0
      %1478 = vmatprep.mubr.bf16.mxu0 0
      %1479 = vmatmul.mubr.bf16.gmra.mrb[0].mxu0 %v1360
      %v1480 = vpop.f32.mrb[0].mxu0
      %v1481 = vadd.f32 0.0, %v1480
      %v1482 = vpop.f32.mrb[0].mxu0
      %v1483 = vpop.f32.mrb[0].mxu0
      %v1484 = vadd.f32 0.0, %v1483
      %v1485 = vpop.f32.mrb[0].mxu0
      %1486 = vmatprep.mubr.bf16.mxu0 0
      %1487 = vmatmul.mubr.bf16.gmra.mrb[0].mxu0 %v1363
      %v1488 = vpop.f32.mrb[0].mxu0
      %v1489 = vadd.f32 0.0, %v1488
      %v1490 = vpop.f32.mrb[0].mxu0
      %v1491 = vpop.f32.mrb[0].mxu0
      %v1492 = vadd.f32 0.0, %v1491
      %v1493 = vpop.f32.mrb[0].mxu0
      %1494 = vmatprep.mubr.bf16.mxu0 0
      %1495 = vmatmul.mubr.bf16.gmra.mrb[0].mxu0 %v1366
      %v1496 = vpop.f32.mrb[0].mxu0
      %v1497 = vadd.f32 0.0, %v1496
      %v1498 = vpop.f32.mrb[0].mxu0
      %v1499 = vpop.f32.mrb[0].mxu0
      %v1500 = vadd.f32 0.0, %v1499
      %v1501 = vpop.f32.mrb[0].mxu0
      %1502 = vmatprep.mubr.bf16.mxu0 0
      %1503 = vmatmul.mubr.bf16.gmra.mrb[0].mxu0 %v1369
      %v1504 = vpop.f32.mrb[0].mxu0
      %v1505 = vadd.f32 0.0, %v1504
      %v1506 = vpop.f32.mrb[0].mxu0
      %v1507 = vpop.f32.mrb[0].mxu0
      %v1508 = vadd.f32 0.0, %v1507
      %v1509 = vpop.f32.mrb[0].mxu0
      %1510 = vmatprep.mubr.bf16.mxu0 0
      %1511 = vmatmul.mubr.bf16.gmra.mrb[0].mxu0 %v1372
      %v1512 = vpop.f32.mrb[0].mxu0
      %v1513 = vadd.f32 0.0, %v1512
      %v1514 = vpop.f32.mrb[0].mxu0
      %v1515 = vpop.f32.mrb[0].mxu0
      %v1516 = vadd.f32 0.0, %v1515
      %v1517 = vpop.f32.mrb[0].mxu0
      %1518 = vmatprep.mubr.bf16.mxu0 0
      %1519 = vmatmul.mubr.bf16.gmra.mrb[0].mxu0 %v1375
      %v1520 = vpop.f32.mrb[0].mxu0
      %v1521 = vadd.f32 0.0, %v1520
      %v1522 = vpop.f32.mrb[0].mxu0
      %v1523 = vpop.f32.mrb[0].mxu0
      %v1524 = vadd.f32 0.0, %v1523
      %v1525 = vpop.f32.mrb[0].mxu0
      %1526 = vmatprep.mubr.bf16.mxu0 0
      %1527 = vmatmul.mubr.bf16.gmra.mrb[0].mxu0 %v1378
      %v1528 = vpop.f32.mrb[0].mxu0
      %v1529 = vadd.f32 0.0, %v1528
      %v1530 = vpop.f32.mrb[0].mxu0
      %v1531 = vpop.f32.mrb[0].mxu0
      %v1532 = vadd.f32 0.0, %v1531
      %v1533 = vpop.f32.mrb[0].mxu0
      %1534 = vmatprep.mubr.bf16.mxu0 0
      %1535 = vmatmul.mubr.bf16.gmra.mrb[0].mxu0 %v1381
      %v1536 = vpop.f32.mrb[0].mxu0
      %v1537 = vadd.f32 0.0, %v1536
      %v1538 = vpop.f32.mrb[0].mxu0
      %v1539 = vpop.f32.mrb[0].mxu0
      %v1540 = vadd.f32 0.0, %v1539
      %v1541 = vpop.f32.mrb[0].mxu0
      %1542 = vmatprep.mubr.bf16.mxu0 0
      %1543 = vmatmul.mubr.bf16.gmra.mrb[0].mxu0 %v1384
      %v1544 = vpop.f32.mrb[0].mxu0
      %v1545 = vadd.f32 0.0, %v1544
      %v1546 = vpop.f32.mrb[0].mxu0
      %v1547 = vpop.f32.mrb[0].mxu0
      %v1548 = vadd.f32 0.0, %v1547
      %v1549 = vpop.f32.mrb[0].mxu0
      %1550 = vdwg.mxu0
      %v1583 = vunpack.c.l.b16 %v851
      %v1584 = vunpack.c.l.b16 %v852
      %v1585 = vunpack.c.l.b16 %v853
      %v1586 = vunpack.c.l.b16 %v854
      %v1587 = vunpack.c.l.b16 %v855
      %v1588 = vunpack.c.l.b16 %v856
      %v1589 = vunpack.c.l.b16 %v857
      %v1590 = vunpack.c.l.b16 %v858
      %v1591 = vunpack.c.l.b16 %v859
      %v1592 = vunpack.c.l.b16 %v860
      %v1593 = vunpack.c.l.b16 %v861
      %v1594 = vunpack.c.l.b16 %v862
      %v1595 = vunpack.c.l.b16 %v863
      %v1596 = vunpack.c.l.b16 %v864
      %v1597 = vunpack.c.l.b16 %v865
      %v1598 = vunpack.c.l.b16 %v866
      %v1599 = vunpack.c.l.b16 %v867
      %v1600 = vunpack.c.l.b16 %v868
      %v1601 = vunpack.c.l.b16 %v869
      %v1602 = vunpack.c.l.b16 %v870
      %v1603 = vunpack.c.l.b16 %v871
      %v1604 = vunpack.c.l.b16 %v872
      %v1605 = vunpack.c.l.b16 %v873
      %v1606 = vunpack.c.l.b16 %v874
      %v1607 = vunpack.c.l.b16 %v875
      %v1608 = vunpack.c.l.b16 %v876
      %v1609 = vunpack.c.l.b16 %v877
      %v1610 = vunpack.c.l.b16 %v878
      %v1611 = vunpack.c.l.b16 %v879
      %v1612 = vunpack.c.l.b16 %v880
      %v1613 = vunpack.c.l.b16 %v881
      %v1614 = vunpack.c.l.b16 %v882
      %v1615 = vpack.c.b16 %v1584, %v1583
      %v1616 = vpack.c.b16 %v1586, %v1585
      %v1617 = vpack.c.b16 %v1588, %v1587
      %v1618 = vpack.c.b16 %v1590, %v1589
      %v1619 = vpack.c.b16 %v1592, %v1591
      %v1620 = vpack.c.b16 %v1594, %v1593
      %v1621 = vpack.c.b16 %v1596, %v1595
      %v1622 = vpack.c.b16 %v1598, %v1597
      %v1623 = vpack.c.b16 %v1600, %v1599
      %v1624 = vpack.c.b16 %v1602, %v1601
      %v1625 = vpack.c.b16 %v1604, %v1603
      %v1626 = vpack.c.b16 %v1606, %v1605
      %v1627 = vpack.c.b16 %v1608, %v1607
      %v1628 = vpack.c.b16 %v1610, %v1609
      %v1629 = vpack.c.b16 %v1612, %v1611
      %v1630 = vpack.c.b16 %v1614, %v1613
      %v1632 = vsel %vm1337, %v1615, 0
      %v1635 = vsel %vm1337, %v1616, 0
      %v1638 = vsel %vm1337, %v1617, 0
      %v1641 = vsel %vm1337, %v1618, 0
      %v1644 = vsel %vm1337, %v1619, 0
      %v1647 = vsel %vm1337, %v1620, 0
      %v1650 = vsel %vm1337, %v1621, 0
      %v1653 = vsel %vm1337, %v1622, 0
      %v1656 = vsel %vm1337, %v1623, 0
      %v1659 = vsel %vm1337, %v1624, 0
      %v1662 = vsel %vm1337, %v1625, 0
      %v1665 = vsel %vm1337, %v1626, 0
      %v1668 = vsel %vm1337, %v1627, 0
      %v1671 = vsel %vm1337, %v1628, 0
      %v1674 = vsel %vm1337, %v1629, 0
      %v1677 = vsel %vm1337, %v1630, 0
      %v1680 = vsel %vm1386, %v883, 0
      %1682 = vmatprep.subr.bf16.mxu0 0
      %1683 = vmatpush1.bf16.msra.mxu0 %v1680
      %1684 = vmatprep.subr.bf16.mxu0 0
      %1685 = vmatpush1.bf16.msra.mxu0 0
      %1686 = vmatprep.subr.bf16.mxu0 0
      %1687 = vmatpush1.bf16.msra.mxu0 0
      %1688 = vmatprep.subr.bf16.mxu0 0
      %1689 = vmatpush1.bf16.msra.mxu0 0
      %1690 = vmatprep.subr.bf16.mxu0 0
      %1691 = vmatpush1.bf16.msra.mxu0 0
      %1692 = vmatprep.subr.bf16.mxu0 0
      %1693 = vmatpush1.bf16.msra.mxu0 0
      %1694 = vmatprep.subr.bf16.mxu0 0
      %1695 = vmatpush1.bf16.msra.mxu0 0
      %1696 = vmatprep.subr.bf16.mxu0 0
      %1697 = vmatpush1.bf16.msra.mxu0 0
      %1698 = vmatprep.subr.bf16.mxu0 0
      %1699 = vmatpush1.bf16.msra.mxu0 0
      %1700 = vmatprep.subr.bf16.mxu0 0
      %1701 = vmatpush1.bf16.msra.mxu0 0
      %1702 = vmatprep.subr.bf16.mxu0 0
      %1703 = vmatpush1.bf16.msra.mxu0 0
      %1704 = vmatprep.subr.bf16.mxu0 0
      %1705 = vmatpush1.bf16.msra.mxu0 0
      %1706 = vmatprep.subr.bf16.mxu0 0
      %1707 = vmatpush1.bf16.msra.mxu0 0
      %1708 = vmatprep.subr.bf16.mxu0 0
      %1709 = vmatpush1.bf16.msra.mxu0 0
      %1710 = vmatprep.subr.bf16.mxu0 0
      %1711 = vmatpush1.bf16.msra.mxu0 0
      %1712 = vmatprep.subr.bf16.mxu0 0
      %1713 = vmatpush1.bf16.msra.mxu0 0
      %1714 = vmatprep.mubr.bf16.mxu0 0
      %1715 = vmatmul.mubr.bf16.gmra.mrb[0].mxu0 %v1632
      %v1716 = vpop.f32.mrb[0].mxu0
      %v1717 = vadd.f32 %v1425, %v1716
      %v1718 = vpop.f32.mrb[0].mxu0
      %v1719 = vpop.f32.mrb[0].mxu0
      %v1720 = vadd.f32 %v1428, %v1719
      %v1721 = vpop.f32.mrb[0].mxu0
      %1722 = vmatprep.mubr.bf16.mxu0 0
      %1723 = vmatmul.mubr.bf16.gmra.mrb[0].mxu0 %v1635
      %v1724 = vpop.f32.mrb[0].mxu0
      %v1725 = vadd.f32 %v1433, %v1724
      %v1726 = vpop.f32.mrb[0].mxu0
      %v1727 = vpop.f32.mrb[0].mxu0
      %v1728 = vadd.f32 %v1436, %v1727
      %v1729 = vpop.f32.mrb[0].mxu0
      %1730 = vmatprep.mubr.bf16.mxu0 0
      %1731 = vmatmul.mubr.bf16.gmra.mrb[0].mxu0 %v1638
      %v1732 = vpop.f32.mrb[0].mxu0
      %v1733 = vadd.f32 %v1441, %v1732
      %v1734 = vpop.f32.mrb[0].mxu0
      %v1735 = vpop.f32.mrb[0].mxu0
      %v1736 = vadd.f32 %v1444, %v1735
      %v1737 = vpop.f32.mrb[0].mxu0
      %1738 = vmatprep.mubr.bf16.mxu0 0
      %1739 = vmatmul.mubr.bf16.gmra.mrb[0].mxu0 %v1641
      %v1740 = vpop.f32.mrb[0].mxu0
      %v1741 = vadd.f32 %v1449, %v1740
      %v1742 = vpop.f32.mrb[0].mxu0
      %v1743 = vpop.f32.mrb[0].mxu0
      %v1744 = vadd.f32 %v1452, %v1743
      %v1745 = vpop.f32.mrb[0].mxu0
      %1746 = vmatprep.mubr.bf16.mxu0 0
      %1747 = vmatmul.mubr.bf16.gmra.mrb[0].mxu0 %v1644
      %v1748 = vpop.f32.mrb[0].mxu0
      %v1749 = vadd.f32 %v1457, %v1748
      %v1750 = vpop.f32.mrb[0].mxu0
      %v1751 = vpop.f32.mrb[0].mxu0
      %v1752 = vadd.f32 %v1460, %v1751
      %v1753 = vpop.f32.mrb[0].mxu0
      %1754 = vmatprep.mubr.bf16.mxu0 0
      %1755 = vmatmul.mubr.bf16.gmra.mrb[0].mxu0 %v1647
      %v1756 = vpop.f32.mrb[0].mxu0
      %v1757 = vadd.f32 %v1465, %v1756
      %v1758 = vpop.f32.mrb[0].mxu0
      %v1759 = vpop.f32.mrb[0].mxu0
      %v1760 = vadd.f32 %v1468, %v1759
      %v1761 = vpop.f32.mrb[0].mxu0
      %1762 = vmatprep.mubr.bf16.mxu0 0
      %1763 = vmatmul.mubr.bf16.gmra.mrb[0].mxu0 %v1650
      %v1764 = vpop.f32.mrb[0].mxu0
      %v1765 = vadd.f32 %v1473, %v1764
      %v1766 = vpop.f32.mrb[0].mxu0
      %v1767 = vpop.f32.mrb[0].mxu0
      %v1768 = vadd.f32 %v1476, %v1767
      %v1769 = vpop.f32.mrb[0].mxu0
      %1770 = vmatprep.mubr.bf16.mxu0 0
      %1771 = vmatmul.mubr.bf16.gmra.mrb[0].mxu0 %v1653
      %v1772 = vpop.f32.mrb[0].mxu0
      %v1773 = vadd.f32 %v1481, %v1772
      %v1774 = vpop.f32.mrb[0].mxu0
      %v1775 = vpop.f32.mrb[0].mxu0
      %v1776 = vadd.f32 %v1484, %v1775
      %v1777 = vpop.f32.mrb[0].mxu0
      %1778 = vmatprep.mubr.bf16.mxu0 0
      %1779 = vmatmul.mubr.bf16.gmra.mrb[0].mxu0 %v1656
      %v1780 = vpop.f32.mrb[0].mxu0
      %v1781 = vadd.f32 %v1489, %v1780
      %v1782 = vpop.f32.mrb[0].mxu0
      %v1783 = vpop.f32.mrb[0].mxu0
      %v1784 = vadd.f32 %v1492, %v1783
      %v1785 = vpop.f32.mrb[0].mxu0
      %1786 = vmatprep.mubr.bf16.mxu0 0
      %1787 = vmatmul.mubr.bf16.gmra.mrb[0].mxu0 %v1659
      %v1788 = vpop.f32.mrb[0].mxu0
      %v1789 = vadd.f32 %v1497, %v1788
      %v1790 = vpop.f32.mrb[0].mxu0
      %v1791 = vpop.f32.mrb[0].mxu0
      %v1792 = vadd.f32 %v1500, %v1791
      %v1793 = vpop.f32.mrb[0].mxu0
      %1794 = vmatprep.mubr.bf16.mxu0 0
      %1795 = vmatmul.mubr.bf16.gmra.mrb[0].mxu0 %v1662
      %v1796 = vpop.f32.mrb[0].mxu0
      %v1797 = vadd.f32 %v1505, %v1796
      %v1798 = vpop.f32.mrb[0].mxu0
      %v1799 = vpop.f32.mrb[0].mxu0
      %v1800 = vadd.f32 %v1508, %v1799
      %v1801 = vpop.f32.mrb[0].mxu0
      %1802 = vmatprep.mubr.bf16.mxu0 0
      %1803 = vmatmul.mubr.bf16.gmra.mrb[0].mxu0 %v1665
      %v1804 = vpop.f32.mrb[0].mxu0
      %v1805 = vadd.f32 %v1513, %v1804
      %v1806 = vpop.f32.mrb[0].mxu0
      %v1807 = vpop.f32.mrb[0].mxu0
      %v1808 = vadd.f32 %v1516, %v1807
      %v1809 = vpop.f32.mrb[0].mxu0
      %1810 = vmatprep.mubr.bf16.mxu0 0
      %1811 = vmatmul.mubr.bf16.gmra.mrb[0].mxu0 %v1668
      %v1812 = vpop.f32.mrb[0].mxu0
      %v1813 = vadd.f32 %v1521, %v1812
      %v1814 = vpop.f32.mrb[0].mxu0
      %v1815 = vpop.f32.mrb[0].mxu0
      %v1816 = vadd.f32 %v1524, %v1815
      %v1817 = vpop.f32.mrb[0].mxu0
      %1818 = vmatprep.mubr.bf16.mxu0 0
      %1819 = vmatmul.mubr.bf16.gmra.mrb[0].mxu0 %v1671
      %v1820 = vpop.f32.mrb[0].mxu0
      %v1821 = vadd.f32 %v1529, %v1820
      %v1822 = vpop.f32.mrb[0].mxu0
      %v1823 = vpop.f32.mrb[0].mxu0
      %v1824 = vadd.f32 %v1532, %v1823
      %v1825 = vpop.f32.mrb[0].mxu0
      %1826 = vmatprep.mubr.bf16.mxu0 0
      %1827 = vmatmul.mubr.bf16.gmra.mrb[0].mxu0 %v1674
      %v1828 = vpop.f32.mrb[0].mxu0
      %v1829 = vadd.f32 %v1537, %v1828
      %v1830 = vpop.f32.mrb[0].mxu0
      %v1831 = vpop.f32.mrb[0].mxu0
      %v1832 = vadd.f32 %v1540, %v1831
      %v1833 = vpop.f32.mrb[0].mxu0
      %1834 = vmatprep.mubr.bf16.mxu0 0
      %1835 = vmatmul.mubr.bf16.gmra.mrb[0].mxu0 %v1677
      %v1836 = vpop.f32.mrb[0].mxu0
      %v1837 = vadd.f32 %v1545, %v1836
      %v1838 = vpop.f32.mrb[0].mxu0
      %v1839 = vpop.f32.mrb[0].mxu0
      %v1840 = vadd.f32 %v1548, %v1839
      %v1841 = vpop.f32.mrb[0].mxu0
      %1842 = vdwg.mxu0
      %v1843 = vld [vmem:[#allocation2] sm:$0xe]
      %v1844 = vld [vmem:[#allocation2 + $0xc] sm:$0xe]
      %v1845 = vld [vmem:[#allocation2 + $0x18] sm:$0xe]
      %v1846 = vld [vmem:[#allocation2 + $0x24] sm:$0xe]
      %v1847 = vld [vmem:[#allocation2 + $0x30] sm:$0xe]
      %v1848 = vld [vmem:[#allocation2 + $0x3c] sm:$0xe]
      %v1849 = vld [vmem:[#allocation2 + $0x48] sm:$0xe]
      %v1850 = vld [vmem:[#allocation2 + $0x54] sm:$0xe]
      %v1851 = vld [vmem:[#allocation2 + $0x60] sm:$0xe]
      %v1852 = vld [vmem:[#allocation2 + $0x6c] sm:$0xe]
      %v1853 = vld [vmem:[#allocation2 + $0x78] sm:$0xe]
      %v1854 = vld [vmem:[#allocation2 + $0x84] sm:$0xe]
      %v1855 = vld [vmem:[#allocation2 + $0x90] sm:$0xe]
      %v1856 = vld [vmem:[#allocation2 + $0x9c] sm:$0xe]
      %v1857 = vld [vmem:[#allocation2 + $0xa8] sm:$0xe]
      %v1858 = vld [vmem:[#allocation2 + $0xb4] sm:$0xe]
      %vm1891 = vcmask 1042432
      %vm1892 = vcmask 1046532
      %vm1893 = vmor %vm1891, %vm1892
      %v1894 = vrot.slane %v1843, 5
      %v1895 = vrot.slane %v1894, 4
      %v1896 = vrot.slane %v852, 5
      %v1897 = vsel %vm1893, %v1895, %v1896
      %v1898 = vrot.slane %v1896, 4
      %v1899 = vrot.slane %v884, 5
      %v1900 = vsel %vm1893, %v1898, %v1899
      %v1901 = vrot.slane %v1844, 5
      %v1902 = vrot.slane %v1901, 4
      %v1903 = vrot.slane %v854, 5
      %v1904 = vsel %vm1893, %v1902, %v1903
      %v1905 = vrot.slane %v1903, 4
      %v1906 = vrot.slane %v885, 5
      %v1907 = vsel %vm1893, %v1905, %v1906
      %v1908 = vrot.slane %v1845, 5
      %v1909 = vrot.slane %v1908, 4
      %v1910 = vrot.slane %v856, 5
      %v1911 = vsel %vm1893, %v1909, %v1910
      %v1912 = vrot.slane %v1910, 4
      %v1913 = vrot.slane %v886, 5
      %v1914 = vsel %vm1893, %v1912, %v1913
      %v1915 = vrot.slane %v1846, 5
      %v1916 = vrot.slane %v1915, 4
      %v1917 = vrot.slane %v858, 5
      %v1918 = vsel %vm1893, %v1916, %v1917
      %v1919 = vrot.slane %v1917, 4
      %v1920 = vrot.slane %v887, 5
      %v1921 = vsel %vm1893, %v1919, %v1920
      %v1922 = vrot.slane %v1847, 5
      %v1923 = vrot.slane %v1922, 4
      %v1924 = vrot.slane %v860, 5
      %v1925 = vsel %vm1893, %v1923, %v1924
      %v1926 = vrot.slane %v1924, 4
      %v1927 = vrot.slane %v888, 5
      %v1928 = vsel %vm1893, %v1926, %v1927
      %v1929 = vrot.slane %v1848, 5
      %v1930 = vrot.slane %v1929, 4
      %v1931 = vrot.slane %v862, 5
      %v1932 = vsel %vm1893, %v1930, %v1931
      %v1933 = vrot.slane %v1931, 4
      %v1934 = vrot.slane %v889, 5
      %v1935 = vsel %vm1893, %v1933, %v1934
      %v1936 = vrot.slane %v1849, 5
      %v1937 = vrot.slane %v1936, 4
      %v1938 = vrot.slane %v864, 5
      %v1939 = vsel %vm1893, %v1937, %v1938
      %v1940 = vrot.slane %v1938, 4
      %v1941 = vrot.slane %v890, 5
      %v1942 = vsel %vm1893, %v1940, %v1941
      %v1943 = vrot.slane %v1850, 5
      %v1944 = vrot.slane %v1943, 4
      %v1945 = vrot.slane %v866, 5
      %v1946 = vsel %vm1893, %v1944, %v1945
      %v1947 = vrot.slane %v1945, 4
      %v1948 = vrot.slane %v891, 5
      %v1949 = vsel %vm1893, %v1947, %v1948
      %v1950 = vrot.slane %v1851, 5
      %v1951 = vrot.slane %v1950, 4
      %v1952 = vrot.slane %v868, 5
      %v1953 = vsel %vm1893, %v1951, %v1952
      %v1954 = vrot.slane %v1952, 4
      %v1955 = vrot.slane %v892, 5
      %v1956 = vsel %vm1893, %v1954, %v1955
      %v1957 = vrot.slane %v1852, 5
      %v1958 = vrot.slane %v1957, 4
      %v1959 = vrot.slane %v870, 5
      %v1960 = vsel %vm1893, %v1958, %v1959
      %v1961 = vrot.slane %v1959, 4
      %v1962 = vrot.slane %v893, 5
      %v1963 = vsel %vm1893, %v1961, %v1962
      %v1964 = vrot.slane %v1853, 5
      %v1965 = vrot.slane %v1964, 4
      %v1966 = vrot.slane %v872, 5
      %v1967 = vsel %vm1893, %v1965, %v1966
      %v1968 = vrot.slane %v1966, 4
      %v1969 = vrot.slane %v894, 5
      %v1970 = vsel %vm1893, %v1968, %v1969
      %v1971 = vrot.slane %v1854, 5
      %v1972 = vrot.slane %v1971, 4
      %v1973 = vrot.slane %v874, 5
      %v1974 = vsel %vm1893, %v1972, %v1973
      %v1975 = vrot.slane %v1973, 4
      %v1976 = vrot.slane %v895, 5
      %v1977 = vsel %vm1893, %v1975, %v1976
      %v1978 = vrot.slane %v1855, 5
      %v1979 = vrot.slane %v1978, 4
      %v1980 = vrot.slane %v876, 5
      %v1981 = vsel %vm1893, %v1979, %v1980
      %v1982 = vrot.slane %v1980, 4
      %v1983 = vrot.slane %v896, 5
      %v1984 = vsel %vm1893, %v1982, %v1983
      %v1985 = vrot.slane %v1856, 5
      %v1986 = vrot.slane %v1985, 4
      %v1987 = vrot.slane %v878, 5
      %v1988 = vsel %vm1893, %v1986, %v1987
      %v1989 = vrot.slane %v1987, 4
      %v1990 = vrot.slane %v897, 5
      %v1991 = vsel %vm1893, %v1989, %v1990
      %v1992 = vrot.slane %v1857, 5
      %v1993 = vrot.slane %v1992, 4
      %v1994 = vrot.slane %v880, 5
      %v1995 = vsel %vm1893, %v1993, %v1994
      %v1996 = vrot.slane %v1994, 4
      %v1997 = vrot.slane %v898, 5
      %v1998 = vsel %vm1893, %v1996, %v1997
      %v1999 = vrot.slane %v1858, 5
      %v2000 = vrot.slane %v1999, 4
      %v2001 = vrot.slane %v882, 5
      %v2002 = vsel %vm1893, %v2000, %v2001
      %v2003 = vrot.slane %v2001, 4
      %v2004 = vrot.slane %v899, 5
      %v2005 = vsel %vm1893, %v2003, %v2004
      %s2006 = scalar_lea.vmem %s1, 4
      %v2007 = vld [vmem:[%s2006] sm:$0x3]
      %v2008 = vunpack.c.l.b16 %v1897
      %v2009 = vunpack.c.l.b16 %v1900
      %v2010 = vunpack.c.l.b16 %v1904
      %v2011 = vunpack.c.l.b16 %v1907
      %v2012 = vunpack.c.l.b16 %v1911
      %v2013 = vunpack.c.l.b16 %v1914
      %v2014 = vunpack.c.l.b16 %v1918
      %v2015 = vunpack.c.l.b16 %v1921
      %v2016 = vunpack.c.l.b16 %v1925
      %v2017 = vunpack.c.l.b16 %v1928
      %v2018 = vunpack.c.l.b16 %v1932
      %v2019 = vunpack.c.l.b16 %v1935
      %v2020 = vunpack.c.l.b16 %v1939
      %v2021 = vunpack.c.l.b16 %v1942
      %v2022 = vunpack.c.l.b16 %v1946
      %v2023 = vunpack.c.l.b16 %v1949
      %v2024 = vunpack.c.l.b16 %v1953
      %v2025 = vunpack.c.l.b16 %v1956
      %v2026 = vunpack.c.l.b16 %v1960
      %v2027 = vunpack.c.l.b16 %v1963
      %v2028 = vunpack.c.l.b16 %v1967
      %v2029 = vunpack.c.l.b16 %v1970
      %v2030 = vunpack.c.l.b16 %v1974
      %v2031 = vunpack.c.l.b16 %v1977
      %v2032 = vunpack.c.l.b16 %v1981
      %v2033 = vunpack.c.l.b16 %v1984
      %v2034 = vunpack.c.l.b16 %v1988
      %v2035 = vunpack.c.l.b16 %v1991
      %v2036 = vunpack.c.l.b16 %v1995
      %v2037 = vunpack.c.l.b16 %v1998
      %v2038 = vunpack.c.l.b16 %v2002
      %v2039 = vunpack.c.l.b16 %v2005
      %v2040 = vpack.c.b16 %v2009, %v2008
      %v2041 = vpack.c.b16 %v2011, %v2010
      %v2042 = vpack.c.b16 %v2013, %v2012
      %v2043 = vpack.c.b16 %v2015, %v2014
      %v2044 = vpack.c.b16 %v2017, %v2016
      %v2045 = vpack.c.b16 %v2019, %v2018
      %v2046 = vpack.c.b16 %v2021, %v2020
      %v2047 = vpack.c.b16 %v2023, %v2022
      %v2048 = vpack.c.b16 %v2025, %v2024
      %v2049 = vpack.c.b16 %v2027, %v2026
      %v2050 = vpack.c.b16 %v2029, %v2028
      %v2051 = vpack.c.b16 %v2031, %v2030
      %v2052 = vpack.c.b16 %v2033, %v2032
      %v2053 = vpack.c.b16 %v2035, %v2034
      %v2054 = vpack.c.b16 %v2037, %v2036
      %v2055 = vpack.c.b16 %v2039, %v2038
      %v2057 = vsel %vm1337, %v2040, 0
      %v2060 = vsel %vm1337, %v2041, 0
      %v2063 = vsel %vm1337, %v2042, 0
      %v2066 = vsel %vm1337, %v2043, 0
      %v2069 = vsel %vm1337, %v2044, 0
      %v2072 = vsel %vm1337, %v2045, 0
      %v2075 = vsel %vm1337, %v2046, 0
      %v2078 = vsel %vm1337, %v2047, 0
      %v2081 = vsel %vm1337, %v2048, 0
      %v2084 = vsel %vm1337, %v2049, 0
      %v2087 = vsel %vm1337, %v2050, 0
      %v2090 = vsel %vm1337, %v2051, 0
      %v2093 = vsel %vm1337, %v2052, 0
      %v2096 = vsel %vm1337, %v2053, 0
      %v2099 = vsel %vm1337, %v2054, 0
      %v2102 = vsel %vm1337, %v2055, 0
      %v2105 = vsel %vm1386, %v2007, 0
      %2107 = vmatprep.subr.bf16.mxu0 0
      %2108 = vmatpush1.bf16.msra.mxu0 %v2105
      %2109 = vmatprep.subr.bf16.mxu0 0
      %2110 = vmatpush1.bf16.msra.mxu0 0
      %2111 = vmatprep.subr.bf16.mxu0 0
      %2112 = vmatpush1.bf16.msra.mxu0 0
      %2113 = vmatprep.subr.bf16.mxu0 0
      %2114 = vmatpush1.bf16.msra.mxu0 0
      %2115 = vmatprep.subr.bf16.mxu0 0
      %2116 = vmatpush1.bf16.msra.mxu0 0
      %2117 = vmatprep.subr.bf16.mxu0 0
      %2118 = vmatpush1.bf16.msra.mxu0 0
      %2119 = vmatprep.subr.bf16.mxu0 0
      %2120 = vmatpush1.bf16.msra.mxu0 0
      %2121 = vmatprep.subr.bf16.mxu0 0
      %2122 = vmatpush1.bf16.msra.mxu0 0
      %2123 = vmatprep.subr.bf16.mxu0 0
      %2124 = vmatpush1.bf16.msra.mxu0 0
      %2125 = vmatprep.subr.bf16.mxu0 0
      %2126 = vmatpush1.bf16.msra.mxu0 0
      %2127 = vmatprep.subr.bf16.mxu0 0
      %2128 = vmatpush1.bf16.msra.mxu0 0
      %2129 = vmatprep.subr.bf16.mxu0 0
      %2130 = vmatpush1.bf16.msra.mxu0 0
      %2131 = vmatprep.subr.bf16.mxu0 0
      %2132 = vmatpush1.bf16.msra.mxu0 0
      %2133 = vmatprep.subr.bf16.mxu0 0
      %2134 = vmatpush1.bf16.msra.mxu0 0
      %2135 = vmatprep.subr.bf16.mxu0 0
      %2136 = vmatpush1.bf16.msra.mxu0 0
      %2137 = vmatprep.subr.bf16.mxu0 0
      %2138 = vmatpush1.bf16.msra.mxu0 0
      %2139 = vmatprep.mubr.bf16.mxu0 0
      %2140 = vmatmul.mubr.bf16.gmra.mrb[0].mxu0 %v2057
      %v2141 = vpop.f32.mrb[0].mxu0
      %v2142 = vadd.f32 0.0, %v2141
      %v2143 = vpop.f32.mrb[0].mxu0
      %v2144 = vpop.f32.mrb[0].mxu0
      %v2145 = vadd.f32 0.0, %v2144
      %v2146 = vpop.f32.mrb[0].mxu0
      %2147 = vmatprep.mubr.bf16.mxu0 0
      %2148 = vmatmul.mubr.bf16.gmra.mrb[0].mxu0 %v2060
      %v2149 = vpop.f32.mrb[0].mxu0
      %v2150 = vadd.f32 0.0, %v2149
      %v2151 = vpop.f32.mrb[0].mxu0
      %v2152 = vpop.f32.mrb[0].mxu0
      %v2153 = vadd.f32 0.0, %v2152
      %v2154 = vpop.f32.mrb[0].mxu0
      %2155 = vmatprep.mubr.bf16.mxu0 0
      %2156 = vmatmul.mubr.bf16.gmra.mrb[0].mxu0 %v2063
      %v2157 = vpop.f32.mrb[0].mxu0
      %v2158 = vadd.f32 0.0, %v2157
      %v2159 = vpop.f32.mrb[0].mxu0
      %v2160 = vpop.f32.mrb[0].mxu0
      %v2161 = vadd.f32 0.0, %v2160
      %v2162 = vpop.f32.mrb[0].mxu0
      %2163 = vmatprep.mubr.bf16.mxu0 0
      %2164 = vmatmul.mubr.bf16.gmra.mrb[0].mxu0 %v2066
      %v2165 = vpop.f32.mrb[0].mxu0
      %v2166 = vadd.f32 0.0, %v2165
      %v2167 = vpop.f32.mrb[0].mxu0
      %v2168 = vpop.f32.mrb[0].mxu0
      %v2169 = vadd.f32 0.0, %v2168
      %v2170 = vpop.f32.mrb[0].mxu0
      %2171 = vmatprep.mubr.bf16.mxu0 0
      %2172 = vmatmul.mubr.bf16.gmra.mrb[0].mxu0 %v2069
      %v2173 = vpop.f32.mrb[0].mxu0
      %v2174 = vadd.f32 0.0, %v2173
      %v2175 = vpop.f32.mrb[0].mxu0
      %v2176 = vpop.f32.mrb[0].mxu0
      %v2177 = vadd.f32 0.0, %v2176
      %v2178 = vpop.f32.mrb[0].mxu0
      %2179 = vmatprep.mubr.bf16.mxu0 0
      %2180 = vmatmul.mubr.bf16.gmra.mrb[0].mxu0 %v2072
      %v2181 = vpop.f32.mrb[0].mxu0
      %v2182 = vadd.f32 0.0, %v2181
      %v2183 = vpop.f32.mrb[0].mxu0
      %v2184 = vpop.f32.mrb[0].mxu0
      %v2185 = vadd.f32 0.0, %v2184
      %v2186 = vpop.f32.mrb[0].mxu0
      %2187 = vmatprep.mubr.bf16.mxu0 0
      %2188 = vmatmul.mubr.bf16.gmra.mrb[0].mxu0 %v2075
      %v2189 = vpop.f32.mrb[0].mxu0
      %v2190 = vadd.f32 0.0, %v2189
      %v2191 = vpop.f32.mrb[0].mxu0
      %v2192 = vpop.f32.mrb[0].mxu0
      %v2193 = vadd.f32 0.0, %v2192
      %v2194 = vpop.f32.mrb[0].mxu0
      %2195 = vmatprep.mubr.bf16.mxu0 0
      %2196 = vmatmul.mubr.bf16.gmra.mrb[0].mxu0 %v2078
      %v2197 = vpop.f32.mrb[0].mxu0
      %v2198 = vadd.f32 0.0, %v2197
      %v2199 = vpop.f32.mrb[0].mxu0
      %v2200 = vpop.f32.mrb[0].mxu0
      %v2201 = vadd.f32 0.0, %v2200
      %v2202 = vpop.f32.mrb[0].mxu0
      %2203 = vmatprep.mubr.bf16.mxu0 0
      %2204 = vmatmul.mubr.bf16.gmra.mrb[0].mxu0 %v2081
      %v2205 = vpop.f32.mrb[0].mxu0
      %v2206 = vadd.f32 0.0, %v2205
      %v2207 = vpop.f32.mrb[0].mxu0
      %v2208 = vpop.f32.mrb[0].mxu0
      %v2209 = vadd.f32 0.0, %v2208
      %v2210 = vpop.f32.mrb[0].mxu0
      %2211 = vmatprep.mubr.bf16.mxu0 0
      %2212 = vmatmul.mubr.bf16.gmra.mrb[0].mxu0 %v2084
      %v2213 = vpop.f32.mrb[0].mxu0
      %v2214 = vadd.f32 0.0, %v2213
      %v2215 = vpop.f32.mrb[0].mxu0
      %v2216 = vpop.f32.mrb[0].mxu0
      %v2217 = vadd.f32 0.0, %v2216
      %v2218 = vpop.f32.mrb[0].mxu0
      %2219 = vmatprep.mubr.bf16.mxu0 0
      %2220 = vmatmul.mubr.bf16.gmra.mrb[0].mxu0 %v2087
      %v2221 = vpop.f32.mrb[0].mxu0
      %v2222 = vadd.f32 0.0, %v2221
      %v2223 = vpop.f32.mrb[0].mxu0
      %v2224 = vpop.f32.mrb[0].mxu0
      %v2225 = vadd.f32 0.0, %v2224
      %v2226 = vpop.f32.mrb[0].mxu0
      %2227 = vmatprep.mubr.bf16.mxu0 0
      %2228 = vmatmul.mubr.bf16.gmra.mrb[0].mxu0 %v2090
      %v2229 = vpop.f32.mrb[0].mxu0
      %v2230 = vadd.f32 0.0, %v2229
      %v2231 = vpop.f32.mrb[0].mxu0
      %v2232 = vpop.f32.mrb[0].mxu0
      %v2233 = vadd.f32 0.0, %v2232
      %v2234 = vpop.f32.mrb[0].mxu0
      %2235 = vmatprep.mubr.bf16.mxu0 0
      %2236 = vmatmul.mubr.bf16.gmra.mrb[0].mxu0 %v2093
      %v2237 = vpop.f32.mrb[0].mxu0
      %v2238 = vadd.f32 0.0, %v2237
      %v2239 = vpop.f32.mrb[0].mxu0
      %v2240 = vpop.f32.mrb[0].mxu0
      %v2241 = vadd.f32 0.0, %v2240
      %v2242 = vpop.f32.mrb[0].mxu0
      %2243 = vmatprep.mubr.bf16.mxu0 0
      %2244 = vmatmul.mubr.bf16.gmra.mrb[0].mxu0 %v2096
      %v2245 = vpop.f32.mrb[0].mxu0
      %v2246 = vadd.f32 0.0, %v2245
      %v2247 = vpop.f32.mrb[0].mxu0
      %v2248 = vpop.f32.mrb[0].mxu0
      %v2249 = vadd.f32 0.0, %v2248
      %v2250 = vpop.f32.mrb[0].mxu0
      %2251 = vmatprep.mubr.bf16.mxu0 0
      %2252 = vmatmul.mubr.bf16.gmra.mrb[0].mxu0 %v2099
      %v2253 = vpop.f32.mrb[0].mxu0
      %v2254 = vadd.f32 0.0, %v2253
      %v2255 = vpop.f32.mrb[0].mxu0
      %v2256 = vpop.f32.mrb[0].mxu0
      %v2257 = vadd.f32 0.0, %v2256
      %v2258 = vpop.f32.mrb[0].mxu0
      %2259 = vmatprep.mubr.bf16.mxu0 0
      %2260 = vmatmul.mubr.bf16.gmra.mrb[0].mxu0 %v2102
      %v2261 = vpop.f32.mrb[0].mxu0
      %v2262 = vadd.f32 0.0, %v2261
      %v2263 = vpop.f32.mrb[0].mxu0
      %v2264 = vpop.f32.mrb[0].mxu0
      %v2265 = vadd.f32 0.0, %v2264
      %v2266 = vpop.f32.mrb[0].mxu0
      %2267 = vdwg.mxu0
      %v2268 = vadd.f32 %v1717, %v2142
      %v2269 = vadd.f32 %v1720, %v2145
      %v2270 = vadd.f32 %v1725, %v2150
      %v2271 = vadd.f32 %v1728, %v2153
      %v2272 = vadd.f32 %v1733, %v2158
      %v2273 = vadd.f32 %v1736, %v2161
      %v2274 = vadd.f32 %v1741, %v2166
      %v2275 = vadd.f32 %v1744, %v2169
      %v2276 = vadd.f32 %v1749, %v2174
      %v2277 = vadd.f32 %v1752, %v2177
      %v2278 = vadd.f32 %v1757, %v2182
      %v2279 = vadd.f32 %v1760, %v2185
      %v2280 = vadd.f32 %v1765, %v2190
      %v2281 = vadd.f32 %v1768, %v2193
      %v2282 = vadd.f32 %v1773, %v2198
      %v2283 = vadd.f32 %v1776, %v2201
      %v2284 = vadd.f32 %v1781, %v2206
      %v2285 = vadd.f32 %v1784, %v2209
      %v2286 = vadd.f32 %v1789, %v2214
      %v2287 = vadd.f32 %v1792, %v2217
      %v2288 = vadd.f32 %v1797, %v2222
      %v2289 = vadd.f32 %v1800, %v2225
      %v2290 = vadd.f32 %v1805, %v2230
      %v2291 = vadd.f32 %v1808, %v2233
      %v2292 = vadd.f32 %v1813, %v2238
      %v2293 = vadd.f32 %v1816, %v2241
      %v2294 = vadd.f32 %v1821, %v2246
      %v2295 = vadd.f32 %v1824, %v2249
      %v2296 = vadd.f32 %v1829, %v2254
      %v2297 = vadd.f32 %v1832, %v2257
      %v2298 = vadd.f32 %v1837, %v2262
      %v2299 = vadd.f32 %v1840, %v2265
      %v2300 = vld [vmem:[%s733] sm:$0xf]
      %v2301 = vld [vmem:[%s733 + $0x4] sm:$0xf]
      %v2302 = vld [vmem:[%s733 + $0xc] sm:$0xf]
      %v2303 = vld [vmem:[%s733 + $0x10] sm:$0xf]
      %v2304 = vld [vmem:[%s733 + $0x18] sm:$0xf]
      %v2305 = vld [vmem:[%s733 + $0x1c] sm:$0xf]
      %v2306 = vld [vmem:[%s733 + $0x24] sm:$0xf]
      %v2307 = vld [vmem:[%s733 + $0x28] sm:$0xf]
      %v2308 = vld [vmem:[%s733 + $0x30] sm:$0xf]
      %v2309 = vld [vmem:[%s733 + $0x34] sm:$0xf]
      %v2310 = vld [vmem:[%s733 + $0x3c] sm:$0xf]
      %v2311 = vld [vmem:[%s733 + $0x40] sm:$0xf]
      %v2312 = vld [vmem:[%s733 + $0x48] sm:$0xf]
      %v2313 = vld [vmem:[%s733 + $0x4c] sm:$0xf]
      %v2314 = vld [vmem:[%s733 + $0x54] sm:$0xf]
      %v2315 = vld [vmem:[%s733 + $0x58] sm:$0xf]
      %v2316 = vld [vmem:[%s733 + $0x60] sm:$0xf]
      %v2317 = vld [vmem:[%s733 + $0x64] sm:$0xf]
      %v2318 = vld [vmem:[%s733 + $0x6c] sm:$0xf]
      %v2319 = vld [vmem:[%s733 + $0x70] sm:$0xf]
      %v2320 = vld [vmem:[%s733 + $0x78] sm:$0xf]
      %v2321 = vld [vmem:[%s733 + $0x7c] sm:$0xf]
      %v2322 = vld [vmem:[%s733 + $0x84] sm:$0xf]
      %v2323 = vld [vmem:[%s733 + $0x88] sm:$0xf]
      %v2324 = vld [vmem:[%s733 + $0x90] sm:$0xf]
      %v2325 = vld [vmem:[%s733 + $0x94] sm:$0xf]
      %v2326 = vld [vmem:[%s733 + $0x9c] sm:$0xf]
      %v2327 = vld [vmem:[%s733 + $0xa0] sm:$0xf]
      %v2328 = vld [vmem:[%s733 + $0xa8] sm:$0xf]
      %v2329 = vld [vmem:[%s733 + $0xac] sm:$0xf]
      %v2330 = vld [vmem:[%s733 + $0xb4] sm:$0xf]
      %v2331 = vld [vmem:[%s733 + $0xb8] sm:$0xf]
      %s2332 = scalar_lea.vmem %s1, 6
      %v2333 = vld [vmem:[%s2332] sm:$0x3]
      %v2366 = vunpack.c.l.b16 %v2300
      %v2367 = vunpack.c.l.b16 %v2301
      %v2368 = vunpack.c.l.b16 %v2302
      %v2369 = vunpack.c.l.b16 %v2303
      %v2370 = vunpack.c.l.b16 %v2304
      %v2371 = vunpack.c.l.b16 %v2305
      %v2372 = vunpack.c.l.b16 %v2306
      %v2373 = vunpack.c.l.b16 %v2307
      %v2374 = vunpack.c.l.b16 %v2308
      %v2375 = vunpack.c.l.b16 %v2309
      %v2376 = vunpack.c.l.b16 %v2310
      %v2377 = vunpack.c.l.b16 %v2311
      %v2378 = vunpack.c.l.b16 %v2312
      %v2379 = vunpack.c.l.b16 %v2313
      %v2380 = vunpack.c.l.b16 %v2314
      %v2381 = vunpack.c.l.b16 %v2315
      %v2382 = vunpack.c.l.b16 %v2316
      %v2383 = vunpack.c.l.b16 %v2317
      %v2384 = vunpack.c.l.b16 %v2318
      %v2385 = vunpack.c.l.b16 %v2319
      %v2386 = vunpack.c.l.b16 %v2320
      %v2387 = vunpack.c.l.b16 %v2321
      %v2388 = vunpack.c.l.b16 %v2322
      %v2389 = vunpack.c.l.b16 %v2323
      %v2390 = vunpack.c.l.b16 %v2324
      %v2391 = vunpack.c.l.b16 %v2325
      %v2392 = vunpack.c.l.b16 %v2326
      %v2393 = vunpack.c.l.b16 %v2327
      %v2394 = vunpack.c.l.b16 %v2328
      %v2395 = vunpack.c.l.b16 %v2329
      %v2396 = vunpack.c.l.b16 %v2330
      %v2397 = vunpack.c.l.b16 %v2331
      %v2398 = vpack.c.b16 %v2367, %v2366
      %v2399 = vpack.c.b16 %v2369, %v2368
      %v2400 = vpack.c.b16 %v2371, %v2370
      %v2401 = vpack.c.b16 %v2373, %v2372
      %v2402 = vpack.c.b16 %v2375, %v2374
      %v2403 = vpack.c.b16 %v2377, %v2376
      %v2404 = vpack.c.b16 %v2379, %v2378
      %v2405 = vpack.c.b16 %v2381, %v2380
      %v2406 = vpack.c.b16 %v2383, %v2382
      %v2407 = vpack.c.b16 %v2385, %v2384
      %v2408 = vpack.c.b16 %v2387, %v2386
      %v2409 = vpack.c.b16 %v2389, %v2388
      %v2410 = vpack.c.b16 %v2391, %v2390
      %v2411 = vpack.c.b16 %v2393, %v2392
      %v2412 = vpack.c.b16 %v2395, %v2394
      %v2413 = vpack.c.b16 %v2397, %v2396
      %v2415 = vsel %vm1337, %v2398, 0
      %v2418 = vsel %vm1337, %v2399, 0
      %v2421 = vsel %vm1337, %v2400, 0
      %v2424 = vsel %vm1337, %v2401, 0
      %v2427 = vsel %vm1337, %v2402, 0
      %v2430 = vsel %vm1337, %v2403, 0
      %v2433 = vsel %vm1337, %v2404, 0
      %v2436 = vsel %vm1337, %v2405, 0
      %v2439 = vsel %vm1337, %v2406, 0
      %v2442 = vsel %vm1337, %v2407, 0
      %v2445 = vsel %vm1337, %v2408, 0
      %v2448 = vsel %vm1337, %v2409, 0
      %v2451 = vsel %vm1337, %v2410, 0
      %v2454 = vsel %vm1337, %v2411, 0
      %v2457 = vsel %vm1337, %v2412, 0
      %v2460 = vsel %vm1337, %v2413, 0
      %v2463 = vsel %vm1386, %v2333, 0
      %2465 = vmatprep.subr.bf16.mxu0 0
      %2466 = vmatpush1.bf16.msra.mxu0 %v2463
      %2467 = vmatprep.subr.bf16.mxu0 0
      %2468 = vmatpush1.bf16.msra.mxu0 0
      %2469 = vmatprep.subr.bf16.mxu0 0
      %2470 = vmatpush1.bf16.msra.mxu0 0
      %2471 = vmatprep.subr.bf16.mxu0 0
      %2472 = vmatpush1.bf16.msra.mxu0 0
      %2473 = vmatprep.subr.bf16.mxu0 0
      %2474 = vmatpush1.bf16.msra.mxu0 0
      %2475 = vmatprep.subr.bf16.mxu0 0
      %2476 = vmatpush1.bf16.msra.mxu0 0
      %2477 = vmatprep.subr.bf16.mxu0 0
      %2478 = vmatpush1.bf16.msra.mxu0 0
      %2479 = vmatprep.subr.bf16.mxu0 0
      %2480 = vmatpush1.bf16.msra.mxu0 0
      %2481 = vmatprep.subr.bf16.mxu0 0
      %2482 = vmatpush1.bf16.msra.mxu0 0
      %2483 = vmatprep.subr.bf16.mxu0 0
      %2484 = vmatpush1.bf16.msra.mxu0 0
      %2485 = vmatprep.subr.bf16.mxu0 0
      %2486 = vmatpush1.bf16.msra.mxu0 0
      %2487 = vmatprep.subr.bf16.mxu0 0
      %2488 = vmatpush1.bf16.msra.mxu0 0
      %2489 = vmatprep.subr.bf16.mxu0 0
      %2490 = vmatpush1.bf16.msra.mxu0 0
      %2491 = vmatprep.subr.bf16.mxu0 0
      %2492 = vmatpush1.bf16.msra.mxu0 0
      %2493 = vmatprep.subr.bf16.mxu0 0
      %2494 = vmatpush1.bf16.msra.mxu0 0
      %2495 = vmatprep.subr.bf16.mxu0 0
      %2496 = vmatpush1.bf16.msra.mxu0 0
      %2497 = vmatprep.mubr.bf16.mxu0 0
      %2498 = vmatmul.mubr.bf16.gmra.mrb[0].mxu0 %v2415
      %v2499 = vpop.f32.mrb[0].mxu0
      %v2500 = vadd.f32 0.0, %v2499
      %v2501 = vpop.f32.mrb[0].mxu0
      %v2502 = vpop.f32.mrb[0].mxu0
      %v2503 = vadd.f32 0.0, %v2502
      %v2504 = vpop.f32.mrb[0].mxu0
      %2505 = vmatprep.mubr.bf16.mxu0 0
      %2506 = vmatmul.mubr.bf16.gmra.mrb[0].mxu0 %v2418
      %v2507 = vpop.f32.mrb[0].mxu0
      %v2508 = vadd.f32 0.0, %v2507
      %v2509 = vpop.f32.mrb[0].mxu0
      %v2510 = vpop.f32.mrb[0].mxu0
      %v2511 = vadd.f32 0.0, %v2510
      %v2512 = vpop.f32.mrb[0].mxu0
      %2513 = vmatprep.mubr.bf16.mxu0 0
      %2514 = vmatmul.mubr.bf16.gmra.mrb[0].mxu0 %v2421
      %v2515 = vpop.f32.mrb[0].mxu0
      %v2516 = vadd.f32 0.0, %v2515
      %v2517 = vpop.f32.mrb[0].mxu0
      %v2518 = vpop.f32.mrb[0].mxu0
      %v2519 = vadd.f32 0.0, %v2518
      %v2520 = vpop.f32.mrb[0].mxu0
      %2521 = vmatprep.mubr.bf16.mxu0 0
      %2522 = vmatmul.mubr.bf16.gmra.mrb[0].mxu0 %v2424
      %v2523 = vpop.f32.mrb[0].mxu0
      %v2524 = vadd.f32 0.0, %v2523
      %v2525 = vpop.f32.mrb[0].mxu0
      %v2526 = vpop.f32.mrb[0].mxu0
      %v2527 = vadd.f32 0.0, %v2526
      %v2528 = vpop.f32.mrb[0].mxu0
      %2529 = vmatprep.mubr.bf16.mxu0 0
      %2530 = vmatmul.mubr.bf16.gmra.mrb[0].mxu0 %v2427
      %v2531 = vpop.f32.mrb[0].mxu0
      %v2532 = vadd.f32 0.0, %v2531
      %v2533 = vpop.f32.mrb[0].mxu0
      %v2534 = vpop.f32.mrb[0].mxu0
      %v2535 = vadd.f32 0.0, %v2534
      %v2536 = vpop.f32.mrb[0].mxu0
      %2537 = vmatprep.mubr.bf16.mxu0 0
      %2538 = vmatmul.mubr.bf16.gmra.mrb[0].mxu0 %v2430
      %v2539 = vpop.f32.mrb[0].mxu0
      %v2540 = vadd.f32 0.0, %v2539
      %v2541 = vpop.f32.mrb[0].mxu0
      %v2542 = vpop.f32.mrb[0].mxu0
      %v2543 = vadd.f32 0.0, %v2542
      %v2544 = vpop.f32.mrb[0].mxu0
      %2545 = vmatprep.mubr.bf16.mxu0 0
      %2546 = vmatmul.mubr.bf16.gmra.mrb[0].mxu0 %v2433
      %v2547 = vpop.f32.mrb[0].mxu0
      %v2548 = vadd.f32 0.0, %v2547
      %v2549 = vpop.f32.mrb[0].mxu0
      %v2550 = vpop.f32.mrb[0].mxu0
      %v2551 = vadd.f32 0.0, %v2550
      %v2552 = vpop.f32.mrb[0].mxu0
      %2553 = vmatprep.mubr.bf16.mxu0 0
      %2554 = vmatmul.mubr.bf16.gmra.mrb[0].mxu0 %v2436
      %v2555 = vpop.f32.mrb[0].mxu0
      %v2556 = vadd.f32 0.0, %v2555
      %v2557 = vpop.f32.mrb[0].mxu0
      %v2558 = vpop.f32.mrb[0].mxu0
      %v2559 = vadd.f32 0.0, %v2558
      %v2560 = vpop.f32.mrb[0].mxu0
      %2561 = vmatprep.mubr.bf16.mxu0 0
      %2562 = vmatmul.mubr.bf16.gmra.mrb[0].mxu0 %v2439
      %v2563 = vpop.f32.mrb[0].mxu0
      %v2564 = vadd.f32 0.0, %v2563
      %v2565 = vpop.f32.mrb[0].mxu0
      %v2566 = vpop.f32.mrb[0].mxu0
      %v2567 = vadd.f32 0.0, %v2566
      %v2568 = vpop.f32.mrb[0].mxu0
      %2569 = vmatprep.mubr.bf16.mxu0 0
      %2570 = vmatmul.mubr.bf16.gmra.mrb[0].mxu0 %v2442
      %v2571 = vpop.f32.mrb[0].mxu0
      %v2572 = vadd.f32 0.0, %v2571
      %v2573 = vpop.f32.mrb[0].mxu0
      %v2574 = vpop.f32.mrb[0].mxu0
      %v2575 = vadd.f32 0.0, %v2574
      %v2576 = vpop.f32.mrb[0].mxu0
      %2577 = vmatprep.mubr.bf16.mxu0 0
      %2578 = vmatmul.mubr.bf16.gmra.mrb[0].mxu0 %v2445
      %v2579 = vpop.f32.mrb[0].mxu0
      %v2580 = vadd.f32 0.0, %v2579
      %v2581 = vpop.f32.mrb[0].mxu0
      %v2582 = vpop.f32.mrb[0].mxu0
      %v2583 = vadd.f32 0.0, %v2582
      %v2584 = vpop.f32.mrb[0].mxu0
      %2585 = vmatprep.mubr.bf16.mxu0 0
      %2586 = vmatmul.mubr.bf16.gmra.mrb[0].mxu0 %v2448
      %v2587 = vpop.f32.mrb[0].mxu0
      %v2588 = vadd.f32 0.0, %v2587
      %v2589 = vpop.f32.mrb[0].mxu0
      %v2590 = vpop.f32.mrb[0].mxu0
      %v2591 = vadd.f32 0.0, %v2590
      %v2592 = vpop.f32.mrb[0].mxu0
      %2593 = vmatprep.mubr.bf16.mxu0 0
      %2594 = vmatmul.mubr.bf16.gmra.mrb[0].mxu0 %v2451
      %v2595 = vpop.f32.mrb[0].mxu0
      %v2596 = vadd.f32 0.0, %v2595
      %v2597 = vpop.f32.mrb[0].mxu0
      %v2598 = vpop.f32.mrb[0].mxu0
      %v2599 = vadd.f32 0.0, %v2598
      %v2600 = vpop.f32.mrb[0].mxu0
      %2601 = vmatprep.mubr.bf16.mxu0 0
      %2602 = vmatmul.mubr.bf16.gmra.mrb[0].mxu0 %v2454
      %v2603 = vpop.f32.mrb[0].mxu0
      %v2604 = vadd.f32 0.0, %v2603
      %v2605 = vpop.f32.mrb[0].mxu0
      %v2606 = vpop.f32.mrb[0].mxu0
      %v2607 = vadd.f32 0.0, %v2606
      %v2608 = vpop.f32.mrb[0].mxu0
      %2609 = vmatprep.mubr.bf16.mxu0 0
      %2610 = vmatmul.mubr.bf16.gmra.mrb[0].mxu0 %v2457
      %v2611 = vpop.f32.mrb[0].mxu0
      %v2612 = vadd.f32 0.0, %v2611
      %v2613 = vpop.f32.mrb[0].mxu0
      %v2614 = vpop.f32.mrb[0].mxu0
      %v2615 = vadd.f32 0.0, %v2614
      %v2616 = vpop.f32.mrb[0].mxu0
      %2617 = vmatprep.mubr.bf16.mxu0 0
      %2618 = vmatmul.mubr.bf16.gmra.mrb[0].mxu0 %v2460
      %v2619 = vpop.f32.mrb[0].mxu0
      %v2620 = vadd.f32 0.0, %v2619
      %v2621 = vpop.f32.mrb[0].mxu0
      %v2622 = vpop.f32.mrb[0].mxu0
      %v2623 = vadd.f32 0.0, %v2622
      %v2624 = vpop.f32.mrb[0].mxu0
      %2625 = vdwg.mxu0
      %v2626 = vadd.f32 %v2268, %v2500
      %v2627 = vadd.f32 %v2269, %v2503
      %v2628 = vadd.f32 %v2270, %v2508
      %v2629 = vadd.f32 %v2271, %v2511
      %v2630 = vadd.f32 %v2272, %v2516
      %v2631 = vadd.f32 %v2273, %v2519
      %v2632 = vadd.f32 %v2274, %v2524
      %v2633 = vadd.f32 %v2275, %v2527
      %v2634 = vadd.f32 %v2276, %v2532
      %v2635 = vadd.f32 %v2277, %v2535
      %v2636 = vadd.f32 %v2278, %v2540
      %v2637 = vadd.f32 %v2279, %v2543
      %v2638 = vadd.f32 %v2280, %v2548
      %v2639 = vadd.f32 %v2281, %v2551
      %v2640 = vadd.f32 %v2282, %v2556
      %v2641 = vadd.f32 %v2283, %v2559
      %v2642 = vadd.f32 %v2284, %v2564
      %v2643 = vadd.f32 %v2285, %v2567
      %v2644 = vadd.f32 %v2286, %v2572
      %v2645 = vadd.f32 %v2287, %v2575
      %v2646 = vadd.f32 %v2288, %v2580
      %v2647 = vadd.f32 %v2289, %v2583
      %v2648 = vadd.f32 %v2290, %v2588
      %v2649 = vadd.f32 %v2291, %v2591
      %v2650 = vadd.f32 %v2292, %v2596
      %v2651 = vadd.f32 %v2293, %v2599
      %v2652 = vadd.f32 %v2294, %v2604
      %v2653 = vadd.f32 %v2295, %v2607
      %v2654 = vadd.f32 %v2296, %v2612
      %v2655 = vadd.f32 %v2297, %v2615
      %v2656 = vadd.f32 %v2298, %v2620
      %v2657 = vadd.f32 %v2299, %v2623
      %v2658 = vld [vmem:[%s733] sm:$0xf]
      %v2659 = vld [vmem:[%s733 + $0x4] sm:$0xf]
      %v2660 = vld [vmem:[%s733 + $0x8] sm:$0x1]
      %v2661 = vld [vmem:[%s733 + $0xc] sm:$0xf]
      %v2662 = vld [vmem:[%s733 + $0x10] sm:$0xf]
      %v2663 = vld [vmem:[%s733 + $0x14] sm:$0x1]
      %v2664 = vld [vmem:[%s733 + $0x18] sm:$0xf]
      %v2665 = vld [vmem:[%s733 + $0x1c] sm:$0xf]
      %v2666 = vld [vmem:[%s733 + $0x20] sm:$0x1]
      %v2667 = vld [vmem:[%s733 + $0x24] sm:$0xf]
      %v2668 = vld [vmem:[%s733 + $0x28] sm:$0xf]
      %v2669 = vld [vmem:[%s733 + $0x2c] sm:$0x1]
      %v2670 = vld [vmem:[%s733 + $0x30] sm:$0xf]
      %v2671 = vld [vmem:[%s733 + $0x34] sm:$0xf]
      %v2672 = vld [vmem:[%s733 + $0x38] sm:$0x1]
      %v2673 = vld [vmem:[%s733 + $0x3c] sm:$0xf]
      %v2674 = vld [vmem:[%s733 + $0x40] sm:$0xf]
      %v2675 = vld [vmem:[%s733 + $0x44] sm:$0x1]
      %v2676 = vld [vmem:[%s733 + $0x48] sm:$0xf]
      %v2677 = vld [vmem:[%s733 + $0x4c] sm:$0xf]
      %v2678 = vld [vmem:[%s733 + $0x50] sm:$0x1]
      %v2679 = vld [vmem:[%s733 + $0x54] sm:$0xf]
      %v2680 = vld [vmem:[%s733 + $0x58] sm:$0xf]
      %v2681 = vld [vmem:[%s733 + $0x5c] sm:$0x1]
      %v2682 = vld [vmem:[%s733 + $0x60] sm:$0xf]
      %v2683 = vld [vmem:[%s733 + $0x64] sm:$0xf]
      %v2684 = vld [vmem:[%s733 + $0x68] sm:$0x1]
      %v2685 = vld [vmem:[%s733 + $0x6c] sm:$0xf]
      %v2686 = vld [vmem:[%s733 + $0x70] sm:$0xf]
      %v2687 = vld [vmem:[%s733 + $0x74] sm:$0x1]
      %v2688 = vld [vmem:[%s733 + $0x78] sm:$0xf]
      %v2689 = vld [vmem:[%s733 + $0x7c] sm:$0xf]
      %v2690 = vld [vmem:[%s733 + $0x80] sm:$0x1]
      %v2691 = vld [vmem:[%s733 + $0x84] sm:$0xf]
      %v2692 = vld [vmem:[%s733 + $0x88] sm:$0xf]
      %v2693 = vld [vmem:[%s733 + $0x8c] sm:$0x1]
      %v2694 = vld [vmem:[%s733 + $0x90] sm:$0xf]
      %v2695 = vld [vmem:[%s733 + $0x94] sm:$0xf]
      %v2696 = vld [vmem:[%s733 + $0x98] sm:$0x1]
      %v2697 = vld [vmem:[%s733 + $0x9c] sm:$0xf]
      %v2698 = vld [vmem:[%s733 + $0xa0] sm:$0xf]
      %v2699 = vld [vmem:[%s733 + $0xa4] sm:$0x1]
      %v2700 = vld [vmem:[%s733 + $0xa8] sm:$0xf]
      %v2701 = vld [vmem:[%s733 + $0xac] sm:$0xf]
      %v2702 = vld [vmem:[%s733 + $0xb0] sm:$0x1]
      %v2703 = vld [vmem:[%s733 + $0xb4] sm:$0xf]
      %v2704 = vld [vmem:[%s733 + $0xb8] sm:$0xf]
      %v2705 = vld [vmem:[%s733 + $0xbc] sm:$0x1]
      %v2707 = vshrl.u32 %v2658, 16
      %v2709 = vrot.slane %v2707, 4
      %v2710 = vshll.u32 %v2658, 16
      %v2712 = vrot.slane %v2710, 5
      %v2713 = vor.u32 %v2709, %v2712
      %v2714 = vrot.slane %v2713, 4
      %v2716 = vshll.u32 %v2659, 16
      %v2718 = vrot.slane %v2716, 5
      %v2719 = vsel %vm902, %v2714, %v2718
      %v2720 = vshrl.u32 %v2659, 16
      %v2722 = vrot.slane %v2720, 4
      %v2723 = vor.u32 %v2722, %v2718
      %v2724 = vrot.slane %v2723, 4
      %v2726 = vshll.u32 %v2660, 16
      %v2728 = vrot.slane %v2726, 5
      %v2729 = vsel %vm902, %v2724, %v2728
      %v2731 = vshrl.u32 %v2661, 16
      %v2733 = vrot.slane %v2731, 4
      %v2734 = vshll.u32 %v2661, 16
      %v2736 = vrot.slane %v2734, 5
      %v2737 = vor.u32 %v2733, %v2736
      %v2738 = vrot.slane %v2737, 4
      %v2740 = vshll.u32 %v2662, 16
      %v2742 = vrot.slane %v2740, 5
      %v2743 = vsel %vm902, %v2738, %v2742
      %v2744 = vshrl.u32 %v2662, 16
      %v2746 = vrot.slane %v2744, 4
      %v2747 = vor.u32 %v2746, %v2742
      %v2748 = vrot.slane %v2747, 4
      %v2750 = vshll.u32 %v2663, 16
      %v2752 = vrot.slane %v2750, 5
      %v2753 = vsel %vm902, %v2748, %v2752
      %v2755 = vshrl.u32 %v2664, 16
      %v2757 = vrot.slane %v2755, 4
      %v2758 = vshll.u32 %v2664, 16
      %v2760 = vrot.slane %v2758, 5
      %v2761 = vor.u32 %v2757, %v2760
      %v2762 = vrot.slane %v2761, 4
      %v2764 = vshll.u32 %v2665, 16
      %v2766 = vrot.slane %v2764, 5
      %v2767 = vsel %vm902, %v2762, %v2766
      %v2768 = vshrl.u32 %v2665, 16
      %v2770 = vrot.slane %v2768, 4
      %v2771 = vor.u32 %v2770, %v2766
      %v2772 = vrot.slane %v2771, 4
      %v2774 = vshll.u32 %v2666, 16
      %v2776 = vrot.slane %v2774, 5
      %v2777 = vsel %vm902, %v2772, %v2776
      %v2779 = vshrl.u32 %v2667, 16
      %v2781 = vrot.slane %v2779, 4
      %v2782 = vshll.u32 %v2667, 16
      %v2784 = vrot.slane %v2782, 5
      %v2785 = vor.u32 %v2781, %v2784
      %v2786 = vrot.slane %v2785, 4
      %v2788 = vshll.u32 %v2668, 16
      %v2790 = vrot.slane %v2788, 5
      %v2791 = vsel %vm902, %v2786, %v2790
      %v2792 = vshrl.u32 %v2668, 16
      %v2794 = vrot.slane %v2792, 4
      %v2795 = vor.u32 %v2794, %v2790
      %v2796 = vrot.slane %v2795, 4
      %v2798 = vshll.u32 %v2669, 16
      %v2800 = vrot.slane %v2798, 5
      %v2801 = vsel %vm902, %v2796, %v2800
      %v2803 = vshrl.u32 %v2670, 16
      %v2805 = vrot.slane %v2803, 4
      %v2806 = vshll.u32 %v2670, 16
      %v2808 = vrot.slane %v2806, 5
      %v2809 = vor.u32 %v2805, %v2808
      %v2810 = vrot.slane %v2809, 4
      %v2812 = vshll.u32 %v2671, 16
      %v2814 = vrot.slane %v2812, 5
      %v2815 = vsel %vm902, %v2810, %v2814
      %v2816 = vshrl.u32 %v2671, 16
      %v2818 = vrot.slane %v2816, 4
      %v2819 = vor.u32 %v2818, %v2814
      %v2820 = vrot.slane %v2819, 4
      %v2822 = vshll.u32 %v2672, 16
      %v2824 = vrot.slane %v2822, 5
      %v2825 = vsel %vm902, %v2820, %v2824
      %v2827 = vshrl.u32 %v2673, 16
      %v2829 = vrot.slane %v2827, 4
      %v2830 = vshll.u32 %v2673, 16
      %v2832 = vrot.slane %v2830, 5
      %v2833 = vor.u32 %v2829, %v2832
      %v2834 = vrot.slane %v2833, 4
      %v2836 = vshll.u32 %v2674, 16
      %v2838 = vrot.slane %v2836, 5
      %v2839 = vsel %vm902, %v2834, %v2838
      %v2840 = vshrl.u32 %v2674, 16
      %v2842 = vrot.slane %v2840, 4
      %v2843 = vor.u32 %v2842, %v2838
      %v2844 = vrot.slane %v2843, 4
      %v2846 = vshll.u32 %v2675, 16
      %v2848 = vrot.slane %v2846, 5
      %v2849 = vsel %vm902, %v2844, %v2848
      %v2851 = vshrl.u32 %v2676, 16
      %v2853 = vrot.slane %v2851, 4
      %v2854 = vshll.u32 %v2676, 16
      %v2856 = vrot.slane %v2854, 5
      %v2857 = vor.u32 %v2853, %v2856
      %v2858 = vrot.slane %v2857, 4
      %v2860 = vshll.u32 %v2677, 16
      %v2862 = vrot.slane %v2860, 5
      %v2863 = vsel %vm902, %v2858, %v2862
      %v2864 = vshrl.u32 %v2677, 16
      %v2866 = vrot.slane %v2864, 4
      %v2867 = vor.u32 %v2866, %v2862
      %v2868 = vrot.slane %v2867, 4
      %v2870 = vshll.u32 %v2678, 16
      %v2872 = vrot.slane %v2870, 5
      %v2873 = vsel %vm902, %v2868, %v2872
      %v2875 = vshrl.u32 %v2679, 16
      %v2877 = vrot.slane %v2875, 4
      %v2878 = vshll.u32 %v2679, 16
      %v2880 = vrot.slane %v2878, 5
      %v2881 = vor.u32 %v2877, %v2880
      %v2882 = vrot.slane %v2881, 4
      %v2884 = vshll.u32 %v2680, 16
      %v2886 = vrot.slane %v2884, 5
      %v2887 = vsel %vm902, %v2882, %v2886
      %v2888 = vshrl.u32 %v2680, 16
      %v2890 = vrot.slane %v2888, 4
      %v2891 = vor.u32 %v2890, %v2886
      %v2892 = vrot.slane %v2891, 4
      %v2894 = vshll.u32 %v2681, 16
      %v2896 = vrot.slane %v2894, 5
      %v2897 = vsel %vm902, %v2892, %v2896
      %v2899 = vshrl.u32 %v2682, 16
      %v2901 = vrot.slane %v2899, 4
      %v2902 = vshll.u32 %v2682, 16
      %v2904 = vrot.slane %v2902, 5
      %v2905 = vor.u32 %v2901, %v2904
      %v2906 = vrot.slane %v2905, 4
      %v2908 = vshll.u32 %v2683, 16
      %v2910 = vrot.slane %v2908, 5
      %v2911 = vsel %vm902, %v2906, %v2910
      %v2912 = vshrl.u32 %v2683, 16
      %v2914 = vrot.slane %v2912, 4
      %v2915 = vor.u32 %v2914, %v2910
      %v2916 = vrot.slane %v2915, 4
      %v2918 = vshll.u32 %v2684, 16
      %v2920 = vrot.slane %v2918, 5
      %v2921 = vsel %vm902, %v2916, %v2920
      %v2923 = vshrl.u32 %v2685, 16
      %v2925 = vrot.slane %v2923, 4
      %v2926 = vshll.u32 %v2685, 16
      %v2928 = vrot.slane %v2926, 5
      %v2929 = vor.u32 %v2925, %v2928
      %v2930 = vrot.slane %v2929, 4
      %v2932 = vshll.u32 %v2686, 16
      %v2934 = vrot.slane %v2932, 5
      %v2935 = vsel %vm902, %v2930, %v2934
      %v2936 = vshrl.u32 %v2686, 16
      %v2938 = vrot.slane %v2936, 4
      %v2939 = vor.u32 %v2938, %v2934
      %v2940 = vrot.slane %v2939, 4
      %v2942 = vshll.u32 %v2687, 16
      %v2944 = vrot.slane %v2942, 5
      %v2945 = vsel %vm902, %v2940, %v2944
      %v2947 = vshrl.u32 %v2688, 16
      %v2949 = vrot.slane %v2947, 4
      %v2950 = vshll.u32 %v2688, 16
      %v2952 = vrot.slane %v2950, 5
      %v2953 = vor.u32 %v2949, %v2952
      %v2954 = vrot.slane %v2953, 4
      %v2956 = vshll.u32 %v2689, 16
      %v2958 = vrot.slane %v2956, 5
      %v2959 = vsel %vm902, %v2954, %v2958
      %v2960 = vshrl.u32 %v2689, 16
      %v2962 = vrot.slane %v2960, 4
      %v2963 = vor.u32 %v2962, %v2958
      %v2964 = vrot.slane %v2963, 4
      %v2966 = vshll.u32 %v2690, 16
      %v2968 = vrot.slane %v2966, 5
      %v2969 = vsel %vm902, %v2964, %v2968
      %v2971 = vshrl.u32 %v2691, 16
      %v2973 = vrot.slane %v2971, 4
      %v2974 = vshll.u32 %v2691, 16
      %v2976 = vrot.slane %v2974, 5
      %v2977 = vor.u32 %v2973, %v2976
      %v2978 = vrot.slane %v2977, 4
      %v2980 = vshll.u32 %v2692, 16
      %v2982 = vrot.slane %v2980, 5
      %v2983 = vsel %vm902, %v2978, %v2982
      %v2984 = vshrl.u32 %v2692, 16
      %v2986 = vrot.slane %v2984, 4
      %v2987 = vor.u32 %v2986, %v2982
      %v2988 = vrot.slane %v2987, 4
      %v2990 = vshll.u32 %v2693, 16
      %v2992 = vrot.slane %v2990, 5
      %v2993 = vsel %vm902, %v2988, %v2992
      %v2995 = vshrl.u32 %v2694, 16
      %v2997 = vrot.slane %v2995, 4
      %v2998 = vshll.u32 %v2694, 16
      %v3000 = vrot.slane %v2998, 5
      %v3001 = vor.u32 %v2997, %v3000
      %v3002 = vrot.slane %v3001, 4
      %v3004 = vshll.u32 %v2695, 16
      %v3006 = vrot.slane %v3004, 5
      %v3007 = vsel %vm902, %v3002, %v3006
      %v3008 = vshrl.u32 %v2695, 16
      %v3010 = vrot.slane %v3008, 4
      %v3011 = vor.u32 %v3010, %v3006
      %v3012 = vrot.slane %v3011, 4
      %v3014 = vshll.u32 %v2696, 16
      %v3016 = vrot.slane %v3014, 5
      %v3017 = vsel %vm902, %v3012, %v3016
      %v3019 = vshrl.u32 %v2697, 16
      %v3021 = vrot.slane %v3019, 4
      %v3022 = vshll.u32 %v2697, 16
      %v3024 = vrot.slane %v3022, 5
      %v3025 = vor.u32 %v3021, %v3024
      %v3026 = vrot.slane %v3025, 4
      %v3028 = vshll.u32 %v2698, 16
      %v3030 = vrot.slane %v3028, 5
      %v3031 = vsel %vm902, %v3026, %v3030
      %v3032 = vshrl.u32 %v2698, 16
      %v3034 = vrot.slane %v3032, 4
      %v3035 = vor.u32 %v3034, %v3030
      %v3036 = vrot.slane %v3035, 4
      %v3038 = vshll.u32 %v2699, 16
      %v3040 = vrot.slane %v3038, 5
      %v3041 = vsel %vm902, %v3036, %v3040
      %v3043 = vshrl.u32 %v2700, 16
      %v3045 = vrot.slane %v3043, 4
      %v3046 = vshll.u32 %v2700, 16
      %v3048 = vrot.slane %v3046, 5
      %v3049 = vor.u32 %v3045, %v3048
      %v3050 = vrot.slane %v3049, 4
      %v3052 = vshll.u32 %v2701, 16
      %v3054 = vrot.slane %v3052, 5
      %v3055 = vsel %vm902, %v3050, %v3054
      %v3056 = vshrl.u32 %v2701, 16
      %v3058 = vrot.slane %v3056, 4
      %v3059 = vor.u32 %v3058, %v3054
      %v3060 = vrot.slane %v3059, 4
      %v3062 = vshll.u32 %v2702, 16
      %v3064 = vrot.slane %v3062, 5
      %v3065 = vsel %vm902, %v3060, %v3064
      %v3067 = vshrl.u32 %v2703, 16
      %v3069 = vrot.slane %v3067, 4
      %v3070 = vshll.u32 %v2703, 16
      %v3072 = vrot.slane %v3070, 5
      %v3073 = vor.u32 %v3069, %v3072
      %v3074 = vrot.slane %v3073, 4
      %v3076 = vshll.u32 %v2704, 16
      %v3078 = vrot.slane %v3076, 5
      %v3079 = vsel %vm902, %v3074, %v3078
      %v3080 = vshrl.u32 %v2704, 16
      %v3082 = vrot.slane %v3080, 4
      %v3083 = vor.u32 %v3082, %v3078
      %v3084 = vrot.slane %v3083, 4
      %v3086 = vshll.u32 %v2705, 16
      %v3088 = vrot.slane %v3086, 5
      %v3089 = vsel %vm902, %v3084, %v3088
      %s3090 = scalar_lea.vmem %s1, 8
      %v3091 = vld [vmem:[%s3090] sm:$0x3]
      %v3092 = vunpack.c.l.b16 %v2719
      %v3093 = vunpack.c.l.b16 %v2729
      %v3094 = vunpack.c.l.b16 %v2743
      %v3095 = vunpack.c.l.b16 %v2753
      %v3096 = vunpack.c.l.b16 %v2767
      %v3097 = vunpack.c.l.b16 %v2777
      %v3098 = vunpack.c.l.b16 %v2791
      %v3099 = vunpack.c.l.b16 %v2801
      %v3100 = vunpack.c.l.b16 %v2815
      %v3101 = vunpack.c.l.b16 %v2825
      %v3102 = vunpack.c.l.b16 %v2839
      %v3103 = vunpack.c.l.b16 %v2849
      %v3104 = vunpack.c.l.b16 %v2863
      %v3105 = vunpack.c.l.b16 %v2873
      %v3106 = vunpack.c.l.b16 %v2887
      %v3107 = vunpack.c.l.b16 %v2897
      %v3108 = vunpack.c.l.b16 %v2911
      %v3109 = vunpack.c.l.b16 %v2921
      %v3110 = vunpack.c.l.b16 %v2935
      %v3111 = vunpack.c.l.b16 %v2945
      %v3112 = vunpack.c.l.b16 %v2959
      %v3113 = vunpack.c.l.b16 %v2969
      %v3114 = vunpack.c.l.b16 %v2983
      %v3115 = vunpack.c.l.b16 %v2993
      %v3116 = vunpack.c.l.b16 %v3007
      %v3117 = vunpack.c.l.b16 %v3017
      %v3118 = vunpack.c.l.b16 %v3031
      %v3119 = vunpack.c.l.b16 %v3041
      %v3120 = vunpack.c.l.b16 %v3055
      %v3121 = vunpack.c.l.b16 %v3065
      %v3122 = vunpack.c.l.b16 %v3079
      %v3123 = vunpack.c.l.b16 %v3089
      %v3124 = vpack.c.b16 %v3093, %v3092
      %v3125 = vpack.c.b16 %v3095, %v3094
      %v3126 = vpack.c.b16 %v3097, %v3096
      %v3127 = vpack.c.b16 %v3099, %v3098
      %v3128 = vpack.c.b16 %v3101, %v3100
      %v3129 = vpack.c.b16 %v3103, %v3102
      %v3130 = vpack.c.b16 %v3105, %v3104
      %v3131 = vpack.c.b16 %v3107, %v3106
      %v3132 = vpack.c.b16 %v3109, %v3108
      %v3133 = vpack.c.b16 %v3111, %v3110
      %v3134 = vpack.c.b16 %v3113, %v3112
      %v3135 = vpack.c.b16 %v3115, %v3114
      %v3136 = vpack.c.b16 %v3117, %v3116
      %v3137 = vpack.c.b16 %v3119, %v3118
      %v3138 = vpack.c.b16 %v3121, %v3120
      %v3139 = vpack.c.b16 %v3123, %v3122
      %v3141 = vsel %vm1337, %v3124, 0
      %v3144 = vsel %vm1337, %v3125, 0
      %v3147 = vsel %vm1337, %v3126, 0
      %v3150 = vsel %vm1337, %v3127, 0
      %v3153 = vsel %vm1337, %v3128, 0
      %v3156 = vsel %vm1337, %v3129, 0
      %v3159 = vsel %vm1337, %v3130, 0
      %v3162 = vsel %vm1337, %v3131, 0
      %v3165 = vsel %vm1337, %v3132, 0
      %v3168 = vsel %vm1337, %v3133, 0
      %v3171 = vsel %vm1337, %v3134, 0
      %v3174 = vsel %vm1337, %v3135, 0
      %v3177 = vsel %vm1337, %v3136, 0
      %v3180 = vsel %vm1337, %v3137, 0
      %v3183 = vsel %vm1337, %v3138, 0
      %v3186 = vsel %vm1337, %v3139, 0
      %v3189 = vsel %vm1386, %v3091, 0
      %3191 = vmatprep.subr.bf16.mxu0 0
      %3192 = vmatpush1.bf16.msra.mxu0 %v3189
      %3193 = vmatprep.subr.bf16.mxu0 0
      %3194 = vmatpush1.bf16.msra.mxu0 0
      %3195 = vmatprep.subr.bf16.mxu0 0
      %3196 = vmatpush1.bf16.msra.mxu0 0
      %3197 = vmatprep.subr.bf16.mxu0 0
      %3198 = vmatpush1.bf16.msra.mxu0 0
      %3199 = vmatprep.subr.bf16.mxu0 0
      %3200 = vmatpush1.bf16.msra.mxu0 0
      %3201 = vmatprep.subr.bf16.mxu0 0
      %3202 = vmatpush1.bf16.msra.mxu0 0
      %3203 = vmatprep.subr.bf16.mxu0 0
      %3204 = vmatpush1.bf16.msra.mxu0 0
      %3205 = vmatprep.subr.bf16.mxu0 0
      %3206 = vmatpush1.bf16.msra.mxu0 0
      %3207 = vmatprep.subr.bf16.mxu0 0
      %3208 = vmatpush1.bf16.msra.mxu0 0
      %3209 = vmatprep.subr.bf16.mxu0 0
      %3210 = vmatpush1.bf16.msra.mxu0 0
      %3211 = vmatprep.subr.bf16.mxu0 0
      %3212 = vmatpush1.bf16.msra.mxu0 0
      %3213 = vmatprep.subr.bf16.mxu0 0
      %3214 = vmatpush1.bf16.msra.mxu0 0
      %3215 = vmatprep.subr.bf16.mxu0 0
      %3216 = vmatpush1.bf16.msra.mxu0 0
      %3217 = vmatprep.subr.bf16.mxu0 0
      %3218 = vmatpush1.bf16.msra.mxu0 0
      %3219 = vmatprep.subr.bf16.mxu0 0
      %3220 = vmatpush1.bf16.msra.mxu0 0
      %3221 = vmatprep.subr.bf16.mxu0 0
      %3222 = vmatpush1.bf16.msra.mxu0 0
      %3223 = vmatprep.mubr.bf16.mxu0 0
      %3224 = vmatmul.mubr.bf16.gmra.mrb[0].mxu0 %v3141
      %v3225 = vpop.f32.mrb[0].mxu0
      %v3226 = vadd.f32 0.0, %v3225
      %v3227 = vpop.f32.mrb[0].mxu0
      %v3228 = vpop.f32.mrb[0].mxu0
      %v3229 = vadd.f32 0.0, %v3228
      %v3230 = vpop.f32.mrb[0].mxu0
      %3231 = vmatprep.mubr.bf16.mxu0 0
      %3232 = vmatmul.mubr.bf16.gmra.mrb[0].mxu0 %v3144
      %v3233 = vpop.f32.mrb[0].mxu0
      %v3234 = vadd.f32 0.0, %v3233
      %v3235 = vpop.f32.mrb[0].mxu0
      %v3236 = vpop.f32.mrb[0].mxu0
      %v3237 = vadd.f32 0.0, %v3236
      %v3238 = vpop.f32.mrb[0].mxu0
      %3239 = vmatprep.mubr.bf16.mxu0 0
      %3240 = vmatmul.mubr.bf16.gmra.mrb[0].mxu0 %v3147
      %v3241 = vpop.f32.mrb[0].mxu0
      %v3242 = vadd.f32 0.0, %v3241
      %v3243 = vpop.f32.mrb[0].mxu0
      %v3244 = vpop.f32.mrb[0].mxu0
      %v3245 = vadd.f32 0.0, %v3244
      %v3246 = vpop.f32.mrb[0].mxu0
      %3247 = vmatprep.mubr.bf16.mxu0 0
      %3248 = vmatmul.mubr.bf16.gmra.mrb[0].mxu0 %v3150
      %v3249 = vpop.f32.mrb[0].mxu0
      %v3250 = vadd.f32 0.0, %v3249
      %v3251 = vpop.f32.mrb[0].mxu0
      %v3252 = vpop.f32.mrb[0].mxu0
      %v3253 = vadd.f32 0.0, %v3252
      %v3254 = vpop.f32.mrb[0].mxu0
      %3255 = vmatprep.mubr.bf16.mxu0 0
      %3256 = vmatmul.mubr.bf16.gmra.mrb[0].mxu0 %v3153
      %v3257 = vpop.f32.mrb[0].mxu0
      %v3258 = vadd.f32 0.0, %v3257
      %v3259 = vpop.f32.mrb[0].mxu0
      %v3260 = vpop.f32.mrb[0].mxu0
      %v3261 = vadd.f32 0.0, %v3260
      %v3262 = vpop.f32.mrb[0].mxu0
      %3263 = vmatprep.mubr.bf16.mxu0 0
      %3264 = vmatmul.mubr.bf16.gmra.mrb[0].mxu0 %v3156
      %v3265 = vpop.f32.mrb[0].mxu0
      %v3266 = vadd.f32 0.0, %v3265
      %v3267 = vpop.f32.mrb[0].mxu0
      %v3268 = vpop.f32.mrb[0].mxu0
      %v3269 = vadd.f32 0.0, %v3268
      %v3270 = vpop.f32.mrb[0].mxu0
      %3271 = vmatprep.mubr.bf16.mxu0 0
      %3272 = vmatmul.mubr.bf16.gmra.mrb[0].mxu0 %v3159
      %v3273 = vpop.f32.mrb[0].mxu0
      %v3274 = vadd.f32 0.0, %v3273
      %v3275 = vpop.f32.mrb[0].mxu0
      %v3276 = vpop.f32.mrb[0].mxu0
      %v3277 = vadd.f32 0.0, %v3276
      %v3278 = vpop.f32.mrb[0].mxu0
      %3279 = vmatprep.mubr.bf16.mxu0 0
      %3280 = vmatmul.mubr.bf16.gmra.mrb[0].mxu0 %v3162
      %v3281 = vpop.f32.mrb[0].mxu0
      %v3282 = vadd.f32 0.0, %v3281
      %v3283 = vpop.f32.mrb[0].mxu0
      %v3284 = vpop.f32.mrb[0].mxu0
      %v3285 = vadd.f32 0.0, %v3284
      %v3286 = vpop.f32.mrb[0].mxu0
      %3287 = vmatprep.mubr.bf16.mxu0 0
      %3288 = vmatmul.mubr.bf16.gmra.mrb[0].mxu0 %v3165
      %v3289 = vpop.f32.mrb[0].mxu0
      %v3290 = vadd.f32 0.0, %v3289
      %v3291 = vpop.f32.mrb[0].mxu0
      %v3292 = vpop.f32.mrb[0].mxu0
      %v3293 = vadd.f32 0.0, %v3292
      %v3294 = vpop.f32.mrb[0].mxu0
      %3295 = vmatprep.mubr.bf16.mxu0 0
      %3296 = vmatmul.mubr.bf16.gmra.mrb[0].mxu0 %v3168
      %v3297 = vpop.f32.mrb[0].mxu0
      %v3298 = vadd.f32 0.0, %v3297
      %v3299 = vpop.f32.mrb[0].mxu0
      %v3300 = vpop.f32.mrb[0].mxu0
      %v3301 = vadd.f32 0.0, %v3300
      %v3302 = vpop.f32.mrb[0].mxu0
      %3303 = vmatprep.mubr.bf16.mxu0 0
      %3304 = vmatmul.mubr.bf16.gmra.mrb[0].mxu0 %v3171
      %v3305 = vpop.f32.mrb[0].mxu0
      %v3306 = vadd.f32 0.0, %v3305
      %v3307 = vpop.f32.mrb[0].mxu0
      %v3308 = vpop.f32.mrb[0].mxu0
      %v3309 = vadd.f32 0.0, %v3308
      %v3310 = vpop.f32.mrb[0].mxu0
      %3311 = vmatprep.mubr.bf16.mxu0 0
      %3312 = vmatmul.mubr.bf16.gmra.mrb[0].mxu0 %v3174
      %v3313 = vpop.f32.mrb[0].mxu0
      %v3314 = vadd.f32 0.0, %v3313
      %v3315 = vpop.f32.mrb[0].mxu0
      %v3316 = vpop.f32.mrb[0].mxu0
      %v3317 = vadd.f32 0.0, %v3316
      %v3318 = vpop.f32.mrb[0].mxu0
      %3319 = vmatprep.mubr.bf16.mxu0 0
      %3320 = vmatmul.mubr.bf16.gmra.mrb[0].mxu0 %v3177
      %v3321 = vpop.f32.mrb[0].mxu0
      %v3322 = vadd.f32 0.0, %v3321
      %v3323 = vpop.f32.mrb[0].mxu0
      %v3324 = vpop.f32.mrb[0].mxu0
      %v3325 = vadd.f32 0.0, %v3324
      %v3326 = vpop.f32.mrb[0].mxu0
      %3327 = vmatprep.mubr.bf16.mxu0 0
      %3328 = vmatmul.mubr.bf16.gmra.mrb[0].mxu0 %v3180
      %v3329 = vpop.f32.mrb[0].mxu0
      %v3330 = vadd.f32 0.0, %v3329
      %v3331 = vpop.f32.mrb[0].mxu0
      %v3332 = vpop.f32.mrb[0].mxu0
      %v3333 = vadd.f32 0.0, %v3332
      %v3334 = vpop.f32.mrb[0].mxu0
      %3335 = vmatprep.mubr.bf16.mxu0 0
      %3336 = vmatmul.mubr.bf16.gmra.mrb[0].mxu0 %v3183
      %v3337 = vpop.f32.mrb[0].mxu0
      %v3338 = vadd.f32 0.0, %v3337
      %v3339 = vpop.f32.mrb[0].mxu0
      %v3340 = vpop.f32.mrb[0].mxu0
      %v3341 = vadd.f32 0.0, %v3340
      %v3342 = vpop.f32.mrb[0].mxu0
      %3343 = vmatprep.mubr.bf16.mxu0 0
      %3344 = vmatmul.mubr.bf16.gmra.mrb[0].mxu0 %v3186
      %v3345 = vpop.f32.mrb[0].mxu0
      %v3346 = vadd.f32 0.0, %v3345
      %v3347 = vpop.f32.mrb[0].mxu0
      %v3348 = vpop.f32.mrb[0].mxu0
      %v3349 = vadd.f32 0.0, %v3348
      %v3350 = vpop.f32.mrb[0].mxu0
      %3351 = vdwg.mxu0
      %v3352 = vadd.f32 %v2626, %v3226
      %v3353 = vadd.f32 %v2627, %v3229
      %v3354 = vadd.f32 %v2628, %v3234
      %v3355 = vadd.f32 %v2629, %v3237
      %v3356 = vadd.f32 %v2630, %v3242
      %v3357 = vadd.f32 %v2631, %v3245
      %v3358 = vadd.f32 %v2632, %v3250
      %v3359 = vadd.f32 %v2633, %v3253
      %v3360 = vadd.f32 %v2634, %v3258
      %v3361 = vadd.f32 %v2635, %v3261
      %v3362 = vadd.f32 %v2636, %v3266
      %v3363 = vadd.f32 %v2637, %v3269
      %v3364 = vadd.f32 %v2638, %v3274
      %v3365 = vadd.f32 %v2639, %v3277
      %v3366 = vadd.f32 %v2640, %v3282
      %v3367 = vadd.f32 %v2641, %v3285
      %v3368 = vadd.f32 %v2642, %v3290
      %v3369 = vadd.f32 %v2643, %v3293
      %v3370 = vadd.f32 %v2644, %v3298
      %v3371 = vadd.f32 %v2645, %v3301
      %v3372 = vadd.f32 %v2646, %v3306
      %v3373 = vadd.f32 %v2647, %v3309
      %v3374 = vadd.f32 %v2648, %v3314
      %v3375 = vadd.f32 %v2649, %v3317
      %v3376 = vadd.f32 %v2650, %v3322
      %v3377 = vadd.f32 %v2651, %v3325
      %v3378 = vadd.f32 %v2652, %v3330
      %v3379 = vadd.f32 %v2653, %v3333
      %v3380 = vadd.f32 %v2654, %v3338
      %v3381 = vadd.f32 %v2655, %v3341
      %v3382 = vadd.f32 %v2656, %v3346
      %v3383 = vadd.f32 %v2657, %v3349
      %v3384 = vld [vmem:[%s733] sm:$0xe]
      %v3385 = vld [vmem:[%s733 + $0xc] sm:$0xe]
      %v3386 = vld [vmem:[%s733 + $0x18] sm:$0xe]
      %v3387 = vld [vmem:[%s733 + $0x24] sm:$0xe]
      %v3388 = vld [vmem:[%s733 + $0x30] sm:$0xe]
      %v3389 = vld [vmem:[%s733 + $0x3c] sm:$0xe]
      %v3390 = vld [vmem:[%s733 + $0x48] sm:$0xe]
      %v3391 = vld [vmem:[%s733 + $0x54] sm:$0xe]
      %v3392 = vld [vmem:[%s733 + $0x60] sm:$0xe]
      %v3393 = vld [vmem:[%s733 + $0x6c] sm:$0xe]
      %v3394 = vld [vmem:[%s733 + $0x78] sm:$0xe]
      %v3395 = vld [vmem:[%s733 + $0x84] sm:$0xe]
      %v3396 = vld [vmem:[%s733 + $0x90] sm:$0xe]
      %v3397 = vld [vmem:[%s733 + $0x9c] sm:$0xe]
      %v3398 = vld [vmem:[%s733 + $0xa8] sm:$0xe]
      %v3399 = vld [vmem:[%s733 + $0xb4] sm:$0xe]
      %v3448 = vrot.slane %v3384, 5
      %v3449 = vrot.slane %v3448, 4
      %v3450 = vrot.slane %v2659, 5
      %v3451 = vsel %vm1893, %v3449, %v3450
      %v3452 = vrot.slane %v3450, 4
      %v3453 = vrot.slane %v2660, 5
      %v3454 = vsel %vm1893, %v3452, %v3453
      %v3455 = vrot.slane %v3385, 5
      %v3456 = vrot.slane %v3455, 4
      %v3457 = vrot.slane %v2662, 5
      %v3458 = vsel %vm1893, %v3456, %v3457
      %v3459 = vrot.slane %v3457, 4
      %v3460 = vrot.slane %v2663, 5
      %v3461 = vsel %vm1893, %v3459, %v3460
      %v3462 = vrot.slane %v3386, 5
      %v3463 = vrot.slane %v3462, 4
      %v3464 = vrot.slane %v2665, 5
      %v3465 = vsel %vm1893, %v3463, %v3464
      %v3466 = vrot.slane %v3464, 4
      %v3467 = vrot.slane %v2666, 5
      %v3468 = vsel %vm1893, %v3466, %v3467
      %v3469 = vrot.slane %v3387, 5
      %v3470 = vrot.slane %v3469, 4
      %v3471 = vrot.slane %v2668, 5
      %v3472 = vsel %vm1893, %v3470, %v3471
      %v3473 = vrot.slane %v3471, 4
      %v3474 = vrot.slane %v2669, 5
      %v3475 = vsel %vm1893, %v3473, %v3474
      %v3476 = vrot.slane %v3388, 5
      %v3477 = vrot.slane %v3476, 4
      %v3478 = vrot.slane %v2671, 5
      %v3479 = vsel %vm1893, %v3477, %v3478
      %v3480 = vrot.slane %v3478, 4
      %v3481 = vrot.slane %v2672, 5
      %v3482 = vsel %vm1893, %v3480, %v3481
      %v3483 = vrot.slane %v3389, 5
      %v3484 = vrot.slane %v3483, 4
      %v3485 = vrot.slane %v2674, 5
      %v3486 = vsel %vm1893, %v3484, %v3485
      %v3487 = vrot.slane %v3485, 4
      %v3488 = vrot.slane %v2675, 5
      %v3489 = vsel %vm1893, %v3487, %v3488
      %v3490 = vrot.slane %v3390, 5
      %v3491 = vrot.slane %v3490, 4
      %v3492 = vrot.slane %v2677, 5
      %v3493 = vsel %vm1893, %v3491, %v3492
      %v3494 = vrot.slane %v3492, 4
      %v3495 = vrot.slane %v2678, 5
      %v3496 = vsel %vm1893, %v3494, %v3495
      %v3497 = vrot.slane %v3391, 5
      %v3498 = vrot.slane %v3497, 4
      %v3499 = vrot.slane %v2680, 5
      %v3500 = vsel %vm1893, %v3498, %v3499
      %v3501 = vrot.slane %v3499, 4
      %v3502 = vrot.slane %v2681, 5
      %v3503 = vsel %vm1893, %v3501, %v3502
      %v3504 = vrot.slane %v3392, 5
      %v3505 = vrot.slane %v3504, 4
      %v3506 = vrot.slane %v2683, 5
      %v3507 = vsel %vm1893, %v3505, %v3506
      %v3508 = vrot.slane %v3506, 4
      %v3509 = vrot.slane %v2684, 5
      %v3510 = vsel %vm1893, %v3508, %v3509
      %v3511 = vrot.slane %v3393, 5
      %v3512 = vrot.slane %v3511, 4
      %v3513 = vrot.slane %v2686, 5
      %v3514 = vsel %vm1893, %v3512, %v3513
      %v3515 = vrot.slane %v3513, 4
      %v3516 = vrot.slane %v2687, 5
      %v3517 = vsel %vm1893, %v3515, %v3516
      %v3518 = vrot.slane %v3394, 5
      %v3519 = vrot.slane %v3518, 4
      %v3520 = vrot.slane %v2689, 5
      %v3521 = vsel %vm1893, %v3519, %v3520
      %v3522 = vrot.slane %v3520, 4
      %v3523 = vrot.slane %v2690, 5
      %v3524 = vsel %vm1893, %v3522, %v3523
      %v3525 = vrot.slane %v3395, 5
      %v3526 = vrot.slane %v3525, 4
      %v3527 = vrot.slane %v2692, 5
      %v3528 = vsel %vm1893, %v3526, %v3527
      %v3529 = vrot.slane %v3527, 4
      %v3530 = vrot.slane %v2693, 5
      %v3531 = vsel %vm1893, %v3529, %v3530
      %v3532 = vrot.slane %v3396, 5
      %v3533 = vrot.slane %v3532, 4
      %v3534 = vrot.slane %v2695, 5
      %v3535 = vsel %vm1893, %v3533, %v3534
      %v3536 = vrot.slane %v3534, 4
      %v3537 = vrot.slane %v2696, 5
      %v3538 = vsel %vm1893, %v3536, %v3537
      %v3539 = vrot.slane %v3397, 5
      %v3540 = vrot.slane %v3539, 4
      %v3541 = vrot.slane %v2698, 5
      %v3542 = vsel %vm1893, %v3540, %v3541
      %v3543 = vrot.slane %v3541, 4
      %v3544 = vrot.slane %v2699, 5
      %v3545 = vsel %vm1893, %v3543, %v3544
      %v3546 = vrot.slane %v3398, 5
      %v3547 = vrot.slane %v3546, 4
      %v3548 = vrot.slane %v2701, 5
      %v3549 = vsel %vm1893, %v3547, %v3548
      %v3550 = vrot.slane %v3548, 4
      %v3551 = vrot.slane %v2702, 5
      %v3552 = vsel %vm1893, %v3550, %v3551
      %v3553 = vrot.slane %v3399, 5
      %v3554 = vrot.slane %v3553, 4
      %v3555 = vrot.slane %v2704, 5
      %v3556 = vsel %vm1893, %v3554, %v3555
      %v3557 = vrot.slane %v3555, 4
      %v3558 = vrot.slane %v2705, 5
      %v3559 = vsel %vm1893, %v3557, %v3558
      %s3560 = scalar_lea.vmem %s1, 10
      %v3561 = vld [vmem:[%s3560] sm:$0x3]
      %v3562 = vunpack.c.l.b16 %v3451
      %v3563 = vunpack.c.l.b16 %v3454
      %v3564 = vunpack.c.l.b16 %v3458
      %v3565 = vunpack.c.l.b16 %v3461
      %v3566 = vunpack.c.l.b16 %v3465
      %v3567 = vunpack.c.l.b16 %v3468
      %v3568 = vunpack.c.l.b16 %v3472
      %v3569 = vunpack.c.l.b16 %v3475
      %v3570 = vunpack.c.l.b16 %v3479
      %v3571 = vunpack.c.l.b16 %v3482
      %v3572 = vunpack.c.l.b16 %v3486
      %v3573 = vunpack.c.l.b16 %v3489
      %v3574 = vunpack.c.l.b16 %v3493
      %v3575 = vunpack.c.l.b16 %v3496
      %v3576 = vunpack.c.l.b16 %v3500
      %v3577 = vunpack.c.l.b16 %v3503
      %v3578 = vunpack.c.l.b16 %v3507
      %v3579 = vunpack.c.l.b16 %v3510
      %v3580 = vunpack.c.l.b16 %v3514
      %v3581 = vunpack.c.l.b16 %v3517
      %v3582 = vunpack.c.l.b16 %v3521
      %v3583 = vunpack.c.l.b16 %v3524
      %v3584 = vunpack.c.l.b16 %v3528
      %v3585 = vunpack.c.l.b16 %v3531
      %v3586 = vunpack.c.l.b16 %v3535
      %v3587 = vunpack.c.l.b16 %v3538
      %v3588 = vunpack.c.l.b16 %v3542
      %v3589 = vunpack.c.l.b16 %v3545
      %v3590 = vunpack.c.l.b16 %v3549
      %v3591 = vunpack.c.l.b16 %v3552
      %v3592 = vunpack.c.l.b16 %v3556
      %v3593 = vunpack.c.l.b16 %v3559
      %v3594 = vpack.c.b16 %v3563, %v3562
      %v3595 = vpack.c.b16 %v3565, %v3564
      %v3596 = vpack.c.b16 %v3567, %v3566
      %v3597 = vpack.c.b16 %v3569, %v3568
      %v3598 = vpack.c.b16 %v3571, %v3570
      %v3599 = vpack.c.b16 %v3573, %v3572
      %v3600 = vpack.c.b16 %v3575, %v3574
      %v3601 = vpack.c.b16 %v3577, %v3576
      %v3602 = vpack.c.b16 %v3579, %v3578
      %v3603 = vpack.c.b16 %v3581, %v3580
      %v3604 = vpack.c.b16 %v3583, %v3582
      %v3605 = vpack.c.b16 %v3585, %v3584
      %v3606 = vpack.c.b16 %v3587, %v3586
      %v3607 = vpack.c.b16 %v3589, %v3588
      %v3608 = vpack.c.b16 %v3591, %v3590
      %v3609 = vpack.c.b16 %v3593, %v3592
      %v3611 = vsel %vm1337, %v3594, 0
      %v3614 = vsel %vm1337, %v3595, 0
      %v3617 = vsel %vm1337, %v3596, 0
      %v3620 = vsel %vm1337, %v3597, 0
      %v3623 = vsel %vm1337, %v3598, 0
      %v3626 = vsel %vm1337, %v3599, 0
      %v3629 = vsel %vm1337, %v3600, 0
      %v3632 = vsel %vm1337, %v3601, 0
      %v3635 = vsel %vm1337, %v3602, 0
      %v3638 = vsel %vm1337, %v3603, 0
      %v3641 = vsel %vm1337, %v3604, 0
      %v3644 = vsel %vm1337, %v3605, 0
      %v3647 = vsel %vm1337, %v3606, 0
      %v3650 = vsel %vm1337, %v3607, 0
      %v3653 = vsel %vm1337, %v3608, 0
      %v3656 = vsel %vm1337, %v3609, 0
      %v3659 = vsel %vm1386, %v3561, 0
      %3661 = vmatprep.subr.bf16.mxu0 0
      %3662 = vmatpush1.bf16.msra.mxu0 %v3659
      %3663 = vmatprep.subr.bf16.mxu0 0
      %3664 = vmatpush1.bf16.msra.mxu0 0
      %3665 = vmatprep.subr.bf16.mxu0 0
      %3666 = vmatpush1.bf16.msra.mxu0 0
      %3667 = vmatprep.subr.bf16.mxu0 0
      %3668 = vmatpush1.bf16.msra.mxu0 0
      %3669 = vmatprep.subr.bf16.mxu0 0
      %3670 = vmatpush1.bf16.msra.mxu0 0
      %3671 = vmatprep.subr.bf16.mxu0 0
      %3672 = vmatpush1.bf16.msra.mxu0 0
      %3673 = vmatprep.subr.bf16.mxu0 0
      %3674 = vmatpush1.bf16.msra.mxu0 0
      %3675 = vmatprep.subr.bf16.mxu0 0
      %3676 = vmatpush1.bf16.msra.mxu0 0
      %3677 = vmatprep.subr.bf16.mxu0 0
      %3678 = vmatpush1.bf16.msra.mxu0 0
      %3679 = vmatprep.subr.bf16.mxu0 0
      %3680 = vmatpush1.bf16.msra.mxu0 0
      %3681 = vmatprep.subr.bf16.mxu0 0
      %3682 = vmatpush1.bf16.msra.mxu0 0
      %3683 = vmatprep.subr.bf16.mxu0 0
      %3684 = vmatpush1.bf16.msra.mxu0 0
      %3685 = vmatprep.subr.bf16.mxu0 0
      %3686 = vmatpush1.bf16.msra.mxu0 0
      %3687 = vmatprep.subr.bf16.mxu0 0
      %3688 = vmatpush1.bf16.msra.mxu0 0
      %3689 = vmatprep.subr.bf16.mxu0 0
      %3690 = vmatpush1.bf16.msra.mxu0 0
      %3691 = vmatprep.subr.bf16.mxu0 0
      %3692 = vmatpush1.bf16.msra.mxu0 0
      %3693 = vmatprep.mubr.bf16.mxu0 0
      %3694 = vmatmul.mubr.bf16.gmra.mrb[0].mxu0 %v3611
      %v3695 = vpop.f32.mrb[0].mxu0
      %v3696 = vadd.f32 0.0, %v3695
      %v3697 = vpop.f32.mrb[0].mxu0
      %v3698 = vpop.f32.mrb[0].mxu0
      %v3699 = vadd.f32 0.0, %v3698
      %v3700 = vpop.f32.mrb[0].mxu0
      %3701 = vmatprep.mubr.bf16.mxu0 0
      %3702 = vmatmul.mubr.bf16.gmra.mrb[0].mxu0 %v3614
      %v3703 = vpop.f32.mrb[0].mxu0
      %v3704 = vadd.f32 0.0, %v3703
      %v3705 = vpop.f32.mrb[0].mxu0
      %v3706 = vpop.f32.mrb[0].mxu0
      %v3707 = vadd.f32 0.0, %v3706
      %v3708 = vpop.f32.mrb[0].mxu0
      %3709 = vmatprep.mubr.bf16.mxu0 0
      %3710 = vmatmul.mubr.bf16.gmra.mrb[0].mxu0 %v3617
      %v3711 = vpop.f32.mrb[0].mxu0
      %v3712 = vadd.f32 0.0, %v3711
      %v3713 = vpop.f32.mrb[0].mxu0
      %v3714 = vpop.f32.mrb[0].mxu0
      %v3715 = vadd.f32 0.0, %v3714
      %v3716 = vpop.f32.mrb[0].mxu0
      %3717 = vmatprep.mubr.bf16.mxu0 0
      %3718 = vmatmul.mubr.bf16.gmra.mrb[0].mxu0 %v3620
      %v3719 = vpop.f32.mrb[0].mxu0
      %v3720 = vadd.f32 0.0, %v3719
      %v3721 = vpop.f32.mrb[0].mxu0
      %v3722 = vpop.f32.mrb[0].mxu0
      %v3723 = vadd.f32 0.0, %v3722
      %v3724 = vpop.f32.mrb[0].mxu0
      %3725 = vmatprep.mubr.bf16.mxu0 0
      %3726 = vmatmul.mubr.bf16.gmra.mrb[0].mxu0 %v3623
      %v3727 = vpop.f32.mrb[0].mxu0
      %v3728 = vadd.f32 0.0, %v3727
      %v3729 = vpop.f32.mrb[0].mxu0
      %v3730 = vpop.f32.mrb[0].mxu0
      %v3731 = vadd.f32 0.0, %v3730
      %v3732 = vpop.f32.mrb[0].mxu0
      %3733 = vmatprep.mubr.bf16.mxu0 0
      %3734 = vmatmul.mubr.bf16.gmra.mrb[0].mxu0 %v3626
      %v3735 = vpop.f32.mrb[0].mxu0
      %v3736 = vadd.f32 0.0, %v3735
      %v3737 = vpop.f32.mrb[0].mxu0
      %v3738 = vpop.f32.mrb[0].mxu0
      %v3739 = vadd.f32 0.0, %v3738
      %v3740 = vpop.f32.mrb[0].mxu0
      %3741 = vmatprep.mubr.bf16.mxu0 0
      %3742 = vmatmul.mubr.bf16.gmra.mrb[0].mxu0 %v3629
      %v3743 = vpop.f32.mrb[0].mxu0
      %v3744 = vadd.f32 0.0, %v3743
      %v3745 = vpop.f32.mrb[0].mxu0
      %v3746 = vpop.f32.mrb[0].mxu0
      %v3747 = vadd.f32 0.0, %v3746
      %v3748 = vpop.f32.mrb[0].mxu0
      %3749 = vmatprep.mubr.bf16.mxu0 0
      %3750 = vmatmul.mubr.bf16.gmra.mrb[0].mxu0 %v3632
      %v3751 = vpop.f32.mrb[0].mxu0
      %v3752 = vadd.f32 0.0, %v3751
      %v3753 = vpop.f32.mrb[0].mxu0
      %v3754 = vpop.f32.mrb[0].mxu0
      %v3755 = vadd.f32 0.0, %v3754
      %v3756 = vpop.f32.mrb[0].mxu0
      %3757 = vmatprep.mubr.bf16.mxu0 0
      %3758 = vmatmul.mubr.bf16.gmra.mrb[0].mxu0 %v3635
      %v3759 = vpop.f32.mrb[0].mxu0
      %v3760 = vadd.f32 0.0, %v3759
      %v3761 = vpop.f32.mrb[0].mxu0
      %v3762 = vpop.f32.mrb[0].mxu0
      %v3763 = vadd.f32 0.0, %v3762
      %v3764 = vpop.f32.mrb[0].mxu0
      %3765 = vmatprep.mubr.bf16.mxu0 0
      %3766 = vmatmul.mubr.bf16.gmra.mrb[0].mxu0 %v3638
      %v3767 = vpop.f32.mrb[0].mxu0
      %v3768 = vadd.f32 0.0, %v3767
      %v3769 = vpop.f32.mrb[0].mxu0
      %v3770 = vpop.f32.mrb[0].mxu0
      %v3771 = vadd.f32 0.0, %v3770
      %v3772 = vpop.f32.mrb[0].mxu0
      %3773 = vmatprep.mubr.bf16.mxu0 0
      %3774 = vmatmul.mubr.bf16.gmra.mrb[0].mxu0 %v3641
      %v3775 = vpop.f32.mrb[0].mxu0
      %v3776 = vadd.f32 0.0, %v3775
      %v3777 = vpop.f32.mrb[0].mxu0
      %v3778 = vpop.f32.mrb[0].mxu0
      %v3779 = vadd.f32 0.0, %v3778
      %v3780 = vpop.f32.mrb[0].mxu0
      %3781 = vmatprep.mubr.bf16.mxu0 0
      %3782 = vmatmul.mubr.bf16.gmra.mrb[0].mxu0 %v3644
      %v3783 = vpop.f32.mrb[0].mxu0
      %v3784 = vadd.f32 0.0, %v3783
      %v3785 = vpop.f32.mrb[0].mxu0
      %v3786 = vpop.f32.mrb[0].mxu0
      %v3787 = vadd.f32 0.0, %v3786
      %v3788 = vpop.f32.mrb[0].mxu0
      %3789 = vmatprep.mubr.bf16.mxu0 0
      %3790 = vmatmul.mubr.bf16.gmra.mrb[0].mxu0 %v3647
      %v3791 = vpop.f32.mrb[0].mxu0
      %v3792 = vadd.f32 0.0, %v3791
      %v3793 = vpop.f32.mrb[0].mxu0
      %v3794 = vpop.f32.mrb[0].mxu0
      %v3795 = vadd.f32 0.0, %v3794
      %v3796 = vpop.f32.mrb[0].mxu0
      %3797 = vmatprep.mubr.bf16.mxu0 0
      %3798 = vmatmul.mubr.bf16.gmra.mrb[0].mxu0 %v3650
      %v3799 = vpop.f32.mrb[0].mxu0
      %v3800 = vadd.f32 0.0, %v3799
      %v3801 = vpop.f32.mrb[0].mxu0
      %v3802 = vpop.f32.mrb[0].mxu0
      %v3803 = vadd.f32 0.0, %v3802
      %v3804 = vpop.f32.mrb[0].mxu0
      %3805 = vmatprep.mubr.bf16.mxu0 0
      %3806 = vmatmul.mubr.bf16.gmra.mrb[0].mxu0 %v3653
      %v3807 = vpop.f32.mrb[0].mxu0
      %v3808 = vadd.f32 0.0, %v3807
      %v3809 = vpop.f32.mrb[0].mxu0
      %v3810 = vpop.f32.mrb[0].mxu0
      %v3811 = vadd.f32 0.0, %v3810
      %v3812 = vpop.f32.mrb[0].mxu0
      %3813 = vmatprep.mubr.bf16.mxu0 0
      %3814 = vmatmul.mubr.bf16.gmra.mrb[0].mxu0 %v3656
      %v3815 = vpop.f32.mrb[0].mxu0
      %v3816 = vadd.f32 0.0, %v3815
      %v3817 = vpop.f32.mrb[0].mxu0
      %v3818 = vpop.f32.mrb[0].mxu0
      %v3819 = vadd.f32 0.0, %v3818
      %v3820 = vpop.f32.mrb[0].mxu0
      %3821 = vdwg.mxu0
      %v3822 = vadd.f32 %v3352, %v3696
      %v3823 = vadd.f32 %v3353, %v3699
      %v3824 = vadd.f32 %v3354, %v3704
      %v3825 = vadd.f32 %v3355, %v3707
      %v3826 = vadd.f32 %v3356, %v3712
      %v3827 = vadd.f32 %v3357, %v3715
      %v3828 = vadd.f32 %v3358, %v3720
      %v3829 = vadd.f32 %v3359, %v3723
      %v3830 = vadd.f32 %v3360, %v3728
      %v3831 = vadd.f32 %v3361, %v3731
      %v3832 = vadd.f32 %v3362, %v3736
      %v3833 = vadd.f32 %v3363, %v3739
      %v3834 = vadd.f32 %v3364, %v3744
      %v3835 = vadd.f32 %v3365, %v3747
      %v3836 = vadd.f32 %v3366, %v3752
      %v3837 = vadd.f32 %v3367, %v3755
      %v3838 = vadd.f32 %v3368, %v3760
      %v3839 = vadd.f32 %v3369, %v3763
      %v3840 = vadd.f32 %v3370, %v3768
      %v3841 = vadd.f32 %v3371, %v3771
      %v3842 = vadd.f32 %v3372, %v3776
      %v3843 = vadd.f32 %v3373, %v3779
      %v3844 = vadd.f32 %v3374, %v3784
      %v3845 = vadd.f32 %v3375, %v3787
      %v3846 = vadd.f32 %v3376, %v3792
      %v3847 = vadd.f32 %v3377, %v3795
      %v3848 = vadd.f32 %v3378, %v3800
      %v3849 = vadd.f32 %v3379, %v3803
      %v3850 = vadd.f32 %v3380, %v3808
      %v3851 = vadd.f32 %v3381, %v3811
      %v3852 = vadd.f32 %v3382, %v3816
      %v3853 = vadd.f32 %v3383, %v3819
      %s3854 = scalar_lea.vmem [#allocation2], 24
      %v3855 = vld [vmem:[%s3854] sm:$0xf]
      %v3856 = vld [vmem:[%s3854 + $0x4] sm:$0xf]
      %v3857 = vld [vmem:[%s3854 + $0xc] sm:$0xf]
      %v3858 = vld [vmem:[%s3854 + $0x10] sm:$0xf]
      %v3859 = vld [vmem:[%s3854 + $0x18] sm:$0xf]
      %v3860 = vld [vmem:[%s3854 + $0x1c] sm:$0xf]
      %v3861 = vld [vmem:[%s3854 + $0x24] sm:$0xf]
      %v3862 = vld [vmem:[%s3854 + $0x28] sm:$0xf]
      %v3863 = vld [vmem:[%s3854 + $0x30] sm:$0xf]
      %v3864 = vld [vmem:[%s3854 + $0x34] sm:$0xf]
      %v3865 = vld [vmem:[%s3854 + $0x3c] sm:$0xf]
      %v3866 = vld [vmem:[%s3854 + $0x40] sm:$0xf]
      %v3867 = vld [vmem:[%s3854 + $0x48] sm:$0xf]
      %v3868 = vld [vmem:[%s3854 + $0x4c] sm:$0xf]
      %v3869 = vld [vmem:[%s3854 + $0x54] sm:$0xf]
      %v3870 = vld [vmem:[%s3854 + $0x58] sm:$0xf]
      %v3871 = vld [vmem:[%s3854 + $0x60] sm:$0xf]
      %v3872 = vld [vmem:[%s3854 + $0x64] sm:$0xf]
      %v3873 = vld [vmem:[%s3854 + $0x6c] sm:$0xf]
      %v3874 = vld [vmem:[%s3854 + $0x70] sm:$0xf]
      %v3875 = vld [vmem:[%s3854 + $0x78] sm:$0xf]
      %v3876 = vld [vmem:[%s3854 + $0x7c] sm:$0xf]
      %v3877 = vld [vmem:[%s3854 + $0x84] sm:$0xf]
      %v3878 = vld [vmem:[%s3854 + $0x88] sm:$0xf]
      %v3879 = vld [vmem:[%s3854 + $0x90] sm:$0xf]
      %v3880 = vld [vmem:[%s3854 + $0x94] sm:$0xf]
      %v3881 = vld [vmem:[%s3854 + $0x9c] sm:$0xf]
      %v3882 = vld [vmem:[%s3854 + $0xa0] sm:$0xf]
      %v3883 = vld [vmem:[%s3854 + $0xa8] sm:$0xf]
      %v3884 = vld [vmem:[%s3854 + $0xac] sm:$0xf]
      %v3885 = vld [vmem:[%s3854 + $0xb4] sm:$0xf]
      %v3886 = vld [vmem:[%s3854 + $0xb8] sm:$0xf]
      %s3887 = scalar_lea.vmem %s1, 12
      %v3888 = vld [vmem:[%s3887] sm:$0x3]
      %v3921 = vunpack.c.l.b16 %v3855
      %v3922 = vunpack.c.l.b16 %v3856
      %v3923 = vunpack.c.l.b16 %v3857
      %v3924 = vunpack.c.l.b16 %v3858
      %v3925 = vunpack.c.l.b16 %v3859
      %v3926 = vunpack.c.l.b16 %v3860
      %v3927 = vunpack.c.l.b16 %v3861
      %v3928 = vunpack.c.l.b16 %v3862
      %v3929 = vunpack.c.l.b16 %v3863
      %v3930 = vunpack.c.l.b16 %v3864
      %v3931 = vunpack.c.l.b16 %v3865
      %v3932 = vunpack.c.l.b16 %v3866
      %v3933 = vunpack.c.l.b16 %v3867
      %v3934 = vunpack.c.l.b16 %v3868
      %v3935 = vunpack.c.l.b16 %v3869
      %v3936 = vunpack.c.l.b16 %v3870
      %v3937 = vunpack.c.l.b16 %v3871
      %v3938 = vunpack.c.l.b16 %v3872
      %v3939 = vunpack.c.l.b16 %v3873
      %v3940 = vunpack.c.l.b16 %v3874
      %v3941 = vunpack.c.l.b16 %v3875
      %v3942 = vunpack.c.l.b16 %v3876
      %v3943 = vunpack.c.l.b16 %v3877
      %v3944 = vunpack.c.l.b16 %v3878
      %v3945 = vunpack.c.l.b16 %v3879
      %v3946 = vunpack.c.l.b16 %v3880
      %v3947 = vunpack.c.l.b16 %v3881
      %v3948 = vunpack.c.l.b16 %v3882
      %v3949 = vunpack.c.l.b16 %v3883
      %v3950 = vunpack.c.l.b16 %v3884
      %v3951 = vunpack.c.l.b16 %v3885
      %v3952 = vunpack.c.l.b16 %v3886
      %v3953 = vpack.c.b16 %v3922, %v3921
      %v3954 = vpack.c.b16 %v3924, %v3923
      %v3955 = vpack.c.b16 %v3926, %v3925
      %v3956 = vpack.c.b16 %v3928, %v3927
      %v3957 = vpack.c.b16 %v3930, %v3929
      %v3958 = vpack.c.b16 %v3932, %v3931
      %v3959 = vpack.c.b16 %v3934, %v3933
      %v3960 = vpack.c.b16 %v3936, %v3935
      %v3961 = vpack.c.b16 %v3938, %v3937
      %v3962 = vpack.c.b16 %v3940, %v3939
      %v3963 = vpack.c.b16 %v3942, %v3941
      %v3964 = vpack.c.b16 %v3944, %v3943
      %v3965 = vpack.c.b16 %v3946, %v3945
      %v3966 = vpack.c.b16 %v3948, %v3947
      %v3967 = vpack.c.b16 %v3950, %v3949
      %v3968 = vpack.c.b16 %v3952, %v3951
      %v3970 = vsel %vm1337, %v3953, 0
      %v3973 = vsel %vm1337, %v3954, 0
      %v3976 = vsel %vm1337, %v3955, 0
      %v3979 = vsel %vm1337, %v3956, 0
      %v3982 = vsel %vm1337, %v3957, 0
      %v3985 = vsel %vm1337, %v3958, 0
      %v3988 = vsel %vm1337, %v3959, 0
      %v3991 = vsel %vm1337, %v3960, 0
      %v3994 = vsel %vm1337, %v3961, 0
      %v3997 = vsel %vm1337, %v3962, 0
      %v4000 = vsel %vm1337, %v3963, 0
      %v4003 = vsel %vm1337, %v3964, 0
      %v4006 = vsel %vm1337, %v3965, 0
      %v4009 = vsel %vm1337, %v3966, 0
      %v4012 = vsel %vm1337, %v3967, 0
      %v4015 = vsel %vm1337, %v3968, 0
      %v4018 = vsel %vm1386, %v3888, 0
      %4020 = vmatprep.subr.bf16.mxu0 0
      %4021 = vmatpush1.bf16.msra.mxu0 %v4018
      %4022 = vmatprep.subr.bf16.mxu0 0
      %4023 = vmatpush1.bf16.msra.mxu0 0
      %4024 = vmatprep.subr.bf16.mxu0 0
      %4025 = vmatpush1.bf16.msra.mxu0 0
      %4026 = vmatprep.subr.bf16.mxu0 0
      %4027 = vmatpush1.bf16.msra.mxu0 0
      %4028 = vmatprep.subr.bf16.mxu0 0
      %4029 = vmatpush1.bf16.msra.mxu0 0
      %4030 = vmatprep.subr.bf16.mxu0 0
      %4031 = vmatpush1.bf16.msra.mxu0 0
      %4032 = vmatprep.subr.bf16.mxu0 0
      %4033 = vmatpush1.bf16.msra.mxu0 0
      %4034 = vmatprep.subr.bf16.mxu0 0
      %4035 = vmatpush1.bf16.msra.mxu0 0
      %4036 = vmatprep.subr.bf16.mxu0 0
      %4037 = vmatpush1.bf16.msra.mxu0 0
      %4038 = vmatprep.subr.bf16.mxu0 0
      %4039 = vmatpush1.bf16.msra.mxu0 0
      %4040 = vmatprep.subr.bf16.mxu0 0
      %4041 = vmatpush1.bf16.msra.mxu0 0
      %4042 = vmatprep.subr.bf16.mxu0 0
      %4043 = vmatpush1.bf16.msra.mxu0 0
      %4044 = vmatprep.subr.bf16.mxu0 0
      %4045 = vmatpush1.bf16.msra.mxu0 0
      %4046 = vmatprep.subr.bf16.mxu0 0
      %4047 = vmatpush1.bf16.msra.mxu0 0
      %4048 = vmatprep.subr.bf16.mxu0 0
      %4049 = vmatpush1.bf16.msra.mxu0 0
      %4050 = vmatprep.subr.bf16.mxu0 0
      %4051 = vmatpush1.bf16.msra.mxu0 0
      %4052 = vmatprep.mubr.bf16.mxu0 0
      %4053 = vmatmul.mubr.bf16.gmra.mrb[0].mxu0 %v3970
      %v4054 = vpop.f32.mrb[0].mxu0
      %v4055 = vadd.f32 0.0, %v4054
      %v4056 = vpop.f32.mrb[0].mxu0
      %v4057 = vpop.f32.mrb[0].mxu0
      %v4058 = vadd.f32 0.0, %v4057
      %v4059 = vpop.f32.mrb[0].mxu0
      %4060 = vmatprep.mubr.bf16.mxu0 0
      %4061 = vmatmul.mubr.bf16.gmra.mrb[0].mxu0 %v3973
      %v4062 = vpop.f32.mrb[0].mxu0
      %v4063 = vadd.f32 0.0, %v4062
      %v4064 = vpop.f32.mrb[0].mxu0
      %v4065 = vpop.f32.mrb[0].mxu0
      %v4066 = vadd.f32 0.0, %v4065
      %v4067 = vpop.f32.mrb[0].mxu0
      %4068 = vmatprep.mubr.bf16.mxu0 0
      %4069 = vmatmul.mubr.bf16.gmra.mrb[0].mxu0 %v3976
      %v4070 = vpop.f32.mrb[0].mxu0
      %v4071 = vadd.f32 0.0, %v4070
      %v4072 = vpop.f32.mrb[0].mxu0
      %v4073 = vpop.f32.mrb[0].mxu0
      %v4074 = vadd.f32 0.0, %v4073
      %v4075 = vpop.f32.mrb[0].mxu0
      %4076 = vmatprep.mubr.bf16.mxu0 0
      %4077 = vmatmul.mubr.bf16.gmra.mrb[0].mxu0 %v3979
      %v4078 = vpop.f32.mrb[0].mxu0
      %v4079 = vadd.f32 0.0, %v4078
      %v4080 = vpop.f32.mrb[0].mxu0
      %v4081 = vpop.f32.mrb[0].mxu0
      %v4082 = vadd.f32 0.0, %v4081
      %v4083 = vpop.f32.mrb[0].mxu0
      %4084 = vmatprep.mubr.bf16.mxu0 0
      %4085 = vmatmul.mubr.bf16.gmra.mrb[0].mxu0 %v3982
      %v4086 = vpop.f32.mrb[0].mxu0
      %v4087 = vadd.f32 0.0, %v4086
      %v4088 = vpop.f32.mrb[0].mxu0
      %v4089 = vpop.f32.mrb[0].mxu0
      %v4090 = vadd.f32 0.0, %v4089
      %v4091 = vpop.f32.mrb[0].mxu0
      %4092 = vmatprep.mubr.bf16.mxu0 0
      %4093 = vmatmul.mubr.bf16.gmra.mrb[0].mxu0 %v3985
      %v4094 = vpop.f32.mrb[0].mxu0
      %v4095 = vadd.f32 0.0, %v4094
      %v4096 = vpop.f32.mrb[0].mxu0
      %v4097 = vpop.f32.mrb[0].mxu0
      %v4098 = vadd.f32 0.0, %v4097
      %v4099 = vpop.f32.mrb[0].mxu0
      %4100 = vmatprep.mubr.bf16.mxu0 0
      %4101 = vmatmul.mubr.bf16.gmra.mrb[0].mxu0 %v3988
      %v4102 = vpop.f32.mrb[0].mxu0
      %v4103 = vadd.f32 0.0, %v4102
      %v4104 = vpop.f32.mrb[0].mxu0
      %v4105 = vpop.f32.mrb[0].mxu0
      %v4106 = vadd.f32 0.0, %v4105
      %v4107 = vpop.f32.mrb[0].mxu0
      %4108 = vmatprep.mubr.bf16.mxu0 0
      %4109 = vmatmul.mubr.bf16.gmra.mrb[0].mxu0 %v3991
      %v4110 = vpop.f32.mrb[0].mxu0
      %v4111 = vadd.f32 0.0, %v4110
      %v4112 = vpop.f32.mrb[0].mxu0
      %v4113 = vpop.f32.mrb[0].mxu0
      %v4114 = vadd.f32 0.0, %v4113
      %v4115 = vpop.f32.mrb[0].mxu0
      %4116 = vmatprep.mubr.bf16.mxu0 0
      %4117 = vmatmul.mubr.bf16.gmra.mrb[0].mxu0 %v3994
      %v4118 = vpop.f32.mrb[0].mxu0
      %v4119 = vadd.f32 0.0, %v4118
      %v4120 = vpop.f32.mrb[0].mxu0
      %v4121 = vpop.f32.mrb[0].mxu0
      %v4122 = vadd.f32 0.0, %v4121
      %v4123 = vpop.f32.mrb[0].mxu0
      %4124 = vmatprep.mubr.bf16.mxu0 0
      %4125 = vmatmul.mubr.bf16.gmra.mrb[0].mxu0 %v3997
      %v4126 = vpop.f32.mrb[0].mxu0
      %v4127 = vadd.f32 0.0, %v4126
      %v4128 = vpop.f32.mrb[0].mxu0
      %v4129 = vpop.f32.mrb[0].mxu0
      %v4130 = vadd.f32 0.0, %v4129
      %v4131 = vpop.f32.mrb[0].mxu0
      %4132 = vmatprep.mubr.bf16.mxu0 0
      %4133 = vmatmul.mubr.bf16.gmra.mrb[0].mxu0 %v4000
      %v4134 = vpop.f32.mrb[0].mxu0
      %v4135 = vadd.f32 0.0, %v4134
      %v4136 = vpop.f32.mrb[0].mxu0
      %v4137 = vpop.f32.mrb[0].mxu0
      %v4138 = vadd.f32 0.0, %v4137
      %v4139 = vpop.f32.mrb[0].mxu0
      %4140 = vmatprep.mubr.bf16.mxu0 0
      %4141 = vmatmul.mubr.bf16.gmra.mrb[0].mxu0 %v4003
      %v4142 = vpop.f32.mrb[0].mxu0
      %v4143 = vadd.f32 0.0, %v4142
      %v4144 = vpop.f32.mrb[0].mxu0
      %v4145 = vpop.f32.mrb[0].mxu0
      %v4146 = vadd.f32 0.0, %v4145
      %v4147 = vpop.f32.mrb[0].mxu0
      %4148 = vmatprep.mubr.bf16.mxu0 0
      %4149 = vmatmul.mubr.bf16.gmra.mrb[0].mxu0 %v4006
      %v4150 = vpop.f32.mrb[0].mxu0
      %v4151 = vadd.f32 0.0, %v4150
      %v4152 = vpop.f32.mrb[0].mxu0
      %v4153 = vpop.f32.mrb[0].mxu0
      %v4154 = vadd.f32 0.0, %v4153
      %v4155 = vpop.f32.mrb[0].mxu0
      %4156 = vmatprep.mubr.bf16.mxu0 0
      %4157 = vmatmul.mubr.bf16.gmra.mrb[0].mxu0 %v4009
      %v4158 = vpop.f32.mrb[0].mxu0
      %v4159 = vadd.f32 0.0, %v4158
      %v4160 = vpop.f32.mrb[0].mxu0
      %v4161 = vpop.f32.mrb[0].mxu0
      %v4162 = vadd.f32 0.0, %v4161
      %v4163 = vpop.f32.mrb[0].mxu0
      %4164 = vmatprep.mubr.bf16.mxu0 0
      %4165 = vmatmul.mubr.bf16.gmra.mrb[0].mxu0 %v4012
      %v4166 = vpop.f32.mrb[0].mxu0
      %v4167 = vadd.f32 0.0, %v4166
      %v4168 = vpop.f32.mrb[0].mxu0
      %v4169 = vpop.f32.mrb[0].mxu0
      %v4170 = vadd.f32 0.0, %v4169
      %v4171 = vpop.f32.mrb[0].mxu0
      %4172 = vmatprep.mubr.bf16.mxu0 0
      %4173 = vmatmul.mubr.bf16.gmra.mrb[0].mxu0 %v4015
      %v4174 = vpop.f32.mrb[0].mxu0
      %v4175 = vadd.f32 0.0, %v4174
      %v4176 = vpop.f32.mrb[0].mxu0
      %v4177 = vpop.f32.mrb[0].mxu0
      %v4178 = vadd.f32 0.0, %v4177
      %v4179 = vpop.f32.mrb[0].mxu0
      %4180 = vdwg.mxu0
      %v4181 = vadd.f32 %v3822, %v4055
      %v4182 = vadd.f32 %v3823, %v4058
      %v4183 = vadd.f32 %v3824, %v4063
      %v4184 = vadd.f32 %v3825, %v4066
      %v4185 = vadd.f32 %v3826, %v4071
      %v4186 = vadd.f32 %v3827, %v4074
      %v4187 = vadd.f32 %v3828, %v4079
      %v4188 = vadd.f32 %v3829, %v4082
      %v4189 = vadd.f32 %v3830, %v4087
      %v4190 = vadd.f32 %v3831, %v4090
      %v4191 = vadd.f32 %v3832, %v4095
      %v4192 = vadd.f32 %v3833, %v4098
      %v4193 = vadd.f32 %v3834, %v4103
      %v4194 = vadd.f32 %v3835, %v4106
      %v4195 = vadd.f32 %v3836, %v4111
      %v4196 = vadd.f32 %v3837, %v4114
      %v4197 = vadd.f32 %v3838, %v4119
      %v4198 = vadd.f32 %v3839, %v4122
      %v4199 = vadd.f32 %v3840, %v4127
      %v4200 = vadd.f32 %v3841, %v4130
      %v4201 = vadd.f32 %v3842, %v4135
      %v4202 = vadd.f32 %v3843, %v4138
      %v4203 = vadd.f32 %v3844, %v4143
      %v4204 = vadd.f32 %v3845, %v4146
      %v4205 = vadd.f32 %v3846, %v4151
      %v4206 = vadd.f32 %v3847, %v4154
      %v4207 = vadd.f32 %v3848, %v4159
      %v4208 = vadd.f32 %v3849, %v4162
      %v4209 = vadd.f32 %v3850, %v4167
      %v4210 = vadd.f32 %v3851, %v4170
      %v4211 = vadd.f32 %v3852, %v4175
      %v4212 = vadd.f32 %v3853, %v4178
      %v4213 = vld [vmem:[%s3854] sm:$0xf]
      %v4214 = vld [vmem:[%s3854 + $0x4] sm:$0xf]
      %v4215 = vld [vmem:[%s3854 + $0x8] sm:$0x1]
      %v4216 = vld [vmem:[%s3854 + $0xc] sm:$0xf]
      %v4217 = vld [vmem:[%s3854 + $0x10] sm:$0xf]
      %v4218 = vld [vmem:[%s3854 + $0x14] sm:$0x1]
      %v4219 = vld [vmem:[%s3854 + $0x18] sm:$0xf]
      %v4220 = vld [vmem:[%s3854 + $0x1c] sm:$0xf]
      %v4221 = vld [vmem:[%s3854 + $0x20] sm:$0x1]
      %v4222 = vld [vmem:[%s3854 + $0x24] sm:$0xf]
      %v4223 = vld [vmem:[%s3854 + $0x28] sm:$0xf]
      %v4224 = vld [vmem:[%s3854 + $0x2c] sm:$0x1]
      %v4225 = vld [vmem:[%s3854 + $0x30] sm:$0xf]
      %v4226 = vld [vmem:[%s3854 + $0x34] sm:$0xf]
      %v4227 = vld [vmem:[%s3854 + $0x38] sm:$0x1]
      %v4228 = vld [vmem:[%s3854 + $0x3c] sm:$0xf]
      %v4229 = vld [vmem:[%s3854 + $0x40] sm:$0xf]
      %v4230 = vld [vmem:[%s3854 + $0x44] sm:$0x1]
      %v4231 = vld [vmem:[%s3854 + $0x48] sm:$0xf]
      %v4232 = vld [vmem:[%s3854 + $0x4c] sm:$0xf]
      %v4233 = vld [vmem:[%s3854 + $0x50] sm:$0x1]
      %v4234 = vld [vmem:[%s3854 + $0x54] sm:$0xf]
      %v4235 = vld [vmem:[%s3854 + $0x58] sm:$0xf]
      %v4236 = vld [vmem:[%s3854 + $0x5c] sm:$0x1]
      %v4237 = vld [vmem:[%s3854 + $0x60] sm:$0xf]
      %v4238 = vld [vmem:[%s3854 + $0x64] sm:$0xf]
      %v4239 = vld [vmem:[%s3854 + $0x68] sm:$0x1]
      %v4240 = vld [vmem:[%s3854 + $0x6c] sm:$0xf]
      %v4241 = vld [vmem:[%s3854 + $0x70] sm:$0xf]
      %v4242 = vld [vmem:[%s3854 + $0x74] sm:$0x1]
      %v4243 = vld [vmem:[%s3854 + $0x78] sm:$0xf]
      %v4244 = vld [vmem:[%s3854 + $0x7c] sm:$0xf]
      %v4245 = vld [vmem:[%s3854 + $0x80] sm:$0x1]
      %v4246 = vld [vmem:[%s3854 + $0x84] sm:$0xf]
      %v4247 = vld [vmem:[%s3854 + $0x88] sm:$0xf]
      %v4248 = vld [vmem:[%s3854 + $0x8c] sm:$0x1]
      %v4249 = vld [vmem:[%s3854 + $0x90] sm:$0xf]
      %v4250 = vld [vmem:[%s3854 + $0x94] sm:$0xf]
      %v4251 = vld [vmem:[%s3854 + $0x98] sm:$0x1]
      %v4252 = vld [vmem:[%s3854 + $0x9c] sm:$0xf]
      %v4253 = vld [vmem:[%s3854 + $0xa0] sm:$0xf]
      %v4254 = vld [vmem:[%s3854 + $0xa4] sm:$0x1]
      %v4255 = vld [vmem:[%s3854 + $0xa8] sm:$0xf]
      %v4256 = vld [vmem:[%s3854 + $0xac] sm:$0xf]
      %v4257 = vld [vmem:[%s3854 + $0xb0] sm:$0x1]
      %v4258 = vld [vmem:[%s3854 + $0xb4] sm:$0xf]
      %v4259 = vld [vmem:[%s3854 + $0xb8] sm:$0xf]
      %v4260 = vld [vmem:[%s3854 + $0xbc] sm:$0x1]
      %v4262 = vshrl.u32 %v4213, 16
      %v4264 = vrot.slane %v4262, 4
      %v4265 = vshll.u32 %v4213, 16
      %v4267 = vrot.slane %v4265, 5
      %v4268 = vor.u32 %v4264, %v4267
      %v4269 = vrot.slane %v4268, 4
      %v4271 = vshll.u32 %v4214, 16
      %v4273 = vrot.slane %v4271, 5
      %v4274 = vsel %vm902, %v4269, %v4273
      %v4275 = vshrl.u32 %v4214, 16
      %v4277 = vrot.slane %v4275, 4
      %v4278 = vor.u32 %v4277, %v4273
      %v4279 = vrot.slane %v4278, 4
      %v4281 = vshll.u32 %v4215, 16
      %v4283 = vrot.slane %v4281, 5
      %v4284 = vsel %vm902, %v4279, %v4283
      %v4286 = vshrl.u32 %v4216, 16
      %v4288 = vrot.slane %v4286, 4
      %v4289 = vshll.u32 %v4216, 16
      %v4291 = vrot.slane %v4289, 5
      %v4292 = vor.u32 %v4288, %v4291
      %v4293 = vrot.slane %v4292, 4
      %v4295 = vshll.u32 %v4217, 16
      %v4297 = vrot.slane %v4295, 5
      %v4298 = vsel %vm902, %v4293, %v4297
      %v4299 = vshrl.u32 %v4217, 16
      %v4301 = vrot.slane %v4299, 4
      %v4302 = vor.u32 %v4301, %v4297
      %v4303 = vrot.slane %v4302, 4
      %v4305 = vshll.u32 %v4218, 16
      %v4307 = vrot.slane %v4305, 5
      %v4308 = vsel %vm902, %v4303, %v4307
      %v4310 = vshrl.u32 %v4219, 16
      %v4312 = vrot.slane %v4310, 4
      %v4313 = vshll.u32 %v4219, 16
      %v4315 = vrot.slane %v4313, 5
      %v4316 = vor.u32 %v4312, %v4315
      %v4317 = vrot.slane %v4316, 4
      %v4319 = vshll.u32 %v4220, 16
      %v4321 = vrot.slane %v4319, 5
      %v4322 = vsel %vm902, %v4317, %v4321
      %v4323 = vshrl.u32 %v4220, 16
      %v4325 = vrot.slane %v4323, 4
      %v4326 = vor.u32 %v4325, %v4321
      %v4327 = vrot.slane %v4326, 4
      %v4329 = vshll.u32 %v4221, 16
      %v4331 = vrot.slane %v4329, 5
      %v4332 = vsel %vm902, %v4327, %v4331
      %v4334 = vshrl.u32 %v4222, 16
      %v4336 = vrot.slane %v4334, 4
      %v4337 = vshll.u32 %v4222, 16
      %v4339 = vrot.slane %v4337, 5
      %v4340 = vor.u32 %v4336, %v4339
      %v4341 = vrot.slane %v4340, 4
      %v4343 = vshll.u32 %v4223, 16
      %v4345 = vrot.slane %v4343, 5
      %v4346 = vsel %vm902, %v4341, %v4345
      %v4347 = vshrl.u32 %v4223, 16
      %v4349 = vrot.slane %v4347, 4
      %v4350 = vor.u32 %v4349, %v4345
      %v4351 = vrot.slane %v4350, 4
      %v4353 = vshll.u32 %v4224, 16
      %v4355 = vrot.slane %v4353, 5
      %v4356 = vsel %vm902, %v4351, %v4355
      %v4358 = vshrl.u32 %v4225, 16
      %v4360 = vrot.slane %v4358, 4
      %v4361 = vshll.u32 %v4225, 16
      %v4363 = vrot.slane %v4361, 5
      %v4364 = vor.u32 %v4360, %v4363
      %v4365 = vrot.slane %v4364, 4
      %v4367 = vshll.u32 %v4226, 16
      %v4369 = vrot.slane %v4367, 5
      %v4370 = vsel %vm902, %v4365, %v4369
      %v4371 = vshrl.u32 %v4226, 16
      %v4373 = vrot.slane %v4371, 4
      %v4374 = vor.u32 %v4373, %v4369
      %v4375 = vrot.slane %v4374, 4
      %v4377 = vshll.u32 %v4227, 16
      %v4379 = vrot.slane %v4377, 5
      %v4380 = vsel %vm902, %v4375, %v4379
      %v4382 = vshrl.u32 %v4228, 16
      %v4384 = vrot.slane %v4382, 4
      %v4385 = vshll.u32 %v4228, 16
      %v4387 = vrot.slane %v4385, 5
      %v4388 = vor.u32 %v4384, %v4387
      %v4389 = vrot.slane %v4388, 4
      %v4391 = vshll.u32 %v4229, 16
      %v4393 = vrot.slane %v4391, 5
      %v4394 = vsel %vm902, %v4389, %v4393
      %v4395 = vshrl.u32 %v4229, 16
      %v4397 = vrot.slane %v4395, 4
      %v4398 = vor.u32 %v4397, %v4393
      %v4399 = vrot.slane %v4398, 4
      %v4401 = vshll.u32 %v4230, 16
      %v4403 = vrot.slane %v4401, 5
      %v4404 = vsel %vm902, %v4399, %v4403
      %v4406 = vshrl.u32 %v4231, 16
      %v4408 = vrot.slane %v4406, 4
      %v4409 = vshll.u32 %v4231, 16
      %v4411 = vrot.slane %v4409, 5
      %v4412 = vor.u32 %v4408, %v4411
      %v4413 = vrot.slane %v4412, 4
      %v4415 = vshll.u32 %v4232, 16
      %v4417 = vrot.slane %v4415, 5
      %v4418 = vsel %vm902, %v4413, %v4417
      %v4419 = vshrl.u32 %v4232, 16
      %v4421 = vrot.slane %v4419, 4
      %v4422 = vor.u32 %v4421, %v4417
      %v4423 = vrot.slane %v4422, 4
      %v4425 = vshll.u32 %v4233, 16
      %v4427 = vrot.slane %v4425, 5
      %v4428 = vsel %vm902, %v4423, %v4427
      %v4430 = vshrl.u32 %v4234, 16
      %v4432 = vrot.slane %v4430, 4
      %v4433 = vshll.u32 %v4234, 16
      %v4435 = vrot.slane %v4433, 5
      %v4436 = vor.u32 %v4432, %v4435
      %v4437 = vrot.slane %v4436, 4
      %v4439 = vshll.u32 %v4235, 16
      %v4441 = vrot.slane %v4439, 5
      %v4442 = vsel %vm902, %v4437, %v4441
      %v4443 = vshrl.u32 %v4235, 16
      %v4445 = vrot.slane %v4443, 4
      %v4446 = vor.u32 %v4445, %v4441
      %v4447 = vrot.slane %v4446, 4
      %v4449 = vshll.u32 %v4236, 16
      %v4451 = vrot.slane %v4449, 5
      %v4452 = vsel %vm902, %v4447, %v4451
      %v4454 = vshrl.u32 %v4237, 16
      %v4456 = vrot.slane %v4454, 4
      %v4457 = vshll.u32 %v4237, 16
      %v4459 = vrot.slane %v4457, 5
      %v4460 = vor.u32 %v4456, %v4459
      %v4461 = vrot.slane %v4460, 4
      %v4463 = vshll.u32 %v4238, 16
      %v4465 = vrot.slane %v4463, 5
      %v4466 = vsel %vm902, %v4461, %v4465
      %v4467 = vshrl.u32 %v4238, 16
      %v4469 = vrot.slane %v4467, 4
      %v4470 = vor.u32 %v4469, %v4465
      %v4471 = vrot.slane %v4470, 4
      %v4473 = vshll.u32 %v4239, 16
      %v4475 = vrot.slane %v4473, 5
      %v4476 = vsel %vm902, %v4471, %v4475
      %v4478 = vshrl.u32 %v4240, 16
      %v4480 = vrot.slane %v4478, 4
      %v4481 = vshll.u32 %v4240, 16
      %v4483 = vrot.slane %v4481, 5
      %v4484 = vor.u32 %v4480, %v4483
      %v4485 = vrot.slane %v4484, 4
      %v4487 = vshll.u32 %v4241, 16
      %v4489 = vrot.slane %v4487, 5
      %v4490 = vsel %vm902, %v4485, %v4489
      %v4491 = vshrl.u32 %v4241, 16
      %v4493 = vrot.slane %v4491, 4
      %v4494 = vor.u32 %v4493, %v4489
      %v4495 = vrot.slane %v4494, 4
      %v4497 = vshll.u32 %v4242, 16
      %v4499 = vrot.slane %v4497, 5
      %v4500 = vsel %vm902, %v4495, %v4499
      %v4502 = vshrl.u32 %v4243, 16
      %v4504 = vrot.slane %v4502, 4
      %v4505 = vshll.u32 %v4243, 16
      %v4507 = vrot.slane %v4505, 5
      %v4508 = vor.u32 %v4504, %v4507
      %v4509 = vrot.slane %v4508, 4
      %v4511 = vshll.u32 %v4244, 16
      %v4513 = vrot.slane %v4511, 5
      %v4514 = vsel %vm902, %v4509, %v4513
      %v4515 = vshrl.u32 %v4244, 16
      %v4517 = vrot.slane %v4515, 4
      %v4518 = vor.u32 %v4517, %v4513
      %v4519 = vrot.slane %v4518, 4
      %v4521 = vshll.u32 %v4245, 16
      %v4523 = vrot.slane %v4521, 5
      %v4524 = vsel %vm902, %v4519, %v4523
      %v4526 = vshrl.u32 %v4246, 16
      %v4528 = vrot.slane %v4526, 4
      %v4529 = vshll.u32 %v4246, 16
      %v4531 = vrot.slane %v4529, 5
      %v4532 = vor.u32 %v4528, %v4531
      %v4533 = vrot.slane %v4532, 4
      %v4535 = vshll.u32 %v4247, 16
      %v4537 = vrot.slane %v4535, 5
      %v4538 = vsel %vm902, %v4533, %v4537
      %v4539 = vshrl.u32 %v4247, 16
      %v4541 = vrot.slane %v4539, 4
      %v4542 = vor.u32 %v4541, %v4537
      %v4543 = vrot.slane %v4542, 4
      %v4545 = vshll.u32 %v4248, 16
      %v4547 = vrot.slane %v4545, 5
      %v4548 = vsel %vm902, %v4543, %v4547
      %v4550 = vshrl.u32 %v4249, 16
      %v4552 = vrot.slane %v4550, 4
      %v4553 = vshll.u32 %v4249, 16
      %v4555 = vrot.slane %v4553, 5
      %v4556 = vor.u32 %v4552, %v4555
      %v4557 = vrot.slane %v4556, 4
      %v4559 = vshll.u32 %v4250, 16
      %v4561 = vrot.slane %v4559, 5
      %v4562 = vsel %vm902, %v4557, %v4561
      %v4563 = vshrl.u32 %v4250, 16
      %v4565 = vrot.slane %v4563, 4
      %v4566 = vor.u32 %v4565, %v4561
      %v4567 = vrot.slane %v4566, 4
      %v4569 = vshll.u32 %v4251, 16
      %v4571 = vrot.slane %v4569, 5
      %v4572 = vsel %vm902, %v4567, %v4571
      %v4574 = vshrl.u32 %v4252, 16
      %v4576 = vrot.slane %v4574, 4
      %v4577 = vshll.u32 %v4252, 16
      %v4579 = vrot.slane %v4577, 5
      %v4580 = vor.u32 %v4576, %v4579
      %v4581 = vrot.slane %v4580, 4
      %v4583 = vshll.u32 %v4253, 16
      %v4585 = vrot.slane %v4583, 5
      %v4586 = vsel %vm902, %v4581, %v4585
      %v4587 = vshrl.u32 %v4253, 16
      %v4589 = vrot.slane %v4587, 4
      %v4590 = vor.u32 %v4589, %v4585
      %v4591 = vrot.slane %v4590, 4
      %v4593 = vshll.u32 %v4254, 16
      %v4595 = vrot.slane %v4593, 5
      %v4596 = vsel %vm902, %v4591, %v4595
      %v4598 = vshrl.u32 %v4255, 16
      %v4600 = vrot.slane %v4598, 4
      %v4601 = vshll.u32 %v4255, 16
      %v4603 = vrot.slane %v4601, 5
      %v4604 = vor.u32 %v4600, %v4603
      %v4605 = vrot.slane %v4604, 4
      %v4607 = vshll.u32 %v4256, 16
      %v4609 = vrot.slane %v4607, 5
      %v4610 = vsel %vm902, %v4605, %v4609
      %v4611 = vshrl.u32 %v4256, 16
      %v4613 = vrot.slane %v4611, 4
      %v4614 = vor.u32 %v4613, %v4609
      %v4615 = vrot.slane %v4614, 4
      %v4617 = vshll.u32 %v4257, 16
      %v4619 = vrot.slane %v4617, 5
      %v4620 = vsel %vm902, %v4615, %v4619
      %v4622 = vshrl.u32 %v4258, 16
      %v4624 = vrot.slane %v4622, 4
      %v4625 = vshll.u32 %v4258, 16
      %v4627 = vrot.slane %v4625, 5
      %v4628 = vor.u32 %v4624, %v4627
      %v4629 = vrot.slane %v4628, 4
      %v4631 = vshll.u32 %v4259, 16
      %v4633 = vrot.slane %v4631, 5
      %v4634 = vsel %vm902, %v4629, %v4633
      %v4635 = vshrl.u32 %v4259, 16
      %v4637 = vrot.slane %v4635, 4
      %v4638 = vor.u32 %v4637, %v4633
      %v4639 = vrot.slane %v4638, 4
      %v4641 = vshll.u32 %v4260, 16
      %v4643 = vrot.slane %v4641, 5
      %v4644 = vsel %vm902, %v4639, %v4643
      %s4645 = scalar_lea.vmem %s1, 14
      %v4646 = vld [vmem:[%s4645] sm:$0x3]
      %v4647 = vunpack.c.l.b16 %v4274
      %v4648 = vunpack.c.l.b16 %v4284
      %v4649 = vunpack.c.l.b16 %v4298
      %v4650 = vunpack.c.l.b16 %v4308
      %v4651 = vunpack.c.l.b16 %v4322
      %v4652 = vunpack.c.l.b16 %v4332
      %v4653 = vunpack.c.l.b16 %v4346
      %v4654 = vunpack.c.l.b16 %v4356
      %v4655 = vunpack.c.l.b16 %v4370
      %v4656 = vunpack.c.l.b16 %v4380
      %v4657 = vunpack.c.l.b16 %v4394
      %v4658 = vunpack.c.l.b16 %v4404
      %v4659 = vunpack.c.l.b16 %v4418
      %v4660 = vunpack.c.l.b16 %v4428
      %v4661 = vunpack.c.l.b16 %v4442
      %v4662 = vunpack.c.l.b16 %v4452
      %v4663 = vunpack.c.l.b16 %v4466
      %v4664 = vunpack.c.l.b16 %v4476
      %v4665 = vunpack.c.l.b16 %v4490
      %v4666 = vunpack.c.l.b16 %v4500
      %v4667 = vunpack.c.l.b16 %v4514
      %v4668 = vunpack.c.l.b16 %v4524
      %v4669 = vunpack.c.l.b16 %v4538
      %v4670 = vunpack.c.l.b16 %v4548
      %v4671 = vunpack.c.l.b16 %v4562
      %v4672 = vunpack.c.l.b16 %v4572
      %v4673 = vunpack.c.l.b16 %v4586
      %v4674 = vunpack.c.l.b16 %v4596
      %v4675 = vunpack.c.l.b16 %v4610
      %v4676 = vunpack.c.l.b16 %v4620
      %v4677 = vunpack.c.l.b16 %v4634
      %v4678 = vunpack.c.l.b16 %v4644
      %v4679 = vpack.c.b16 %v4648, %v4647
      %v4680 = vpack.c.b16 %v4650, %v4649
      %v4681 = vpack.c.b16 %v4652, %v4651
      %v4682 = vpack.c.b16 %v4654, %v4653
      %v4683 = vpack.c.b16 %v4656, %v4655
      %v4684 = vpack.c.b16 %v4658, %v4657
      %v4685 = vpack.c.b16 %v4660, %v4659
      %v4686 = vpack.c.b16 %v4662, %v4661
      %v4687 = vpack.c.b16 %v4664, %v4663
      %v4688 = vpack.c.b16 %v4666, %v4665
      %v4689 = vpack.c.b16 %v4668, %v4667
      %v4690 = vpack.c.b16 %v4670, %v4669
      %v4691 = vpack.c.b16 %v4672, %v4671
      %v4692 = vpack.c.b16 %v4674, %v4673
      %v4693 = vpack.c.b16 %v4676, %v4675
      %v4694 = vpack.c.b16 %v4678, %v4677
      %v4696 = vsel %vm1337, %v4679, 0
      %v4699 = vsel %vm1337, %v4680, 0
      %v4702 = vsel %vm1337, %v4681, 0
      %v4705 = vsel %vm1337, %v4682, 0
      %v4708 = vsel %vm1337, %v4683, 0
      %v4711 = vsel %vm1337, %v4684, 0
      %v4714 = vsel %vm1337, %v4685, 0
      %v4717 = vsel %vm1337, %v4686, 0
      %v4720 = vsel %vm1337, %v4687, 0
      %v4723 = vsel %vm1337, %v4688, 0
      %v4726 = vsel %vm1337, %v4689, 0
      %v4729 = vsel %vm1337, %v4690, 0
      %v4732 = vsel %vm1337, %v4691, 0
      %v4735 = vsel %vm1337, %v4692, 0
      %v4738 = vsel %vm1337, %v4693, 0
      %v4741 = vsel %vm1337, %v4694, 0
      %v4744 = vsel %vm1386, %v4646, 0
      %4746 = vmatprep.subr.bf16.mxu0 0
      %4747 = vmatpush1.bf16.msra.mxu0 %v4744
      %4748 = vmatprep.subr.bf16.mxu0 0
      %4749 = vmatpush1.bf16.msra.mxu0 0
      %4750 = vmatprep.subr.bf16.mxu0 0
      %4751 = vmatpush1.bf16.msra.mxu0 0
      %4752 = vmatprep.subr.bf16.mxu0 0
      %4753 = vmatpush1.bf16.msra.mxu0 0
      %4754 = vmatprep.subr.bf16.mxu0 0
      %4755 = vmatpush1.bf16.msra.mxu0 0
      %4756 = vmatprep.subr.bf16.mxu0 0
      %4757 = vmatpush1.bf16.msra.mxu0 0
      %4758 = vmatprep.subr.bf16.mxu0 0
      %4759 = vmatpush1.bf16.msra.mxu0 0
      %4760 = vmatprep.subr.bf16.mxu0 0
      %4761 = vmatpush1.bf16.msra.mxu0 0
      %4762 = vmatprep.subr.bf16.mxu0 0
      %4763 = vmatpush1.bf16.msra.mxu0 0
      %4764 = vmatprep.subr.bf16.mxu0 0
      %4765 = vmatpush1.bf16.msra.mxu0 0
      %4766 = vmatprep.subr.bf16.mxu0 0
      %4767 = vmatpush1.bf16.msra.mxu0 0
      %4768 = vmatprep.subr.bf16.mxu0 0
      %4769 = vmatpush1.bf16.msra.mxu0 0
      %4770 = vmatprep.subr.bf16.mxu0 0
      %4771 = vmatpush1.bf16.msra.mxu0 0
      %4772 = vmatprep.subr.bf16.mxu0 0
      %4773 = vmatpush1.bf16.msra.mxu0 0
      %4774 = vmatprep.subr.bf16.mxu0 0
      %4775 = vmatpush1.bf16.msra.mxu0 0
      %4776 = vmatprep.subr.bf16.mxu0 0
      %4777 = vmatpush1.bf16.msra.mxu0 0
      %4778 = vmatprep.mubr.bf16.mxu0 0
      %4779 = vmatmul.mubr.bf16.gmra.mrb[0].mxu0 %v4696
      %v4780 = vpop.f32.mrb[0].mxu0
      %v4781 = vadd.f32 0.0, %v4780
      %v4782 = vpop.f32.mrb[0].mxu0
      %v4783 = vpop.f32.mrb[0].mxu0
      %v4784 = vadd.f32 0.0, %v4783
      %v4785 = vpop.f32.mrb[0].mxu0
      %4786 = vmatprep.mubr.bf16.mxu0 0
      %4787 = vmatmul.mubr.bf16.gmra.mrb[0].mxu0 %v4699
      %v4788 = vpop.f32.mrb[0].mxu0
      %v4789 = vadd.f32 0.0, %v4788
      %v4790 = vpop.f32.mrb[0].mxu0
      %v4791 = vpop.f32.mrb[0].mxu0
      %v4792 = vadd.f32 0.0, %v4791
      %v4793 = vpop.f32.mrb[0].mxu0
      %4794 = vmatprep.mubr.bf16.mxu0 0
      %4795 = vmatmul.mubr.bf16.gmra.mrb[0].mxu0 %v4702
      %v4796 = vpop.f32.mrb[0].mxu0
      %v4797 = vadd.f32 0.0, %v4796
      %v4798 = vpop.f32.mrb[0].mxu0
      %v4799 = vpop.f32.mrb[0].mxu0
      %v4800 = vadd.f32 0.0, %v4799
      %v4801 = vpop.f32.mrb[0].mxu0
      %4802 = vmatprep.mubr.bf16.mxu0 0
      %4803 = vmatmul.mubr.bf16.gmra.mrb[0].mxu0 %v4705
      %v4804 = vpop.f32.mrb[0].mxu0
      %v4805 = vadd.f32 0.0, %v4804
      %v4806 = vpop.f32.mrb[0].mxu0
      %v4807 = vpop.f32.mrb[0].mxu0
      %v4808 = vadd.f32 0.0, %v4807
      %v4809 = vpop.f32.mrb[0].mxu0
      %4810 = vmatprep.mubr.bf16.mxu0 0
      %4811 = vmatmul.mubr.bf16.gmra.mrb[0].mxu0 %v4708
      %v4812 = vpop.f32.mrb[0].mxu0
      %v4813 = vadd.f32 0.0, %v4812
      %v4814 = vpop.f32.mrb[0].mxu0
      %v4815 = vpop.f32.mrb[0].mxu0
      %v4816 = vadd.f32 0.0, %v4815
      %v4817 = vpop.f32.mrb[0].mxu0
      %4818 = vmatprep.mubr.bf16.mxu0 0
      %4819 = vmatmul.mubr.bf16.gmra.mrb[0].mxu0 %v4711
      %v4820 = vpop.f32.mrb[0].mxu0
      %v4821 = vadd.f32 0.0, %v4820
      %v4822 = vpop.f32.mrb[0].mxu0
      %v4823 = vpop.f32.mrb[0].mxu0
      %v4824 = vadd.f32 0.0, %v4823
      %v4825 = vpop.f32.mrb[0].mxu0
      %4826 = vmatprep.mubr.bf16.mxu0 0
      %4827 = vmatmul.mubr.bf16.gmra.mrb[0].mxu0 %v4714
      %v4828 = vpop.f32.mrb[0].mxu0
      %v4829 = vadd.f32 0.0, %v4828
      %v4830 = vpop.f32.mrb[0].mxu0
      %v4831 = vpop.f32.mrb[0].mxu0
      %v4832 = vadd.f32 0.0, %v4831
      %v4833 = vpop.f32.mrb[0].mxu0
      %4834 = vmatprep.mubr.bf16.mxu0 0
      %4835 = vmatmul.mubr.bf16.gmra.mrb[0].mxu0 %v4717
      %v4836 = vpop.f32.mrb[0].mxu0
      %v4837 = vadd.f32 0.0, %v4836
      %v4838 = vpop.f32.mrb[0].mxu0
      %v4839 = vpop.f32.mrb[0].mxu0
      %v4840 = vadd.f32 0.0, %v4839
      %v4841 = vpop.f32.mrb[0].mxu0
      %4842 = vmatprep.mubr.bf16.mxu0 0
      %4843 = vmatmul.mubr.bf16.gmra.mrb[0].mxu0 %v4720
      %v4844 = vpop.f32.mrb[0].mxu0
      %v4845 = vadd.f32 0.0, %v4844
      %v4846 = vpop.f32.mrb[0].mxu0
      %v4847 = vpop.f32.mrb[0].mxu0
      %v4848 = vadd.f32 0.0, %v4847
      %v4849 = vpop.f32.mrb[0].mxu0
      %4850 = vmatprep.mubr.bf16.mxu0 0
      %4851 = vmatmul.mubr.bf16.gmra.mrb[0].mxu0 %v4723
      %v4852 = vpop.f32.mrb[0].mxu0
      %v4853 = vadd.f32 0.0, %v4852
      %v4854 = vpop.f32.mrb[0].mxu0
      %v4855 = vpop.f32.mrb[0].mxu0
      %v4856 = vadd.f32 0.0, %v4855
      %v4857 = vpop.f32.mrb[0].mxu0
      %4858 = vmatprep.mubr.bf16.mxu0 0
      %4859 = vmatmul.mubr.bf16.gmra.mrb[0].mxu0 %v4726
      %v4860 = vpop.f32.mrb[0].mxu0
      %v4861 = vadd.f32 0.0, %v4860
      %v4862 = vpop.f32.mrb[0].mxu0
      %v4863 = vpop.f32.mrb[0].mxu0
      %v4864 = vadd.f32 0.0, %v4863
      %v4865 = vpop.f32.mrb[0].mxu0
      %4866 = vmatprep.mubr.bf16.mxu0 0
      %4867 = vmatmul.mubr.bf16.gmra.mrb[0].mxu0 %v4729
      %v4868 = vpop.f32.mrb[0].mxu0
      %v4869 = vadd.f32 0.0, %v4868
      %v4870 = vpop.f32.mrb[0].mxu0
      %v4871 = vpop.f32.mrb[0].mxu0
      %v4872 = vadd.f32 0.0, %v4871
      %v4873 = vpop.f32.mrb[0].mxu0
      %4874 = vmatprep.mubr.bf16.mxu0 0
      %4875 = vmatmul.mubr.bf16.gmra.mrb[0].mxu0 %v4732
      %v4876 = vpop.f32.mrb[0].mxu0
      %v4877 = vadd.f32 0.0, %v4876
      %v4878 = vpop.f32.mrb[0].mxu0
      %v4879 = vpop.f32.mrb[0].mxu0
      %v4880 = vadd.f32 0.0, %v4879
      %v4881 = vpop.f32.mrb[0].mxu0
      %4882 = vmatprep.mubr.bf16.mxu0 0
      %4883 = vmatmul.mubr.bf16.gmra.mrb[0].mxu0 %v4735
      %v4884 = vpop.f32.mrb[0].mxu0
      %v4885 = vadd.f32 0.0, %v4884
      %v4886 = vpop.f32.mrb[0].mxu0
      %v4887 = vpop.f32.mrb[0].mxu0
      %v4888 = vadd.f32 0.0, %v4887
      %v4889 = vpop.f32.mrb[0].mxu0
      %4890 = vmatprep.mubr.bf16.mxu0 0
      %4891 = vmatmul.mubr.bf16.gmra.mrb[0].mxu0 %v4738
      %v4892 = vpop.f32.mrb[0].mxu0
      %v4893 = vadd.f32 0.0, %v4892
      %v4894 = vpop.f32.mrb[0].mxu0
      %v4895 = vpop.f32.mrb[0].mxu0
      %v4896 = vadd.f32 0.0, %v4895
      %v4897 = vpop.f32.mrb[0].mxu0
      %4898 = vmatprep.mubr.bf16.mxu0 0
      %4899 = vmatmul.mubr.bf16.gmra.mrb[0].mxu0 %v4741
      %v4900 = vpop.f32.mrb[0].mxu0
      %v4901 = vadd.f32 0.0, %v4900
      %v4902 = vpop.f32.mrb[0].mxu0
      %v4903 = vpop.f32.mrb[0].mxu0
      %v4904 = vadd.f32 0.0, %v4903
      %v4905 = vpop.f32.mrb[0].mxu0
      %4906 = vdwg.mxu0
      %v4907 = vadd.f32 %v4181, %v4781
      %v4908 = vadd.f32 %v4182, %v4784
      %v4909 = vadd.f32 %v4183, %v4789
      %v4910 = vadd.f32 %v4184, %v4792
      %v4911 = vadd.f32 %v4185, %v4797
      %v4912 = vadd.f32 %v4186, %v4800
      %v4913 = vadd.f32 %v4187, %v4805
      %v4914 = vadd.f32 %v4188, %v4808
      %v4915 = vadd.f32 %v4189, %v4813
      %v4916 = vadd.f32 %v4190, %v4816
      %v4917 = vadd.f32 %v4191, %v4821
      %v4918 = vadd.f32 %v4192, %v4824
      %v4919 = vadd.f32 %v4193, %v4829
      %v4920 = vadd.f32 %v4194, %v4832
      %v4921 = vadd.f32 %v4195, %v4837
      %v4922 = vadd.f32 %v4196, %v4840
      %v4923 = vadd.f32 %v4197, %v4845
      %v4924 = vadd.f32 %v4198, %v4848
      %v4925 = vadd.f32 %v4199, %v4853
      %v4926 = vadd.f32 %v4200, %v4856
      %v4927 = vadd.f32 %v4201, %v4861
      %v4928 = vadd.f32 %v4202, %v4864
      %v4929 = vadd.f32 %v4203, %v4869
      %v4930 = vadd.f32 %v4204, %v4872
      %v4931 = vadd.f32 %v4205, %v4877
      %v4932 = vadd.f32 %v4206, %v4880
      %v4933 = vadd.f32 %v4207, %v4885
      %v4934 = vadd.f32 %v4208, %v4888
      %v4935 = vadd.f32 %v4209, %v4893
      %v4936 = vadd.f32 %v4210, %v4896
      %v4937 = vadd.f32 %v4211, %v4901
      %v4938 = vadd.f32 %v4212, %v4904
      %v4939 = vld [vmem:[%s3854] sm:$0xe]
      %v4940 = vld [vmem:[%s3854 + $0xc] sm:$0xe]
      %v4941 = vld [vmem:[%s3854 + $0x18] sm:$0xe]
      %v4942 = vld [vmem:[%s3854 + $0x24] sm:$0xe]
      %v4943 = vld [vmem:[%s3854 + $0x30] sm:$0xe]
      %v4944 = vld [vmem:[%s3854 + $0x3c] sm:$0xe]
      %v4945 = vld [vmem:[%s3854 + $0x48] sm:$0xe]
      %v4946 = vld [vmem:[%s3854 + $0x54] sm:$0xe]
      %v4947 = vld [vmem:[%s3854 + $0x60] sm:$0xe]
      %v4948 = vld [vmem:[%s3854 + $0x6c] sm:$0xe]
      %v4949 = vld [vmem:[%s3854 + $0x78] sm:$0xe]
      %v4950 = vld [vmem:[%s3854 + $0x84] sm:$0xe]
      %v4951 = vld [vmem:[%s3854 + $0x90] sm:$0xe]
      %v4952 = vld [vmem:[%s3854 + $0x9c] sm:$0xe]
      %v4953 = vld [vmem:[%s3854 + $0xa8] sm:$0xe]
      %v4954 = vld [vmem:[%s3854 + $0xb4] sm:$0xe]
      %v5003 = vrot.slane %v4939, 5
      %v5004 = vrot.slane %v5003, 4
      %v5005 = vrot.slane %v4214, 5
      %v5006 = vsel %vm1893, %v5004, %v5005
      %v5007 = vrot.slane %v5005, 4
      %v5008 = vrot.slane %v4215, 5
      %v5009 = vsel %vm1893, %v5007, %v5008
      %v5010 = vrot.slane %v4940, 5
      %v5011 = vrot.slane %v5010, 4
      %v5012 = vrot.slane %v4217, 5
      %v5013 = vsel %vm1893, %v5011, %v5012
      %v5014 = vrot.slane %v5012, 4
      %v5015 = vrot.slane %v4218, 5
      %v5016 = vsel %vm1893, %v5014, %v5015
      %v5017 = vrot.slane %v4941, 5
      %v5018 = vrot.slane %v5017, 4
      %v5019 = vrot.slane %v4220, 5
      %v5020 = vsel %vm1893, %v5018, %v5019
      %v5021 = vrot.slane %v5019, 4
      %v5022 = vrot.slane %v4221, 5
      %v5023 = vsel %vm1893, %v5021, %v5022
      %v5024 = vrot.slane %v4942, 5
      %v5025 = vrot.slane %v5024, 4
      %v5026 = vrot.slane %v4223, 5
      %v5027 = vsel %vm1893, %v5025, %v5026
      %v5028 = vrot.slane %v5026, 4
      %v5029 = vrot.slane %v4224, 5
      %v5030 = vsel %vm1893, %v5028, %v5029
      %v5031 = vrot.slane %v4943, 5
      %v5032 = vrot.slane %v5031, 4
      %v5033 = vrot.slane %v4226, 5
      %v5034 = vsel %vm1893, %v5032, %v5033
      %v5035 = vrot.slane %v5033, 4
      %v5036 = vrot.slane %v4227, 5
      %v5037 = vsel %vm1893, %v5035, %v5036
      %v5038 = vrot.slane %v4944, 5
      %v5039 = vrot.slane %v5038, 4
      %v5040 = vrot.slane %v4229, 5
      %v5041 = vsel %vm1893, %v5039, %v5040
      %v5042 = vrot.slane %v5040, 4
      %v5043 = vrot.slane %v4230, 5
      %v5044 = vsel %vm1893, %v5042, %v5043
      %v5045 = vrot.slane %v4945, 5
      %v5046 = vrot.slane %v5045, 4
      %v5047 = vrot.slane %v4232, 5
      %v5048 = vsel %vm1893, %v5046, %v5047
      %v5049 = vrot.slane %v5047, 4
      %v5050 = vrot.slane %v4233, 5
      %v5051 = vsel %vm1893, %v5049, %v5050
      %v5052 = vrot.slane %v4946, 5
      %v5053 = vrot.slane %v5052, 4
      %v5054 = vrot.slane %v4235, 5
      %v5055 = vsel %vm1893, %v5053, %v5054
      %v5056 = vrot.slane %v5054, 4
      %v5057 = vrot.slane %v4236, 5
      %v5058 = vsel %vm1893, %v5056, %v5057
      %v5059 = vrot.slane %v4947, 5
      %v5060 = vrot.slane %v5059, 4
      %v5061 = vrot.slane %v4238, 5
      %v5062 = vsel %vm1893, %v5060, %v5061
      %v5063 = vrot.slane %v5061, 4
      %v5064 = vrot.slane %v4239, 5
      %v5065 = vsel %vm1893, %v5063, %v5064
      %v5066 = vrot.slane %v4948, 5
      %v5067 = vrot.slane %v5066, 4
      %v5068 = vrot.slane %v4241, 5
      %v5069 = vsel %vm1893, %v5067, %v5068
      %v5070 = vrot.slane %v5068, 4
      %v5071 = vrot.slane %v4242, 5
      %v5072 = vsel %vm1893, %v5070, %v5071
      %v5073 = vrot.slane %v4949, 5
      %v5074 = vrot.slane %v5073, 4
      %v5075 = vrot.slane %v4244, 5
      %v5076 = vsel %vm1893, %v5074, %v5075
      %v5077 = vrot.slane %v5075, 4
      %v5078 = vrot.slane %v4245, 5
      %v5079 = vsel %vm1893, %v5077, %v5078
      %v5080 = vrot.slane %v4950, 5
      %v5081 = vrot.slane %v5080, 4
      %v5082 = vrot.slane %v4247, 5
      %v5083 = vsel %vm1893, %v5081, %v5082
      %v5084 = vrot.slane %v5082, 4
      %v5085 = vrot.slane %v4248, 5
      %v5086 = vsel %vm1893, %v5084, %v5085
      %v5087 = vrot.slane %v4951, 5
      %v5088 = vrot.slane %v5087, 4
      %v5089 = vrot.slane %v4250, 5
      %v5090 = vsel %vm1893, %v5088, %v5089
      %v5091 = vrot.slane %v5089, 4
      %v5092 = vrot.slane %v4251, 5
      %v5093 = vsel %vm1893, %v5091, %v5092
      %v5094 = vrot.slane %v4952, 5
      %v5095 = vrot.slane %v5094, 4
      %v5096 = vrot.slane %v4253, 5
      %v5097 = vsel %vm1893, %v5095, %v5096
      %v5098 = vrot.slane %v5096, 4
      %v5099 = vrot.slane %v4254, 5
      %v5100 = vsel %vm1893, %v5098, %v5099
      %v5101 = vrot.slane %v4953, 5
      %v5102 = vrot.slane %v5101, 4
      %v5103 = vrot.slane %v4256, 5
      %v5104 = vsel %vm1893, %v5102, %v5103
      %v5105 = vrot.slane %v5103, 4
      %v5106 = vrot.slane %v4257, 5
      %v5107 = vsel %vm1893, %v5105, %v5106
      %v5108 = vrot.slane %v4954, 5
      %v5109 = vrot.slane %v5108, 4
      %v5110 = vrot.slane %v4259, 5
      %v5111 = vsel %vm1893, %v5109, %v5110
      %v5112 = vrot.slane %v5110, 4
      %v5113 = vrot.slane %v4260, 5
      %v5114 = vsel %vm1893, %v5112, %v5113
      %s5115 = scalar_lea.vmem %s1, 16
      %v5116 = vld [vmem:[%s5115] sm:$0x3]
      %v5117 = vunpack.c.l.b16 %v5006
      %v5118 = vunpack.c.l.b16 %v5009
      %v5119 = vunpack.c.l.b16 %v5013
      %v5120 = vunpack.c.l.b16 %v5016
      %v5121 = vunpack.c.l.b16 %v5020
      %v5122 = vunpack.c.l.b16 %v5023
      %v5123 = vunpack.c.l.b16 %v5027
      %v5124 = vunpack.c.l.b16 %v5030
      %v5125 = vunpack.c.l.b16 %v5034
      %v5126 = vunpack.c.l.b16 %v5037
      %v5127 = vunpack.c.l.b16 %v5041
      %v5128 = vunpack.c.l.b16 %v5044
      %v5129 = vunpack.c.l.b16 %v5048
      %v5130 = vunpack.c.l.b16 %v5051
      %v5131 = vunpack.c.l.b16 %v5055
      %v5132 = vunpack.c.l.b16 %v5058
      %v5133 = vunpack.c.l.b16 %v5062
      %v5134 = vunpack.c.l.b16 %v5065
      %v5135 = vunpack.c.l.b16 %v5069
      %v5136 = vunpack.c.l.b16 %v5072
      %v5137 = vunpack.c.l.b16 %v5076
      %v5138 = vunpack.c.l.b16 %v5079
      %v5139 = vunpack.c.l.b16 %v5083
      %v5140 = vunpack.c.l.b16 %v5086
      %v5141 = vunpack.c.l.b16 %v5090
      %v5142 = vunpack.c.l.b16 %v5093
      %v5143 = vunpack.c.l.b16 %v5097
      %v5144 = vunpack.c.l.b16 %v5100
      %v5145 = vunpack.c.l.b16 %v5104
      %v5146 = vunpack.c.l.b16 %v5107
      %v5147 = vunpack.c.l.b16 %v5111
      %v5148 = vunpack.c.l.b16 %v5114
      %v5149 = vpack.c.b16 %v5118, %v5117
      %v5150 = vpack.c.b16 %v5120, %v5119
      %v5151 = vpack.c.b16 %v5122, %v5121
      %v5152 = vpack.c.b16 %v5124, %v5123
      %v5153 = vpack.c.b16 %v5126, %v5125
      %v5154 = vpack.c.b16 %v5128, %v5127
      %v5155 = vpack.c.b16 %v5130, %v5129
      %v5156 = vpack.c.b16 %v5132, %v5131
      %v5157 = vpack.c.b16 %v5134, %v5133
      %v5158 = vpack.c.b16 %v5136, %v5135
      %v5159 = vpack.c.b16 %v5138, %v5137
      %v5160 = vpack.c.b16 %v5140, %v5139
      %v5161 = vpack.c.b16 %v5142, %v5141
      %v5162 = vpack.c.b16 %v5144, %v5143
      %v5163 = vpack.c.b16 %v5146, %v5145
      %v5164 = vpack.c.b16 %v5148, %v5147
      %v5166 = vsel %vm1337, %v5149, 0
      %v5169 = vsel %vm1337, %v5150, 0
      %v5172 = vsel %vm1337, %v5151, 0
      %v5175 = vsel %vm1337, %v5152, 0
      %v5178 = vsel %vm1337, %v5153, 0
      %v5181 = vsel %vm1337, %v5154, 0
      %v5184 = vsel %vm1337, %v5155, 0
      %v5187 = vsel %vm1337, %v5156, 0
      %v5190 = vsel %vm1337, %v5157, 0
      %v5193 = vsel %vm1337, %v5158, 0
      %v5196 = vsel %vm1337, %v5159, 0
      %v5199 = vsel %vm1337, %v5160, 0
      %v5202 = vsel %vm1337, %v5161, 0
      %v5205 = vsel %vm1337, %v5162, 0
      %v5208 = vsel %vm1337, %v5163, 0
      %v5211 = vsel %vm1337, %v5164, 0
      %v5214 = vsel %vm1386, %v5116, 0
      %5216 = vmatprep.subr.bf16.mxu0 0
      %5217 = vmatpush1.bf16.msra.mxu0 %v5214
      %5218 = vmatprep.subr.bf16.mxu0 0
      %5219 = vmatpush1.bf16.msra.mxu0 0
      %5220 = vmatprep.subr.bf16.mxu0 0
      %5221 = vmatpush1.bf16.msra.mxu0 0
      %5222 = vmatprep.subr.bf16.mxu0 0
      %5223 = vmatpush1.bf16.msra.mxu0 0
      %5224 = vmatprep.subr.bf16.mxu0 0
      %5225 = vmatpush1.bf16.msra.mxu0 0
      %5226 = vmatprep.subr.bf16.mxu0 0
      %5227 = vmatpush1.bf16.msra.mxu0 0
      %5228 = vmatprep.subr.bf16.mxu0 0
      %5229 = vmatpush1.bf16.msra.mxu0 0
      %5230 = vmatprep.subr.bf16.mxu0 0
      %5231 = vmatpush1.bf16.msra.mxu0 0
      %5232 = vmatprep.subr.bf16.mxu0 0
      %5233 = vmatpush1.bf16.msra.mxu0 0
      %5234 = vmatprep.subr.bf16.mxu0 0
      %5235 = vmatpush1.bf16.msra.mxu0 0
      %5236 = vmatprep.subr.bf16.mxu0 0
      %5237 = vmatpush1.bf16.msra.mxu0 0
      %5238 = vmatprep.subr.bf16.mxu0 0
      %5239 = vmatpush1.bf16.msra.mxu0 0
      %5240 = vmatprep.subr.bf16.mxu0 0
      %5241 = vmatpush1.bf16.msra.mxu0 0
      %5242 = vmatprep.subr.bf16.mxu0 0
      %5243 = vmatpush1.bf16.msra.mxu0 0
      %5244 = vmatprep.subr.bf16.mxu0 0
      %5245 = vmatpush1.bf16.msra.mxu0 0
      %5246 = vmatprep.subr.bf16.mxu0 0
      %5247 = vmatpush1.bf16.msra.mxu0 0
      %5248 = vmatprep.mubr.bf16.mxu0 0
      %5249 = vmatmul.mubr.bf16.gmra.mrb[0].mxu0 %v5166
      %v5250 = vpop.f32.mrb[0].mxu0
      %v5251 = vadd.f32 0.0, %v5250
      %v5252 = vpop.f32.mrb[0].mxu0
      %v5253 = vpop.f32.mrb[0].mxu0
      %v5254 = vadd.f32 0.0, %v5253
      %v5255 = vpop.f32.mrb[0].mxu0
      %5256 = vmatprep.mubr.bf16.mxu0 0
      %5257 = vmatmul.mubr.bf16.gmra.mrb[0].mxu0 %v5169
      %v5258 = vpop.f32.mrb[0].mxu0
      %v5259 = vadd.f32 0.0, %v5258
      %v5260 = vpop.f32.mrb[0].mxu0
      %v5261 = vpop.f32.mrb[0].mxu0
      %v5262 = vadd.f32 0.0, %v5261
      %v5263 = vpop.f32.mrb[0].mxu0
      %5264 = vmatprep.mubr.bf16.mxu0 0
      %5265 = vmatmul.mubr.bf16.gmra.mrb[0].mxu0 %v5172
      %v5266 = vpop.f32.mrb[0].mxu0
      %v5267 = vadd.f32 0.0, %v5266
      %v5268 = vpop.f32.mrb[0].mxu0
      %v5269 = vpop.f32.mrb[0].mxu0
      %v5270 = vadd.f32 0.0, %v5269
      %v5271 = vpop.f32.mrb[0].mxu0
      %5272 = vmatprep.mubr.bf16.mxu0 0
      %5273 = vmatmul.mubr.bf16.gmra.mrb[0].mxu0 %v5175
      %v5274 = vpop.f32.mrb[0].mxu0
      %v5275 = vadd.f32 0.0, %v5274
      %v5276 = vpop.f32.mrb[0].mxu0
      %v5277 = vpop.f32.mrb[0].mxu0
      %v5278 = vadd.f32 0.0, %v5277
      %v5279 = vpop.f32.mrb[0].mxu0
      %5280 = vmatprep.mubr.bf16.mxu0 0
      %5281 = vmatmul.mubr.bf16.gmra.mrb[0].mxu0 %v5178
      %v5282 = vpop.f32.mrb[0].mxu0
      %v5283 = vadd.f32 0.0, %v5282
      %v5284 = vpop.f32.mrb[0].mxu0
      %v5285 = vpop.f32.mrb[0].mxu0
      %v5286 = vadd.f32 0.0, %v5285
      %v5287 = vpop.f32.mrb[0].mxu0
      %5288 = vmatprep.mubr.bf16.mxu0 0
      %5289 = vmatmul.mubr.bf16.gmra.mrb[0].mxu0 %v5181
      %v5290 = vpop.f32.mrb[0].mxu0
      %v5291 = vadd.f32 0.0, %v5290
      %v5292 = vpop.f32.mrb[0].mxu0
      %v5293 = vpop.f32.mrb[0].mxu0
      %v5294 = vadd.f32 0.0, %v5293
      %v5295 = vpop.f32.mrb[0].mxu0
      %5296 = vmatprep.mubr.bf16.mxu0 0
      %5297 = vmatmul.mubr.bf16.gmra.mrb[0].mxu0 %v5184
      %v5298 = vpop.f32.mrb[0].mxu0
      %v5299 = vadd.f32 0.0, %v5298
      %v5300 = vpop.f32.mrb[0].mxu0
      %v5301 = vpop.f32.mrb[0].mxu0
      %v5302 = vadd.f32 0.0, %v5301
      %v5303 = vpop.f32.mrb[0].mxu0
      %5304 = vmatprep.mubr.bf16.mxu0 0
      %5305 = vmatmul.mubr.bf16.gmra.mrb[0].mxu0 %v5187
      %v5306 = vpop.f32.mrb[0].mxu0
      %v5307 = vadd.f32 0.0, %v5306
      %v5308 = vpop.f32.mrb[0].mxu0
      %v5309 = vpop.f32.mrb[0].mxu0
      %v5310 = vadd.f32 0.0, %v5309
      %v5311 = vpop.f32.mrb[0].mxu0
      %5312 = vmatprep.mubr.bf16.mxu0 0
      %5313 = vmatmul.mubr.bf16.gmra.mrb[0].mxu0 %v5190
      %v5314 = vpop.f32.mrb[0].mxu0
      %v5315 = vadd.f32 0.0, %v5314
      %v5316 = vpop.f32.mrb[0].mxu0
      %v5317 = vpop.f32.mrb[0].mxu0
      %v5318 = vadd.f32 0.0, %v5317
      %v5319 = vpop.f32.mrb[0].mxu0
      %5320 = vmatprep.mubr.bf16.mxu0 0
      %5321 = vmatmul.mubr.bf16.gmra.mrb[0].mxu0 %v5193
      %v5322 = vpop.f32.mrb[0].mxu0
      %v5323 = vadd.f32 0.0, %v5322
      %v5324 = vpop.f32.mrb[0].mxu0
      %v5325 = vpop.f32.mrb[0].mxu0
      %v5326 = vadd.f32 0.0, %v5325
      %v5327 = vpop.f32.mrb[0].mxu0
      %5328 = vmatprep.mubr.bf16.mxu0 0
      %5329 = vmatmul.mubr.bf16.gmra.mrb[0].mxu0 %v5196
      %v5330 = vpop.f32.mrb[0].mxu0
      %v5331 = vadd.f32 0.0, %v5330
      %v5332 = vpop.f32.mrb[0].mxu0
      %v5333 = vpop.f32.mrb[0].mxu0
      %v5334 = vadd.f32 0.0, %v5333
      %v5335 = vpop.f32.mrb[0].mxu0
      %5336 = vmatprep.mubr.bf16.mxu0 0
      %5337 = vmatmul.mubr.bf16.gmra.mrb[0].mxu0 %v5199
      %v5338 = vpop.f32.mrb[0].mxu0
      %v5339 = vadd.f32 0.0, %v5338
      %v5340 = vpop.f32.mrb[0].mxu0
      %v5341 = vpop.f32.mrb[0].mxu0
      %v5342 = vadd.f32 0.0, %v5341
      %v5343 = vpop.f32.mrb[0].mxu0
      %5344 = vmatprep.mubr.bf16.mxu0 0
      %5345 = vmatmul.mubr.bf16.gmra.mrb[0].mxu0 %v5202
      %v5346 = vpop.f32.mrb[0].mxu0
      %v5347 = vadd.f32 0.0, %v5346
      %v5348 = vpop.f32.mrb[0].mxu0
      %v5349 = vpop.f32.mrb[0].mxu0
      %v5350 = vadd.f32 0.0, %v5349
      %v5351 = vpop.f32.mrb[0].mxu0
      %5352 = vmatprep.mubr.bf16.mxu0 0
      %5353 = vmatmul.mubr.bf16.gmra.mrb[0].mxu0 %v5205
      %v5354 = vpop.f32.mrb[0].mxu0
      %v5355 = vadd.f32 0.0, %v5354
      %v5356 = vpop.f32.mrb[0].mxu0
      %v5357 = vpop.f32.mrb[0].mxu0
      %v5358 = vadd.f32 0.0, %v5357
      %v5359 = vpop.f32.mrb[0].mxu0
      %5360 = vmatprep.mubr.bf16.mxu0 0
      %5361 = vmatmul.mubr.bf16.gmra.mrb[0].mxu0 %v5208
      %v5362 = vpop.f32.mrb[0].mxu0
      %v5363 = vadd.f32 0.0, %v5362
      %v5364 = vpop.f32.mrb[0].mxu0
      %v5365 = vpop.f32.mrb[0].mxu0
      %v5366 = vadd.f32 0.0, %v5365
      %v5367 = vpop.f32.mrb[0].mxu0
      %5368 = vmatprep.mubr.bf16.mxu0 0
      %5369 = vmatmul.mubr.bf16.gmra.mrb[0].mxu0 %v5211
      %v5370 = vpop.f32.mrb[0].mxu0
      %v5371 = vadd.f32 0.0, %v5370
      %v5372 = vpop.f32.mrb[0].mxu0
      %v5373 = vpop.f32.mrb[0].mxu0
      %v5374 = vadd.f32 0.0, %v5373
      %v5375 = vpop.f32.mrb[0].mxu0
      %5376 = vdwg.mxu0
      %v5377 = vadd.f32 %v4907, %v5251
      %v5378 = vadd.f32 %v4908, %v5254
      %v5379 = vadd.f32 %v4909, %v5259
      %v5380 = vadd.f32 %v4910, %v5262
      %v5381 = vadd.f32 %v4911, %v5267
      %v5382 = vadd.f32 %v4912, %v5270
      %v5383 = vadd.f32 %v4913, %v5275
      %v5384 = vadd.f32 %v4914, %v5278
      %v5385 = vadd.f32 %v4915, %v5283
      %v5386 = vadd.f32 %v4916, %v5286
      %v5387 = vadd.f32 %v4917, %v5291
      %v5388 = vadd.f32 %v4918, %v5294
      %v5389 = vadd.f32 %v4919, %v5299
      %v5390 = vadd.f32 %v4920, %v5302
      %v5391 = vadd.f32 %v4921, %v5307
      %v5392 = vadd.f32 %v4922, %v5310
      %v5393 = vadd.f32 %v4923, %v5315
      %v5394 = vadd.f32 %v4924, %v5318
      %v5395 = vadd.f32 %v4925, %v5323
      %v5396 = vadd.f32 %v4926, %v5326
      %v5397 = vadd.f32 %v4927, %v5331
      %v5398 = vadd.f32 %v4928, %v5334
      %v5399 = vadd.f32 %v4929, %v5339
      %v5400 = vadd.f32 %v4930, %v5342
      %v5401 = vadd.f32 %v4931, %v5347
      %v5402 = vadd.f32 %v4932, %v5350
      %v5403 = vadd.f32 %v4933, %v5355
      %v5404 = vadd.f32 %v4934, %v5358
      %v5405 = vadd.f32 %v4935, %v5363
      %v5406 = vadd.f32 %v4936, %v5366
      %v5407 = vadd.f32 %v4937, %v5371
      %v5408 = vadd.f32 %v4938, %v5374
      %v5409 = vld [vmem:[%s2] sm:$0x1]
      %v5411 = vlaneseq
      %v5412 = vshrl.u32 %v5411, 7
      %v5413 = vsub.s32 0, %v5412
      %v5414 = vrot.slane %v5409, %v5413
      %v5416 = vadd.f32 %v5377, %v5414
      %v5417 = vadd.f32 %v5378, %v5414
      %v5418 = vadd.f32 %v5379, %v5414
      %v5419 = vadd.f32 %v5380, %v5414
      %v5420 = vadd.f32 %v5381, %v5414
      %v5421 = vadd.f32 %v5382, %v5414
      %v5422 = vadd.f32 %v5383, %v5414
      %v5423 = vadd.f32 %v5384, %v5414
      %v5424 = vadd.f32 %v5385, %v5414
      %v5425 = vadd.f32 %v5386, %v5414
      %v5426 = vadd.f32 %v5387, %v5414
      %v5427 = vadd.f32 %v5388, %v5414
      %v5428 = vadd.f32 %v5389, %v5414
      %v5429 = vadd.f32 %v5390, %v5414
      %v5430 = vadd.f32 %v5391, %v5414
      %v5431 = vadd.f32 %v5392, %v5414
      %v5432 = vadd.f32 %v5393, %v5414
      %v5433 = vadd.f32 %v5394, %v5414
      %v5434 = vadd.f32 %v5395, %v5414
      %v5435 = vadd.f32 %v5396, %v5414
      %v5436 = vadd.f32 %v5397, %v5414
      %v5437 = vadd.f32 %v5398, %v5414
      %v5438 = vadd.f32 %v5399, %v5414
      %v5439 = vadd.f32 %v5400, %v5414
      %v5440 = vadd.f32 %v5401, %v5414
      %v5441 = vadd.f32 %v5402, %v5414
      %v5442 = vadd.f32 %v5403, %v5414
      %v5443 = vadd.f32 %v5404, %v5414
      %v5444 = vadd.f32 %v5405, %v5414
      %v5445 = vadd.f32 %v5406, %v5414
      %v5446 = vadd.f32 %v5407, %v5414
      %v5447 = vadd.f32 %v5408, %v5414
      %v5448 = vmul.f32 %v5416, %v5416
      %v5449 = vmul.f32 %v5417, %v5417
      %v5450 = vmul.f32 %v5418, %v5418
      %v5451 = vmul.f32 %v5419, %v5419
      %v5452 = vmul.f32 %v5420, %v5420
      %v5453 = vmul.f32 %v5421, %v5421
      %v5454 = vmul.f32 %v5422, %v5422
      %v5455 = vmul.f32 %v5423, %v5423
      %v5456 = vmul.f32 %v5424, %v5424
      %v5457 = vmul.f32 %v5425, %v5425
      %v5458 = vmul.f32 %v5426, %v5426
      %v5459 = vmul.f32 %v5427, %v5427
      %v5460 = vmul.f32 %v5428, %v5428
      %v5461 = vmul.f32 %v5429, %v5429
      %v5462 = vmul.f32 %v5430, %v5430
      %v5463 = vmul.f32 %v5431, %v5431
      %v5464 = vmul.f32 %v5432, %v5432
      %v5465 = vmul.f32 %v5433, %v5433
      %v5466 = vmul.f32 %v5434, %v5434
      %v5467 = vmul.f32 %v5435, %v5435
      %v5468 = vmul.f32 %v5436, %v5436
      %v5469 = vmul.f32 %v5437, %v5437
      %v5470 = vmul.f32 %v5438, %v5438
      %v5471 = vmul.f32 %v5439, %v5439
      %v5472 = vmul.f32 %v5440, %v5440
      %v5473 = vmul.f32 %v5441, %v5441
      %v5474 = vmul.f32 %v5442, %v5442
      %v5475 = vmul.f32 %v5443, %v5443
      %v5476 = vmul.f32 %v5444, %v5444
      %v5477 = vmul.f32 %v5445, %v5445
      %v5478 = vmul.f32 %v5446, %v5446
      %v5479 = vmul.f32 %v5447, %v5447
      %vm5480 = vcmask 64512
      %v5481 = vsel %vm5480, %v5448, 0.0
      %5482 = vadd.xlane.f32.xlu0 %v5481
      %v5483 = vpop.xlane.xlu0 %5482
      %v5484 = vsel %vm5480, %v5449, 0.0
      %5485 = vadd.xlane.f32.xlu0 %v5484
      %v5486 = vpop.xlane.xlu0 %5485
      %v5487 = vsel %vm5480, %v5450, 0.0
      %5488 = vadd.xlane.f32.xlu0 %v5487
      %v5489 = vpop.xlane.xlu0 %5488
      %v5490 = vsel %vm5480, %v5451, 0.0
      %5491 = vadd.xlane.f32.xlu0 %v5490
      %v5492 = vpop.xlane.xlu0 %5491
      %v5493 = vsel %vm5480, %v5452, 0.0
      %5494 = vadd.xlane.f32.xlu0 %v5493
      %v5495 = vpop.xlane.xlu0 %5494
      %v5496 = vsel %vm5480, %v5453, 0.0
      %5497 = vadd.xlane.f32.xlu0 %v5496
      %v5498 = vpop.xlane.xlu0 %5497
      %v5499 = vsel %vm5480, %v5454, 0.0
      %5500 = vadd.xlane.f32.xlu0 %v5499
      %v5501 = vpop.xlane.xlu0 %5500
      %v5502 = vsel %vm5480, %v5455, 0.0
      %5503 = vadd.xlane.f32.xlu0 %v5502
      %v5504 = vpop.xlane.xlu0 %5503
      %v5505 = vsel %vm5480, %v5456, 0.0
      %5506 = vadd.xlane.f32.xlu0 %v5505
      %v5507 = vpop.xlane.xlu0 %5506
      %v5508 = vsel %vm5480, %v5457, 0.0
      %5509 = vadd.xlane.f32.xlu0 %v5508
      %v5510 = vpop.xlane.xlu0 %5509
      %v5511 = vsel %vm5480, %v5458, 0.0
      %5512 = vadd.xlane.f32.xlu0 %v5511
      %v5513 = vpop.xlane.xlu0 %5512
      %v5514 = vsel %vm5480, %v5459, 0.0
      %5515 = vadd.xlane.f32.xlu0 %v5514
      %v5516 = vpop.xlane.xlu0 %5515
      %v5517 = vsel %vm5480, %v5460, 0.0
      %5518 = vadd.xlane.f32.xlu0 %v5517
      %v5519 = vpop.xlane.xlu0 %5518
      %v5520 = vsel %vm5480, %v5461, 0.0
      %5521 = vadd.xlane.f32.xlu0 %v5520
      %v5522 = vpop.xlane.xlu0 %5521
      %v5523 = vsel %vm5480, %v5462, 0.0
      %5524 = vadd.xlane.f32.xlu0 %v5523
      %v5525 = vpop.xlane.xlu0 %5524
      %v5526 = vsel %vm5480, %v5463, 0.0
      %5527 = vadd.xlane.f32.xlu0 %v5526
      %v5528 = vpop.xlane.xlu0 %5527
      %v5529 = vsel %vm5480, %v5464, 0.0
      %5530 = vadd.xlane.f32.xlu0 %v5529
      %v5531 = vpop.xlane.xlu0 %5530
      %v5532 = vsel %vm5480, %v5465, 0.0
      %5533 = vadd.xlane.f32.xlu0 %v5532
      %v5534 = vpop.xlane.xlu0 %5533
      %v5535 = vsel %vm5480, %v5466, 0.0
      %5536 = vadd.xlane.f32.xlu0 %v5535
      %v5537 = vpop.xlane.xlu0 %5536
      %v5538 = vsel %vm5480, %v5467, 0.0
      %5539 = vadd.xlane.f32.xlu0 %v5538
      %v5540 = vpop.xlane.xlu0 %5539
      %v5541 = vsel %vm5480, %v5468, 0.0
      %5542 = vadd.xlane.f32.xlu0 %v5541
      %v5543 = vpop.xlane.xlu0 %5542
      %v5544 = vsel %vm5480, %v5469, 0.0
      %5545 = vadd.xlane.f32.xlu0 %v5544
      %v5546 = vpop.xlane.xlu0 %5545
      %v5547 = vsel %vm5480, %v5470, 0.0
      %5548 = vadd.xlane.f32.xlu0 %v5547
      %v5549 = vpop.xlane.xlu0 %5548
      %v5550 = vsel %vm5480, %v5471, 0.0
      %5551 = vadd.xlane.f32.xlu0 %v5550
      %v5552 = vpop.xlane.xlu0 %5551
      %v5553 = vsel %vm5480, %v5472, 0.0
      %5554 = vadd.xlane.f32.xlu0 %v5553
      %v5555 = vpop.xlane.xlu0 %5554
      %v5556 = vsel %vm5480, %v5473, 0.0
      %5557 = vadd.xlane.f32.xlu0 %v5556
      %v5558 = vpop.xlane.xlu0 %5557
      %v5559 = vsel %vm5480, %v5474, 0.0
      %5560 = vadd.xlane.f32.xlu0 %v5559
      %v5561 = vpop.xlane.xlu0 %5560
      %v5562 = vsel %vm5480, %v5475, 0.0
      %5563 = vadd.xlane.f32.xlu0 %v5562
      %v5564 = vpop.xlane.xlu0 %5563
      %v5565 = vsel %vm5480, %v5476, 0.0
      %5566 = vadd.xlane.f32.xlu0 %v5565
      %v5567 = vpop.xlane.xlu0 %5566
      %v5568 = vsel %vm5480, %v5477, 0.0
      %5569 = vadd.xlane.f32.xlu0 %v5568
      %v5570 = vpop.xlane.xlu0 %5569
      %v5571 = vsel %vm5480, %v5478, 0.0
      %5572 = vadd.xlane.f32.xlu0 %v5571
      %v5573 = vpop.xlane.xlu0 %5572
      %v5574 = vsel %vm5480, %v5479, 0.0
      %5575 = vadd.xlane.f32.xlu0 %v5574
      %v5576 = vpop.xlane.xlu0 %5575
      %v5577 = vrcp.pop 8.0
      %v5578 = vmul.f32 %v5483, %v5577
      %v5579 = vmul.f32 %v5486, %v5577
      %v5580 = vmul.f32 %v5489, %v5577
      %v5581 = vmul.f32 %v5492, %v5577
      %v5582 = vmul.f32 %v5495, %v5577
      %v5583 = vmul.f32 %v5498, %v5577
      %v5584 = vmul.f32 %v5501, %v5577
      %v5585 = vmul.f32 %v5504, %v5577
      %v5586 = vmul.f32 %v5507, %v5577
      %v5587 = vmul.f32 %v5510, %v5577
      %v5588 = vmul.f32 %v5513, %v5577
      %v5589 = vmul.f32 %v5516, %v5577
      %v5590 = vmul.f32 %v5519, %v5577
      %v5591 = vmul.f32 %v5522, %v5577
      %v5592 = vmul.f32 %v5525, %v5577
      %v5593 = vmul.f32 %v5528, %v5577
      %v5594 = vmul.f32 %v5531, %v5577
      %v5595 = vmul.f32 %v5534, %v5577
      %v5596 = vmul.f32 %v5537, %v5577
      %v5597 = vmul.f32 %v5540, %v5577
      %v5598 = vmul.f32 %v5543, %v5577
      %v5599 = vmul.f32 %v5546, %v5577
      %v5600 = vmul.f32 %v5549, %v5577
      %v5601 = vmul.f32 %v5552, %v5577
      %v5602 = vmul.f32 %v5555, %v5577
      %v5603 = vmul.f32 %v5558, %v5577
      %v5604 = vmul.f32 %v5561, %v5577
      %v5605 = vmul.f32 %v5564, %v5577
      %v5606 = vmul.f32 %v5567, %v5577
      %v5607 = vmul.f32 %v5570, %v5577
      %v5608 = vmul.f32 %v5573, %v5577
      %v5609 = vmul.f32 %v5576, %v5577
      %v5610 = vadd.f32 %v5578, 1e-08
      %v5611 = vadd.f32 %v5579, 1e-08
      %v5612 = vadd.f32 %v5580, 1e-08
      %v5613 = vadd.f32 %v5581, 1e-08
      %v5614 = vadd.f32 %v5582, 1e-08
      %v5615 = vadd.f32 %v5583, 1e-08
      %v5616 = vadd.f32 %v5584, 1e-08
      %v5617 = vadd.f32 %v5585, 1e-08
      %v5618 = vadd.f32 %v5586, 1e-08
      %v5619 = vadd.f32 %v5587, 1e-08
      %v5620 = vadd.f32 %v5588, 1e-08
      %v5621 = vadd.f32 %v5589, 1e-08
      %v5622 = vadd.f32 %v5590, 1e-08
      %v5623 = vadd.f32 %v5591, 1e-08
      %v5624 = vadd.f32 %v5592, 1e-08
      %v5625 = vadd.f32 %v5593, 1e-08
      %v5626 = vadd.f32 %v5594, 1e-08
      %v5627 = vadd.f32 %v5595, 1e-08
      %v5628 = vadd.f32 %v5596, 1e-08
      %v5629 = vadd.f32 %v5597, 1e-08
      %v5630 = vadd.f32 %v5598, 1e-08
      %v5631 = vadd.f32 %v5599, 1e-08
      %v5632 = vadd.f32 %v5600, 1e-08
      %v5633 = vadd.f32 %v5601, 1e-08
      %v5634 = vadd.f32 %v5602, 1e-08
      %v5635 = vadd.f32 %v5603, 1e-08
      %v5636 = vadd.f32 %v5604, 1e-08
      %v5637 = vadd.f32 %v5605, 1e-08
      %v5638 = vadd.f32 %v5606, 1e-08
      %v5639 = vadd.f32 %v5607, 1e-08
      %v5640 = vadd.f32 %v5608, 1e-08
      %v5641 = vadd.f32 %v5609, 1e-08
      %v5642 = vrsqrt.pop %v5610
      %v5643 = vrsqrt.pop %v5611
      %v5644 = vrsqrt.pop %v5612
      %v5645 = vrsqrt.pop %v5613
      %v5646 = vrsqrt.pop %v5614
      %v5647 = vrsqrt.pop %v5615
      %v5648 = vrsqrt.pop %v5616
      %v5649 = vrsqrt.pop %v5617
      %v5650 = vrsqrt.pop %v5618
      %v5651 = vrsqrt.pop %v5619
      %v5652 = vrsqrt.pop %v5620
      %v5653 = vrsqrt.pop %v5621
      %v5654 = vrsqrt.pop %v5622
      %v5655 = vrsqrt.pop %v5623
      %v5656 = vrsqrt.pop %v5624
      %v5657 = vrsqrt.pop %v5625
      %v5658 = vrsqrt.pop %v5626
      %v5659 = vrsqrt.pop %v5627
      %v5660 = vrsqrt.pop %v5628
      %v5661 = vrsqrt.pop %v5629
      %v5662 = vrsqrt.pop %v5630
      %v5663 = vrsqrt.pop %v5631
      %v5664 = vrsqrt.pop %v5632
      %v5665 = vrsqrt.pop %v5633
      %v5666 = vrsqrt.pop %v5634
      %v5667 = vrsqrt.pop %v5635
      %v5668 = vrsqrt.pop %v5636
      %v5669 = vrsqrt.pop %v5637
      %v5670 = vrsqrt.pop %v5638
      %v5671 = vrsqrt.pop %v5639
      %v5672 = vrsqrt.pop %v5640
      %v5673 = vrsqrt.pop %v5641
      %v5674 = vmul.f32 %v5416, %v5642
      %v5675 = vmul.f32 %v5417, %v5643
      %v5676 = vmul.f32 %v5418, %v5644
      %v5677 = vmul.f32 %v5419, %v5645
      %v5678 = vmul.f32 %v5420, %v5646
      %v5679 = vmul.f32 %v5421, %v5647
      %v5680 = vmul.f32 %v5422, %v5648
      %v5681 = vmul.f32 %v5423, %v5649
      %v5682 = vmul.f32 %v5424, %v5650
      %v5683 = vmul.f32 %v5425, %v5651
      %v5684 = vmul.f32 %v5426, %v5652
      %v5685 = vmul.f32 %v5427, %v5653
      %v5686 = vmul.f32 %v5428, %v5654
      %v5687 = vmul.f32 %v5429, %v5655
      %v5688 = vmul.f32 %v5430, %v5656
      %v5689 = vmul.f32 %v5431, %v5657
      %v5690 = vmul.f32 %v5432, %v5658
      %v5691 = vmul.f32 %v5433, %v5659
      %v5692 = vmul.f32 %v5434, %v5660
      %v5693 = vmul.f32 %v5435, %v5661
      %v5694 = vmul.f32 %v5436, %v5662
      %v5695 = vmul.f32 %v5437, %v5663
      %v5696 = vmul.f32 %v5438, %v5664
      %v5697 = vmul.f32 %v5439, %v5665
      %v5698 = vmul.f32 %v5440, %v5666
      %v5699 = vmul.f32 %v5441, %v5667
      %v5700 = vmul.f32 %v5442, %v5668
      %v5701 = vmul.f32 %v5443, %v5669
      %v5702 = vmul.f32 %v5444, %v5670
      %v5703 = vmul.f32 %v5445, %v5671
      %v5704 = vmul.f32 %v5446, %v5672
      %v5705 = vmul.f32 %v5447, %v5673
      %v5706 = vmul.f32 %v5674, 0.1
      %v5707 = vmul.f32 %v5675, 0.1
      %v5708 = vmul.f32 %v5676, 0.1
      %v5709 = vmul.f32 %v5677, 0.1
      %v5710 = vmul.f32 %v5678, 0.1
      %v5711 = vmul.f32 %v5679, 0.1
      %v5712 = vmul.f32 %v5680, 0.1
      %v5713 = vmul.f32 %v5681, 0.1
      %v5714 = vmul.f32 %v5682, 0.1
      %v5715 = vmul.f32 %v5683, 0.1
      %v5716 = vmul.f32 %v5684, 0.1
      %v5717 = vmul.f32 %v5685, 0.1
      %v5718 = vmul.f32 %v5686, 0.1
      %v5719 = vmul.f32 %v5687, 0.1
      %v5720 = vmul.f32 %v5688, 0.1
      %v5721 = vmul.f32 %v5689, 0.1
      %v5722 = vmul.f32 %v5690, 0.1
      %v5723 = vmul.f32 %v5691, 0.1
      %v5724 = vmul.f32 %v5692, 0.1
      %v5725 = vmul.f32 %v5693, 0.1
      %v5726 = vmul.f32 %v5694, 0.1
      %v5727 = vmul.f32 %v5695, 0.1
      %v5728 = vmul.f32 %v5696, 0.1
      %v5729 = vmul.f32 %v5697, 0.1
      %v5730 = vmul.f32 %v5698, 0.1
      %v5731 = vmul.f32 %v5699, 0.1
      %v5732 = vmul.f32 %v5700, 0.1
      %v5733 = vmul.f32 %v5701, 0.1
      %v5734 = vmul.f32 %v5702, 0.1
      %v5735 = vmul.f32 %v5703, 0.1
      %v5736 = vmul.f32 %v5704, 0.1
      %v5737 = vmul.f32 %v5705, 0.1
      %v5738 = vmax.f32 %v5674, %v5706
      %v5739 = vmax.f32 %v5675, %v5707
      %v5740 = vmax.f32 %v5676, %v5708
      %v5741 = vmax.f32 %v5677, %v5709
      %v5742 = vmax.f32 %v5678, %v5710
      %v5743 = vmax.f32 %v5679, %v5711
      %v5744 = vmax.f32 %v5680, %v5712
      %v5745 = vmax.f32 %v5681, %v5713
      %v5746 = vmax.f32 %v5682, %v5714
      %v5747 = vmax.f32 %v5683, %v5715
      %v5748 = vmax.f32 %v5684, %v5716
      %v5749 = vmax.f32 %v5685, %v5717
      %v5750 = vmax.f32 %v5686, %v5718
      %v5751 = vmax.f32 %v5687, %v5719
      %v5752 = vmax.f32 %v5688, %v5720
      %v5753 = vmax.f32 %v5689, %v5721
      %v5754 = vmax.f32 %v5690, %v5722
      %v5755 = vmax.f32 %v5691, %v5723
      %v5756 = vmax.f32 %v5692, %v5724
      %v5757 = vmax.f32 %v5693, %v5725
      %v5758 = vmax.f32 %v5694, %v5726
      %v5759 = vmax.f32 %v5695, %v5727
      %v5760 = vmax.f32 %v5696, %v5728
      %v5761 = vmax.f32 %v5697, %v5729
      %v5762 = vmax.f32 %v5698, %v5730
      %v5763 = vmax.f32 %v5699, %v5731
      %v5764 = vmax.f32 %v5700, %v5732
      %v5765 = vmax.f32 %v5701, %v5733
      %v5766 = vmax.f32 %v5702, %v5734
      %v5767 = vmax.f32 %v5703, %v5735
      %v5768 = vmax.f32 %v5704, %v5736
      %v5769 = vmax.f32 %v5705, %v5737
      %vm5770 = vcmask 60416
      %5771 = vst.msk [vmem:[#allocation3] sm:$0xf] %vm5770, 0
      %5772 = vst.msk [vmem:[#allocation3 + $0x4] sm:$0xf] %vm5770, 0
      %vm5773 = vcmask 57344
      %5774 = vst.msk [vmem:[#allocation3 + $0x8] sm:$0x1] %vm5773, 0
      %5775 = vst.msk [vmem:[#allocation3 + $0xc] sm:$0xf] %vm5770, 0
      %5776 = vst.msk [vmem:[#allocation3 + $0x10] sm:$0xf] %vm5770, 0
      %5777 = vst.msk [vmem:[#allocation3 + $0x14] sm:$0x1] %vm5773, 0
      %5778 = vst.msk [vmem:[#allocation3 + $0x18] sm:$0xf] %vm5770, 0
      %5779 = vst.msk [vmem:[#allocation3 + $0x1c] sm:$0xf] %vm5770, 0
      %5780 = vst.msk [vmem:[#allocation3 + $0x20] sm:$0x1] %vm5773, 0
      %5781 = vst.msk [vmem:[#allocation3 + $0x24] sm:$0xf] %vm5770, 0
      %5782 = vst.msk [vmem:[#allocation3 + $0x28] sm:$0xf] %vm5770, 0
      %5783 = vst.msk [vmem:[#allocation3 + $0x2c] sm:$0x1] %vm5773, 0
      %5784 = vst.msk [vmem:[#allocation3 + $0x30] sm:$0xf] %vm5770, 0
      %5785 = vst.msk [vmem:[#allocation3 + $0x34] sm:$0xf] %vm5770, 0
      %5786 = vst.msk [vmem:[#allocation3 + $0x38] sm:$0x1] %vm5773, 0
      %5787 = vst.msk [vmem:[#allocation3 + $0x3c] sm:$0xf] %vm5770, 0
      %5788 = vst.msk [vmem:[#allocation3 + $0x40] sm:$0xf] %vm5770, 0
      %5789 = vst.msk [vmem:[#allocation3 + $0x44] sm:$0x1] %vm5773, 0
      %5790 = vst.msk [vmem:[#allocation3 + $0x48] sm:$0xf] %vm5770, 0
      %5791 = vst.msk [vmem:[#allocation3 + $0x4c] sm:$0xf] %vm5770, 0
      %5792 = vst.msk [vmem:[#allocation3 + $0x50] sm:$0x1] %vm5773, 0
      %5793 = vst.msk [vmem:[#allocation3 + $0x54] sm:$0xf] %vm5770, 0
      %5794 = vst.msk [vmem:[#allocation3 + $0x58] sm:$0xf] %vm5770, 0
      %5795 = vst.msk [vmem:[#allocation3 + $0x5c] sm:$0x1] %vm5773, 0
      %5796 = vst.msk [vmem:[#allocation3 + $0x60] sm:$0xf] %vm5770, 0
      %5797 = vst.msk [vmem:[#allocation3 + $0x64] sm:$0xf] %vm5770, 0
      %5798 = vst.msk [vmem:[#allocation3 + $0x68] sm:$0x1] %vm5773, 0
      %5799 = vst.msk [vmem:[#allocation3 + $0x6c] sm:$0xf] %vm5770, 0
      %5800 = vst.msk [vmem:[#allocation3 + $0x70] sm:$0xf] %vm5770, 0
      %5801 = vst.msk [vmem:[#allocation3 + $0x74] sm:$0x1] %vm5773, 0
      %5802 = vst.msk [vmem:[#allocation3 + $0x78] sm:$0xf] %vm5770, 0
      %5803 = vst.msk [vmem:[#allocation3 + $0x7c] sm:$0xf] %vm5770, 0
      %5804 = vst.msk [vmem:[#allocation3 + $0x80] sm:$0x1] %vm5773, 0
      %5805 = vst.msk [vmem:[#allocation3 + $0x84] sm:$0xf] %vm5770, 0
      %5806 = vst.msk [vmem:[#allocation3 + $0x88] sm:$0xf] %vm5770, 0
      %5807 = vst.msk [vmem:[#allocation3 + $0x8c] sm:$0x1] %vm5773, 0
      %5808 = vst.msk [vmem:[#allocation3 + $0x90] sm:$0xf] %vm5770, 0
      %5809 = vst.msk [vmem:[#allocation3 + $0x94] sm:$0xf] %vm5770, 0
      %5810 = vst.msk [vmem:[#allocation3 + $0x98] sm:$0x1] %vm5773, 0
      %5811 = vst.msk [vmem:[#allocation3 + $0x9c] sm:$0xf] %vm5770, 0
      %5812 = vst.msk [vmem:[#allocation3 + $0xa0] sm:$0xf] %vm5770, 0
      %5813 = vst.msk [vmem:[#allocation3 + $0xa4] sm:$0x1] %vm5773, 0
      %5814 = vst.msk [vmem:[#allocation3 + $0xa8] sm:$0xf] %vm5770, 0
      %5815 = vst.msk [vmem:[#allocation3 + $0xac] sm:$0xf] %vm5770, 0
      %5816 = vst.msk [vmem:[#allocation3 + $0xb0] sm:$0x1] %vm5773, 0
      %5817 = vst.msk [vmem:[#allocation3 + $0xb4] sm:$0xf] %vm5770, 0
      %5818 = vst.msk [vmem:[#allocation3 + $0xb8] sm:$0xf] %vm5770, 0
      %5819 = vst.msk [vmem:[#allocation3 + $0xbc] sm:$0x1] %vm5773, 0
      %5820 = vst.msk [vmem:[#allocation3 + $0xc0] sm:$0xf] %vm5770, 0
      %5821 = vst.msk [vmem:[#allocation3 + $0xc4] sm:$0xf] %vm5770, 0
      %5822 = vst.msk [vmem:[#allocation3 + $0xc8] sm:$0x1] %vm5773, 0
      %5823 = vst.msk [vmem:[#allocation3 + $0xcc] sm:$0xf] %vm5770, 0
      %5824 = vst.msk [vmem:[#allocation3 + $0xd0] sm:$0xf] %vm5770, 0
      %5825 = vst.msk [vmem:[#allocation3 + $0xd4] sm:$0x1] %vm5773, 0
      %v5826 = vpack.c.bf16 %v5739, %v5738
      %v5827 = vpack.c.bf16 %v5741, %v5740
      %v5828 = vpack.c.bf16 %v5743, %v5742
      %v5829 = vpack.c.bf16 %v5745, %v5744
      %v5830 = vpack.c.bf16 %v5747, %v5746
      %v5831 = vpack.c.bf16 %v5749, %v5748
      %v5832 = vpack.c.bf16 %v5751, %v5750
      %v5833 = vpack.c.bf16 %v5753, %v5752
      %v5834 = vpack.c.bf16 %v5755, %v5754
      %v5835 = vpack.c.bf16 %v5757, %v5756
      %v5836 = vpack.c.bf16 %v5759, %v5758
      %v5837 = vpack.c.bf16 %v5761, %v5760
      %v5838 = vpack.c.bf16 %v5763, %v5762
      %v5839 = vpack.c.bf16 %v5765, %v5764
      %v5840 = vpack.c.bf16 %v5767, %v5766
      %v5841 = vpack.c.bf16 %v5769, %v5768
      %v5858 = vunpack.c.l.b16 %v5826
      %v5859 = vunpack.c.h.b16 %v5826
      %v5860 = vunpack.c.l.b16 %v5827
      %v5861 = vunpack.c.h.b16 %v5827
      %v5862 = vunpack.c.l.b16 %v5828
      %v5863 = vunpack.c.h.b16 %v5828
      %v5864 = vunpack.c.l.b16 %v5829
      %v5865 = vunpack.c.h.b16 %v5829
      %v5866 = vunpack.c.l.b16 %v5830
      %v5867 = vunpack.c.h.b16 %v5830
      %v5868 = vunpack.c.l.b16 %v5831
      %v5869 = vunpack.c.h.b16 %v5831
      %v5870 = vunpack.c.l.b16 %v5832
      %v5871 = vunpack.c.h.b16 %v5832
      %v5872 = vunpack.c.l.b16 %v5833
      %v5873 = vunpack.c.h.b16 %v5833
      %v5874 = vunpack.c.l.b16 %v5834
      %v5875 = vunpack.c.h.b16 %v5834
      %v5876 = vunpack.c.l.b16 %v5835
      %v5877 = vunpack.c.h.b16 %v5835
      %v5878 = vunpack.c.l.b16 %v5836
      %v5879 = vunpack.c.h.b16 %v5836
      %v5880 = vunpack.c.l.b16 %v5837
      %v5881 = vunpack.c.h.b16 %v5837
      %v5882 = vunpack.c.l.b16 %v5838
      %v5883 = vunpack.c.h.b16 %v5838
      %v5884 = vunpack.c.l.b16 %v5839
      %v5885 = vunpack.c.h.b16 %v5839
      %v5886 = vunpack.c.l.b16 %v5840
      %v5887 = vunpack.c.h.b16 %v5840
      %v5888 = vunpack.c.l.b16 %v5841
      %v5889 = vunpack.c.h.b16 %v5841
      %v5890 = vpack.c.b16 %v5858, %v5858
      %v5891 = vpack.c.b16 %v5859, %v5859
      %v5892 = vpack.c.b16 %v5860, %v5860
      %v5893 = vpack.c.b16 %v5861, %v5861
      %v5894 = vpack.c.b16 %v5862, %v5862
      %v5895 = vpack.c.b16 %v5863, %v5863
      %v5896 = vpack.c.b16 %v5864, %v5864
      %v5897 = vpack.c.b16 %v5865, %v5865
      %v5898 = vpack.c.b16 %v5866, %v5866
      %v5899 = vpack.c.b16 %v5867, %v5867
      %v5900 = vpack.c.b16 %v5868, %v5868
      %v5901 = vpack.c.b16 %v5869, %v5869
      %v5902 = vpack.c.b16 %v5870, %v5870
      %v5903 = vpack.c.b16 %v5871, %v5871
      %v5904 = vpack.c.b16 %v5872, %v5872
      %v5905 = vpack.c.b16 %v5873, %v5873
      %v5906 = vpack.c.b16 %v5874, %v5874
      %v5907 = vpack.c.b16 %v5875, %v5875
      %v5908 = vpack.c.b16 %v5876, %v5876
      %v5909 = vpack.c.b16 %v5877, %v5877
      %v5910 = vpack.c.b16 %v5878, %v5878
      %v5911 = vpack.c.b16 %v5879, %v5879
      %v5912 = vpack.c.b16 %v5880, %v5880
      %v5913 = vpack.c.b16 %v5881, %v5881
      %v5914 = vpack.c.b16 %v5882, %v5882
      %v5915 = vpack.c.b16 %v5883, %v5883
      %v5916 = vpack.c.b16 %v5884, %v5884
      %v5917 = vpack.c.b16 %v5885, %v5885
      %v5918 = vpack.c.b16 %v5886, %v5886
      %v5919 = vpack.c.b16 %v5887, %v5887
      %v5920 = vpack.c.b16 %v5888, %v5888
      %v5921 = vpack.c.b16 %v5889, %v5889
      %v5923 = vshrl.u32 %v5890, 16
      %v5925 = vrot.slane %v5923, 7
      %v5926 = vshll.u32 %v5890, 16
      %v5928 = vor.u32 %v5925, %v5926
      %v5929 = vrot.slane %v5925, 4
      %v5931 = vshrl.u32 %v5891, 16
      %v5933 = vrot.slane %v5931, 7
      %v5934 = vshll.u32 %v5891, 16
      %v5936 = vor.u32 %v5933, %v5934
      %v5937 = vsel %vm412, %v5929, %v5936
      %v5938 = vrot.slane %v5933, 4
      %v5940 = vshrl.u32 %v5892, 16
      %v5942 = vrot.slane %v5940, 7
      %v5943 = vshll.u32 %v5892, 16
      %v5945 = vor.u32 %v5942, %v5943
      %v5946 = vrot.slane %v5942, 4
      %v5948 = vshrl.u32 %v5893, 16
      %v5950 = vrot.slane %v5948, 7
      %v5951 = vshll.u32 %v5893, 16
      %v5953 = vor.u32 %v5950, %v5951
      %v5954 = vsel %vm412, %v5946, %v5953
      %v5955 = vrot.slane %v5950, 4
      %v5957 = vshrl.u32 %v5894, 16
      %v5959 = vrot.slane %v5957, 7
      %v5960 = vshll.u32 %v5894, 16
      %v5962 = vor.u32 %v5959, %v5960
      %v5963 = vrot.slane %v5959, 4
      %v5965 = vshrl.u32 %v5895, 16
      %v5967 = vrot.slane %v5965, 7
      %v5968 = vshll.u32 %v5895, 16
      %v5970 = vor.u32 %v5967, %v5968
      %v5971 = vsel %vm412, %v5963, %v5970
      %v5972 = vrot.slane %v5967, 4
      %v5974 = vshrl.u32 %v5896, 16
      %v5976 = vrot.slane %v5974, 7
      %v5977 = vshll.u32 %v5896, 16
      %v5979 = vor.u32 %v5976, %v5977
      %v5980 = vrot.slane %v5976, 4
      %v5982 = vshrl.u32 %v5897, 16
      %v5984 = vrot.slane %v5982, 7
      %v5985 = vshll.u32 %v5897, 16
      %v5987 = vor.u32 %v5984, %v5985
      %v5988 = vsel %vm412, %v5980, %v5987
      %v5989 = vrot.slane %v5984, 4
      %v5991 = vshrl.u32 %v5898, 16
      %v5993 = vrot.slane %v5991, 7
      %v5994 = vshll.u32 %v5898, 16
      %v5996 = vor.u32 %v5993, %v5994
      %v5997 = vrot.slane %v5993, 4
      %v5999 = vshrl.u32 %v5899, 16
      %v6001 = vrot.slane %v5999, 7
      %v6002 = vshll.u32 %v5899, 16
      %v6004 = vor.u32 %v6001, %v6002
      %v6005 = vsel %vm412, %v5997, %v6004
      %v6006 = vrot.slane %v6001, 4
      %v6008 = vshrl.u32 %v5900, 16
      %v6010 = vrot.slane %v6008, 7
      %v6011 = vshll.u32 %v5900, 16
      %v6013 = vor.u32 %v6010, %v6011
      %v6014 = vrot.slane %v6010, 4
      %v6016 = vshrl.u32 %v5901, 16
      %v6018 = vrot.slane %v6016, 7
      %v6019 = vshll.u32 %v5901, 16
      %v6021 = vor.u32 %v6018, %v6019
      %v6022 = vsel %vm412, %v6014, %v6021
      %v6023 = vrot.slane %v6018, 4
      %v6025 = vshrl.u32 %v5902, 16
      %v6027 = vrot.slane %v6025, 7
      %v6028 = vshll.u32 %v5902, 16
      %v6030 = vor.u32 %v6027, %v6028
      %v6031 = vrot.slane %v6027, 4
      %v6033 = vshrl.u32 %v5903, 16
      %v6035 = vrot.slane %v6033, 7
      %v6036 = vshll.u32 %v5903, 16
      %v6038 = vor.u32 %v6035, %v6036
      %v6039 = vsel %vm412, %v6031, %v6038
      %v6040 = vrot.slane %v6035, 4
      %v6042 = vshrl.u32 %v5904, 16
      %v6044 = vrot.slane %v6042, 7
      %v6045 = vshll.u32 %v5904, 16
      %v6047 = vor.u32 %v6044, %v6045
      %v6048 = vrot.slane %v6044, 4
      %v6050 = vshrl.u32 %v5905, 16
      %v6052 = vrot.slane %v6050, 7
      %v6053 = vshll.u32 %v5905, 16
      %v6055 = vor.u32 %v6052, %v6053
      %v6056 = vsel %vm412, %v6048, %v6055
      %v6057 = vrot.slane %v6052, 4
      %v6059 = vshrl.u32 %v5906, 16
      %v6061 = vrot.slane %v6059, 7
      %v6062 = vshll.u32 %v5906, 16
      %v6064 = vor.u32 %v6061, %v6062
      %v6065 = vrot.slane %v6061, 4
      %v6067 = vshrl.u32 %v5907, 16
      %v6069 = vrot.slane %v6067, 7
      %v6070 = vshll.u32 %v5907, 16
      %v6072 = vor.u32 %v6069, %v6070
      %v6073 = vsel %vm412, %v6065, %v6072
      %v6074 = vrot.slane %v6069, 4
      %v6076 = vshrl.u32 %v5908, 16
      %v6078 = vrot.slane %v6076, 7
      %v6079 = vshll.u32 %v5908, 16
      %v6081 = vor.u32 %v6078, %v6079
      %v6082 = vrot.slane %v6078, 4
      %v6084 = vshrl.u32 %v5909, 16
      %v6086 = vrot.slane %v6084, 7
      %v6087 = vshll.u32 %v5909, 16
      %v6089 = vor.u32 %v6086, %v6087
      %v6090 = vsel %vm412, %v6082, %v6089
      %v6091 = vrot.slane %v6086, 4
      %v6093 = vshrl.u32 %v5910, 16
      %v6095 = vrot.slane %v6093, 7
      %v6096 = vshll.u32 %v5910, 16
      %v6098 = vor.u32 %v6095, %v6096
      %v6099 = vrot.slane %v6095, 4
      %v6101 = vshrl.u32 %v5911, 16
      %v6103 = vrot.slane %v6101, 7
      %v6104 = vshll.u32 %v5911, 16
      %v6106 = vor.u32 %v6103, %v6104
      %v6107 = vsel %vm412, %v6099, %v6106
      %v6108 = vrot.slane %v6103, 4
      %v6110 = vshrl.u32 %v5912, 16
      %v6112 = vrot.slane %v6110, 7
      %v6113 = vshll.u32 %v5912, 16
      %v6115 = vor.u32 %v6112, %v6113
      %v6116 = vrot.slane %v6112, 4
      %v6118 = vshrl.u32 %v5913, 16
      %v6120 = vrot.slane %v6118, 7
      %v6121 = vshll.u32 %v5913, 16
      %v6123 = vor.u32 %v6120, %v6121
      %v6124 = vsel %vm412, %v6116, %v6123
      %v6125 = vrot.slane %v6120, 4
      %v6127 = vshrl.u32 %v5914, 16
      %v6129 = vrot.slane %v6127, 7
      %v6130 = vshll.u32 %v5914, 16
      %v6132 = vor.u32 %v6129, %v6130
      %v6133 = vrot.slane %v6129, 4
      %v6135 = vshrl.u32 %v5915, 16
      %v6137 = vrot.slane %v6135, 7
      %v6138 = vshll.u32 %v5915, 16
      %v6140 = vor.u32 %v6137, %v6138
      %v6141 = vsel %vm412, %v6133, %v6140
      %v6142 = vrot.slane %v6137, 4
      %v6144 = vshrl.u32 %v5916, 16
      %v6146 = vrot.slane %v6144, 7
      %v6147 = vshll.u32 %v5916, 16
      %v6149 = vor.u32 %v6146, %v6147
      %v6150 = vrot.slane %v6146, 4
      %v6152 = vshrl.u32 %v5917, 16
      %v6154 = vrot.slane %v6152, 7
      %v6155 = vshll.u32 %v5917, 16
      %v6157 = vor.u32 %v6154, %v6155
      %v6158 = vsel %vm412, %v6150, %v6157
      %v6159 = vrot.slane %v6154, 4
      %v6161 = vshrl.u32 %v5918, 16
      %v6163 = vrot.slane %v6161, 7
      %v6164 = vshll.u32 %v5918, 16
      %v6166 = vor.u32 %v6163, %v6164
      %v6167 = vrot.slane %v6163, 4
      %v6169 = vshrl.u32 %v5919, 16
      %v6171 = vrot.slane %v6169, 7
      %v6172 = vshll.u32 %v5919, 16
      %v6174 = vor.u32 %v6171, %v6172
      %v6175 = vsel %vm412, %v6167, %v6174
      %v6176 = vrot.slane %v6171, 4
      %v6178 = vshrl.u32 %v5920, 16
      %v6180 = vrot.slane %v6178, 7
      %v6181 = vshll.u32 %v5920, 16
      %v6183 = vor.u32 %v6180, %v6181
      %v6184 = vrot.slane %v6180, 4
      %v6186 = vshrl.u32 %v5921, 16
      %v6188 = vrot.slane %v6186, 7
      %v6189 = vshll.u32 %v5921, 16
      %v6191 = vor.u32 %v6188, %v6189
      %v6192 = vsel %vm412, %v6184, %v6191
      %v6193 = vrot.slane %v6188, 4
      %s6242 = scalar_lea.vmem [#allocation3], 12
      %vm6243 = vcmask 60416
      %vm6244 = vmand %vm6243, %vm735
      %v6245 = vld [vmem:[%s6242] sm:$0xf]
      %v6246 = vsel %vm6244, %v5928, %v6245
      %6247 = vst [vmem:[%s6242] sm:$0xf] %v6246
      %6248 = vst.msk [vmem:[%s6242 + $0x4] sm:$0xf] %vm5770, %v5937
      %vm6249 = vcmask 57344
      %vm6250 = vmand %vm6249, %vm410
      %v6251 = vld [vmem:[%s6242 + $0x8] sm:$0x1]
      %v6252 = vsel %vm6250, %v5938, %v6251
      %6253 = vst [vmem:[%s6242 + $0x8] sm:$0x1] %v6252
      %v6254 = vld [vmem:[%s6242 + $0xc] sm:$0xf]
      %v6255 = vsel %vm6244, %v5945, %v6254
      %6256 = vst [vmem:[%s6242 + $0xc] sm:$0xf] %v6255
      %6257 = vst.msk [vmem:[%s6242 + $0x10] sm:$0xf] %vm5770, %v5954
      %v6258 = vld [vmem:[%s6242 + $0x14] sm:$0x1]
      %v6259 = vsel %vm6250, %v5955, %v6258
      %6260 = vst [vmem:[%s6242 + $0x14] sm:$0x1] %v6259
      %v6261 = vld [vmem:[%s6242 + $0x18] sm:$0xf]
      %v6262 = vsel %vm6244, %v5962, %v6261
      %6263 = vst [vmem:[%s6242 + $0x18] sm:$0xf] %v6262
      %6264 = vst.msk [vmem:[%s6242 + $0x1c] sm:$0xf] %vm5770, %v5971
      %v6265 = vld [vmem:[%s6242 + $0x20] sm:$0x1]
      %v6266 = vsel %vm6250, %v5972, %v6265
      %6267 = vst [vmem:[%s6242 + $0x20] sm:$0x1] %v6266
      %v6268 = vld [vmem:[%s6242 + $0x24] sm:$0xf]
      %v6269 = vsel %vm6244, %v5979, %v6268
      %6270 = vst [vmem:[%s6242 + $0x24] sm:$0xf] %v6269
      %6271 = vst.msk [vmem:[%s6242 + $0x28] sm:$0xf] %vm5770, %v5988
      %v6272 = vld [vmem:[%s6242 + $0x2c] sm:$0x1]
      %v6273 = vsel %vm6250, %v5989, %v6272
      %6274 = vst [vmem:[%s6242 + $0x2c] sm:$0x1] %v6273
      %v6275 = vld [vmem:[%s6242 + $0x30] sm:$0xf]
      %v6276 = vsel %vm6244, %v5996, %v6275
      %6277 = vst [vmem:[%s6242 + $0x30] sm:$0xf] %v6276
      %6278 = vst.msk [vmem:[%s6242 + $0x34] sm:$0xf] %vm5770, %v6005
      %v6279 = vld [vmem:[%s6242 + $0x38] sm:$0x1]
      %v6280 = vsel %vm6250, %v6006, %v6279
      %6281 = vst [vmem:[%s6242 + $0x38] sm:$0x1] %v6280
      %v6282 = vld [vmem:[%s6242 + $0x3c] sm:$0xf]
      %v6283 = vsel %vm6244, %v6013, %v6282
      %6284 = vst [vmem:[%s6242 + $0x3c] sm:$0xf] %v6283
      %6285 = vst.msk [vmem:[%s6242 + $0x40] sm:$0xf] %vm5770, %v6022
      %v6286 = vld [vmem:[%s6242 + $0x44] sm:$0x1]
      %v6287 = vsel %vm6250, %v6023, %v6286
      %6288 = vst [vmem:[%s6242 + $0x44] sm:$0x1] %v6287
      %v6289 = vld [vmem:[%s6242 + $0x48] sm:$0xf]
      %v6290 = vsel %vm6244, %v6030, %v6289
      %6291 = vst [vmem:[%s6242 + $0x48] sm:$0xf] %v6290
      %6292 = vst.msk [vmem:[%s6242 + $0x4c] sm:$0xf] %vm5770, %v6039
      %v6293 = vld [vmem:[%s6242 + $0x50] sm:$0x1]
      %v6294 = vsel %vm6250, %v6040, %v6293
      %6295 = vst [vmem:[%s6242 + $0x50] sm:$0x1] %v6294
      %v6296 = vld [vmem:[%s6242 + $0x54] sm:$0xf]
      %v6297 = vsel %vm6244, %v6047, %v6296
      %6298 = vst [vmem:[%s6242 + $0x54] sm:$0xf] %v6297
      %6299 = vst.msk [vmem:[%s6242 + $0x58] sm:$0xf] %vm5770, %v6056
      %v6300 = vld [vmem:[%s6242 + $0x5c] sm:$0x1]
      %v6301 = vsel %vm6250, %v6057, %v6300
      %6302 = vst [vmem:[%s6242 + $0x5c] sm:$0x1] %v6301
      %v6303 = vld [vmem:[%s6242 + $0x60] sm:$0xf]
      %v6304 = vsel %vm6244, %v6064, %v6303
      %6305 = vst [vmem:[%s6242 + $0x60] sm:$0xf] %v6304
      %6306 = vst.msk [vmem:[%s6242 + $0x64] sm:$0xf] %vm5770, %v6073
      %v6307 = vld [vmem:[%s6242 + $0x68] sm:$0x1]
      %v6308 = vsel %vm6250, %v6074, %v6307
      %6309 = vst [vmem:[%s6242 + $0x68] sm:$0x1] %v6308
      %v6310 = vld [vmem:[%s6242 + $0x6c] sm:$0xf]
      %v6311 = vsel %vm6244, %v6081, %v6310
      %6312 = vst [vmem:[%s6242 + $0x6c] sm:$0xf] %v6311
      %6313 = vst.msk [vmem:[%s6242 + $0x70] sm:$0xf] %vm5770, %v6090
      %v6314 = vld [vmem:[%s6242 + $0x74] sm:$0x1]
      %v6315 = vsel %vm6250, %v6091, %v6314
      %6316 = vst [vmem:[%s6242 + $0x74] sm:$0x1] %v6315
      %v6317 = vld [vmem:[%s6242 + $0x78] sm:$0xf]
      %v6318 = vsel %vm6244, %v6098, %v6317
      %6319 = vst [vmem:[%s6242 + $0x78] sm:$0xf] %v6318
      %6320 = vst.msk [vmem:[%s6242 + $0x7c] sm:$0xf] %vm5770, %v6107
      %v6321 = vld [vmem:[%s6242 + $0x80] sm:$0x1]
      %v6322 = vsel %vm6250, %v6108, %v6321
      %6323 = vst [vmem:[%s6242 + $0x80] sm:$0x1] %v6322
      %v6324 = vld [vmem:[%s6242 + $0x84] sm:$0xf]
      %v6325 = vsel %vm6244, %v6115, %v6324
      %6326 = vst [vmem:[%s6242 + $0x84] sm:$0xf] %v6325
      %6327 = vst.msk [vmem:[%s6242 + $0x88] sm:$0xf] %vm5770, %v6124
      %v6328 = vld [vmem:[%s6242 + $0x8c] sm:$0x1]
      %v6329 = vsel %vm6250, %v6125, %v6328
      %6330 = vst [vmem:[%s6242 + $0x8c] sm:$0x1] %v6329
      %v6331 = vld [vmem:[%s6242 + $0x90] sm:$0xf]
      %v6332 = vsel %vm6244, %v6132, %v6331
      %6333 = vst [vmem:[%s6242 + $0x90] sm:$0xf] %v6332
      %6334 = vst.msk [vmem:[%s6242 + $0x94] sm:$0xf] %vm5770, %v6141
      %v6335 = vld [vmem:[%s6242 + $0x98] sm:$0x1]
      %v6336 = vsel %vm6250, %v6142, %v6335
      %6337 = vst [vmem:[%s6242 + $0x98] sm:$0x1] %v6336
      %v6338 = vld [vmem:[%s6242 + $0x9c] sm:$0xf]
      %v6339 = vsel %vm6244, %v6149, %v6338
      %6340 = vst [vmem:[%s6242 + $0x9c] sm:$0xf] %v6339
      %6341 = vst.msk [vmem:[%s6242 + $0xa0] sm:$0xf] %vm5770, %v6158
      %v6342 = vld [vmem:[%s6242 + $0xa4] sm:$0x1]
      %v6343 = vsel %vm6250, %v6159, %v6342
      %6344 = vst [vmem:[%s6242 + $0xa4] sm:$0x1] %v6343
      %v6345 = vld [vmem:[%s6242 + $0xa8] sm:$0xf]
      %v6346 = vsel %vm6244, %v6166, %v6345
      %6347 = vst [vmem:[%s6242 + $0xa8] sm:$0xf] %v6346
      %6348 = vst.msk [vmem:[%s6242 + $0xac] sm:$0xf] %vm5770, %v6175
      %v6349 = vld [vmem:[%s6242 + $0xb0] sm:$0x1]
      %v6350 = vsel %vm6250, %v6176, %v6349
      %6351 = vst [vmem:[%s6242 + $0xb0] sm:$0x1] %v6350
      %v6352 = vld [vmem:[%s6242 + $0xb4] sm:$0xf]
      %v6353 = vsel %vm6244, %v6183, %v6352
      %6354 = vst [vmem:[%s6242 + $0xb4] sm:$0xf] %v6353
      %6355 = vst.msk [vmem:[%s6242 + $0xb8] sm:$0xf] %vm5770, %v6192
      %v6356 = vld [vmem:[%s6242 + $0xbc] sm:$0x1]
      %v6357 = vsel %vm6250, %v6193, %v6356
      %6358 = vst [vmem:[%s6242 + $0xbc] sm:$0x1] %v6357
      %v6359 = vld [vmem:[#allocation3] sm:$0xf]
      %v6360 = vld [vmem:[#allocation3 + $0x4] sm:$0xf]
      %v6361 = vld [vmem:[#allocation3 + $0xc] sm:$0xf]
      %v6362 = vld [vmem:[#allocation3 + $0x10] sm:$0xf]
      %v6363 = vld [vmem:[#allocation3 + $0x18] sm:$0xf]
      %v6364 = vld [vmem:[#allocation3 + $0x1c] sm:$0xf]
      %v6365 = vld [vmem:[#allocation3 + $0x24] sm:$0xf]
      %v6366 = vld [vmem:[#allocation3 + $0x28] sm:$0xf]
      %v6367 = vld [vmem:[#allocation3 + $0x30] sm:$0xf]
      %v6368 = vld [vmem:[#allocation3 + $0x34] sm:$0xf]
      %v6369 = vld [vmem:[#allocation3 + $0x3c] sm:$0xf]
      %v6370 = vld [vmem:[#allocation3 + $0x40] sm:$0xf]
      %v6371 = vld [vmem:[#allocation3 + $0x48] sm:$0xf]
      %v6372 = vld [vmem:[#allocation3 + $0x4c] sm:$0xf]
      %v6373 = vld [vmem:[#allocation3 + $0x54] sm:$0xf]
      %v6374 = vld [vmem:[#allocation3 + $0x58] sm:$0xf]
      %v6375 = vld [vmem:[#allocation3 + $0x60] sm:$0xf]
      %v6376 = vld [vmem:[#allocation3 + $0x64] sm:$0xf]
      %v6377 = vld [vmem:[#allocation3 + $0x6c] sm:$0xf]
      %v6378 = vld [vmem:[#allocation3 + $0x70] sm:$0xf]
      %v6379 = vld [vmem:[#allocation3 + $0x78] sm:$0xf]
      %v6380 = vld [vmem:[#allocation3 + $0x7c] sm:$0xf]
      %v6381 = vld [vmem:[#allocation3 + $0x84] sm:$0xf]
      %v6382 = vld [vmem:[#allocation3 + $0x88] sm:$0xf]
      %v6383 = vld [vmem:[#allocation3 + $0x90] sm:$0xf]
      %v6384 = vld [vmem:[#allocation3 + $0x94] sm:$0xf]
      %v6385 = vld [vmem:[#allocation3 + $0x9c] sm:$0xf]
      %v6386 = vld [vmem:[#allocation3 + $0xa0] sm:$0xf]
      %v6387 = vld [vmem:[#allocation3 + $0xa8] sm:$0xf]
      %v6388 = vld [vmem:[#allocation3 + $0xac] sm:$0xf]
      %v6389 = vld [vmem:[#allocation3 + $0xb4] sm:$0xf]
      %v6390 = vld [vmem:[#allocation3 + $0xb8] sm:$0xf]
      %v6391 = vld [vmem:[%s3] sm:$0xf]
      %v6392 = vld [vmem:[#allocation3 + $0x8] sm:$0x1]
      %v6393 = vld [vmem:[#allocation3 + $0x14] sm:$0x1]
      %v6394 = vld [vmem:[#allocation3 + $0x20] sm:$0x1]
      %v6395 = vld [vmem:[#allocation3 + $0x2c] sm:$0x1]
      %v6396 = vld [vmem:[#allocation3 + $0x38] sm:$0x1]
      %v6397 = vld [vmem:[#allocation3 + $0x44] sm:$0x1]
      %v6398 = vld [vmem:[#allocation3 + $0x50] sm:$0x1]
      %v6399 = vld [vmem:[#allocation3 + $0x5c] sm:$0x1]
      %v6400 = vld [vmem:[#allocation3 + $0x68] sm:$0x1]
      %v6401 = vld [vmem:[#allocation3 + $0x74] sm:$0x1]
      %v6402 = vld [vmem:[#allocation3 + $0x80] sm:$0x1]
      %v6403 = vld [vmem:[#allocation3 + $0x8c] sm:$0x1]
      %v6404 = vld [vmem:[#allocation3 + $0x98] sm:$0x1]
      %v6405 = vld [vmem:[#allocation3 + $0xa4] sm:$0x1]
      %v6406 = vld [vmem:[#allocation3 + $0xb0] sm:$0x1]
      %v6407 = vld [vmem:[#allocation3 + $0xbc] sm:$0x1]
      %v6409 = vshrl.u32 %v6359, 16
      %v6411 = vrot.slane %v6409, 4
      %v6412 = vshll.u32 %v6359, 16
      %v6414 = vrot.slane %v6412, 5
      %v6415 = vor.u32 %v6411, %v6414
      %v6416 = vrot.slane %v6415, 4
      %v6418 = vshll.u32 %v6360, 16
      %v6420 = vrot.slane %v6418, 5
      %v6421 = vsel %vm902, %v6416, %v6420
      %v6422 = vshrl.u32 %v6360, 16
      %v6424 = vrot.slane %v6422, 4
      %v6425 = vor.u32 %v6424, %v6420
      %v6426 = vrot.slane %v6425, 4
      %v6428 = vshll.u32 %v6392, 16
      %v6430 = vrot.slane %v6428, 5
      %v6431 = vsel %vm902, %v6426, %v6430
      %v6433 = vshrl.u32 %v6361, 16
      %v6435 = vrot.slane %v6433, 4
      %v6436 = vshll.u32 %v6361, 16
      %v6438 = vrot.slane %v6436, 5
      %v6439 = vor.u32 %v6435, %v6438
      %v6440 = vrot.slane %v6439, 4
      %v6442 = vshll.u32 %v6362, 16
      %v6444 = vrot.slane %v6442, 5
      %v6445 = vsel %vm902, %v6440, %v6444
      %v6446 = vshrl.u32 %v6362, 16
      %v6448 = vrot.slane %v6446, 4
      %v6449 = vor.u32 %v6448, %v6444
      %v6450 = vrot.slane %v6449, 4
      %v6452 = vshll.u32 %v6393, 16
      %v6454 = vrot.slane %v6452, 5
      %v6455 = vsel %vm902, %v6450, %v6454
      %v6457 = vshrl.u32 %v6363, 16
      %v6459 = vrot.slane %v6457, 4
      %v6460 = vshll.u32 %v6363, 16
      %v6462 = vrot.slane %v6460, 5
      %v6463 = vor.u32 %v6459, %v6462
      %v6464 = vrot.slane %v6463, 4
      %v6466 = vshll.u32 %v6364, 16
      %v6468 = vrot.slane %v6466, 5
      %v6469 = vsel %vm902, %v6464, %v6468
      %v6470 = vshrl.u32 %v6364, 16
      %v6472 = vrot.slane %v6470, 4
      %v6473 = vor.u32 %v6472, %v6468
      %v6474 = vrot.slane %v6473, 4
      %v6476 = vshll.u32 %v6394, 16
      %v6478 = vrot.slane %v6476, 5
      %v6479 = vsel %vm902, %v6474, %v6478
      %v6481 = vshrl.u32 %v6365, 16
      %v6483 = vrot.slane %v6481, 4
      %v6484 = vshll.u32 %v6365, 16
      %v6486 = vrot.slane %v6484, 5
      %v6487 = vor.u32 %v6483, %v6486
      %v6488 = vrot.slane %v6487, 4
      %v6490 = vshll.u32 %v6366, 16
      %v6492 = vrot.slane %v6490, 5
      %v6493 = vsel %vm902, %v6488, %v6492
      %v6494 = vshrl.u32 %v6366, 16
      %v6496 = vrot.slane %v6494, 4
      %v6497 = vor.u32 %v6496, %v6492
      %v6498 = vrot.slane %v6497, 4
      %v6500 = vshll.u32 %v6395, 16
      %v6502 = vrot.slane %v6500, 5
      %v6503 = vsel %vm902, %v6498, %v6502
      %v6505 = vshrl.u32 %v6367, 16
      %v6507 = vrot.slane %v6505, 4
      %v6508 = vshll.u32 %v6367, 16
      %v6510 = vrot.slane %v6508, 5
      %v6511 = vor.u32 %v6507, %v6510
      %v6512 = vrot.slane %v6511, 4
      %v6514 = vshll.u32 %v6368, 16
      %v6516 = vrot.slane %v6514, 5
      %v6517 = vsel %vm902, %v6512, %v6516
      %v6518 = vshrl.u32 %v6368, 16
      %v6520 = vrot.slane %v6518, 4
      %v6521 = vor.u32 %v6520, %v6516
      %v6522 = vrot.slane %v6521, 4
      %v6524 = vshll.u32 %v6396, 16
      %v6526 = vrot.slane %v6524, 5
      %v6527 = vsel %vm902, %v6522, %v6526
      %v6529 = vshrl.u32 %v6369, 16
      %v6531 = vrot.slane %v6529, 4
      %v6532 = vshll.u32 %v6369, 16
      %v6534 = vrot.slane %v6532, 5
      %v6535 = vor.u32 %v6531, %v6534
      %v6536 = vrot.slane %v6535, 4
      %v6538 = vshll.u32 %v6370, 16
      %v6540 = vrot.slane %v6538, 5
      %v6541 = vsel %vm902, %v6536, %v6540
      %v6542 = vshrl.u32 %v6370, 16
      %v6544 = vrot.slane %v6542, 4
      %v6545 = vor.u32 %v6544, %v6540
      %v6546 = vrot.slane %v6545, 4
      %v6548 = vshll.u32 %v6397, 16
      %v6550 = vrot.slane %v6548, 5
      %v6551 = vsel %vm902, %v6546, %v6550
      %v6553 = vshrl.u32 %v6371, 16
      %v6555 = vrot.slane %v6553, 4
      %v6556 = vshll.u32 %v6371, 16
      %v6558 = vrot.slane %v6556, 5
      %v6559 = vor.u32 %v6555, %v6558
      %v6560 = vrot.slane %v6559, 4
      %v6562 = vshll.u32 %v6372, 16
      %v6564 = vrot.slane %v6562, 5
      %v6565 = vsel %vm902, %v6560, %v6564
      %v6566 = vshrl.u32 %v6372, 16
      %v6568 = vrot.slane %v6566, 4
      %v6569 = vor.u32 %v6568, %v6564
      %v6570 = vrot.slane %v6569, 4
      %v6572 = vshll.u32 %v6398, 16
      %v6574 = vrot.slane %v6572, 5
      %v6575 = vsel %vm902, %v6570, %v6574
      %v6577 = vshrl.u32 %v6373, 16
      %v6579 = vrot.slane %v6577, 4
      %v6580 = vshll.u32 %v6373, 16
      %v6582 = vrot.slane %v6580, 5
      %v6583 = vor.u32 %v6579, %v6582
      %v6584 = vrot.slane %v6583, 4
      %v6586 = vshll.u32 %v6374, 16
      %v6588 = vrot.slane %v6586, 5
      %v6589 = vsel %vm902, %v6584, %v6588
      %v6590 = vshrl.u32 %v6374, 16
      %v6592 = vrot.slane %v6590, 4
      %v6593 = vor.u32 %v6592, %v6588
      %v6594 = vrot.slane %v6593, 4
      %v6596 = vshll.u32 %v6399, 16
      %v6598 = vrot.slane %v6596, 5
      %v6599 = vsel %vm902, %v6594, %v6598
      %v6601 = vshrl.u32 %v6375, 16
      %v6603 = vrot.slane %v6601, 4
      %v6604 = vshll.u32 %v6375, 16
      %v6606 = vrot.slane %v6604, 5
      %v6607 = vor.u32 %v6603, %v6606
      %v6608 = vrot.slane %v6607, 4
      %v6610 = vshll.u32 %v6376, 16
      %v6612 = vrot.slane %v6610, 5
      %v6613 = vsel %vm902, %v6608, %v6612
      %v6614 = vshrl.u32 %v6376, 16
      %v6616 = vrot.slane %v6614, 4
      %v6617 = vor.u32 %v6616, %v6612
      %v6618 = vrot.slane %v6617, 4
      %v6620 = vshll.u32 %v6400, 16
      %v6622 = vrot.slane %v6620, 5
      %v6623 = vsel %vm902, %v6618, %v6622
      %v6625 = vshrl.u32 %v6377, 16
      %v6627 = vrot.slane %v6625, 4
      %v6628 = vshll.u32 %v6377, 16
      %v6630 = vrot.slane %v6628, 5
      %v6631 = vor.u32 %v6627, %v6630
      %v6632 = vrot.slane %v6631, 4
      %v6634 = vshll.u32 %v6378, 16
      %v6636 = vrot.slane %v6634, 5
      %v6637 = vsel %vm902, %v6632, %v6636
      %v6638 = vshrl.u32 %v6378, 16
      %v6640 = vrot.slane %v6638, 4
      %v6641 = vor.u32 %v6640, %v6636
      %v6642 = vrot.slane %v6641, 4
      %v6644 = vshll.u32 %v6401, 16
      %v6646 = vrot.slane %v6644, 5
      %v6647 = vsel %vm902, %v6642, %v6646
      %v6649 = vshrl.u32 %v6379, 16
      %v6651 = vrot.slane %v6649, 4
      %v6652 = vshll.u32 %v6379, 16
      %v6654 = vrot.slane %v6652, 5
      %v6655 = vor.u32 %v6651, %v6654
      %v6656 = vrot.slane %v6655, 4
      %v6658 = vshll.u32 %v6380, 16
      %v6660 = vrot.slane %v6658, 5
      %v6661 = vsel %vm902, %v6656, %v6660
      %v6662 = vshrl.u32 %v6380, 16
      %v6664 = vrot.slane %v6662, 4
      %v6665 = vor.u32 %v6664, %v6660
      %v6666 = vrot.slane %v6665, 4
      %v6668 = vshll.u32 %v6402, 16
      %v6670 = vrot.slane %v6668, 5
      %v6671 = vsel %vm902, %v6666, %v6670
      %v6673 = vshrl.u32 %v6381, 16
      %v6675 = vrot.slane %v6673, 4
      %v6676 = vshll.u32 %v6381, 16
      %v6678 = vrot.slane %v6676, 5
      %v6679 = vor.u32 %v6675, %v6678
      %v6680 = vrot.slane %v6679, 4
      %v6682 = vshll.u32 %v6382, 16
      %v6684 = vrot.slane %v6682, 5
      %v6685 = vsel %vm902, %v6680, %v6684
      %v6686 = vshrl.u32 %v6382, 16
      %v6688 = vrot.slane %v6686, 4
      %v6689 = vor.u32 %v6688, %v6684
      %v6690 = vrot.slane %v6689, 4
      %v6692 = vshll.u32 %v6403, 16
      %v6694 = vrot.slane %v6692, 5
      %v6695 = vsel %vm902, %v6690, %v6694
      %v6697 = vshrl.u32 %v6383, 16
      %v6699 = vrot.slane %v6697, 4
      %v6700 = vshll.u32 %v6383, 16
      %v6702 = vrot.slane %v6700, 5
      %v6703 = vor.u32 %v6699, %v6702
      %v6704 = vrot.slane %v6703, 4
      %v6706 = vshll.u32 %v6384, 16
      %v6708 = vrot.slane %v6706, 5
      %v6709 = vsel %vm902, %v6704, %v6708
      %v6710 = vshrl.u32 %v6384, 16
      %v6712 = vrot.slane %v6710, 4
      %v6713 = vor.u32 %v6712, %v6708
      %v6714 = vrot.slane %v6713, 4
      %v6716 = vshll.u32 %v6404, 16
      %v6718 = vrot.slane %v6716, 5
      %v6719 = vsel %vm902, %v6714, %v6718
      %v6721 = vshrl.u32 %v6385, 16
      %v6723 = vrot.slane %v6721, 4
      %v6724 = vshll.u32 %v6385, 16
      %v6726 = vrot.slane %v6724, 5
      %v6727 = vor.u32 %v6723, %v6726
      %v6728 = vrot.slane %v6727, 4
      %v6730 = vshll.u32 %v6386, 16
      %v6732 = vrot.slane %v6730, 5
      %v6733 = vsel %vm902, %v6728, %v6732
      %v6734 = vshrl.u32 %v6386, 16
      %v6736 = vrot.slane %v6734, 4
      %v6737 = vor.u32 %v6736, %v6732
      %v6738 = vrot.slane %v6737, 4
      %v6740 = vshll.u32 %v6405, 16
      %v6742 = vrot.slane %v6740, 5
      %v6743 = vsel %vm902, %v6738, %v6742
      %v6745 = vshrl.u32 %v6387, 16
      %v6747 = vrot.slane %v6745, 4
      %v6748 = vshll.u32 %v6387, 16
      %v6750 = vrot.slane %v6748, 5
      %v6751 = vor.u32 %v6747, %v6750
      %v6752 = vrot.slane %v6751, 4
      %v6754 = vshll.u32 %v6388, 16
      %v6756 = vrot.slane %v6754, 5
      %v6757 = vsel %vm902, %v6752, %v6756
      %v6758 = vshrl.u32 %v6388, 16
      %v6760 = vrot.slane %v6758, 4
      %v6761 = vor.u32 %v6760, %v6756
      %v6762 = vrot.slane %v6761, 4
      %v6764 = vshll.u32 %v6406, 16
      %v6766 = vrot.slane %v6764, 5
      %v6767 = vsel %vm902, %v6762, %v6766
      %v6769 = vshrl.u32 %v6389, 16
      %v6771 = vrot.slane %v6769, 4
      %v6772 = vshll.u32 %v6389, 16
      %v6774 = vrot.slane %v6772, 5
      %v6775 = vor.u32 %v6771, %v6774
      %v6776 = vrot.slane %v6775, 4
      %v6778 = vshll.u32 %v6390, 16
      %v6780 = vrot.slane %v6778, 5
      %v6781 = vsel %vm902, %v6776, %v6780
      %v6782 = vshrl.u32 %v6390, 16
      %v6784 = vrot.slane %v6782, 4
      %v6785 = vor.u32 %v6784, %v6780
      %v6786 = vrot.slane %v6785, 4
      %v6788 = vshll.u32 %v6407, 16
      %v6790 = vrot.slane %v6788, 5
      %v6791 = vsel %vm902, %v6786, %v6790
      %s6792 = scalar_lea.vmem %s3, 4
      %v6793 = vld [vmem:[%s6792] sm:$0xf]
      %v6794 = vunpack.c.l.b16 %v6421
      %v6795 = vunpack.c.l.b16 %v6431
      %v6796 = vunpack.c.l.b16 %v6445
      %v6797 = vunpack.c.l.b16 %v6455
      %v6798 = vunpack.c.l.b16 %v6469
      %v6799 = vunpack.c.l.b16 %v6479
      %v6800 = vunpack.c.l.b16 %v6493
      %v6801 = vunpack.c.l.b16 %v6503
      %v6802 = vunpack.c.l.b16 %v6517
      %v6803 = vunpack.c.l.b16 %v6527
      %v6804 = vunpack.c.l.b16 %v6541
      %v6805 = vunpack.c.l.b16 %v6551
      %v6806 = vunpack.c.l.b16 %v6565
      %v6807 = vunpack.c.l.b16 %v6575
      %v6808 = vunpack.c.l.b16 %v6589
      %v6809 = vunpack.c.l.b16 %v6599
      %v6810 = vunpack.c.l.b16 %v6613
      %v6811 = vunpack.c.l.b16 %v6623
      %v6812 = vunpack.c.l.b16 %v6637
      %v6813 = vunpack.c.l.b16 %v6647
      %v6814 = vunpack.c.l.b16 %v6661
      %v6815 = vunpack.c.l.b16 %v6671
      %v6816 = vunpack.c.l.b16 %v6685
      %v6817 = vunpack.c.l.b16 %v6695
      %v6818 = vunpack.c.l.b16 %v6709
      %v6819 = vunpack.c.l.b16 %v6719
      %v6820 = vunpack.c.l.b16 %v6733
      %v6821 = vunpack.c.l.b16 %v6743
      %v6822 = vunpack.c.l.b16 %v6757
      %v6823 = vunpack.c.l.b16 %v6767
      %v6824 = vunpack.c.l.b16 %v6781
      %v6825 = vunpack.c.l.b16 %v6791
      %v6826 = vpack.c.b16 %v6795, %v6794
      %v6827 = vpack.c.b16 %v6797, %v6796
      %v6828 = vpack.c.b16 %v6799, %v6798
      %v6829 = vpack.c.b16 %v6801, %v6800
      %v6830 = vpack.c.b16 %v6803, %v6802
      %v6831 = vpack.c.b16 %v6805, %v6804
      %v6832 = vpack.c.b16 %v6807, %v6806
      %v6833 = vpack.c.b16 %v6809, %v6808
      %v6834 = vpack.c.b16 %v6811, %v6810
      %v6835 = vpack.c.b16 %v6813, %v6812
      %v6836 = vpack.c.b16 %v6815, %v6814
      %v6837 = vpack.c.b16 %v6817, %v6816
      %v6838 = vpack.c.b16 %v6819, %v6818
      %v6839 = vpack.c.b16 %v6821, %v6820
      %v6840 = vpack.c.b16 %v6823, %v6822
      %v6841 = vpack.c.b16 %v6825, %v6824
      %v6843 = vsel %vm5480, %v6826, 0
      %v6846 = vsel %vm5480, %v6827, 0
      %v6849 = vsel %vm5480, %v6828, 0
      %v6852 = vsel %vm5480, %v6829, 0
      %v6855 = vsel %vm5480, %v6830, 0
      %v6858 = vsel %vm5480, %v6831, 0
      %v6861 = vsel %vm5480, %v6832, 0
      %v6864 = vsel %vm5480, %v6833, 0
      %v6867 = vsel %vm5480, %v6834, 0
      %v6870 = vsel %vm5480, %v6835, 0
      %v6873 = vsel %vm5480, %v6836, 0
      %v6876 = vsel %vm5480, %v6837, 0
      %v6879 = vsel %vm5480, %v6838, 0
      %v6882 = vsel %vm5480, %v6839, 0
      %v6885 = vsel %vm5480, %v6840, 0
      %v6888 = vsel %vm5480, %v6841, 0
      %vm6890 = vcmask 1043456
      %v6892 = vsel %vm6890, %v6793, 0
      %6894 = vmatprep.subr.bf16.mxu0 0
      %6895 = vmatpush1.bf16.msra.mxu0 %v6892
      %6896 = vmatprep.subr.bf16.mxu0 0
      %6897 = vmatpush1.bf16.msra.mxu0 0
      %6898 = vmatprep.subr.bf16.mxu0 0
      %6899 = vmatpush1.bf16.msra.mxu0 0
      %6900 = vmatprep.subr.bf16.mxu0 0
      %6901 = vmatpush1.bf16.msra.mxu0 0
      %6902 = vmatprep.subr.bf16.mxu0 0
      %6903 = vmatpush1.bf16.msra.mxu0 0
      %6904 = vmatprep.subr.bf16.mxu0 0
      %6905 = vmatpush1.bf16.msra.mxu0 0
      %6906 = vmatprep.subr.bf16.mxu0 0
      %6907 = vmatpush1.bf16.msra.mxu0 0
      %6908 = vmatprep.subr.bf16.mxu0 0
      %6909 = vmatpush1.bf16.msra.mxu0 0
      %6910 = vmatprep.subr.bf16.mxu0 0
      %6911 = vmatpush1.bf16.msra.mxu0 0
      %6912 = vmatprep.subr.bf16.mxu0 0
      %6913 = vmatpush1.bf16.msra.mxu0 0
      %6914 = vmatprep.subr.bf16.mxu0 0
      %6915 = vmatpush1.bf16.msra.mxu0 0
      %6916 = vmatprep.subr.bf16.mxu0 0
      %6917 = vmatpush1.bf16.msra.mxu0 0
      %6918 = vmatprep.subr.bf16.mxu0 0
      %6919 = vmatpush1.bf16.msra.mxu0 0
      %6920 = vmatprep.subr.bf16.mxu0 0
      %6921 = vmatpush1.bf16.msra.mxu0 0
      %6922 = vmatprep.subr.bf16.mxu0 0
      %6923 = vmatpush1.bf16.msra.mxu0 0
      %6924 = vmatprep.subr.bf16.mxu0 0
      %6925 = vmatpush1.bf16.msra.mxu0 0
      %6926 = vmatprep.mubr.bf16.mxu0 0
      %6927 = vmatmul.mubr.bf16.gmra.mrb[0].mxu0 %v6843
      %v6928 = vpop.f32.mrb[0].mxu0
      %v6929 = vadd.f32 0.0, %v6928
      %v6930 = vpop.f32.mrb[0].mxu0
      %v6931 = vpop.f32.mrb[0].mxu0
      %v6932 = vadd.f32 0.0, %v6931
      %v6933 = vpop.f32.mrb[0].mxu0
      %6934 = vmatprep.mubr.bf16.mxu0 0
      %6935 = vmatmul.mubr.bf16.gmra.mrb[0].mxu0 %v6846
      %v6936 = vpop.f32.mrb[0].mxu0
      %v6937 = vadd.f32 0.0, %v6936
      %v6938 = vpop.f32.mrb[0].mxu0
      %v6939 = vpop.f32.mrb[0].mxu0
      %v6940 = vadd.f32 0.0, %v6939
      %v6941 = vpop.f32.mrb[0].mxu0
      %6942 = vmatprep.mubr.bf16.mxu0 0
      %6943 = vmatmul.mubr.bf16.gmra.mrb[0].mxu0 %v6849
      %v6944 = vpop.f32.mrb[0].mxu0
      %v6945 = vadd.f32 0.0, %v6944
      %v6946 = vpop.f32.mrb[0].mxu0
      %v6947 = vpop.f32.mrb[0].mxu0
      %v6948 = vadd.f32 0.0, %v6947
      %v6949 = vpop.f32.mrb[0].mxu0
      %6950 = vmatprep.mubr.bf16.mxu0 0
      %6951 = vmatmul.mubr.bf16.gmra.mrb[0].mxu0 %v6852
      %v6952 = vpop.f32.mrb[0].mxu0
      %v6953 = vadd.f32 0.0, %v6952
      %v6954 = vpop.f32.mrb[0].mxu0
      %v6955 = vpop.f32.mrb[0].mxu0
      %v6956 = vadd.f32 0.0, %v6955
      %v6957 = vpop.f32.mrb[0].mxu0
      %6958 = vmatprep.mubr.bf16.mxu0 0
      %6959 = vmatmul.mubr.bf16.gmra.mrb[0].mxu0 %v6855
      %v6960 = vpop.f32.mrb[0].mxu0
      %v6961 = vadd.f32 0.0, %v6960
      %v6962 = vpop.f32.mrb[0].mxu0
      %v6963 = vpop.f32.mrb[0].mxu0
      %v6964 = vadd.f32 0.0, %v6963
      %v6965 = vpop.f32.mrb[0].mxu0
      %6966 = vmatprep.mubr.bf16.mxu0 0
      %6967 = vmatmul.mubr.bf16.gmra.mrb[0].mxu0 %v6858
      %v6968 = vpop.f32.mrb[0].mxu0
      %v6969 = vadd.f32 0.0, %v6968
      %v6970 = vpop.f32.mrb[0].mxu0
      %v6971 = vpop.f32.mrb[0].mxu0
      %v6972 = vadd.f32 0.0, %v6971
      %v6973 = vpop.f32.mrb[0].mxu0
      %6974 = vmatprep.mubr.bf16.mxu0 0
      %6975 = vmatmul.mubr.bf16.gmra.mrb[0].mxu0 %v6861
      %v6976 = vpop.f32.mrb[0].mxu0
      %v6977 = vadd.f32 0.0, %v6976
      %v6978 = vpop.f32.mrb[0].mxu0
      %v6979 = vpop.f32.mrb[0].mxu0
      %v6980 = vadd.f32 0.0, %v6979
      %v6981 = vpop.f32.mrb[0].mxu0
      %6982 = vmatprep.mubr.bf16.mxu0 0
      %6983 = vmatmul.mubr.bf16.gmra.mrb[0].mxu0 %v6864
      %v6984 = vpop.f32.mrb[0].mxu0
      %v6985 = vadd.f32 0.0, %v6984
      %v6986 = vpop.f32.mrb[0].mxu0
      %v6987 = vpop.f32.mrb[0].mxu0
      %v6988 = vadd.f32 0.0, %v6987
      %v6989 = vpop.f32.mrb[0].mxu0
      %6990 = vmatprep.mubr.bf16.mxu0 0
      %6991 = vmatmul.mubr.bf16.gmra.mrb[0].mxu0 %v6867
      %v6992 = vpop.f32.mrb[0].mxu0
      %v6993 = vadd.f32 0.0, %v6992
      %v6994 = vpop.f32.mrb[0].mxu0
      %v6995 = vpop.f32.mrb[0].mxu0
      %v6996 = vadd.f32 0.0, %v6995
      %v6997 = vpop.f32.mrb[0].mxu0
      %6998 = vmatprep.mubr.bf16.mxu0 0
      %6999 = vmatmul.mubr.bf16.gmra.mrb[0].mxu0 %v6870
      %v7000 = vpop.f32.mrb[0].mxu0
      %v7001 = vadd.f32 0.0, %v7000
      %v7002 = vpop.f32.mrb[0].mxu0
      %v7003 = vpop.f32.mrb[0].mxu0
      %v7004 = vadd.f32 0.0, %v7003
      %v7005 = vpop.f32.mrb[0].mxu0
      %7006 = vmatprep.mubr.bf16.mxu0 0
      %7007 = vmatmul.mubr.bf16.gmra.mrb[0].mxu0 %v6873
      %v7008 = vpop.f32.mrb[0].mxu0
      %v7009 = vadd.f32 0.0, %v7008
      %v7010 = vpop.f32.mrb[0].mxu0
      %v7011 = vpop.f32.mrb[0].mxu0
      %v7012 = vadd.f32 0.0, %v7011
      %v7013 = vpop.f32.mrb[0].mxu0
      %7014 = vmatprep.mubr.bf16.mxu0 0
      %7015 = vmatmul.mubr.bf16.gmra.mrb[0].mxu0 %v6876
      %v7016 = vpop.f32.mrb[0].mxu0
      %v7017 = vadd.f32 0.0, %v7016
      %v7018 = vpop.f32.mrb[0].mxu0
      %v7019 = vpop.f32.mrb[0].mxu0
      %v7020 = vadd.f32 0.0, %v7019
      %v7021 = vpop.f32.mrb[0].mxu0
      %7022 = vmatprep.mubr.bf16.mxu0 0
      %7023 = vmatmul.mubr.bf16.gmra.mrb[0].mxu0 %v6879
      %v7024 = vpop.f32.mrb[0].mxu0
      %v7025 = vadd.f32 0.0, %v7024
      %v7026 = vpop.f32.mrb[0].mxu0
      %v7027 = vpop.f32.mrb[0].mxu0
      %v7028 = vadd.f32 0.0, %v7027
      %v7029 = vpop.f32.mrb[0].mxu0
      %7030 = vmatprep.mubr.bf16.mxu0 0
      %7031 = vmatmul.mubr.bf16.gmra.mrb[0].mxu0 %v6882
      %v7032 = vpop.f32.mrb[0].mxu0
      %v7033 = vadd.f32 0.0, %v7032
      %v7034 = vpop.f32.mrb[0].mxu0
      %v7035 = vpop.f32.mrb[0].mxu0
      %v7036 = vadd.f32 0.0, %v7035
      %v7037 = vpop.f32.mrb[0].mxu0
      %7038 = vmatprep.mubr.bf16.mxu0 0
      %7039 = vmatmul.mubr.bf16.gmra.mrb[0].mxu0 %v6885
      %v7040 = vpop.f32.mrb[0].mxu0
      %v7041 = vadd.f32 0.0, %v7040
      %v7042 = vpop.f32.mrb[0].mxu0
      %v7043 = vpop.f32.mrb[0].mxu0
      %v7044 = vadd.f32 0.0, %v7043
      %v7045 = vpop.f32.mrb[0].mxu0
      %7046 = vmatprep.mubr.bf16.mxu0 0
      %7047 = vmatmul.mubr.bf16.gmra.mrb[0].mxu0 %v6888
      %v7048 = vpop.f32.mrb[0].mxu0
      %v7049 = vadd.f32 0.0, %v7048
      %v7050 = vpop.f32.mrb[0].mxu0
      %v7051 = vpop.f32.mrb[0].mxu0
      %v7052 = vadd.f32 0.0, %v7051
      %v7053 = vpop.f32.mrb[0].mxu0
      %7054 = vdwg.mxu0
      %v7087 = vunpack.c.l.b16 %v6359
      %v7088 = vunpack.c.l.b16 %v6360
      %v7089 = vunpack.c.l.b16 %v6361
      %v7090 = vunpack.c.l.b16 %v6362
      %v7091 = vunpack.c.l.b16 %v6363
      %v7092 = vunpack.c.l.b16 %v6364
      %v7093 = vunpack.c.l.b16 %v6365
      %v7094 = vunpack.c.l.b16 %v6366
      %v7095 = vunpack.c.l.b16 %v6367
      %v7096 = vunpack.c.l.b16 %v6368
      %v7097 = vunpack.c.l.b16 %v6369
      %v7098 = vunpack.c.l.b16 %v6370
      %v7099 = vunpack.c.l.b16 %v6371
      %v7100 = vunpack.c.l.b16 %v6372
      %v7101 = vunpack.c.l.b16 %v6373
      %v7102 = vunpack.c.l.b16 %v6374
      %v7103 = vunpack.c.l.b16 %v6375
      %v7104 = vunpack.c.l.b16 %v6376
      %v7105 = vunpack.c.l.b16 %v6377
      %v7106 = vunpack.c.l.b16 %v6378
      %v7107 = vunpack.c.l.b16 %v6379
      %v7108 = vunpack.c.l.b16 %v6380
      %v7109 = vunpack.c.l.b16 %v6381
      %v7110 = vunpack.c.l.b16 %v6382
      %v7111 = vunpack.c.l.b16 %v6383
      %v7112 = vunpack.c.l.b16 %v6384
      %v7113 = vunpack.c.l.b16 %v6385
      %v7114 = vunpack.c.l.b16 %v6386
      %v7115 = vunpack.c.l.b16 %v6387
      %v7116 = vunpack.c.l.b16 %v6388
      %v7117 = vunpack.c.l.b16 %v6389
      %v7118 = vunpack.c.l.b16 %v6390
      %v7119 = vpack.c.b16 %v7088, %v7087
      %v7120 = vpack.c.b16 %v7090, %v7089
      %v7121 = vpack.c.b16 %v7092, %v7091
      %v7122 = vpack.c.b16 %v7094, %v7093
      %v7123 = vpack.c.b16 %v7096, %v7095
      %v7124 = vpack.c.b16 %v7098, %v7097
      %v7125 = vpack.c.b16 %v7100, %v7099
      %v7126 = vpack.c.b16 %v7102, %v7101
      %v7127 = vpack.c.b16 %v7104, %v7103
      %v7128 = vpack.c.b16 %v7106, %v7105
      %v7129 = vpack.c.b16 %v7108, %v7107
      %v7130 = vpack.c.b16 %v7110, %v7109
      %v7131 = vpack.c.b16 %v7112, %v7111
      %v7132 = vpack.c.b16 %v7114, %v7113
      %v7133 = vpack.c.b16 %v7116, %v7115
      %v7134 = vpack.c.b16 %v7118, %v7117
      %v7136 = vsel %vm5480, %v7119, 0
      %v7139 = vsel %vm5480, %v7120, 0
      %v7142 = vsel %vm5480, %v7121, 0
      %v7145 = vsel %vm5480, %v7122, 0
      %v7148 = vsel %vm5480, %v7123, 0
      %v7151 = vsel %vm5480, %v7124, 0
      %v7154 = vsel %vm5480, %v7125, 0
      %v7157 = vsel %vm5480, %v7126, 0
      %v7160 = vsel %vm5480, %v7127, 0
      %v7163 = vsel %vm5480, %v7128, 0
      %v7166 = vsel %vm5480, %v7129, 0
      %v7169 = vsel %vm5480, %v7130, 0
      %v7172 = vsel %vm5480, %v7131, 0
      %v7175 = vsel %vm5480, %v7132, 0
      %v7178 = vsel %vm5480, %v7133, 0
      %v7181 = vsel %vm5480, %v7134, 0
      %v7184 = vsel %vm6890, %v6391, 0
      %7186 = vmatprep.subr.bf16.mxu0 0
      %7187 = vmatpush1.bf16.msra.mxu0 %v7184
      %7188 = vmatprep.subr.bf16.mxu0 0
      %7189 = vmatpush1.bf16.msra.mxu0 0
      %7190 = vmatprep.subr.bf16.mxu0 0
      %7191 = vmatpush1.bf16.msra.mxu0 0
      %7192 = vmatprep.subr.bf16.mxu0 0
      %7193 = vmatpush1.bf16.msra.mxu0 0
      %7194 = vmatprep.subr.bf16.mxu0 0
      %7195 = vmatpush1.bf16.msra.mxu0 0
      %7196 = vmatprep.subr.bf16.mxu0 0
      %7197 = vmatpush1.bf16.msra.mxu0 0
      %7198 = vmatprep.subr.bf16.mxu0 0
      %7199 = vmatpush1.bf16.msra.mxu0 0
      %7200 = vmatprep.subr.bf16.mxu0 0
      %7201 = vmatpush1.bf16.msra.mxu0 0
      %7202 = vmatprep.subr.bf16.mxu0 0
      %7203 = vmatpush1.bf16.msra.mxu0 0
      %7204 = vmatprep.subr.bf16.mxu0 0
      %7205 = vmatpush1.bf16.msra.mxu0 0
      %7206 = vmatprep.subr.bf16.mxu0 0
      %7207 = vmatpush1.bf16.msra.mxu0 0
      %7208 = vmatprep.subr.bf16.mxu0 0
      %7209 = vmatpush1.bf16.msra.mxu0 0
      %7210 = vmatprep.subr.bf16.mxu0 0
      %7211 = vmatpush1.bf16.msra.mxu0 0
      %7212 = vmatprep.subr.bf16.mxu0 0
      %7213 = vmatpush1.bf16.msra.mxu0 0
      %7214 = vmatprep.subr.bf16.mxu0 0
      %7215 = vmatpush1.bf16.msra.mxu0 0
      %7216 = vmatprep.subr.bf16.mxu0 0
      %7217 = vmatpush1.bf16.msra.mxu0 0
      %7218 = vmatprep.mubr.bf16.mxu0 0
      %7219 = vmatmul.mubr.bf16.gmra.mrb[0].mxu0 %v7136
      %v7220 = vpop.f32.mrb[0].mxu0
      %v7221 = vadd.f32 %v6929, %v7220
      %v7222 = vpop.f32.mrb[0].mxu0
      %v7223 = vpop.f32.mrb[0].mxu0
      %v7224 = vadd.f32 %v6932, %v7223
      %v7225 = vpop.f32.mrb[0].mxu0
      %7226 = vmatprep.mubr.bf16.mxu0 0
      %7227 = vmatmul.mubr.bf16.gmra.mrb[0].mxu0 %v7139
      %v7228 = vpop.f32.mrb[0].mxu0
      %v7229 = vadd.f32 %v6937, %v7228
      %v7230 = vpop.f32.mrb[0].mxu0
      %v7231 = vpop.f32.mrb[0].mxu0
      %v7232 = vadd.f32 %v6940, %v7231
      %v7233 = vpop.f32.mrb[0].mxu0
      %7234 = vmatprep.mubr.bf16.mxu0 0
      %7235 = vmatmul.mubr.bf16.gmra.mrb[0].mxu0 %v7142
      %v7236 = vpop.f32.mrb[0].mxu0
      %v7237 = vadd.f32 %v6945, %v7236
      %v7238 = vpop.f32.mrb[0].mxu0
      %v7239 = vpop.f32.mrb[0].mxu0
      %v7240 = vadd.f32 %v6948, %v7239
      %v7241 = vpop.f32.mrb[0].mxu0
      %7242 = vmatprep.mubr.bf16.mxu0 0
      %7243 = vmatmul.mubr.bf16.gmra.mrb[0].mxu0 %v7145
      %v7244 = vpop.f32.mrb[0].mxu0
      %v7245 = vadd.f32 %v6953, %v7244
      %v7246 = vpop.f32.mrb[0].mxu0
      %v7247 = vpop.f32.mrb[0].mxu0
      %v7248 = vadd.f32 %v6956, %v7247
      %v7249 = vpop.f32.mrb[0].mxu0
      %7250 = vmatprep.mubr.bf16.mxu0 0
      %7251 = vmatmul.mubr.bf16.gmra.mrb[0].mxu0 %v7148
      %v7252 = vpop.f32.mrb[0].mxu0
      %v7253 = vadd.f32 %v6961, %v7252
      %v7254 = vpop.f32.mrb[0].mxu0
      %v7255 = vpop.f32.mrb[0].mxu0
      %v7256 = vadd.f32 %v6964, %v7255
      %v7257 = vpop.f32.mrb[0].mxu0
      %7258 = vmatprep.mubr.bf16.mxu0 0
      %7259 = vmatmul.mubr.bf16.gmra.mrb[0].mxu0 %v7151
      %v7260 = vpop.f32.mrb[0].mxu0
      %v7261 = vadd.f32 %v6969, %v7260
      %v7262 = vpop.f32.mrb[0].mxu0
      %v7263 = vpop.f32.mrb[0].mxu0
      %v7264 = vadd.f32 %v6972, %v7263
      %v7265 = vpop.f32.mrb[0].mxu0
      %7266 = vmatprep.mubr.bf16.mxu0 0
      %7267 = vmatmul.mubr.bf16.gmra.mrb[0].mxu0 %v7154
      %v7268 = vpop.f32.mrb[0].mxu0
      %v7269 = vadd.f32 %v6977, %v7268
      %v7270 = vpop.f32.mrb[0].mxu0
      %v7271 = vpop.f32.mrb[0].mxu0
      %v7272 = vadd.f32 %v6980, %v7271
      %v7273 = vpop.f32.mrb[0].mxu0
      %7274 = vmatprep.mubr.bf16.mxu0 0
      %7275 = vmatmul.mubr.bf16.gmra.mrb[0].mxu0 %v7157
      %v7276 = vpop.f32.mrb[0].mxu0
      %v7277 = vadd.f32 %v6985, %v7276
      %v7278 = vpop.f32.mrb[0].mxu0
      %v7279 = vpop.f32.mrb[0].mxu0
      %v7280 = vadd.f32 %v6988, %v7279
      %v7281 = vpop.f32.mrb[0].mxu0
      %7282 = vmatprep.mubr.bf16.mxu0 0
      %7283 = vmatmul.mubr.bf16.gmra.mrb[0].mxu0 %v7160
      %v7284 = vpop.f32.mrb[0].mxu0
      %v7285 = vadd.f32 %v6993, %v7284
      %v7286 = vpop.f32.mrb[0].mxu0
      %v7287 = vpop.f32.mrb[0].mxu0
      %v7288 = vadd.f32 %v6996, %v7287
      %v7289 = vpop.f32.mrb[0].mxu0
      %7290 = vmatprep.mubr.bf16.mxu0 0
      %7291 = vmatmul.mubr.bf16.gmra.mrb[0].mxu0 %v7163
      %v7292 = vpop.f32.mrb[0].mxu0
      %v7293 = vadd.f32 %v7001, %v7292
      %v7294 = vpop.f32.mrb[0].mxu0
      %v7295 = vpop.f32.mrb[0].mxu0
      %v7296 = vadd.f32 %v7004, %v7295
      %v7297 = vpop.f32.mrb[0].mxu0
      %7298 = vmatprep.mubr.bf16.mxu0 0
      %7299 = vmatmul.mubr.bf16.gmra.mrb[0].mxu0 %v7166
      %v7300 = vpop.f32.mrb[0].mxu0
      %v7301 = vadd.f32 %v7009, %v7300
      %v7302 = vpop.f32.mrb[0].mxu0
      %v7303 = vpop.f32.mrb[0].mxu0
      %v7304 = vadd.f32 %v7012, %v7303
      %v7305 = vpop.f32.mrb[0].mxu0
      %7306 = vmatprep.mubr.bf16.mxu0 0
      %7307 = vmatmul.mubr.bf16.gmra.mrb[0].mxu0 %v7169
      %v7308 = vpop.f32.mrb[0].mxu0
      %v7309 = vadd.f32 %v7017, %v7308
      %v7310 = vpop.f32.mrb[0].mxu0
      %v7311 = vpop.f32.mrb[0].mxu0
      %v7312 = vadd.f32 %v7020, %v7311
      %v7313 = vpop.f32.mrb[0].mxu0
      %7314 = vmatprep.mubr.bf16.mxu0 0
      %7315 = vmatmul.mubr.bf16.gmra.mrb[0].mxu0 %v7172
      %v7316 = vpop.f32.mrb[0].mxu0
      %v7317 = vadd.f32 %v7025, %v7316
      %v7318 = vpop.f32.mrb[0].mxu0
      %v7319 = vpop.f32.mrb[0].mxu0
      %v7320 = vadd.f32 %v7028, %v7319
      %v7321 = vpop.f32.mrb[0].mxu0
      %7322 = vmatprep.mubr.bf16.mxu0 0
      %7323 = vmatmul.mubr.bf16.gmra.mrb[0].mxu0 %v7175
      %v7324 = vpop.f32.mrb[0].mxu0
      %v7325 = vadd.f32 %v7033, %v7324
      %v7326 = vpop.f32.mrb[0].mxu0
      %v7327 = vpop.f32.mrb[0].mxu0
      %v7328 = vadd.f32 %v7036, %v7327
      %v7329 = vpop.f32.mrb[0].mxu0
      %7330 = vmatprep.mubr.bf16.mxu0 0
      %7331 = vmatmul.mubr.bf16.gmra.mrb[0].mxu0 %v7178
      %v7332 = vpop.f32.mrb[0].mxu0
      %v7333 = vadd.f32 %v7041, %v7332
      %v7334 = vpop.f32.mrb[0].mxu0
      %v7335 = vpop.f32.mrb[0].mxu0
      %v7336 = vadd.f32 %v7044, %v7335
      %v7337 = vpop.f32.mrb[0].mxu0
      %7338 = vmatprep.mubr.bf16.mxu0 0
      %7339 = vmatmul.mubr.bf16.gmra.mrb[0].mxu0 %v7181
      %v7340 = vpop.f32.mrb[0].mxu0
      %v7341 = vadd.f32 %v7049, %v7340
      %v7342 = vpop.f32.mrb[0].mxu0
      %v7343 = vpop.f32.mrb[0].mxu0
      %v7344 = vadd.f32 %v7052, %v7343
      %v7345 = vpop.f32.mrb[0].mxu0
      %7346 = vdwg.mxu0
      %v7347 = vld [vmem:[#allocation3] sm:$0xe]
      %v7348 = vld [vmem:[#allocation3 + $0xc] sm:$0xe]
      %v7349 = vld [vmem:[#allocation3 + $0x18] sm:$0xe]
      %v7350 = vld [vmem:[#allocation3 + $0x24] sm:$0xe]
      %v7351 = vld [vmem:[#allocation3 + $0x30] sm:$0xe]
      %v7352 = vld [vmem:[#allocation3 + $0x3c] sm:$0xe]
      %v7353 = vld [vmem:[#allocation3 + $0x48] sm:$0xe]
      %v7354 = vld [vmem:[#allocation3 + $0x54] sm:$0xe]
      %v7355 = vld [vmem:[#allocation3 + $0x60] sm:$0xe]
      %v7356 = vld [vmem:[#allocation3 + $0x6c] sm:$0xe]
      %v7357 = vld [vmem:[#allocation3 + $0x78] sm:$0xe]
      %v7358 = vld [vmem:[#allocation3 + $0x84] sm:$0xe]
      %v7359 = vld [vmem:[#allocation3 + $0x90] sm:$0xe]
      %v7360 = vld [vmem:[#allocation3 + $0x9c] sm:$0xe]
      %v7361 = vld [vmem:[#allocation3 + $0xa8] sm:$0xe]
      %v7362 = vld [vmem:[#allocation3 + $0xb4] sm:$0xe]
      %v7395 = vrot.slane %v7347, 5
      %v7396 = vrot.slane %v7395, 4
      %v7397 = vrot.slane %v6360, 5
      %v7398 = vsel %vm1893, %v7396, %v7397
      %v7399 = vrot.slane %v7397, 4
      %v7400 = vrot.slane %v6392, 5
      %v7401 = vsel %vm1893, %v7399, %v7400
      %v7402 = vrot.slane %v7348, 5
      %v7403 = vrot.slane %v7402, 4
      %v7404 = vrot.slane %v6362, 5
      %v7405 = vsel %vm1893, %v7403, %v7404
      %v7406 = vrot.slane %v7404, 4
      %v7407 = vrot.slane %v6393, 5
      %v7408 = vsel %vm1893, %v7406, %v7407
      %v7409 = vrot.slane %v7349, 5
      %v7410 = vrot.slane %v7409, 4
      %v7411 = vrot.slane %v6364, 5
      %v7412 = vsel %vm1893, %v7410, %v7411
      %v7413 = vrot.slane %v7411, 4
      %v7414 = vrot.slane %v6394, 5
      %v7415 = vsel %vm1893, %v7413, %v7414
      %v7416 = vrot.slane %v7350, 5
      %v7417 = vrot.slane %v7416, 4
      %v7418 = vrot.slane %v6366, 5
      %v7419 = vsel %vm1893, %v7417, %v7418
      %v7420 = vrot.slane %v7418, 4
      %v7421 = vrot.slane %v6395, 5
      %v7422 = vsel %vm1893, %v7420, %v7421
      %v7423 = vrot.slane %v7351, 5
      %v7424 = vrot.slane %v7423, 4
      %v7425 = vrot.slane %v6368, 5
      %v7426 = vsel %vm1893, %v7424, %v7425
      %v7427 = vrot.slane %v7425, 4
      %v7428 = vrot.slane %v6396, 5
      %v7429 = vsel %vm1893, %v7427, %v7428
      %v7430 = vrot.slane %v7352, 5
      %v7431 = vrot.slane %v7430, 4
      %v7432 = vrot.slane %v6370, 5
      %v7433 = vsel %vm1893, %v7431, %v7432
      %v7434 = vrot.slane %v7432, 4
      %v7435 = vrot.slane %v6397, 5
      %v7436 = vsel %vm1893, %v7434, %v7435
      %v7437 = vrot.slane %v7353, 5
      %v7438 = vrot.slane %v7437, 4
      %v7439 = vrot.slane %v6372, 5
      %v7440 = vsel %vm1893, %v7438, %v7439
      %v7441 = vrot.slane %v7439, 4
      %v7442 = vrot.slane %v6398, 5
      %v7443 = vsel %vm1893, %v7441, %v7442
      %v7444 = vrot.slane %v7354, 5
      %v7445 = vrot.slane %v7444, 4
      %v7446 = vrot.slane %v6374, 5
      %v7447 = vsel %vm1893, %v7445, %v7446
      %v7448 = vrot.slane %v7446, 4
      %v7449 = vrot.slane %v6399, 5
      %v7450 = vsel %vm1893, %v7448, %v7449
      %v7451 = vrot.slane %v7355, 5
      %v7452 = vrot.slane %v7451, 4
      %v7453 = vrot.slane %v6376, 5
      %v7454 = vsel %vm1893, %v7452, %v7453
      %v7455 = vrot.slane %v7453, 4
      %v7456 = vrot.slane %v6400, 5
      %v7457 = vsel %vm1893, %v7455, %v7456
      %v7458 = vrot.slane %v7356, 5
      %v7459 = vrot.slane %v7458, 4
      %v7460 = vrot.slane %v6378, 5
      %v7461 = vsel %vm1893, %v7459, %v7460
      %v7462 = vrot.slane %v7460, 4
      %v7463 = vrot.slane %v6401, 5
      %v7464 = vsel %vm1893, %v7462, %v7463
      %v7465 = vrot.slane %v7357, 5
      %v7466 = vrot.slane %v7465, 4
      %v7467 = vrot.slane %v6380, 5
      %v7468 = vsel %vm1893, %v7466, %v7467
      %v7469 = vrot.slane %v7467, 4
      %v7470 = vrot.slane %v6402, 5
      %v7471 = vsel %vm1893, %v7469, %v7470
      %v7472 = vrot.slane %v7358, 5
      %v7473 = vrot.slane %v7472, 4
      %v7474 = vrot.slane %v6382, 5
      %v7475 = vsel %vm1893, %v7473, %v7474
      %v7476 = vrot.slane %v7474, 4
      %v7477 = vrot.slane %v6403, 5
      %v7478 = vsel %vm1893, %v7476, %v7477
      %v7479 = vrot.slane %v7359, 5
      %v7480 = vrot.slane %v7479, 4
      %v7481 = vrot.slane %v6384, 5
      %v7482 = vsel %vm1893, %v7480, %v7481
      %v7483 = vrot.slane %v7481, 4
      %v7484 = vrot.slane %v6404, 5
      %v7485 = vsel %vm1893, %v7483, %v7484
      %v7486 = vrot.slane %v7360, 5
      %v7487 = vrot.slane %v7486, 4
      %v7488 = vrot.slane %v6386, 5
      %v7489 = vsel %vm1893, %v7487, %v7488
      %v7490 = vrot.slane %v7488, 4
      %v7491 = vrot.slane %v6405, 5
      %v7492 = vsel %vm1893, %v7490, %v7491
      %v7493 = vrot.slane %v7361, 5
      %v7494 = vrot.slane %v7493, 4
      %v7495 = vrot.slane %v6388, 5
      %v7496 = vsel %vm1893, %v7494, %v7495
      %v7497 = vrot.slane %v7495, 4
      %v7498 = vrot.slane %v6406, 5
      %v7499 = vsel %vm1893, %v7497, %v7498
      %v7500 = vrot.slane %v7362, 5
      %v7501 = vrot.slane %v7500, 4
      %v7502 = vrot.slane %v6390, 5
      %v7503 = vsel %vm1893, %v7501, %v7502
      %v7504 = vrot.slane %v7502, 4
      %v7505 = vrot.slane %v6407, 5
      %v7506 = vsel %vm1893, %v7504, %v7505
      %s7507 = scalar_lea.vmem %s3, 8
      %v7508 = vld [vmem:[%s7507] sm:$0xf]
      %v7509 = vunpack.c.l.b16 %v7398
      %v7510 = vunpack.c.l.b16 %v7401
      %v7511 = vunpack.c.l.b16 %v7405
      %v7512 = vunpack.c.l.b16 %v7408
      %v7513 = vunpack.c.l.b16 %v7412
      %v7514 = vunpack.c.l.b16 %v7415
      %v7515 = vunpack.c.l.b16 %v7419
      %v7516 = vunpack.c.l.b16 %v7422
      %v7517 = vunpack.c.l.b16 %v7426
      %v7518 = vunpack.c.l.b16 %v7429
      %v7519 = vunpack.c.l.b16 %v7433
      %v7520 = vunpack.c.l.b16 %v7436
      %v7521 = vunpack.c.l.b16 %v7440
      %v7522 = vunpack.c.l.b16 %v7443
      %v7523 = vunpack.c.l.b16 %v7447
      %v7524 = vunpack.c.l.b16 %v7450
      %v7525 = vunpack.c.l.b16 %v7454
      %v7526 = vunpack.c.l.b16 %v7457
      %v7527 = vunpack.c.l.b16 %v7461
      %v7528 = vunpack.c.l.b16 %v7464
      %v7529 = vunpack.c.l.b16 %v7468
      %v7530 = vunpack.c.l.b16 %v7471
      %v7531 = vunpack.c.l.b16 %v7475
      %v7532 = vunpack.c.l.b16 %v7478
      %v7533 = vunpack.c.l.b16 %v7482
      %v7534 = vunpack.c.l.b16 %v7485
      %v7535 = vunpack.c.l.b16 %v7489
      %v7536 = vunpack.c.l.b16 %v7492
      %v7537 = vunpack.c.l.b16 %v7496
      %v7538 = vunpack.c.l.b16 %v7499
      %v7539 = vunpack.c.l.b16 %v7503
      %v7540 = vunpack.c.l.b16 %v7506
      %v7541 = vpack.c.b16 %v7510, %v7509
      %v7542 = vpack.c.b16 %v7512, %v7511
      %v7543 = vpack.c.b16 %v7514, %v7513
      %v7544 = vpack.c.b16 %v7516, %v7515
      %v7545 = vpack.c.b16 %v7518, %v7517
      %v7546 = vpack.c.b16 %v7520, %v7519
      %v7547 = vpack.c.b16 %v7522, %v7521
      %v7548 = vpack.c.b16 %v7524, %v7523
      %v7549 = vpack.c.b16 %v7526, %v7525
      %v7550 = vpack.c.b16 %v7528, %v7527
      %v7551 = vpack.c.b16 %v7530, %v7529
      %v7552 = vpack.c.b16 %v7532, %v7531
      %v7553 = vpack.c.b16 %v7534, %v7533
      %v7554 = vpack.c.b16 %v7536, %v7535
      %v7555 = vpack.c.b16 %v7538, %v7537
      %v7556 = vpack.c.b16 %v7540, %v7539
      %v7558 = vsel %vm5480, %v7541, 0
      %v7561 = vsel %vm5480, %v7542, 0
      %v7564 = vsel %vm5480, %v7543, 0
      %v7567 = vsel %vm5480, %v7544, 0
      %v7570 = vsel %vm5480, %v7545, 0
      %v7573 = vsel %vm5480, %v7546, 0
      %v7576 = vsel %vm5480, %v7547, 0
      %v7579 = vsel %vm5480, %v7548, 0
      %v7582 = vsel %vm5480, %v7549, 0
      %v7585 = vsel %vm5480, %v7550, 0
      %v7588 = vsel %vm5480, %v7551, 0
      %v7591 = vsel %vm5480, %v7552, 0
      %v7594 = vsel %vm5480, %v7553, 0
      %v7597 = vsel %vm5480, %v7554, 0
      %v7600 = vsel %vm5480, %v7555, 0
      %v7603 = vsel %vm5480, %v7556, 0
      %v7606 = vsel %vm6890, %v7508, 0
      %7608 = vmatprep.subr.bf16.mxu0 0
      %7609 = vmatpush1.bf16.msra.mxu0 %v7606
      %7610 = vmatprep.subr.bf16.mxu0 0
      %7611 = vmatpush1.bf16.msra.mxu0 0
      %7612 = vmatprep.subr.bf16.mxu0 0
      %7613 = vmatpush1.bf16.msra.mxu0 0
      %7614 = vmatprep.subr.bf16.mxu0 0
      %7615 = vmatpush1.bf16.msra.mxu0 0
      %7616 = vmatprep.subr.bf16.mxu0 0
      %7617 = vmatpush1.bf16.msra.mxu0 0
      %7618 = vmatprep.subr.bf16.mxu0 0
      %7619 = vmatpush1.bf16.msra.mxu0 0
      %7620 = vmatprep.subr.bf16.mxu0 0
      %7621 = vmatpush1.bf16.msra.mxu0 0
      %7622 = vmatprep.subr.bf16.mxu0 0
      %7623 = vmatpush1.bf16.msra.mxu0 0
      %7624 = vmatprep.subr.bf16.mxu0 0
      %7625 = vmatpush1.bf16.msra.mxu0 0
      %7626 = vmatprep.subr.bf16.mxu0 0
      %7627 = vmatpush1.bf16.msra.mxu0 0
      %7628 = vmatprep.subr.bf16.mxu0 0
      %7629 = vmatpush1.bf16.msra.mxu0 0
      %7630 = vmatprep.subr.bf16.mxu0 0
      %7631 = vmatpush1.bf16.msra.mxu0 0
      %7632 = vmatprep.subr.bf16.mxu0 0
      %7633 = vmatpush1.bf16.msra.mxu0 0
      %7634 = vmatprep.subr.bf16.mxu0 0
      %7635 = vmatpush1.bf16.msra.mxu0 0
      %7636 = vmatprep.subr.bf16.mxu0 0
      %7637 = vmatpush1.bf16.msra.mxu0 0
      %7638 = vmatprep.subr.bf16.mxu0 0
      %7639 = vmatpush1.bf16.msra.mxu0 0
      %7640 = vmatprep.mubr.bf16.mxu0 0
      %7641 = vmatmul.mubr.bf16.gmra.mrb[0].mxu0 %v7558
      %v7642 = vpop.f32.mrb[0].mxu0
      %v7643 = vadd.f32 0.0, %v7642
      %v7644 = vpop.f32.mrb[0].mxu0
      %v7645 = vpop.f32.mrb[0].mxu0
      %v7646 = vadd.f32 0.0, %v7645
      %v7647 = vpop.f32.mrb[0].mxu0
      %7648 = vmatprep.mubr.bf16.mxu0 0
      %7649 = vmatmul.mubr.bf16.gmra.mrb[0].mxu0 %v7561
      %v7650 = vpop.f32.mrb[0].mxu0
      %v7651 = vadd.f32 0.0, %v7650
      %v7652 = vpop.f32.mrb[0].mxu0
      %v7653 = vpop.f32.mrb[0].mxu0
      %v7654 = vadd.f32 0.0, %v7653
      %v7655 = vpop.f32.mrb[0].mxu0
      %7656 = vmatprep.mubr.bf16.mxu0 0
      %7657 = vmatmul.mubr.bf16.gmra.mrb[0].mxu0 %v7564
      %v7658 = vpop.f32.mrb[0].mxu0
      %v7659 = vadd.f32 0.0, %v7658
      %v7660 = vpop.f32.mrb[0].mxu0
      %v7661 = vpop.f32.mrb[0].mxu0
      %v7662 = vadd.f32 0.0, %v7661
      %v7663 = vpop.f32.mrb[0].mxu0
      %7664 = vmatprep.mubr.bf16.mxu0 0
      %7665 = vmatmul.mubr.bf16.gmra.mrb[0].mxu0 %v7567
      %v7666 = vpop.f32.mrb[0].mxu0
      %v7667 = vadd.f32 0.0, %v7666
      %v7668 = vpop.f32.mrb[0].mxu0
      %v7669 = vpop.f32.mrb[0].mxu0
      %v7670 = vadd.f32 0.0, %v7669
      %v7671 = vpop.f32.mrb[0].mxu0
      %7672 = vmatprep.mubr.bf16.mxu0 0
      %7673 = vmatmul.mubr.bf16.gmra.mrb[0].mxu0 %v7570
      %v7674 = vpop.f32.mrb[0].mxu0
      %v7675 = vadd.f32 0.0, %v7674
      %v7676 = vpop.f32.mrb[0].mxu0
      %v7677 = vpop.f32.mrb[0].mxu0
      %v7678 = vadd.f32 0.0, %v7677
      %v7679 = vpop.f32.mrb[0].mxu0
      %7680 = vmatprep.mubr.bf16.mxu0 0
      %7681 = vmatmul.mubr.bf16.gmra.mrb[0].mxu0 %v7573
      %v7682 = vpop.f32.mrb[0].mxu0
      %v7683 = vadd.f32 0.0, %v7682
      %v7684 = vpop.f32.mrb[0].mxu0
      %v7685 = vpop.f32.mrb[0].mxu0
      %v7686 = vadd.f32 0.0, %v7685
      %v7687 = vpop.f32.mrb[0].mxu0
      %7688 = vmatprep.mubr.bf16.mxu0 0
      %7689 = vmatmul.mubr.bf16.gmra.mrb[0].mxu0 %v7576
      %v7690 = vpop.f32.mrb[0].mxu0
      %v7691 = vadd.f32 0.0, %v7690
      %v7692 = vpop.f32.mrb[0].mxu0
      %v7693 = vpop.f32.mrb[0].mxu0
      %v7694 = vadd.f32 0.0, %v7693
      %v7695 = vpop.f32.mrb[0].mxu0
      %7696 = vmatprep.mubr.bf16.mxu0 0
      %7697 = vmatmul.mubr.bf16.gmra.mrb[0].mxu0 %v7579
      %v7698 = vpop.f32.mrb[0].mxu0
      %v7699 = vadd.f32 0.0, %v7698
      %v7700 = vpop.f32.mrb[0].mxu0
      %v7701 = vpop.f32.mrb[0].mxu0
      %v7702 = vadd.f32 0.0, %v7701
      %v7703 = vpop.f32.mrb[0].mxu0
      %7704 = vmatprep.mubr.bf16.mxu0 0
      %7705 = vmatmul.mubr.bf16.gmra.mrb[0].mxu0 %v7582
      %v7706 = vpop.f32.mrb[0].mxu0
      %v7707 = vadd.f32 0.0, %v7706
      %v7708 = vpop.f32.mrb[0].mxu0
      %v7709 = vpop.f32.mrb[0].mxu0
      %v7710 = vadd.f32 0.0, %v7709
      %v7711 = vpop.f32.mrb[0].mxu0
      %7712 = vmatprep.mubr.bf16.mxu0 0
      %7713 = vmatmul.mubr.bf16.gmra.mrb[0].mxu0 %v7585
      %v7714 = vpop.f32.mrb[0].mxu0
      %v7715 = vadd.f32 0.0, %v7714
      %v7716 = vpop.f32.mrb[0].mxu0
      %v7717 = vpop.f32.mrb[0].mxu0
      %v7718 = vadd.f32 0.0, %v7717
      %v7719 = vpop.f32.mrb[0].mxu0
      %7720 = vmatprep.mubr.bf16.mxu0 0
      %7721 = vmatmul.mubr.bf16.gmra.mrb[0].mxu0 %v7588
      %v7722 = vpop.f32.mrb[0].mxu0
      %v7723 = vadd.f32 0.0, %v7722
      %v7724 = vpop.f32.mrb[0].mxu0
      %v7725 = vpop.f32.mrb[0].mxu0
      %v7726 = vadd.f32 0.0, %v7725
      %v7727 = vpop.f32.mrb[0].mxu0
      %7728 = vmatprep.mubr.bf16.mxu0 0
      %7729 = vmatmul.mubr.bf16.gmra.mrb[0].mxu0 %v7591
      %v7730 = vpop.f32.mrb[0].mxu0
      %v7731 = vadd.f32 0.0, %v7730
      %v7732 = vpop.f32.mrb[0].mxu0
      %v7733 = vpop.f32.mrb[0].mxu0
      %v7734 = vadd.f32 0.0, %v7733
      %v7735 = vpop.f32.mrb[0].mxu0
      %7736 = vmatprep.mubr.bf16.mxu0 0
      %7737 = vmatmul.mubr.bf16.gmra.mrb[0].mxu0 %v7594
      %v7738 = vpop.f32.mrb[0].mxu0
      %v7739 = vadd.f32 0.0, %v7738
      %v7740 = vpop.f32.mrb[0].mxu0
      %v7741 = vpop.f32.mrb[0].mxu0
      %v7742 = vadd.f32 0.0, %v7741
      %v7743 = vpop.f32.mrb[0].mxu0
      %7744 = vmatprep.mubr.bf16.mxu0 0
      %7745 = vmatmul.mubr.bf16.gmra.mrb[0].mxu0 %v7597
      %v7746 = vpop.f32.mrb[0].mxu0
      %v7747 = vadd.f32 0.0, %v7746
      %v7748 = vpop.f32.mrb[0].mxu0
      %v7749 = vpop.f32.mrb[0].mxu0
      %v7750 = vadd.f32 0.0, %v7749
      %v7751 = vpop.f32.mrb[0].mxu0
      %7752 = vmatprep.mubr.bf16.mxu0 0
      %7753 = vmatmul.mubr.bf16.gmra.mrb[0].mxu0 %v7600
      %v7754 = vpop.f32.mrb[0].mxu0
      %v7755 = vadd.f32 0.0, %v7754
      %v7756 = vpop.f32.mrb[0].mxu0
      %v7757 = vpop.f32.mrb[0].mxu0
      %v7758 = vadd.f32 0.0, %v7757
      %v7759 = vpop.f32.mrb[0].mxu0
      %7760 = vmatprep.mubr.bf16.mxu0 0
      %7761 = vmatmul.mubr.bf16.gmra.mrb[0].mxu0 %v7603
      %v7762 = vpop.f32.mrb[0].mxu0
      %v7763 = vadd.f32 0.0, %v7762
      %v7764 = vpop.f32.mrb[0].mxu0
      %v7765 = vpop.f32.mrb[0].mxu0
      %v7766 = vadd.f32 0.0, %v7765
      %v7767 = vpop.f32.mrb[0].mxu0
      %7768 = vdwg.mxu0
      %v7769 = vadd.f32 %v7221, %v7643
      %v7770 = vadd.f32 %v7224, %v7646
      %v7771 = vadd.f32 %v7229, %v7651
      %v7772 = vadd.f32 %v7232, %v7654
      %v7773 = vadd.f32 %v7237, %v7659
      %v7774 = vadd.f32 %v7240, %v7662
      %v7775 = vadd.f32 %v7245, %v7667
      %v7776 = vadd.f32 %v7248, %v7670
      %v7777 = vadd.f32 %v7253, %v7675
      %v7778 = vadd.f32 %v7256, %v7678
      %v7779 = vadd.f32 %v7261, %v7683
      %v7780 = vadd.f32 %v7264, %v7686
      %v7781 = vadd.f32 %v7269, %v7691
      %v7782 = vadd.f32 %v7272, %v7694
      %v7783 = vadd.f32 %v7277, %v7699
      %v7784 = vadd.f32 %v7280, %v7702
      %v7785 = vadd.f32 %v7285, %v7707
      %v7786 = vadd.f32 %v7288, %v7710
      %v7787 = vadd.f32 %v7293, %v7715
      %v7788 = vadd.f32 %v7296, %v7718
      %v7789 = vadd.f32 %v7301, %v7723
      %v7790 = vadd.f32 %v7304, %v7726
      %v7791 = vadd.f32 %v7309, %v7731
      %v7792 = vadd.f32 %v7312, %v7734
      %v7793 = vadd.f32 %v7317, %v7739
      %v7794 = vadd.f32 %v7320, %v7742
      %v7795 = vadd.f32 %v7325, %v7747
      %v7796 = vadd.f32 %v7328, %v7750
      %v7797 = vadd.f32 %v7333, %v7755
      %v7798 = vadd.f32 %v7336, %v7758
      %v7799 = vadd.f32 %v7341, %v7763
      %v7800 = vadd.f32 %v7344, %v7766
      %v7801 = vld [vmem:[%s6242] sm:$0xf]
      %v7802 = vld [vmem:[%s6242 + $0x4] sm:$0xf]
      %v7803 = vld [vmem:[%s6242 + $0xc] sm:$0xf]
      %v7804 = vld [vmem:[%s6242 + $0x10] sm:$0xf]
      %v7805 = vld [vmem:[%s6242 + $0x18] sm:$0xf]
      %v7806 = vld [vmem:[%s6242 + $0x1c] sm:$0xf]
      %v7807 = vld [vmem:[%s6242 + $0x24] sm:$0xf]
      %v7808 = vld [vmem:[%s6242 + $0x28] sm:$0xf]
      %v7809 = vld [vmem:[%s6242 + $0x30] sm:$0xf]
      %v7810 = vld [vmem:[%s6242 + $0x34] sm:$0xf]
      %v7811 = vld [vmem:[%s6242 + $0x3c] sm:$0xf]
      %v7812 = vld [vmem:[%s6242 + $0x40] sm:$0xf]
      %v7813 = vld [vmem:[%s6242 + $0x48] sm:$0xf]
      %v7814 = vld [vmem:[%s6242 + $0x4c] sm:$0xf]
      %v7815 = vld [vmem:[%s6242 + $0x54] sm:$0xf]
      %v7816 = vld [vmem:[%s6242 + $0x58] sm:$0xf]
      %v7817 = vld [vmem:[%s6242 + $0x60] sm:$0xf]
      %v7818 = vld [vmem:[%s6242 + $0x64] sm:$0xf]
      %v7819 = vld [vmem:[%s6242 + $0x6c] sm:$0xf]
      %v7820 = vld [vmem:[%s6242 + $0x70] sm:$0xf]
      %v7821 = vld [vmem:[%s6242 + $0x78] sm:$0xf]
      %v7822 = vld [vmem:[%s6242 + $0x7c] sm:$0xf]
      %v7823 = vld [vmem:[%s6242 + $0x84] sm:$0xf]
      %v7824 = vld [vmem:[%s6242 + $0x88] sm:$0xf]
      %v7825 = vld [vmem:[%s6242 + $0x90] sm:$0xf]
      %v7826 = vld [vmem:[%s6242 + $0x94] sm:$0xf]
      %v7827 = vld [vmem:[%s6242 + $0x9c] sm:$0xf]
      %v7828 = vld [vmem:[%s6242 + $0xa0] sm:$0xf]
      %v7829 = vld [vmem:[%s6242 + $0xa8] sm:$0xf]
      %v7830 = vld [vmem:[%s6242 + $0xac] sm:$0xf]
      %v7831 = vld [vmem:[%s6242 + $0xb4] sm:$0xf]
      %v7832 = vld [vmem:[%s6242 + $0xb8] sm:$0xf]
      %s7833 = scalar_lea.vmem %s3, 12
      %v7834 = vld [vmem:[%s7833] sm:$0xf]
      %v7867 = vunpack.c.l.b16 %v7801
      %v7868 = vunpack.c.l.b16 %v7802
      %v7869 = vunpack.c.l.b16 %v7803
      %v7870 = vunpack.c.l.b16 %v7804
      %v7871 = vunpack.c.l.b16 %v7805
      %v7872 = vunpack.c.l.b16 %v7806
      %v7873 = vunpack.c.l.b16 %v7807
      %v7874 = vunpack.c.l.b16 %v7808
      %v7875 = vunpack.c.l.b16 %v7809
      %v7876 = vunpack.c.l.b16 %v7810
      %v7877 = vunpack.c.l.b16 %v7811
      %v7878 = vunpack.c.l.b16 %v7812
      %v7879 = vunpack.c.l.b16 %v7813
      %v7880 = vunpack.c.l.b16 %v7814
      %v7881 = vunpack.c.l.b16 %v7815
      %v7882 = vunpack.c.l.b16 %v7816
      %v7883 = vunpack.c.l.b16 %v7817
      %v7884 = vunpack.c.l.b16 %v7818
      %v7885 = vunpack.c.l.b16 %v7819
      %v7886 = vunpack.c.l.b16 %v7820
      %v7887 = vunpack.c.l.b16 %v7821
      %v7888 = vunpack.c.l.b16 %v7822
      %v7889 = vunpack.c.l.b16 %v7823
      %v7890 = vunpack.c.l.b16 %v7824
      %v7891 = vunpack.c.l.b16 %v7825
      %v7892 = vunpack.c.l.b16 %v7826
      %v7893 = vunpack.c.l.b16 %v7827
      %v7894 = vunpack.c.l.b16 %v7828
      %v7895 = vunpack.c.l.b16 %v7829
      %v7896 = vunpack.c.l.b16 %v7830
      %v7897 = vunpack.c.l.b16 %v7831
      %v7898 = vunpack.c.l.b16 %v7832
      %v7899 = vpack.c.b16 %v7868, %v7867
      %v7900 = vpack.c.b16 %v7870, %v7869
      %v7901 = vpack.c.b16 %v7872, %v7871
      %v7902 = vpack.c.b16 %v7874, %v7873
      %v7903 = vpack.c.b16 %v7876, %v7875
      %v7904 = vpack.c.b16 %v7878, %v7877
      %v7905 = vpack.c.b16 %v7880, %v7879
      %v7906 = vpack.c.b16 %v7882, %v7881
      %v7907 = vpack.c.b16 %v7884, %v7883
      %v7908 = vpack.c.b16 %v7886, %v7885
      %v7909 = vpack.c.b16 %v7888, %v7887
      %v7910 = vpack.c.b16 %v7890, %v7889
      %v7911 = vpack.c.b16 %v7892, %v7891
      %v7912 = vpack.c.b16 %v7894, %v7893
      %v7913 = vpack.c.b16 %v7896, %v7895
      %v7914 = vpack.c.b16 %v7898, %v7897
      %v7916 = vsel %vm5480, %v7899, 0
      %v7919 = vsel %vm5480, %v7900, 0
      %v7922 = vsel %vm5480, %v7901, 0
      %v7925 = vsel %vm5480, %v7902, 0
      %v7928 = vsel %vm5480, %v7903, 0
      %v7931 = vsel %vm5480, %v7904, 0
      %v7934 = vsel %vm5480, %v7905, 0
      %v7937 = vsel %vm5480, %v7906, 0
      %v7940 = vsel %vm5480, %v7907, 0
      %v7943 = vsel %vm5480, %v7908, 0
      %v7946 = vsel %vm5480, %v7909, 0
      %v7949 = vsel %vm5480, %v7910, 0
      %v7952 = vsel %vm5480, %v7911, 0
      %v7955 = vsel %vm5480, %v7912, 0
      %v7958 = vsel %vm5480, %v7913, 0
      %v7961 = vsel %vm5480, %v7914, 0
      %v7964 = vsel %vm6890, %v7834, 0
      %7966 = vmatprep.subr.bf16.mxu0 0
      %7967 = vmatpush1.bf16.msra.mxu0 %v7964
      %7968 = vmatprep.subr.bf16.mxu0 0
      %7969 = vmatpush1.bf16.msra.mxu0 0
      %7970 = vmatprep.subr.bf16.mxu0 0
      %7971 = vmatpush1.bf16.msra.mxu0 0
      %7972 = vmatprep.subr.bf16.mxu0 0
      %7973 = vmatpush1.bf16.msra.mxu0 0
      %7974 = vmatprep.subr.bf16.mxu0 0
      %7975 = vmatpush1.bf16.msra.mxu0 0
      %7976 = vmatprep.subr.bf16.mxu0 0
      %7977 = vmatpush1.bf16.msra.mxu0 0
      %7978 = vmatprep.subr.bf16.mxu0 0
      %7979 = vmatpush1.bf16.msra.mxu0 0
      %7980 = vmatprep.subr.bf16.mxu0 0
      %7981 = vmatpush1.bf16.msra.mxu0 0
      %7982 = vmatprep.subr.bf16.mxu0 0
      %7983 = vmatpush1.bf16.msra.mxu0 0
      %7984 = vmatprep.subr.bf16.mxu0 0
      %7985 = vmatpush1.bf16.msra.mxu0 0
      %7986 = vmatprep.subr.bf16.mxu0 0
      %7987 = vmatpush1.bf16.msra.mxu0 0
      %7988 = vmatprep.subr.bf16.mxu0 0
      %7989 = vmatpush1.bf16.msra.mxu0 0
      %7990 = vmatprep.subr.bf16.mxu0 0
      %7991 = vmatpush1.bf16.msra.mxu0 0
      %7992 = vmatprep.subr.bf16.mxu0 0
      %7993 = vmatpush1.bf16.msra.mxu0 0
      %7994 = vmatprep.subr.bf16.mxu0 0
      %7995 = vmatpush1.bf16.msra.mxu0 0
      %7996 = vmatprep.subr.bf16.mxu0 0
      %7997 = vmatpush1.bf16.msra.mxu0 0
      %7998 = vmatprep.mubr.bf16.mxu0 0
      %7999 = vmatmul.mubr.bf16.gmra.mrb[0].mxu0 %v7916
      %v8000 = vpop.f32.mrb[0].mxu0
      %v8001 = vadd.f32 0.0, %v8000
      %v8002 = vpop.f32.mrb[0].mxu0
      %v8003 = vpop.f32.mrb[0].mxu0
      %v8004 = vadd.f32 0.0, %v8003
      %v8005 = vpop.f32.mrb[0].mxu0
      %8006 = vmatprep.mubr.bf16.mxu0 0
      %8007 = vmatmul.mubr.bf16.gmra.mrb[0].mxu0 %v7919
      %v8008 = vpop.f32.mrb[0].mxu0
      %v8009 = vadd.f32 0.0, %v8008
      %v8010 = vpop.f32.mrb[0].mxu0
      %v8011 = vpop.f32.mrb[0].mxu0
      %v8012 = vadd.f32 0.0, %v8011
      %v8013 = vpop.f32.mrb[0].mxu0
      %8014 = vmatprep.mubr.bf16.mxu0 0
      %8015 = vmatmul.mubr.bf16.gmra.mrb[0].mxu0 %v7922
      %v8016 = vpop.f32.mrb[0].mxu0
      %v8017 = vadd.f32 0.0, %v8016
      %v8018 = vpop.f32.mrb[0].mxu0
      %v8019 = vpop.f32.mrb[0].mxu0
      %v8020 = vadd.f32 0.0, %v8019
      %v8021 = vpop.f32.mrb[0].mxu0
      %8022 = vmatprep.mubr.bf16.mxu0 0
      %8023 = vmatmul.mubr.bf16.gmra.mrb[0].mxu0 %v7925
      %v8024 = vpop.f32.mrb[0].mxu0
      %v8025 = vadd.f32 0.0, %v8024
      %v8026 = vpop.f32.mrb[0].mxu0
      %v8027 = vpop.f32.mrb[0].mxu0
      %v8028 = vadd.f32 0.0, %v8027
      %v8029 = vpop.f32.mrb[0].mxu0
      %8030 = vmatprep.mubr.bf16.mxu0 0
      %8031 = vmatmul.mubr.bf16.gmra.mrb[0].mxu0 %v7928
      %v8032 = vpop.f32.mrb[0].mxu0
      %v8033 = vadd.f32 0.0, %v8032
      %v8034 = vpop.f32.mrb[0].mxu0
      %v8035 = vpop.f32.mrb[0].mxu0
      %v8036 = vadd.f32 0.0, %v8035
      %v8037 = vpop.f32.mrb[0].mxu0
      %8038 = vmatprep.mubr.bf16.mxu0 0
      %8039 = vmatmul.mubr.bf16.gmra.mrb[0].mxu0 %v7931
      %v8040 = vpop.f32.mrb[0].mxu0
      %v8041 = vadd.f32 0.0, %v8040
      %v8042 = vpop.f32.mrb[0].mxu0
      %v8043 = vpop.f32.mrb[0].mxu0
      %v8044 = vadd.f32 0.0, %v8043
      %v8045 = vpop.f32.mrb[0].mxu0
      %8046 = vmatprep.mubr.bf16.mxu0 0
      %8047 = vmatmul.mubr.bf16.gmra.mrb[0].mxu0 %v7934
      %v8048 = vpop.f32.mrb[0].mxu0
      %v8049 = vadd.f32 0.0, %v8048
      %v8050 = vpop.f32.mrb[0].mxu0
      %v8051 = vpop.f32.mrb[0].mxu0
      %v8052 = vadd.f32 0.0, %v8051
      %v8053 = vpop.f32.mrb[0].mxu0
      %8054 = vmatprep.mubr.bf16.mxu0 0
      %8055 = vmatmul.mubr.bf16.gmra.mrb[0].mxu0 %v7937
      %v8056 = vpop.f32.mrb[0].mxu0
      %v8057 = vadd.f32 0.0, %v8056
      %v8058 = vpop.f32.mrb[0].mxu0
      %v8059 = vpop.f32.mrb[0].mxu0
      %v8060 = vadd.f32 0.0, %v8059
      %v8061 = vpop.f32.mrb[0].mxu0
      %8062 = vmatprep.mubr.bf16.mxu0 0
      %8063 = vmatmul.mubr.bf16.gmra.mrb[0].mxu0 %v7940
      %v8064 = vpop.f32.mrb[0].mxu0
      %v8065 = vadd.f32 0.0, %v8064
      %v8066 = vpop.f32.mrb[0].mxu0
      %v8067 = vpop.f32.mrb[0].mxu0
      %v8068 = vadd.f32 0.0, %v8067
      %v8069 = vpop.f32.mrb[0].mxu0
      %8070 = vmatprep.mubr.bf16.mxu0 0
      %8071 = vmatmul.mubr.bf16.gmra.mrb[0].mxu0 %v7943
      %v8072 = vpop.f32.mrb[0].mxu0
      %v8073 = vadd.f32 0.0, %v8072
      %v8074 = vpop.f32.mrb[0].mxu0
      %v8075 = vpop.f32.mrb[0].mxu0
      %v8076 = vadd.f32 0.0, %v8075
      %v8077 = vpop.f32.mrb[0].mxu0
      %8078 = vmatprep.mubr.bf16.mxu0 0
      %8079 = vmatmul.mubr.bf16.gmra.mrb[0].mxu0 %v7946
      %v8080 = vpop.f32.mrb[0].mxu0
      %v8081 = vadd.f32 0.0, %v8080
      %v8082 = vpop.f32.mrb[0].mxu0
      %v8083 = vpop.f32.mrb[0].mxu0
      %v8084 = vadd.f32 0.0, %v8083
      %v8085 = vpop.f32.mrb[0].mxu0
      %8086 = vmatprep.mubr.bf16.mxu0 0
      %8087 = vmatmul.mubr.bf16.gmra.mrb[0].mxu0 %v7949
      %v8088 = vpop.f32.mrb[0].mxu0
      %v8089 = vadd.f32 0.0, %v8088
      %v8090 = vpop.f32.mrb[0].mxu0
      %v8091 = vpop.f32.mrb[0].mxu0
      %v8092 = vadd.f32 0.0, %v8091
      %v8093 = vpop.f32.mrb[0].mxu0
      %8094 = vmatprep.mubr.bf16.mxu0 0
      %8095 = vmatmul.mubr.bf16.gmra.mrb[0].mxu0 %v7952
      %v8096 = vpop.f32.mrb[0].mxu0
      %v8097 = vadd.f32 0.0, %v8096
      %v8098 = vpop.f32.mrb[0].mxu0
      %v8099 = vpop.f32.mrb[0].mxu0
      %v8100 = vadd.f32 0.0, %v8099
      %v8101 = vpop.f32.mrb[0].mxu0
      %8102 = vmatprep.mubr.bf16.mxu0 0
      %8103 = vmatmul.mubr.bf16.gmra.mrb[0].mxu0 %v7955
      %v8104 = vpop.f32.mrb[0].mxu0
      %v8105 = vadd.f32 0.0, %v8104
      %v8106 = vpop.f32.mrb[0].mxu0
      %v8107 = vpop.f32.mrb[0].mxu0
      %v8108 = vadd.f32 0.0, %v8107
      %v8109 = vpop.f32.mrb[0].mxu0
      %8110 = vmatprep.mubr.bf16.mxu0 0
      %8111 = vmatmul.mubr.bf16.gmra.mrb[0].mxu0 %v7958
      %v8112 = vpop.f32.mrb[0].mxu0
      %v8113 = vadd.f32 0.0, %v8112
      %v8114 = vpop.f32.mrb[0].mxu0
      %v8115 = vpop.f32.mrb[0].mxu0
      %v8116 = vadd.f32 0.0, %v8115
      %v8117 = vpop.f32.mrb[0].mxu0
      %8118 = vmatprep.mubr.bf16.mxu0 0
      %8119 = vmatmul.mubr.bf16.gmra.mrb[0].mxu0 %v7961
      %v8120 = vpop.f32.mrb[0].mxu0
      %v8121 = vadd.f32 0.0, %v8120
      %v8122 = vpop.f32.mrb[0].mxu0
      %v8123 = vpop.f32.mrb[0].mxu0
      %v8124 = vadd.f32 0.0, %v8123
      %v8125 = vpop.f32.mrb[0].mxu0
      %8126 = vdwg.mxu0
      %v8127 = vadd.f32 %v7769, %v8001
      %v8128 = vadd.f32 %v7770, %v8004
      %v8129 = vadd.f32 %v7771, %v8009
      %v8130 = vadd.f32 %v7772, %v8012
      %v8131 = vadd.f32 %v7773, %v8017
      %v8132 = vadd.f32 %v7774, %v8020
      %v8133 = vadd.f32 %v7775, %v8025
      %v8134 = vadd.f32 %v7776, %v8028
      %v8135 = vadd.f32 %v7777, %v8033
      %v8136 = vadd.f32 %v7778, %v8036
      %v8137 = vadd.f32 %v7779, %v8041
      %v8138 = vadd.f32 %v7780, %v8044
      %v8139 = vadd.f32 %v7781, %v8049
      %v8140 = vadd.f32 %v7782, %v8052
      %v8141 = vadd.f32 %v7783, %v8057
      %v8142 = vadd.f32 %v7784, %v8060
      %v8143 = vadd.f32 %v7785, %v8065
      %v8144 = vadd.f32 %v7786, %v8068
      %v8145 = vadd.f32 %v7787, %v8073
      %v8146 = vadd.f32 %v7788, %v8076
      %v8147 = vadd.f32 %v7789, %v8081
      %v8148 = vadd.f32 %v7790, %v8084
      %v8149 = vadd.f32 %v7791, %v8089
      %v8150 = vadd.f32 %v7792, %v8092
      %v8151 = vadd.f32 %v7793, %v8097
      %v8152 = vadd.f32 %v7794, %v8100
      %v8153 = vadd.f32 %v7795, %v8105
      %v8154 = vadd.f32 %v7796, %v8108
      %v8155 = vadd.f32 %v7797, %v8113
      %v8156 = vadd.f32 %v7798, %v8116
      %v8157 = vadd.f32 %v7799, %v8121
      %v8158 = vadd.f32 %v7800, %v8124
      %v8159 = vld [vmem:[%s6242] sm:$0xf]
      %v8160 = vld [vmem:[%s6242 + $0x4] sm:$0xf]
      %v8161 = vld [vmem:[%s6242 + $0x8] sm:$0x1]
      %v8162 = vld [vmem:[%s6242 + $0xc] sm:$0xf]
      %v8163 = vld [vmem:[%s6242 + $0x10] sm:$0xf]
      %v8164 = vld [vmem:[%s6242 + $0x14] sm:$0x1]
      %v8165 = vld [vmem:[%s6242 + $0x18] sm:$0xf]
      %v8166 = vld [vmem:[%s6242 + $0x1c] sm:$0xf]
      %v8167 = vld [vmem:[%s6242 + $0x20] sm:$0x1]
      %v8168 = vld [vmem:[%s6242 + $0x24] sm:$0xf]
      %v8169 = vld [vmem:[%s6242 + $0x28] sm:$0xf]
      %v8170 = vld [vmem:[%s6242 + $0x2c] sm:$0x1]
      %v8171 = vld [vmem:[%s6242 + $0x30] sm:$0xf]
      %v8172 = vld [vmem:[%s6242 + $0x34] sm:$0xf]
      %v8173 = vld [vmem:[%s6242 + $0x38] sm:$0x1]
      %v8174 = vld [vmem:[%s6242 + $0x3c] sm:$0xf]
      %v8175 = vld [vmem:[%s6242 + $0x40] sm:$0xf]
      %v8176 = vld [vmem:[%s6242 + $0x44] sm:$0x1]
      %v8177 = vld [vmem:[%s6242 + $0x48] sm:$0xf]
      %v8178 = vld [vmem:[%s6242 + $0x4c] sm:$0xf]
      %v8179 = vld [vmem:[%s6242 + $0x50] sm:$0x1]
      %v8180 = vld [vmem:[%s6242 + $0x54] sm:$0xf]
      %v8181 = vld [vmem:[%s6242 + $0x58] sm:$0xf]
      %v8182 = vld [vmem:[%s6242 + $0x5c] sm:$0x1]
      %v8183 = vld [vmem:[%s6242 + $0x60] sm:$0xf]
      %v8184 = vld [vmem:[%s6242 + $0x64] sm:$0xf]
      %v8185 = vld [vmem:[%s6242 + $0x68] sm:$0x1]
      %v8186 = vld [vmem:[%s6242 + $0x6c] sm:$0xf]
      %v8187 = vld [vmem:[%s6242 + $0x70] sm:$0xf]
      %v8188 = vld [vmem:[%s6242 + $0x74] sm:$0x1]
      %v8189 = vld [vmem:[%s6242 + $0x78] sm:$0xf]
      %v8190 = vld [vmem:[%s6242 + $0x7c] sm:$0xf]
      %v8191 = vld [vmem:[%s6242 + $0x80] sm:$0x1]
      %v8192 = vld [vmem:[%s6242 + $0x84] sm:$0xf]
      %v8193 = vld [vmem:[%s6242 + $0x88] sm:$0xf]
      %v8194 = vld [vmem:[%s6242 + $0x8c] sm:$0x1]
      %v8195 = vld [vmem:[%s6242 + $0x90] sm:$0xf]
      %v8196 = vld [vmem:[%s6242 + $0x94] sm:$0xf]
      %v8197 = vld [vmem:[%s6242 + $0x98] sm:$0x1]
      %v8198 = vld [vmem:[%s6242 + $0x9c] sm:$0xf]
      %v8199 = vld [vmem:[%s6242 + $0xa0] sm:$0xf]
      %v8200 = vld [vmem:[%s6242 + $0xa4] sm:$0x1]
      %v8201 = vld [vmem:[%s6242 + $0xa8] sm:$0xf]
      %v8202 = vld [vmem:[%s6242 + $0xac] sm:$0xf]
      %v8203 = vld [vmem:[%s6242 + $0xb0] sm:$0x1]
      %v8204 = vld [vmem:[%s6242 + $0xb4] sm:$0xf]
      %v8205 = vld [vmem:[%s6242 + $0xb8] sm:$0xf]
      %v8206 = vld [vmem:[%s6242 + $0xbc] sm:$0x1]
      %v8208 = vshrl.u32 %v8159, 16
      %v8210 = vrot.slane %v8208, 4
      %v8211 = vshll.u32 %v8159, 16
      %v8213 = vrot.slane %v8211, 5
      %v8214 = vor.u32 %v8210, %v8213
      %v8215 = vrot.slane %v8214, 4
      %v8217 = vshll.u32 %v8160, 16
      %v8219 = vrot.slane %v8217, 5
      %v8220 = vsel %vm902, %v8215, %v8219
      %v8221 = vshrl.u32 %v8160, 16
      %v8223 = vrot.slane %v8221, 4
      %v8224 = vor.u32 %v8223, %v8219
      %v8225 = vrot.slane %v8224, 4
      %v8227 = vshll.u32 %v8161, 16
      %v8229 = vrot.slane %v8227, 5
      %v8230 = vsel %vm902, %v8225, %v8229
      %v8232 = vshrl.u32 %v8162, 16
      %v8234 = vrot.slane %v8232, 4
      %v8235 = vshll.u32 %v8162, 16
      %v8237 = vrot.slane %v8235, 5
      %v8238 = vor.u32 %v8234, %v8237
      %v8239 = vrot.slane %v8238, 4
      %v8241 = vshll.u32 %v8163, 16
      %v8243 = vrot.slane %v8241, 5
      %v8244 = vsel %vm902, %v8239, %v8243
      %v8245 = vshrl.u32 %v8163, 16
      %v8247 = vrot.slane %v8245, 4
      %v8248 = vor.u32 %v8247, %v8243
      %v8249 = vrot.slane %v8248, 4
      %v8251 = vshll.u32 %v8164, 16
      %v8253 = vrot.slane %v8251, 5
      %v8254 = vsel %vm902, %v8249, %v8253
      %v8256 = vshrl.u32 %v8165, 16
      %v8258 = vrot.slane %v8256, 4
      %v8259 = vshll.u32 %v8165, 16
      %v8261 = vrot.slane %v8259, 5
      %v8262 = vor.u32 %v8258, %v8261
      %v8263 = vrot.slane %v8262, 4
      %v8265 = vshll.u32 %v8166, 16
      %v8267 = vrot.slane %v8265, 5
      %v8268 = vsel %vm902, %v8263, %v8267
      %v8269 = vshrl.u32 %v8166, 16
      %v8271 = vrot.slane %v8269, 4
      %v8272 = vor.u32 %v8271, %v8267
      %v8273 = vrot.slane %v8272, 4
      %v8275 = vshll.u32 %v8167, 16
      %v8277 = vrot.slane %v8275, 5
      %v8278 = vsel %vm902, %v8273, %v8277
      %v8280 = vshrl.u32 %v8168, 16
      %v8282 = vrot.slane %v8280, 4
      %v8283 = vshll.u32 %v8168, 16
      %v8285 = vrot.slane %v8283, 5
      %v8286 = vor.u32 %v8282, %v8285
      %v8287 = vrot.slane %v8286, 4
      %v8289 = vshll.u32 %v8169, 16
      %v8291 = vrot.slane %v8289, 5
      %v8292 = vsel %vm902, %v8287, %v8291
      %v8293 = vshrl.u32 %v8169, 16
      %v8295 = vrot.slane %v8293, 4
      %v8296 = vor.u32 %v8295, %v8291
      %v8297 = vrot.slane %v8296, 4
      %v8299 = vshll.u32 %v8170, 16
      %v8301 = vrot.slane %v8299, 5
      %v8302 = vsel %vm902, %v8297, %v8301
      %v8304 = vshrl.u32 %v8171, 16
      %v8306 = vrot.slane %v8304, 4
      %v8307 = vshll.u32 %v8171, 16
      %v8309 = vrot.slane %v8307, 5
      %v8310 = vor.u32 %v8306, %v8309
      %v8311 = vrot.slane %v8310, 4
      %v8313 = vshll.u32 %v8172, 16
      %v8315 = vrot.slane %v8313, 5
      %v8316 = vsel %vm902, %v8311, %v8315
      %v8317 = vshrl.u32 %v8172, 16
      %v8319 = vrot.slane %v8317, 4
      %v8320 = vor.u32 %v8319, %v8315
      %v8321 = vrot.slane %v8320, 4
      %v8323 = vshll.u32 %v8173, 16
      %v8325 = vrot.slane %v8323, 5
      %v8326 = vsel %vm902, %v8321, %v8325
      %v8328 = vshrl.u32 %v8174, 16
      %v8330 = vrot.slane %v8328, 4
      %v8331 = vshll.u32 %v8174, 16
      %v8333 = vrot.slane %v8331, 5
      %v8334 = vor.u32 %v8330, %v8333
      %v8335 = vrot.slane %v8334, 4
      %v8337 = vshll.u32 %v8175, 16
      %v8339 = vrot.slane %v8337, 5
      %v8340 = vsel %vm902, %v8335, %v8339
      %v8341 = vshrl.u32 %v8175, 16
      %v8343 = vrot.slane %v8341, 4
      %v8344 = vor.u32 %v8343, %v8339
      %v8345 = vrot.slane %v8344, 4
      %v8347 = vshll.u32 %v8176, 16
      %v8349 = vrot.slane %v8347, 5
      %v8350 = vsel %vm902, %v8345, %v8349
      %v8352 = vshrl.u32 %v8177, 16
      %v8354 = vrot.slane %v8352, 4
      %v8355 = vshll.u32 %v8177, 16
      %v8357 = vrot.slane %v8355, 5
      %v8358 = vor.u32 %v8354, %v8357
      %v8359 = vrot.slane %v8358, 4
      %v8361 = vshll.u32 %v8178, 16
      %v8363 = vrot.slane %v8361, 5
      %v8364 = vsel %vm902, %v8359, %v8363
      %v8365 = vshrl.u32 %v8178, 16
      %v8367 = vrot.slane %v8365, 4
      %v8368 = vor.u32 %v8367, %v8363
      %v8369 = vrot.slane %v8368, 4
      %v8371 = vshll.u32 %v8179, 16
      %v8373 = vrot.slane %v8371, 5
      %v8374 = vsel %vm902, %v8369, %v8373
      %v8376 = vshrl.u32 %v8180, 16
      %v8378 = vrot.slane %v8376, 4
      %v8379 = vshll.u32 %v8180, 16
      %v8381 = vrot.slane %v8379, 5
      %v8382 = vor.u32 %v8378, %v8381
      %v8383 = vrot.slane %v8382, 4
      %v8385 = vshll.u32 %v8181, 16
      %v8387 = vrot.slane %v8385, 5
      %v8388 = vsel %vm902, %v8383, %v8387
      %v8389 = vshrl.u32 %v8181, 16
      %v8391 = vrot.slane %v8389, 4
      %v8392 = vor.u32 %v8391, %v8387
      %v8393 = vrot.slane %v8392, 4
      %v8395 = vshll.u32 %v8182, 16
      %v8397 = vrot.slane %v8395, 5
      %v8398 = vsel %vm902, %v8393, %v8397
      %v8400 = vshrl.u32 %v8183, 16
      %v8402 = vrot.slane %v8400, 4
      %v8403 = vshll.u32 %v8183, 16
      %v8405 = vrot.slane %v8403, 5
      %v8406 = vor.u32 %v8402, %v8405
      %v8407 = vrot.slane %v8406, 4
      %v8409 = vshll.u32 %v8184, 16
      %v8411 = vrot.slane %v8409, 5
      %v8412 = vsel %vm902, %v8407, %v8411
      %v8413 = vshrl.u32 %v8184, 16
      %v8415 = vrot.slane %v8413, 4
      %v8416 = vor.u32 %v8415, %v8411
      %v8417 = vrot.slane %v8416, 4
      %v8419 = vshll.u32 %v8185, 16
      %v8421 = vrot.slane %v8419, 5
      %v8422 = vsel %vm902, %v8417, %v8421
      %v8424 = vshrl.u32 %v8186, 16
      %v8426 = vrot.slane %v8424, 4
      %v8427 = vshll.u32 %v8186, 16
      %v8429 = vrot.slane %v8427, 5
      %v8430 = vor.u32 %v8426, %v8429
      %v8431 = vrot.slane %v8430, 4
      %v8433 = vshll.u32 %v8187, 16
      %v8435 = vrot.slane %v8433, 5
      %v8436 = vsel %vm902, %v8431, %v8435
      %v8437 = vshrl.u32 %v8187, 16
      %v8439 = vrot.slane %v8437, 4
      %v8440 = vor.u32 %v8439, %v8435
      %v8441 = vrot.slane %v8440, 4
      %v8443 = vshll.u32 %v8188, 16
      %v8445 = vrot.slane %v8443, 5
      %v8446 = vsel %vm902, %v8441, %v8445
      %v8448 = vshrl.u32 %v8189, 16
      %v8450 = vrot.slane %v8448, 4
      %v8451 = vshll.u32 %v8189, 16
      %v8453 = vrot.slane %v8451, 5
      %v8454 = vor.u32 %v8450, %v8453
      %v8455 = vrot.slane %v8454, 4
      %v8457 = vshll.u32 %v8190, 16
      %v8459 = vrot.slane %v8457, 5
      %v8460 = vsel %vm902, %v8455, %v8459
      %v8461 = vshrl.u32 %v8190, 16
      %v8463 = vrot.slane %v8461, 4
      %v8464 = vor.u32 %v8463, %v8459
      %v8465 = vrot.slane %v8464, 4
      %v8467 = vshll.u32 %v8191, 16
      %v8469 = vrot.slane %v8467, 5
      %v8470 = vsel %vm902, %v8465, %v8469
      %v8472 = vshrl.u32 %v8192, 16
      %v8474 = vrot.slane %v8472, 4
      %v8475 = vshll.u32 %v8192, 16
      %v8477 = vrot.slane %v8475, 5
      %v8478 = vor.u32 %v8474, %v8477
      %v8479 = vrot.slane %v8478, 4
      %v8481 = vshll.u32 %v8193, 16
      %v8483 = vrot.slane %v8481, 5
      %v8484 = vsel %vm902, %v8479, %v8483
      %v8485 = vshrl.u32 %v8193, 16
      %v8487 = vrot.slane %v8485, 4
      %v8488 = vor.u32 %v8487, %v8483
      %v8489 = vrot.slane %v8488, 4
      %v8491 = vshll.u32 %v8194, 16
      %v8493 = vrot.slane %v8491, 5
      %v8494 = vsel %vm902, %v8489, %v8493
      %v8496 = vshrl.u32 %v8195, 16
      %v8498 = vrot.slane %v8496, 4
      %v8499 = vshll.u32 %v8195, 16
      %v8501 = vrot.slane %v8499, 5
      %v8502 = vor.u32 %v8498, %v8501
      %v8503 = vrot.slane %v8502, 4
      %v8505 = vshll.u32 %v8196, 16
      %v8507 = vrot.slane %v8505, 5
      %v8508 = vsel %vm902, %v8503, %v8507
      %v8509 = vshrl.u32 %v8196, 16
      %v8511 = vrot.slane %v8509, 4
      %v8512 = vor.u32 %v8511, %v8507
      %v8513 = vrot.slane %v8512, 4
      %v8515 = vshll.u32 %v8197, 16
      %v8517 = vrot.slane %v8515, 5
      %v8518 = vsel %vm902, %v8513, %v8517
      %v8520 = vshrl.u32 %v8198, 16
      %v8522 = vrot.slane %v8520, 4
      %v8523 = vshll.u32 %v8198, 16
      %v8525 = vrot.slane %v8523, 5
      %v8526 = vor.u32 %v8522, %v8525
      %v8527 = vrot.slane %v8526, 4
      %v8529 = vshll.u32 %v8199, 16
      %v8531 = vrot.slane %v8529, 5
      %v8532 = vsel %vm902, %v8527, %v8531
      %v8533 = vshrl.u32 %v8199, 16
      %v8535 = vrot.slane %v8533, 4
      %v8536 = vor.u32 %v8535, %v8531
      %v8537 = vrot.slane %v8536, 4
      %v8539 = vshll.u32 %v8200, 16
      %v8541 = vrot.slane %v8539, 5
      %v8542 = vsel %vm902, %v8537, %v8541
      %v8544 = vshrl.u32 %v8201, 16
      %v8546 = vrot.slane %v8544, 4
      %v8547 = vshll.u32 %v8201, 16
      %v8549 = vrot.slane %v8547, 5
      %v8550 = vor.u32 %v8546, %v8549
      %v8551 = vrot.slane %v8550, 4
      %v8553 = vshll.u32 %v8202, 16
      %v8555 = vrot.slane %v8553, 5
      %v8556 = vsel %vm902, %v8551, %v8555
      %v8557 = vshrl.u32 %v8202, 16
      %v8559 = vrot.slane %v8557, 4
      %v8560 = vor.u32 %v8559, %v8555
      %v8561 = vrot.slane %v8560, 4
      %v8563 = vshll.u32 %v8203, 16
      %v8565 = vrot.slane %v8563, 5
      %v8566 = vsel %vm902, %v8561, %v8565
      %v8568 = vshrl.u32 %v8204, 16
      %v8570 = vrot.slane %v8568, 4
      %v8571 = vshll.u32 %v8204, 16
      %v8573 = vrot.slane %v8571, 5
      %v8574 = vor.u32 %v8570, %v8573
      %v8575 = vrot.slane %v8574, 4
      %v8577 = vshll.u32 %v8205, 16
      %v8579 = vrot.slane %v8577, 5
      %v8580 = vsel %vm902, %v8575, %v8579
      %v8581 = vshrl.u32 %v8205, 16
      %v8583 = vrot.slane %v8581, 4
      %v8584 = vor.u32 %v8583, %v8579
      %v8585 = vrot.slane %v8584, 4
      %v8587 = vshll.u32 %v8206, 16
      %v8589 = vrot.slane %v8587, 5
      %v8590 = vsel %vm902, %v8585, %v8589
      %s8591 = scalar_lea.vmem %s3, 16
      %v8592 = vld [vmem:[%s8591] sm:$0xf]
      %v8593 = vunpack.c.l.b16 %v8220
      %v8594 = vunpack.c.l.b16 %v8230
      %v8595 = vunpack.c.l.b16 %v8244
      %v8596 = vunpack.c.l.b16 %v8254
      %v8597 = vunpack.c.l.b16 %v8268
      %v8598 = vunpack.c.l.b16 %v8278
      %v8599 = vunpack.c.l.b16 %v8292
      %v8600 = vunpack.c.l.b16 %v8302
      %v8601 = vunpack.c.l.b16 %v8316
      %v8602 = vunpack.c.l.b16 %v8326
      %v8603 = vunpack.c.l.b16 %v8340
      %v8604 = vunpack.c.l.b16 %v8350
      %v8605 = vunpack.c.l.b16 %v8364
      %v8606 = vunpack.c.l.b16 %v8374
      %v8607 = vunpack.c.l.b16 %v8388
      %v8608 = vunpack.c.l.b16 %v8398
      %v8609 = vunpack.c.l.b16 %v8412
      %v8610 = vunpack.c.l.b16 %v8422
      %v8611 = vunpack.c.l.b16 %v8436
      %v8612 = vunpack.c.l.b16 %v8446
      %v8613 = vunpack.c.l.b16 %v8460
      %v8614 = vunpack.c.l.b16 %v8470
      %v8615 = vunpack.c.l.b16 %v8484
      %v8616 = vunpack.c.l.b16 %v8494
      %v8617 = vunpack.c.l.b16 %v8508
      %v8618 = vunpack.c.l.b16 %v8518
      %v8619 = vunpack.c.l.b16 %v8532
      %v8620 = vunpack.c.l.b16 %v8542
      %v8621 = vunpack.c.l.b16 %v8556
      %v8622 = vunpack.c.l.b16 %v8566
      %v8623 = vunpack.c.l.b16 %v8580
      %v8624 = vunpack.c.l.b16 %v8590
      %v8625 = vpack.c.b16 %v8594, %v8593
      %v8626 = vpack.c.b16 %v8596, %v8595
      %v8627 = vpack.c.b16 %v8598, %v8597
      %v8628 = vpack.c.b16 %v8600, %v8599
      %v8629 = vpack.c.b16 %v8602, %v8601
      %v8630 = vpack.c.b16 %v8604, %v8603
      %v8631 = vpack.c.b16 %v8606, %v8605
      %v8632 = vpack.c.b16 %v8608, %v8607
      %v8633 = vpack.c.b16 %v8610, %v8609
      %v8634 = vpack.c.b16 %v8612, %v8611
      %v8635 = vpack.c.b16 %v8614, %v8613
      %v8636 = vpack.c.b16 %v8616, %v8615
      %v8637 = vpack.c.b16 %v8618, %v8617
      %v8638 = vpack.c.b16 %v8620, %v8619
      %v8639 = vpack.c.b16 %v8622, %v8621
      %v8640 = vpack.c.b16 %v8624, %v8623
      %v8642 = vsel %vm5480, %v8625, 0
      %v8645 = vsel %vm5480, %v8626, 0
      %v8648 = vsel %vm5480, %v8627, 0
      %v8651 = vsel %vm5480, %v8628, 0
      %v8654 = vsel %vm5480, %v8629, 0
      %v8657 = vsel %vm5480, %v8630, 0
      %v8660 = vsel %vm5480, %v8631, 0
      %v8663 = vsel %vm5480, %v8632, 0
      %v8666 = vsel %vm5480, %v8633, 0
      %v8669 = vsel %vm5480, %v8634, 0
      %v8672 = vsel %vm5480, %v8635, 0
      %v8675 = vsel %vm5480, %v8636, 0
      %v8678 = vsel %vm5480, %v8637, 0
      %v8681 = vsel %vm5480, %v8638, 0
      %v8684 = vsel %vm5480, %v8639, 0
      %v8687 = vsel %vm5480, %v8640, 0
      %v8690 = vsel %vm6890, %v8592, 0
      %8692 = vmatprep.subr.bf16.mxu0 0
      %8693 = vmatpush1.bf16.msra.mxu0 %v8690
      %8694 = vmatprep.subr.bf16.mxu0 0
      %8695 = vmatpush1.bf16.msra.mxu0 0
      %8696 = vmatprep.subr.bf16.mxu0 0
      %8697 = vmatpush1.bf16.msra.mxu0 0
      %8698 = vmatprep.subr.bf16.mxu0 0
      %8699 = vmatpush1.bf16.msra.mxu0 0
      %8700 = vmatprep.subr.bf16.mxu0 0
      %8701 = vmatpush1.bf16.msra.mxu0 0
      %8702 = vmatprep.subr.bf16.mxu0 0
      %8703 = vmatpush1.bf16.msra.mxu0 0
      %8704 = vmatprep.subr.bf16.mxu0 0
      %8705 = vmatpush1.bf16.msra.mxu0 0
      %8706 = vmatprep.subr.bf16.mxu0 0
      %8707 = vmatpush1.bf16.msra.mxu0 0
      %8708 = vmatprep.subr.bf16.mxu0 0
      %8709 = vmatpush1.bf16.msra.mxu0 0
      %8710 = vmatprep.subr.bf16.mxu0 0
      %8711 = vmatpush1.bf16.msra.mxu0 0
      %8712 = vmatprep.subr.bf16.mxu0 0
      %8713 = vmatpush1.bf16.msra.mxu0 0
      %8714 = vmatprep.subr.bf16.mxu0 0
      %8715 = vmatpush1.bf16.msra.mxu0 0
      %8716 = vmatprep.subr.bf16.mxu0 0
      %8717 = vmatpush1.bf16.msra.mxu0 0
      %8718 = vmatprep.subr.bf16.mxu0 0
      %8719 = vmatpush1.bf16.msra.mxu0 0
      %8720 = vmatprep.subr.bf16.mxu0 0
      %8721 = vmatpush1.bf16.msra.mxu0 0
      %8722 = vmatprep.subr.bf16.mxu0 0
      %8723 = vmatpush1.bf16.msra.mxu0 0
      %8724 = vmatprep.mubr.bf16.mxu0 0
      %8725 = vmatmul.mubr.bf16.gmra.mrb[0].mxu0 %v8642
      %v8726 = vpop.f32.mrb[0].mxu0
      %v8727 = vadd.f32 0.0, %v8726
      %v8728 = vpop.f32.mrb[0].mxu0
      %v8729 = vpop.f32.mrb[0].mxu0
      %v8730 = vadd.f32 0.0, %v8729
      %v8731 = vpop.f32.mrb[0].mxu0
      %8732 = vmatprep.mubr.bf16.mxu0 0
      %8733 = vmatmul.mubr.bf16.gmra.mrb[0].mxu0 %v8645
      %v8734 = vpop.f32.mrb[0].mxu0
      %v8735 = vadd.f32 0.0, %v8734
      %v8736 = vpop.f32.mrb[0].mxu0
      %v8737 = vpop.f32.mrb[0].mxu0
      %v8738 = vadd.f32 0.0, %v8737
      %v8739 = vpop.f32.mrb[0].mxu0
      %8740 = vmatprep.mubr.bf16.mxu0 0
      %8741 = vmatmul.mubr.bf16.gmra.mrb[0].mxu0 %v8648
      %v8742 = vpop.f32.mrb[0].mxu0
      %v8743 = vadd.f32 0.0, %v8742
      %v8744 = vpop.f32.mrb[0].mxu0
      %v8745 = vpop.f32.mrb[0].mxu0
      %v8746 = vadd.f32 0.0, %v8745
      %v8747 = vpop.f32.mrb[0].mxu0
      %8748 = vmatprep.mubr.bf16.mxu0 0
      %8749 = vmatmul.mubr.bf16.gmra.mrb[0].mxu0 %v8651
      %v8750 = vpop.f32.mrb[0].mxu0
      %v8751 = vadd.f32 0.0, %v8750
      %v8752 = vpop.f32.mrb[0].mxu0
      %v8753 = vpop.f32.mrb[0].mxu0
      %v8754 = vadd.f32 0.0, %v8753
      %v8755 = vpop.f32.mrb[0].mxu0
      %8756 = vmatprep.mubr.bf16.mxu0 0
      %8757 = vmatmul.mubr.bf16.gmra.mrb[0].mxu0 %v8654
      %v8758 = vpop.f32.mrb[0].mxu0
      %v8759 = vadd.f32 0.0, %v8758
      %v8760 = vpop.f32.mrb[0].mxu0
      %v8761 = vpop.f32.mrb[0].mxu0
      %v8762 = vadd.f32 0.0, %v8761
      %v8763 = vpop.f32.mrb[0].mxu0
      %8764 = vmatprep.mubr.bf16.mxu0 0
      %8765 = vmatmul.mubr.bf16.gmra.mrb[0].mxu0 %v8657
      %v8766 = vpop.f32.mrb[0].mxu0
      %v8767 = vadd.f32 0.0, %v8766
      %v8768 = vpop.f32.mrb[0].mxu0
      %v8769 = vpop.f32.mrb[0].mxu0
      %v8770 = vadd.f32 0.0, %v8769
      %v8771 = vpop.f32.mrb[0].mxu0
      %8772 = vmatprep.mubr.bf16.mxu0 0
      %8773 = vmatmul.mubr.bf16.gmra.mrb[0].mxu0 %v8660
      %v8774 = vpop.f32.mrb[0].mxu0
      %v8775 = vadd.f32 0.0, %v8774
      %v8776 = vpop.f32.mrb[0].mxu0
      %v8777 = vpop.f32.mrb[0].mxu0
      %v8778 = vadd.f32 0.0, %v8777
      %v8779 = vpop.f32.mrb[0].mxu0
      %8780 = vmatprep.mubr.bf16.mxu0 0
      %8781 = vmatmul.mubr.bf16.gmra.mrb[0].mxu0 %v8663
      %v8782 = vpop.f32.mrb[0].mxu0
      %v8783 = vadd.f32 0.0, %v8782
      %v8784 = vpop.f32.mrb[0].mxu0
      %v8785 = vpop.f32.mrb[0].mxu0
      %v8786 = vadd.f32 0.0, %v8785
      %v8787 = vpop.f32.mrb[0].mxu0
      %8788 = vmatprep.mubr.bf16.mxu0 0
      %8789 = vmatmul.mubr.bf16.gmra.mrb[0].mxu0 %v8666
      %v8790 = vpop.f32.mrb[0].mxu0
      %v8791 = vadd.f32 0.0, %v8790
      %v8792 = vpop.f32.mrb[0].mxu0
      %v8793 = vpop.f32.mrb[0].mxu0
      %v8794 = vadd.f32 0.0, %v8793
      %v8795 = vpop.f32.mrb[0].mxu0
      %8796 = vmatprep.mubr.bf16.mxu0 0
      %8797 = vmatmul.mubr.bf16.gmra.mrb[0].mxu0 %v8669
      %v8798 = vpop.f32.mrb[0].mxu0
      %v8799 = vadd.f32 0.0, %v8798
      %v8800 = vpop.f32.mrb[0].mxu0
      %v8801 = vpop.f32.mrb[0].mxu0
      %v8802 = vadd.f32 0.0, %v8801
      %v8803 = vpop.f32.mrb[0].mxu0
      %8804 = vmatprep.mubr.bf16.mxu0 0
      %8805 = vmatmul.mubr.bf16.gmra.mrb[0].mxu0 %v8672
      %v8806 = vpop.f32.mrb[0].mxu0
      %v8807 = vadd.f32 0.0, %v8806
      %v8808 = vpop.f32.mrb[0].mxu0
      %v8809 = vpop.f32.mrb[0].mxu0
      %v8810 = vadd.f32 0.0, %v8809
      %v8811 = vpop.f32.mrb[0].mxu0
      %8812 = vmatprep.mubr.bf16.mxu0 0
      %8813 = vmatmul.mubr.bf16.gmra.mrb[0].mxu0 %v8675
      %v8814 = vpop.f32.mrb[0].mxu0
      %v8815 = vadd.f32 0.0, %v8814
      %v8816 = vpop.f32.mrb[0].mxu0
      %v8817 = vpop.f32.mrb[0].mxu0
      %v8818 = vadd.f32 0.0, %v8817
      %v8819 = vpop.f32.mrb[0].mxu0
      %8820 = vmatprep.mubr.bf16.mxu0 0
      %8821 = vmatmul.mubr.bf16.gmra.mrb[0].mxu0 %v8678
      %v8822 = vpop.f32.mrb[0].mxu0
      %v8823 = vadd.f32 0.0, %v8822
      %v8824 = vpop.f32.mrb[0].mxu0
      %v8825 = vpop.f32.mrb[0].mxu0
      %v8826 = vadd.f32 0.0, %v8825
      %v8827 = vpop.f32.mrb[0].mxu0
      %8828 = vmatprep.mubr.bf16.mxu0 0
      %8829 = vmatmul.mubr.bf16.gmra.mrb[0].mxu0 %v8681
      %v8830 = vpop.f32.mrb[0].mxu0
      %v8831 = vadd.f32 0.0, %v8830
      %v8832 = vpop.f32.mrb[0].mxu0
      %v8833 = vpop.f32.mrb[0].mxu0
      %v8834 = vadd.f32 0.0, %v8833
      %v8835 = vpop.f32.mrb[0].mxu0
      %8836 = vmatprep.mubr.bf16.mxu0 0
      %8837 = vmatmul.mubr.bf16.gmra.mrb[0].mxu0 %v8684
      %v8838 = vpop.f32.mrb[0].mxu0
      %v8839 = vadd.f32 0.0, %v8838
      %v8840 = vpop.f32.mrb[0].mxu0
      %v8841 = vpop.f32.mrb[0].mxu0
      %v8842 = vadd.f32 0.0, %v8841
      %v8843 = vpop.f32.mrb[0].mxu0
      %8844 = vmatprep.mubr.bf16.mxu0 0
      %8845 = vmatmul.mubr.bf16.gmra.mrb[0].mxu0 %v8687
      %v8846 = vpop.f32.mrb[0].mxu0
      %v8847 = vadd.f32 0.0, %v8846
      %v8848 = vpop.f32.mrb[0].mxu0
      %v8849 = vpop.f32.mrb[0].mxu0
      %v8850 = vadd.f32 0.0, %v8849
      %v8851 = vpop.f32.mrb[0].mxu0
      %8852 = vdwg.mxu0
      %v8853 = vadd.f32 %v8127, %v8727
      %v8854 = vadd.f32 %v8128, %v8730
      %v8855 = vadd.f32 %v8129, %v8735
      %v8856 = vadd.f32 %v8130, %v8738
      %v8857 = vadd.f32 %v8131, %v8743
      %v8858 = vadd.f32 %v8132, %v8746
      %v8859 = vadd.f32 %v8133, %v8751
      %v8860 = vadd.f32 %v8134, %v8754
      %v8861 = vadd.f32 %v8135, %v8759
      %v8862 = vadd.f32 %v8136, %v8762
      %v8863 = vadd.f32 %v8137, %v8767
      %v8864 = vadd.f32 %v8138, %v8770
      %v8865 = vadd.f32 %v8139, %v8775
      %v8866 = vadd.f32 %v8140, %v8778
      %v8867 = vadd.f32 %v8141, %v8783
      %v8868 = vadd.f32 %v8142, %v8786
      %v8869 = vadd.f32 %v8143, %v8791
      %v8870 = vadd.f32 %v8144, %v8794
      %v8871 = vadd.f32 %v8145, %v8799
      %v8872 = vadd.f32 %v8146, %v8802
      %v8873 = vadd.f32 %v8147, %v8807
      %v8874 = vadd.f32 %v8148, %v8810
      %v8875 = vadd.f32 %v8149, %v8815
      %v8876 = vadd.f32 %v8150, %v8818
      %v8877 = vadd.f32 %v8151, %v8823
      %v8878 = vadd.f32 %v8152, %v8826
      %v8879 = vadd.f32 %v8153, %v8831
      %v8880 = vadd.f32 %v8154, %v8834
      %v8881 = vadd.f32 %v8155, %v8839
      %v8882 = vadd.f32 %v8156, %v8842
      %v8883 = vadd.f32 %v8157, %v8847
      %v8884 = vadd.f32 %v8158, %v8850
      %v8885 = vld [vmem:[%s6242] sm:$0xe]
      %v8886 = vld [vmem:[%s6242 + $0xc] sm:$0xe]
      %v8887 = vld [vmem:[%s6242 + $0x18] sm:$0xe]
      %v8888 = vld [vmem:[%s6242 + $0x24] sm:$0xe]
      %v8889 = vld [vmem:[%s6242 + $0x30] sm:$0xe]
      %v8890 = vld [vmem:[%s6242 + $0x3c] sm:$0xe]
      %v8891 = vld [vmem:[%s6242 + $0x48] sm:$0xe]
      %v8892 = vld [vmem:[%s6242 + $0x54] sm:$0xe]
      %v8893 = vld [vmem:[%s6242 + $0x60] sm:$0xe]
      %v8894 = vld [vmem:[%s6242 + $0x6c] sm:$0xe]
      %v8895 = vld [vmem:[%s6242 + $0x78] sm:$0xe]
      %v8896 = vld [vmem:[%s6242 + $0x84] sm:$0xe]
      %v8897 = vld [vmem:[%s6242 + $0x90] sm:$0xe]
      %v8898 = vld [vmem:[%s6242 + $0x9c] sm:$0xe]
      %v8899 = vld [vmem:[%s6242 + $0xa8] sm:$0xe]
      %v8900 = vld [vmem:[%s6242 + $0xb4] sm:$0xe]
      %v8949 = vrot.slane %v8885, 5
      %v8950 = vrot.slane %v8949, 4
      %v8951 = vrot.slane %v8160, 5
      %v8952 = vsel %vm1893, %v8950, %v8951
      %v8953 = vrot.slane %v8951, 4
      %v8954 = vrot.slane %v8161, 5
      %v8955 = vsel %vm1893, %v8953, %v8954
      %v8956 = vrot.slane %v8886, 5
      %v8957 = vrot.slane %v8956, 4
      %v8958 = vrot.slane %v8163, 5
      %v8959 = vsel %vm1893, %v8957, %v8958
      %v8960 = vrot.slane %v8958, 4
      %v8961 = vrot.slane %v8164, 5
      %v8962 = vsel %vm1893, %v8960, %v8961
      %v8963 = vrot.slane %v8887, 5
      %v8964 = vrot.slane %v8963, 4
      %v8965 = vrot.slane %v8166, 5
      %v8966 = vsel %vm1893, %v8964, %v8965
      %v8967 = vrot.slane %v8965, 4
      %v8968 = vrot.slane %v8167, 5
      %v8969 = vsel %vm1893, %v8967, %v8968
      %v8970 = vrot.slane %v8888, 5
      %v8971 = vrot.slane %v8970, 4
      %v8972 = vrot.slane %v8169, 5
      %v8973 = vsel %vm1893, %v8971, %v8972
      %v8974 = vrot.slane %v8972, 4
      %v8975 = vrot.slane %v8170, 5
      %v8976 = vsel %vm1893, %v8974, %v8975
      %v8977 = vrot.slane %v8889, 5
      %v8978 = vrot.slane %v8977, 4
      %v8979 = vrot.slane %v8172, 5
      %v8980 = vsel %vm1893, %v8978, %v8979
      %v8981 = vrot.slane %v8979, 4
      %v8982 = vrot.slane %v8173, 5
      %v8983 = vsel %vm1893, %v8981, %v8982
      %v8984 = vrot.slane %v8890, 5
      %v8985 = vrot.slane %v8984, 4
      %v8986 = vrot.slane %v8175, 5
      %v8987 = vsel %vm1893, %v8985, %v8986
      %v8988 = vrot.slane %v8986, 4
      %v8989 = vrot.slane %v8176, 5
      %v8990 = vsel %vm1893, %v8988, %v8989
      %v8991 = vrot.slane %v8891, 5
      %v8992 = vrot.slane %v8991, 4
      %v8993 = vrot.slane %v8178, 5
      %v8994 = vsel %vm1893, %v8992, %v8993
      %v8995 = vrot.slane %v8993, 4
      %v8996 = vrot.slane %v8179, 5
      %v8997 = vsel %vm1893, %v8995, %v8996
      %v8998 = vrot.slane %v8892, 5
      %v8999 = vrot.slane %v8998, 4
      %v9000 = vrot.slane %v8181, 5
      %v9001 = vsel %vm1893, %v8999, %v9000
      %v9002 = vrot.slane %v9000, 4
      %v9003 = vrot.slane %v8182, 5
      %v9004 = vsel %vm1893, %v9002, %v9003
      %v9005 = vrot.slane %v8893, 5
      %v9006 = vrot.slane %v9005, 4
      %v9007 = vrot.slane %v8184, 5
      %v9008 = vsel %vm1893, %v9006, %v9007
      %v9009 = vrot.slane %v9007, 4
      %v9010 = vrot.slane %v8185, 5
      %v9011 = vsel %vm1893, %v9009, %v9010
      %v9012 = vrot.slane %v8894, 5
      %v9013 = vrot.slane %v9012, 4
      %v9014 = vrot.slane %v8187, 5
      %v9015 = vsel %vm1893, %v9013, %v9014
      %v9016 = vrot.slane %v9014, 4
      %v9017 = vrot.slane %v8188, 5
      %v9018 = vsel %vm1893, %v9016, %v9017
      %v9019 = vrot.slane %v8895, 5
      %v9020 = vrot.slane %v9019, 4
      %v9021 = vrot.slane %v8190, 5
      %v9022 = vsel %vm1893, %v9020, %v9021
      %v9023 = vrot.slane %v9021, 4
      %v9024 = vrot.slane %v8191, 5
      %v9025 = vsel %vm1893, %v9023, %v9024
      %v9026 = vrot.slane %v8896, 5
      %v9027 = vrot.slane %v9026, 4
      %v9028 = vrot.slane %v8193, 5
      %v9029 = vsel %vm1893, %v9027, %v9028
      %v9030 = vrot.slane %v9028, 4
      %v9031 = vrot.slane %v8194, 5
      %v9032 = vsel %vm1893, %v9030, %v9031
      %v9033 = vrot.slane %v8897, 5
      %v9034 = vrot.slane %v9033, 4
      %v9035 = vrot.slane %v8196, 5
      %v9036 = vsel %vm1893, %v9034, %v9035
      %v9037 = vrot.slane %v9035, 4
      %v9038 = vrot.slane %v8197, 5
      %v9039 = vsel %vm1893, %v9037, %v9038
      %v9040 = vrot.slane %v8898, 5
      %v9041 = vrot.slane %v9040, 4
      %v9042 = vrot.slane %v8199, 5
      %v9043 = vsel %vm1893, %v9041, %v9042
      %v9044 = vrot.slane %v9042, 4
      %v9045 = vrot.slane %v8200, 5
      %v9046 = vsel %vm1893, %v9044, %v9045
      %v9047 = vrot.slane %v8899, 5
      %v9048 = vrot.slane %v9047, 4
      %v9049 = vrot.slane %v8202, 5
      %v9050 = vsel %vm1893, %v9048, %v9049
      %v9051 = vrot.slane %v9049, 4
      %v9052 = vrot.slane %v8203, 5
      %v9053 = vsel %vm1893, %v9051, %v9052
      %v9054 = vrot.slane %v8900, 5
      %v9055 = vrot.slane %v9054, 4
      %v9056 = vrot.slane %v8205, 5
      %v9057 = vsel %vm1893, %v9055, %v9056
      %v9058 = vrot.slane %v9056, 4
      %v9059 = vrot.slane %v8206, 5
      %v9060 = vsel %vm1893, %v9058, %v9059
      %s9061 = scalar_lea.vmem %s3, 20
      %v9062 = vld [vmem:[%s9061] sm:$0xf]
      %v9063 = vunpack.c.l.b16 %v8952
      %v9064 = vunpack.c.l.b16 %v8955
      %v9065 = vunpack.c.l.b16 %v8959
      %v9066 = vunpack.c.l.b16 %v8962
      %v9067 = vunpack.c.l.b16 %v8966
      %v9068 = vunpack.c.l.b16 %v8969
      %v9069 = vunpack.c.l.b16 %v8973
      %v9070 = vunpack.c.l.b16 %v8976
      %v9071 = vunpack.c.l.b16 %v8980
      %v9072 = vunpack.c.l.b16 %v8983
      %v9073 = vunpack.c.l.b16 %v8987
      %v9074 = vunpack.c.l.b16 %v8990
      %v9075 = vunpack.c.l.b16 %v8994
      %v9076 = vunpack.c.l.b16 %v8997
      %v9077 = vunpack.c.l.b16 %v9001
      %v9078 = vunpack.c.l.b16 %v9004
      %v9079 = vunpack.c.l.b16 %v9008
      %v9080 = vunpack.c.l.b16 %v9011
      %v9081 = vunpack.c.l.b16 %v9015
      %v9082 = vunpack.c.l.b16 %v9018
      %v9083 = vunpack.c.l.b16 %v9022
      %v9084 = vunpack.c.l.b16 %v9025
      %v9085 = vunpack.c.l.b16 %v9029
      %v9086 = vunpack.c.l.b16 %v9032
      %v9087 = vunpack.c.l.b16 %v9036
      %v9088 = vunpack.c.l.b16 %v9039
      %v9089 = vunpack.c.l.b16 %v9043
      %v9090 = vunpack.c.l.b16 %v9046
      %v9091 = vunpack.c.l.b16 %v9050
      %v9092 = vunpack.c.l.b16 %v9053
      %v9093 = vunpack.c.l.b16 %v9057
      %v9094 = vunpack.c.l.b16 %v9060
      %v9095 = vpack.c.b16 %v9064, %v9063
      %v9096 = vpack.c.b16 %v9066, %v9065
      %v9097 = vpack.c.b16 %v9068, %v9067
      %v9098 = vpack.c.b16 %v9070, %v9069
      %v9099 = vpack.c.b16 %v9072, %v9071
      %v9100 = vpack.c.b16 %v9074, %v9073
      %v9101 = vpack.c.b16 %v9076, %v9075
      %v9102 = vpack.c.b16 %v9078, %v9077
      %v9103 = vpack.c.b16 %v9080, %v9079
      %v9104 = vpack.c.b16 %v9082, %v9081
      %v9105 = vpack.c.b16 %v9084, %v9083
      %v9106 = vpack.c.b16 %v9086, %v9085
      %v9107 = vpack.c.b16 %v9088, %v9087
      %v9108 = vpack.c.b16 %v9090, %v9089
      %v9109 = vpack.c.b16 %v9092, %v9091
      %v9110 = vpack.c.b16 %v9094, %v9093
      %v9112 = vsel %vm5480, %v9095, 0
      %v9115 = vsel %vm5480, %v9096, 0
      %v9118 = vsel %vm5480, %v9097, 0
      %v9121 = vsel %vm5480, %v9098, 0
      %v9124 = vsel %vm5480, %v9099, 0
      %v9127 = vsel %vm5480, %v9100, 0
      %v9130 = vsel %vm5480, %v9101, 0
      %v9133 = vsel %vm5480, %v9102, 0
      %v9136 = vsel %vm5480, %v9103, 0
      %v9139 = vsel %vm5480, %v9104, 0
      %v9142 = vsel %vm5480, %v9105, 0
      %v9145 = vsel %vm5480, %v9106, 0
      %v9148 = vsel %vm5480, %v9107, 0
      %v9151 = vsel %vm5480, %v9108, 0
      %v9154 = vsel %vm5480, %v9109, 0
      %v9157 = vsel %vm5480, %v9110, 0
      %v9160 = vsel %vm6890, %v9062, 0
      %9162 = vmatprep.subr.bf16.mxu0 0
      %9163 = vmatpush1.bf16.msra.mxu0 %v9160
      %9164 = vmatprep.subr.bf16.mxu0 0
      %9165 = vmatpush1.bf16.msra.mxu0 0
      %9166 = vmatprep.subr.bf16.mxu0 0
      %9167 = vmatpush1.bf16.msra.mxu0 0
      %9168 = vmatprep.subr.bf16.mxu0 0
      %9169 = vmatpush1.bf16.msra.mxu0 0
      %9170 = vmatprep.subr.bf16.mxu0 0
      %9171 = vmatpush1.bf16.msra.mxu0 0
      %9172 = vmatprep.subr.bf16.mxu0 0
      %9173 = vmatpush1.bf16.msra.mxu0 0
      %9174 = vmatprep.subr.bf16.mxu0 0
      %9175 = vmatpush1.bf16.msra.mxu0 0
      %9176 = vmatprep.subr.bf16.mxu0 0
      %9177 = vmatpush1.bf16.msra.mxu0 0
      %9178 = vmatprep.subr.bf16.mxu0 0
      %9179 = vmatpush1.bf16.msra.mxu0 0
      %9180 = vmatprep.subr.bf16.mxu0 0
      %9181 = vmatpush1.bf16.msra.mxu0 0
      %9182 = vmatprep.subr.bf16.mxu0 0
      %9183 = vmatpush1.bf16.msra.mxu0 0
      %9184 = vmatprep.subr.bf16.mxu0 0
      %9185 = vmatpush1.bf16.msra.mxu0 0
      %9186 = vmatprep.subr.bf16.mxu0 0
      %9187 = vmatpush1.bf16.msra.mxu0 0
      %9188 = vmatprep.subr.bf16.mxu0 0
      %9189 = vmatpush1.bf16.msra.mxu0 0
      %9190 = vmatprep.subr.bf16.mxu0 0
      %9191 = vmatpush1.bf16.msra.mxu0 0
      %9192 = vmatprep.subr.bf16.mxu0 0
      %9193 = vmatpush1.bf16.msra.mxu0 0
      %9194 = vmatprep.mubr.bf16.mxu0 0
      %9195 = vmatmul.mubr.bf16.gmra.mrb[0].mxu0 %v9112
      %v9196 = vpop.f32.mrb[0].mxu0
      %v9197 = vadd.f32 0.0, %v9196
      %v9198 = vpop.f32.mrb[0].mxu0
      %v9199 = vpop.f32.mrb[0].mxu0
      %v9200 = vadd.f32 0.0, %v9199
      %v9201 = vpop.f32.mrb[0].mxu0
      %9202 = vmatprep.mubr.bf16.mxu0 0
      %9203 = vmatmul.mubr.bf16.gmra.mrb[0].mxu0 %v9115
      %v9204 = vpop.f32.mrb[0].mxu0
      %v9205 = vadd.f32 0.0, %v9204
      %v9206 = vpop.f32.mrb[0].mxu0
      %v9207 = vpop.f32.mrb[0].mxu0
      %v9208 = vadd.f32 0.0, %v9207
      %v9209 = vpop.f32.mrb[0].mxu0
      %9210 = vmatprep.mubr.bf16.mxu0 0
      %9211 = vmatmul.mubr.bf16.gmra.mrb[0].mxu0 %v9118
      %v9212 = vpop.f32.mrb[0].mxu0
      %v9213 = vadd.f32 0.0, %v9212
      %v9214 = vpop.f32.mrb[0].mxu0
      %v9215 = vpop.f32.mrb[0].mxu0
      %v9216 = vadd.f32 0.0, %v9215
      %v9217 = vpop.f32.mrb[0].mxu0
      %9218 = vmatprep.mubr.bf16.mxu0 0
      %9219 = vmatmul.mubr.bf16.gmra.mrb[0].mxu0 %v9121
      %v9220 = vpop.f32.mrb[0].mxu0
      %v9221 = vadd.f32 0.0, %v9220
      %v9222 = vpop.f32.mrb[0].mxu0
      %v9223 = vpop.f32.mrb[0].mxu0
      %v9224 = vadd.f32 0.0, %v9223
      %v9225 = vpop.f32.mrb[0].mxu0
      %9226 = vmatprep.mubr.bf16.mxu0 0
      %9227 = vmatmul.mubr.bf16.gmra.mrb[0].mxu0 %v9124
      %v9228 = vpop.f32.mrb[0].mxu0
      %v9229 = vadd.f32 0.0, %v9228
      %v9230 = vpop.f32.mrb[0].mxu0
      %v9231 = vpop.f32.mrb[0].mxu0
      %v9232 = vadd.f32 0.0, %v9231
      %v9233 = vpop.f32.mrb[0].mxu0
      %9234 = vmatprep.mubr.bf16.mxu0 0
      %9235 = vmatmul.mubr.bf16.gmra.mrb[0].mxu0 %v9127
      %v9236 = vpop.f32.mrb[0].mxu0
      %v9237 = vadd.f32 0.0, %v9236
      %v9238 = vpop.f32.mrb[0].mxu0
      %v9239 = vpop.f32.mrb[0].mxu0
      %v9240 = vadd.f32 0.0, %v9239
      %v9241 = vpop.f32.mrb[0].mxu0
      %9242 = vmatprep.mubr.bf16.mxu0 0
      %9243 = vmatmul.mubr.bf16.gmra.mrb[0].mxu0 %v9130
      %v9244 = vpop.f32.mrb[0].mxu0
      %v9245 = vadd.f32 0.0, %v9244
      %v9246 = vpop.f32.mrb[0].mxu0
      %v9247 = vpop.f32.mrb[0].mxu0
      %v9248 = vadd.f32 0.0, %v9247
      %v9249 = vpop.f32.mrb[0].mxu0
      %9250 = vmatprep.mubr.bf16.mxu0 0
      %9251 = vmatmul.mubr.bf16.gmra.mrb[0].mxu0 %v9133
      %v9252 = vpop.f32.mrb[0].mxu0
      %v9253 = vadd.f32 0.0, %v9252
      %v9254 = vpop.f32.mrb[0].mxu0
      %v9255 = vpop.f32.mrb[0].mxu0
      %v9256 = vadd.f32 0.0, %v9255
      %v9257 = vpop.f32.mrb[0].mxu0
      %9258 = vmatprep.mubr.bf16.mxu0 0
      %9259 = vmatmul.mubr.bf16.gmra.mrb[0].mxu0 %v9136
      %v9260 = vpop.f32.mrb[0].mxu0
      %v9261 = vadd.f32 0.0, %v9260
      %v9262 = vpop.f32.mrb[0].mxu0
      %v9263 = vpop.f32.mrb[0].mxu0
      %v9264 = vadd.f32 0.0, %v9263
      %v9265 = vpop.f32.mrb[0].mxu0
      %9266 = vmatprep.mubr.bf16.mxu0 0
      %9267 = vmatmul.mubr.bf16.gmra.mrb[0].mxu0 %v9139
      %v9268 = vpop.f32.mrb[0].mxu0
      %v9269 = vadd.f32 0.0, %v9268
      %v9270 = vpop.f32.mrb[0].mxu0
      %v9271 = vpop.f32.mrb[0].mxu0
      %v9272 = vadd.f32 0.0, %v9271
      %v9273 = vpop.f32.mrb[0].mxu0
      %9274 = vmatprep.mubr.bf16.mxu0 0
      %9275 = vmatmul.mubr.bf16.gmra.mrb[0].mxu0 %v9142
      %v9276 = vpop.f32.mrb[0].mxu0
      %v9277 = vadd.f32 0.0, %v9276
      %v9278 = vpop.f32.mrb[0].mxu0
      %v9279 = vpop.f32.mrb[0].mxu0
      %v9280 = vadd.f32 0.0, %v9279
      %v9281 = vpop.f32.mrb[0].mxu0
      %9282 = vmatprep.mubr.bf16.mxu0 0
      %9283 = vmatmul.mubr.bf16.gmra.mrb[0].mxu0 %v9145
      %v9284 = vpop.f32.mrb[0].mxu0
      %v9285 = vadd.f32 0.0, %v9284
      %v9286 = vpop.f32.mrb[0].mxu0
      %v9287 = vpop.f32.mrb[0].mxu0
      %v9288 = vadd.f32 0.0, %v9287
      %v9289 = vpop.f32.mrb[0].mxu0
      %9290 = vmatprep.mubr.bf16.mxu0 0
      %9291 = vmatmul.mubr.bf16.gmra.mrb[0].mxu0 %v9148
      %v9292 = vpop.f32.mrb[0].mxu0
      %v9293 = vadd.f32 0.0, %v9292
      %v9294 = vpop.f32.mrb[0].mxu0
      %v9295 = vpop.f32.mrb[0].mxu0
      %v9296 = vadd.f32 0.0, %v9295
      %v9297 = vpop.f32.mrb[0].mxu0
      %9298 = vmatprep.mubr.bf16.mxu0 0
      %9299 = vmatmul.mubr.bf16.gmra.mrb[0].mxu0 %v9151
      %v9300 = vpop.f32.mrb[0].mxu0
      %v9301 = vadd.f32 0.0, %v9300
      %v9302 = vpop.f32.mrb[0].mxu0
      %v9303 = vpop.f32.mrb[0].mxu0
      %v9304 = vadd.f32 0.0, %v9303
      %v9305 = vpop.f32.mrb[0].mxu0
      %9306 = vmatprep.mubr.bf16.mxu0 0
      %9307 = vmatmul.mubr.bf16.gmra.mrb[0].mxu0 %v9154
      %v9308 = vpop.f32.mrb[0].mxu0
      %v9309 = vadd.f32 0.0, %v9308
      %v9310 = vpop.f32.mrb[0].mxu0
      %v9311 = vpop.f32.mrb[0].mxu0
      %v9312 = vadd.f32 0.0, %v9311
      %v9313 = vpop.f32.mrb[0].mxu0
      %9314 = vmatprep.mubr.bf16.mxu0 0
      %9315 = vmatmul.mubr.bf16.gmra.mrb[0].mxu0 %v9157
      %v9316 = vpop.f32.mrb[0].mxu0
      %v9317 = vadd.f32 0.0, %v9316
      %v9318 = vpop.f32.mrb[0].mxu0
      %v9319 = vpop.f32.mrb[0].mxu0
      %v9320 = vadd.f32 0.0, %v9319
      %v9321 = vpop.f32.mrb[0].mxu0
      %9322 = vdwg.mxu0
      %v9323 = vadd.f32 %v8853, %v9197
      %v9324 = vadd.f32 %v8854, %v9200
      %v9325 = vadd.f32 %v8855, %v9205
      %v9326 = vadd.f32 %v8856, %v9208
      %v9327 = vadd.f32 %v8857, %v9213
      %v9328 = vadd.f32 %v8858, %v9216
      %v9329 = vadd.f32 %v8859, %v9221
      %v9330 = vadd.f32 %v8860, %v9224
      %v9331 = vadd.f32 %v8861, %v9229
      %v9332 = vadd.f32 %v8862, %v9232
      %v9333 = vadd.f32 %v8863, %v9237
      %v9334 = vadd.f32 %v8864, %v9240
      %v9335 = vadd.f32 %v8865, %v9245
      %v9336 = vadd.f32 %v8866, %v9248
      %v9337 = vadd.f32 %v8867, %v9253
      %v9338 = vadd.f32 %v8868, %v9256
      %v9339 = vadd.f32 %v8869, %v9261
      %v9340 = vadd.f32 %v8870, %v9264
      %v9341 = vadd.f32 %v8871, %v9269
      %v9342 = vadd.f32 %v8872, %v9272
      %v9343 = vadd.f32 %v8873, %v9277
      %v9344 = vadd.f32 %v8874, %v9280
      %v9345 = vadd.f32 %v8875, %v9285
      %v9346 = vadd.f32 %v8876, %v9288
      %v9347 = vadd.f32 %v8877, %v9293
      %v9348 = vadd.f32 %v8878, %v9296
      %v9349 = vadd.f32 %v8879, %v9301
      %v9350 = vadd.f32 %v8880, %v9304
      %v9351 = vadd.f32 %v8881, %v9309
      %v9352 = vadd.f32 %v8882, %v9312
      %v9353 = vadd.f32 %v8883, %v9317
      %v9354 = vadd.f32 %v8884, %v9320
      %s9355 = scalar_lea.vmem [#allocation3], 24
      %v9356 = vld [vmem:[%s9355] sm:$0xf]
      %v9357 = vld [vmem:[%s9355 + $0x4] sm:$0xf]
      %v9358 = vld [vmem:[%s9355 + $0xc] sm:$0xf]
      %v9359 = vld [vmem:[%s9355 + $0x10] sm:$0xf]
      %v9360 = vld [vmem:[%s9355 + $0x18] sm:$0xf]
      %v9361 = vld [vmem:[%s9355 + $0x1c] sm:$0xf]
      %v9362 = vld [vmem:[%s9355 + $0x24] sm:$0xf]
      %v9363 = vld [vmem:[%s9355 + $0x28] sm:$0xf]
      %v9364 = vld [vmem:[%s9355 + $0x30] sm:$0xf]
      %v9365 = vld [vmem:[%s9355 + $0x34] sm:$0xf]
      %v9366 = vld [vmem:[%s9355 + $0x3c] sm:$0xf]
      %v9367 = vld [vmem:[%s9355 + $0x40] sm:$0xf]
      %v9368 = vld [vmem:[%s9355 + $0x48] sm:$0xf]
      %v9369 = vld [vmem:[%s9355 + $0x4c] sm:$0xf]
      %v9370 = vld [vmem:[%s9355 + $0x54] sm:$0xf]
      %v9371 = vld [vmem:[%s9355 + $0x58] sm:$0xf]
      %v9372 = vld [vmem:[%s9355 + $0x60] sm:$0xf]
      %v9373 = vld [vmem:[%s9355 + $0x64] sm:$0xf]
      %v9374 = vld [vmem:[%s9355 + $0x6c] sm:$0xf]
      %v9375 = vld [vmem:[%s9355 + $0x70] sm:$0xf]
      %v9376 = vld [vmem:[%s9355 + $0x78] sm:$0xf]
      %v9377 = vld [vmem:[%s9355 + $0x7c] sm:$0xf]
      %v9378 = vld [vmem:[%s9355 + $0x84] sm:$0xf]
      %v9379 = vld [vmem:[%s9355 + $0x88] sm:$0xf]
      %v9380 = vld [vmem:[%s9355 + $0x90] sm:$0xf]
      %v9381 = vld [vmem:[%s9355 + $0x94] sm:$0xf]
      %v9382 = vld [vmem:[%s9355 + $0x9c] sm:$0xf]
      %v9383 = vld [vmem:[%s9355 + $0xa0] sm:$0xf]
      %v9384 = vld [vmem:[%s9355 + $0xa8] sm:$0xf]
      %v9385 = vld [vmem:[%s9355 + $0xac] sm:$0xf]
      %v9386 = vld [vmem:[%s9355 + $0xb4] sm:$0xf]
      %v9387 = vld [vmem:[%s9355 + $0xb8] sm:$0xf]
      %s9388 = scalar_lea.vmem %s3, 24
      %v9389 = vld [vmem:[%s9388] sm:$0xf]
      %v9422 = vunpack.c.l.b16 %v9356
      %v9423 = vunpack.c.l.b16 %v9357
      %v9424 = vunpack.c.l.b16 %v9358
      %v9425 = vunpack.c.l.b16 %v9359
      %v9426 = vunpack.c.l.b16 %v9360
      %v9427 = vunpack.c.l.b16 %v9361
      %v9428 = vunpack.c.l.b16 %v9362
      %v9429 = vunpack.c.l.b16 %v9363
      %v9430 = vunpack.c.l.b16 %v9364
      %v9431 = vunpack.c.l.b16 %v9365
      %v9432 = vunpack.c.l.b16 %v9366
      %v9433 = vunpack.c.l.b16 %v9367
      %v9434 = vunpack.c.l.b16 %v9368
      %v9435 = vunpack.c.l.b16 %v9369
      %v9436 = vunpack.c.l.b16 %v9370
      %v9437 = vunpack.c.l.b16 %v9371
      %v9438 = vunpack.c.l.b16 %v9372
      %v9439 = vunpack.c.l.b16 %v9373
      %v9440 = vunpack.c.l.b16 %v9374
      %v9441 = vunpack.c.l.b16 %v9375
      %v9442 = vunpack.c.l.b16 %v9376
      %v9443 = vunpack.c.l.b16 %v9377
      %v9444 = vunpack.c.l.b16 %v9378
      %v9445 = vunpack.c.l.b16 %v9379
      %v9446 = vunpack.c.l.b16 %v9380
      %v9447 = vunpack.c.l.b16 %v9381
      %v9448 = vunpack.c.l.b16 %v9382
      %v9449 = vunpack.c.l.b16 %v9383
      %v9450 = vunpack.c.l.b16 %v9384
      %v9451 = vunpack.c.l.b16 %v9385
      %v9452 = vunpack.c.l.b16 %v9386
      %v9453 = vunpack.c.l.b16 %v9387
      %v9454 = vpack.c.b16 %v9423, %v9422
      %v9455 = vpack.c.b16 %v9425, %v9424
      %v9456 = vpack.c.b16 %v9427, %v9426
      %v9457 = vpack.c.b16 %v9429, %v9428
      %v9458 = vpack.c.b16 %v9431, %v9430
      %v9459 = vpack.c.b16 %v9433, %v9432
      %v9460 = vpack.c.b16 %v9435, %v9434
      %v9461 = vpack.c.b16 %v9437, %v9436
      %v9462 = vpack.c.b16 %v9439, %v9438
      %v9463 = vpack.c.b16 %v9441, %v9440
      %v9464 = vpack.c.b16 %v9443, %v9442
      %v9465 = vpack.c.b16 %v9445, %v9444
      %v9466 = vpack.c.b16 %v9447, %v9446
      %v9467 = vpack.c.b16 %v9449, %v9448
      %v9468 = vpack.c.b16 %v9451, %v9450
      %v9469 = vpack.c.b16 %v9453, %v9452
      %v9471 = vsel %vm5480, %v9454, 0
      %v9474 = vsel %vm5480, %v9455, 0
      %v9477 = vsel %vm5480, %v9456, 0
      %v9480 = vsel %vm5480, %v9457, 0
      %v9483 = vsel %vm5480, %v9458, 0
      %v9486 = vsel %vm5480, %v9459, 0
      %v9489 = vsel %vm5480, %v9460, 0
      %v9492 = vsel %vm5480, %v9461, 0
      %v9495 = vsel %vm5480, %v9462, 0
      %v9498 = vsel %vm5480, %v9463, 0
      %v9501 = vsel %vm5480, %v9464, 0
      %v9504 = vsel %vm5480, %v9465, 0
      %v9507 = vsel %vm5480, %v9466, 0
      %v9510 = vsel %vm5480, %v9467, 0
      %v9513 = vsel %vm5480, %v9468, 0
      %v9516 = vsel %vm5480, %v9469, 0
      %v9519 = vsel %vm6890, %v9389, 0
      %9521 = vmatprep.subr.bf16.mxu0 0
      %9522 = vmatpush1.bf16.msra.mxu0 %v9519
      %9523 = vmatprep.subr.bf16.mxu0 0
      %9524 = vmatpush1.bf16.msra.mxu0 0
      %9525 = vmatprep.subr.bf16.mxu0 0
      %9526 = vmatpush1.bf16.msra.mxu0 0
      %9527 = vmatprep.subr.bf16.mxu0 0
      %9528 = vmatpush1.bf16.msra.mxu0 0
      %9529 = vmatprep.subr.bf16.mxu0 0
      %9530 = vmatpush1.bf16.msra.mxu0 0
      %9531 = vmatprep.subr.bf16.mxu0 0
      %9532 = vmatpush1.bf16.msra.mxu0 0
      %9533 = vmatprep.subr.bf16.mxu0 0
      %9534 = vmatpush1.bf16.msra.mxu0 0
      %9535 = vmatprep.subr.bf16.mxu0 0
      %9536 = vmatpush1.bf16.msra.mxu0 0
      %9537 = vmatprep.subr.bf16.mxu0 0
      %9538 = vmatpush1.bf16.msra.mxu0 0
      %9539 = vmatprep.subr.bf16.mxu0 0
      %9540 = vmatpush1.bf16.msra.mxu0 0
      %9541 = vmatprep.subr.bf16.mxu0 0
      %9542 = vmatpush1.bf16.msra.mxu0 0
      %9543 = vmatprep.subr.bf16.mxu0 0
      %9544 = vmatpush1.bf16.msra.mxu0 0
      %9545 = vmatprep.subr.bf16.mxu0 0
      %9546 = vmatpush1.bf16.msra.mxu0 0
      %9547 = vmatprep.subr.bf16.mxu0 0
      %9548 = vmatpush1.bf16.msra.mxu0 0
      %9549 = vmatprep.subr.bf16.mxu0 0
      %9550 = vmatpush1.bf16.msra.mxu0 0
      %9551 = vmatprep.subr.bf16.mxu0 0
      %9552 = vmatpush1.bf16.msra.mxu0 0
      %9553 = vmatprep.mubr.bf16.mxu0 0
      %9554 = vmatmul.mubr.bf16.gmra.mrb[0].mxu0 %v9471
      %v9555 = vpop.f32.mrb[0].mxu0
      %v9556 = vadd.f32 0.0, %v9555
      %v9557 = vpop.f32.mrb[0].mxu0
      %v9558 = vpop.f32.mrb[0].mxu0
      %v9559 = vadd.f32 0.0, %v9558
      %v9560 = vpop.f32.mrb[0].mxu0
      %9561 = vmatprep.mubr.bf16.mxu0 0
      %9562 = vmatmul.mubr.bf16.gmra.mrb[0].mxu0 %v9474
      %v9563 = vpop.f32.mrb[0].mxu0
      %v9564 = vadd.f32 0.0, %v9563
      %v9565 = vpop.f32.mrb[0].mxu0
      %v9566 = vpop.f32.mrb[0].mxu0
      %v9567 = vadd.f32 0.0, %v9566
      %v9568 = vpop.f32.mrb[0].mxu0
      %9569 = vmatprep.mubr.bf16.mxu0 0
      %9570 = vmatmul.mubr.bf16.gmra.mrb[0].mxu0 %v9477
      %v9571 = vpop.f32.mrb[0].mxu0
      %v9572 = vadd.f32 0.0, %v9571
      %v9573 = vpop.f32.mrb[0].mxu0
      %v9574 = vpop.f32.mrb[0].mxu0
      %v9575 = vadd.f32 0.0, %v9574
      %v9576 = vpop.f32.mrb[0].mxu0
      %9577 = vmatprep.mubr.bf16.mxu0 0
      %9578 = vmatmul.mubr.bf16.gmra.mrb[0].mxu0 %v9480
      %v9579 = vpop.f32.mrb[0].mxu0
      %v9580 = vadd.f32 0.0, %v9579
      %v9581 = vpop.f32.mrb[0].mxu0
      %v9582 = vpop.f32.mrb[0].mxu0
      %v9583 = vadd.f32 0.0, %v9582
      %v9584 = vpop.f32.mrb[0].mxu0
      %9585 = vmatprep.mubr.bf16.mxu0 0
      %9586 = vmatmul.mubr.bf16.gmra.mrb[0].mxu0 %v9483
      %v9587 = vpop.f32.mrb[0].mxu0
      %v9588 = vadd.f32 0.0, %v9587
      %v9589 = vpop.f32.mrb[0].mxu0
      %v9590 = vpop.f32.mrb[0].mxu0
      %v9591 = vadd.f32 0.0, %v9590
      %v9592 = vpop.f32.mrb[0].mxu0
      %9593 = vmatprep.mubr.bf16.mxu0 0
      %9594 = vmatmul.mubr.bf16.gmra.mrb[0].mxu0 %v9486
      %v9595 = vpop.f32.mrb[0].mxu0
      %v9596 = vadd.f32 0.0, %v9595
      %v9597 = vpop.f32.mrb[0].mxu0
      %v9598 = vpop.f32.mrb[0].mxu0
      %v9599 = vadd.f32 0.0, %v9598
      %v9600 = vpop.f32.mrb[0].mxu0
      %9601 = vmatprep.mubr.bf16.mxu0 0
      %9602 = vmatmul.mubr.bf16.gmra.mrb[0].mxu0 %v9489
      %v9603 = vpop.f32.mrb[0].mxu0
      %v9604 = vadd.f32 0.0, %v9603
      %v9605 = vpop.f32.mrb[0].mxu0
      %v9606 = vpop.f32.mrb[0].mxu0
      %v9607 = vadd.f32 0.0, %v9606
      %v9608 = vpop.f32.mrb[0].mxu0
      %9609 = vmatprep.mubr.bf16.mxu0 0
      %9610 = vmatmul.mubr.bf16.gmra.mrb[0].mxu0 %v9492
      %v9611 = vpop.f32.mrb[0].mxu0
      %v9612 = vadd.f32 0.0, %v9611
      %v9613 = vpop.f32.mrb[0].mxu0
      %v9614 = vpop.f32.mrb[0].mxu0
      %v9615 = vadd.f32 0.0, %v9614
      %v9616 = vpop.f32.mrb[0].mxu0
      %9617 = vmatprep.mubr.bf16.mxu0 0
      %9618 = vmatmul.mubr.bf16.gmra.mrb[0].mxu0 %v9495
      %v9619 = vpop.f32.mrb[0].mxu0
      %v9620 = vadd.f32 0.0, %v9619
      %v9621 = vpop.f32.mrb[0].mxu0
      %v9622 = vpop.f32.mrb[0].mxu0
      %v9623 = vadd.f32 0.0, %v9622
      %v9624 = vpop.f32.mrb[0].mxu0
      %9625 = vmatprep.mubr.bf16.mxu0 0
      %9626 = vmatmul.mubr.bf16.gmra.mrb[0].mxu0 %v9498
      %v9627 = vpop.f32.mrb[0].mxu0
      %v9628 = vadd.f32 0.0, %v9627
      %v9629 = vpop.f32.mrb[0].mxu0
      %v9630 = vpop.f32.mrb[0].mxu0
      %v9631 = vadd.f32 0.0, %v9630
      %v9632 = vpop.f32.mrb[0].mxu0
      %9633 = vmatprep.mubr.bf16.mxu0 0
      %9634 = vmatmul.mubr.bf16.gmra.mrb[0].mxu0 %v9501
      %v9635 = vpop.f32.mrb[0].mxu0
      %v9636 = vadd.f32 0.0, %v9635
      %v9637 = vpop.f32.mrb[0].mxu0
      %v9638 = vpop.f32.mrb[0].mxu0
      %v9639 = vadd.f32 0.0, %v9638
      %v9640 = vpop.f32.mrb[0].mxu0
      %9641 = vmatprep.mubr.bf16.mxu0 0
      %9642 = vmatmul.mubr.bf16.gmra.mrb[0].mxu0 %v9504
      %v9643 = vpop.f32.mrb[0].mxu0
      %v9644 = vadd.f32 0.0, %v9643
      %v9645 = vpop.f32.mrb[0].mxu0
      %v9646 = vpop.f32.mrb[0].mxu0
      %v9647 = vadd.f32 0.0, %v9646
      %v9648 = vpop.f32.mrb[0].mxu0
      %9649 = vmatprep.mubr.bf16.mxu0 0
      %9650 = vmatmul.mubr.bf16.gmra.mrb[0].mxu0 %v9507
      %v9651 = vpop.f32.mrb[0].mxu0
      %v9652 = vadd.f32 0.0, %v9651
      %v9653 = vpop.f32.mrb[0].mxu0
      %v9654 = vpop.f32.mrb[0].mxu0
      %v9655 = vadd.f32 0.0, %v9654
      %v9656 = vpop.f32.mrb[0].mxu0
      %9657 = vmatprep.mubr.bf16.mxu0 0
      %9658 = vmatmul.mubr.bf16.gmra.mrb[0].mxu0 %v9510
      %v9659 = vpop.f32.mrb[0].mxu0
      %v9660 = vadd.f32 0.0, %v9659
      %v9661 = vpop.f32.mrb[0].mxu0
      %v9662 = vpop.f32.mrb[0].mxu0
      %v9663 = vadd.f32 0.0, %v9662
      %v9664 = vpop.f32.mrb[0].mxu0
      %9665 = vmatprep.mubr.bf16.mxu0 0
      %9666 = vmatmul.mubr.bf16.gmra.mrb[0].mxu0 %v9513
      %v9667 = vpop.f32.mrb[0].mxu0
      %v9668 = vadd.f32 0.0, %v9667
      %v9669 = vpop.f32.mrb[0].mxu0
      %v9670 = vpop.f32.mrb[0].mxu0
      %v9671 = vadd.f32 0.0, %v9670
      %v9672 = vpop.f32.mrb[0].mxu0
      %9673 = vmatprep.mubr.bf16.mxu0 0
      %9674 = vmatmul.mubr.bf16.gmra.mrb[0].mxu0 %v9516
      %v9675 = vpop.f32.mrb[0].mxu0
      %v9676 = vadd.f32 0.0, %v9675
      %v9677 = vpop.f32.mrb[0].mxu0
      %v9678 = vpop.f32.mrb[0].mxu0
      %v9679 = vadd.f32 0.0, %v9678
      %v9680 = vpop.f32.mrb[0].mxu0
      %9681 = vdwg.mxu0
      %v9682 = vadd.f32 %v9323, %v9556
      %v9683 = vadd.f32 %v9324, %v9559
      %v9684 = vadd.f32 %v9325, %v9564
      %v9685 = vadd.f32 %v9326, %v9567
      %v9686 = vadd.f32 %v9327, %v9572
      %v9687 = vadd.f32 %v9328, %v9575
      %v9688 = vadd.f32 %v9329, %v9580
      %v9689 = vadd.f32 %v9330, %v9583
      %v9690 = vadd.f32 %v9331, %v9588
      %v9691 = vadd.f32 %v9332, %v9591
      %v9692 = vadd.f32 %v9333, %v9596
      %v9693 = vadd.f32 %v9334, %v9599
      %v9694 = vadd.f32 %v9335, %v9604
      %v9695 = vadd.f32 %v9336, %v9607
      %v9696 = vadd.f32 %v9337, %v9612
      %v9697 = vadd.f32 %v9338, %v9615
      %v9698 = vadd.f32 %v9339, %v9620
      %v9699 = vadd.f32 %v9340, %v9623
      %v9700 = vadd.f32 %v9341, %v9628
      %v9701 = vadd.f32 %v9342, %v9631
      %v9702 = vadd.f32 %v9343, %v9636
      %v9703 = vadd.f32 %v9344, %v9639
      %v9704 = vadd.f32 %v9345, %v9644
      %v9705 = vadd.f32 %v9346, %v9647
      %v9706 = vadd.f32 %v9347, %v9652
      %v9707 = vadd.f32 %v9348, %v9655
      %v9708 = vadd.f32 %v9349, %v9660
      %v9709 = vadd.f32 %v9350, %v9663
      %v9710 = vadd.f32 %v9351, %v9668
      %v9711 = vadd.f32 %v9352, %v9671
      %v9712 = vadd.f32 %v9353, %v9676
      %v9713 = vadd.f32 %v9354, %v9679
      %v9714 = vld [vmem:[%s9355] sm:$0xf]
      %v9715 = vld [vmem:[%s9355 + $0x4] sm:$0xf]
      %v9716 = vld [vmem:[%s9355 + $0x8] sm:$0x1]
      %v9717 = vld [vmem:[%s9355 + $0xc] sm:$0xf]
      %v9718 = vld [vmem:[%s9355 + $0x10] sm:$0xf]
      %v9719 = vld [vmem:[%s9355 + $0x14] sm:$0x1]
      %v9720 = vld [vmem:[%s9355 + $0x18] sm:$0xf]
      %v9721 = vld [vmem:[%s9355 + $0x1c] sm:$0xf]
      %v9722 = vld [vmem:[%s9355 + $0x20] sm:$0x1]
      %v9723 = vld [vmem:[%s9355 + $0x24] sm:$0xf]
      %v9724 = vld [vmem:[%s9355 + $0x28] sm:$0xf]
      %v9725 = vld [vmem:[%s9355 + $0x2c] sm:$0x1]
      %v9726 = vld [vmem:[%s9355 + $0x30] sm:$0xf]
      %v9727 = vld [vmem:[%s9355 + $0x34] sm:$0xf]
      %v9728 = vld [vmem:[%s9355 + $0x38] sm:$0x1]
      %v9729 = vld [vmem:[%s9355 + $0x3c] sm:$0xf]
      %v9730 = vld [vmem:[%s9355 + $0x40] sm:$0xf]
      %v9731 = vld [vmem:[%s9355 + $0x44] sm:$0x1]
      %v9732 = vld [vmem:[%s9355 + $0x48] sm:$0xf]
      %v9733 = vld [vmem:[%s9355 + $0x4c] sm:$0xf]
      %v9734 = vld [vmem:[%s9355 + $0x50] sm:$0x1]
      %v9735 = vld [vmem:[%s9355 + $0x54] sm:$0xf]
      %v9736 = vld [vmem:[%s9355 + $0x58] sm:$0xf]
      %v9737 = vld [vmem:[%s9355 + $0x5c] sm:$0x1]
      %v9738 = vld [vmem:[%s9355 + $0x60] sm:$0xf]
      %v9739 = vld [vmem:[%s9355 + $0x64] sm:$0xf]
      %v9740 = vld [vmem:[%s9355 + $0x68] sm:$0x1]
      %v9741 = vld [vmem:[%s9355 + $0x6c] sm:$0xf]
      %v9742 = vld [vmem:[%s9355 + $0x70] sm:$0xf]
      %v9743 = vld [vmem:[%s9355 + $0x74] sm:$0x1]
      %v9744 = vld [vmem:[%s9355 + $0x78] sm:$0xf]
      %v9745 = vld [vmem:[%s9355 + $0x7c] sm:$0xf]
      %v9746 = vld [vmem:[%s9355 + $0x80] sm:$0x1]
      %v9747 = vld [vmem:[%s9355 + $0x84] sm:$0xf]
      %v9748 = vld [vmem:[%s9355 + $0x88] sm:$0xf]
      %v9749 = vld [vmem:[%s9355 + $0x8c] sm:$0x1]
      %v9750 = vld [vmem:[%s9355 + $0x90] sm:$0xf]
      %v9751 = vld [vmem:[%s9355 + $0x94] sm:$0xf]
      %v9752 = vld [vmem:[%s9355 + $0x98] sm:$0x1]
      %v9753 = vld [vmem:[%s9355 + $0x9c] sm:$0xf]
      %v9754 = vld [vmem:[%s9355 + $0xa0] sm:$0xf]
      %v9755 = vld [vmem:[%s9355 + $0xa4] sm:$0x1]
      %v9756 = vld [vmem:[%s9355 + $0xa8] sm:$0xf]
      %v9757 = vld [vmem:[%s9355 + $0xac] sm:$0xf]
      %v9758 = vld [vmem:[%s9355 + $0xb0] sm:$0x1]
      %v9759 = vld [vmem:[%s9355 + $0xb4] sm:$0xf]
      %v9760 = vld [vmem:[%s9355 + $0xb8] sm:$0xf]
      %v9761 = vld [vmem:[%s9355 + $0xbc] sm:$0x1]
      %v9763 = vshrl.u32 %v9714, 16
      %v9765 = vrot.slane %v9763, 4
      %v9766 = vshll.u32 %v9714, 16
      %v9768 = vrot.slane %v9766, 5
      %v9769 = vor.u32 %v9765, %v9768
      %v9770 = vrot.slane %v9769, 4
      %v9772 = vshll.u32 %v9715, 16
      %v9774 = vrot.slane %v9772, 5
      %v9775 = vsel %vm902, %v9770, %v9774
      %v9776 = vshrl.u32 %v9715, 16
      %v9778 = vrot.slane %v9776, 4
      %v9779 = vor.u32 %v9778, %v9774
      %v9780 = vrot.slane %v9779, 4
      %v9782 = vshll.u32 %v9716, 16
      %v9784 = vrot.slane %v9782, 5
      %v9785 = vsel %vm902, %v9780, %v9784
      %v9787 = vshrl.u32 %v9717, 16
      %v9789 = vrot.slane %v9787, 4
      %v9790 = vshll.u32 %v9717, 16
      %v9792 = vrot.slane %v9790, 5
      %v9793 = vor.u32 %v9789, %v9792
      %v9794 = vrot.slane %v9793, 4
      %v9796 = vshll.u32 %v9718, 16
      %v9798 = vrot.slane %v9796, 5
      %v9799 = vsel %vm902, %v9794, %v9798
      %v9800 = vshrl.u32 %v9718, 16
      %v9802 = vrot.slane %v9800, 4
      %v9803 = vor.u32 %v9802, %v9798
      %v9804 = vrot.slane %v9803, 4
      %v9806 = vshll.u32 %v9719, 16
      %v9808 = vrot.slane %v9806, 5
      %v9809 = vsel %vm902, %v9804, %v9808
      %v9811 = vshrl.u32 %v9720, 16
      %v9813 = vrot.slane %v9811, 4
      %v9814 = vshll.u32 %v9720, 16
      %v9816 = vrot.slane %v9814, 5
      %v9817 = vor.u32 %v9813, %v9816
      %v9818 = vrot.slane %v9817, 4
      %v9820 = vshll.u32 %v9721, 16
      %v9822 = vrot.slane %v9820, 5
      %v9823 = vsel %vm902, %v9818, %v9822
      %v9824 = vshrl.u32 %v9721, 16
      %v9826 = vrot.slane %v9824, 4
      %v9827 = vor.u32 %v9826, %v9822
      %v9828 = vrot.slane %v9827, 4
      %v9830 = vshll.u32 %v9722, 16
      %v9832 = vrot.slane %v9830, 5
      %v9833 = vsel %vm902, %v9828, %v9832
      %v9835 = vshrl.u32 %v9723, 16
      %v9837 = vrot.slane %v9835, 4
      %v9838 = vshll.u32 %v9723, 16
      %v9840 = vrot.slane %v9838, 5
      %v9841 = vor.u32 %v9837, %v9840
      %v9842 = vrot.slane %v9841, 4
      %v9844 = vshll.u32 %v9724, 16
      %v9846 = vrot.slane %v9844, 5
      %v9847 = vsel %vm902, %v9842, %v9846
      %v9848 = vshrl.u32 %v9724, 16
      %v9850 = vrot.slane %v9848, 4
      %v9851 = vor.u32 %v9850, %v9846
      %v9852 = vrot.slane %v9851, 4
      %v9854 = vshll.u32 %v9725, 16
      %v9856 = vrot.slane %v9854, 5
      %v9857 = vsel %vm902, %v9852, %v9856
      %v9859 = vshrl.u32 %v9726, 16
      %v9861 = vrot.slane %v9859, 4
      %v9862 = vshll.u32 %v9726, 16
      %v9864 = vrot.slane %v9862, 5
      %v9865 = vor.u32 %v9861, %v9864
      %v9866 = vrot.slane %v9865, 4
      %v9868 = vshll.u32 %v9727, 16
      %v9870 = vrot.slane %v9868, 5
      %v9871 = vsel %vm902, %v9866, %v9870
      %v9872 = vshrl.u32 %v9727, 16
      %v9874 = vrot.slane %v9872, 4
      %v9875 = vor.u32 %v9874, %v9870
      %v9876 = vrot.slane %v9875, 4
      %v9878 = vshll.u32 %v9728, 16
      %v9880 = vrot.slane %v9878, 5
      %v9881 = vsel %vm902, %v9876, %v9880
      %v9883 = vshrl.u32 %v9729, 16
      %v9885 = vrot.slane %v9883, 4
      %v9886 = vshll.u32 %v9729, 16
      %v9888 = vrot.slane %v9886, 5
      %v9889 = vor.u32 %v9885, %v9888
      %v9890 = vrot.slane %v9889, 4
      %v9892 = vshll.u32 %v9730, 16
      %v9894 = vrot.slane %v9892, 5
      %v9895 = vsel %vm902, %v9890, %v9894
      %v9896 = vshrl.u32 %v9730, 16
      %v9898 = vrot.slane %v9896, 4
      %v9899 = vor.u32 %v9898, %v9894
      %v9900 = vrot.slane %v9899, 4
      %v9902 = vshll.u32 %v9731, 16
      %v9904 = vrot.slane %v9902, 5
      %v9905 = vsel %vm902, %v9900, %v9904
      %v9907 = vshrl.u32 %v9732, 16
      %v9909 = vrot.slane %v9907, 4
      %v9910 = vshll.u32 %v9732, 16
      %v9912 = vrot.slane %v9910, 5
      %v9913 = vor.u32 %v9909, %v9912
      %v9914 = vrot.slane %v9913, 4
      %v9916 = vshll.u32 %v9733, 16
      %v9918 = vrot.slane %v9916, 5
      %v9919 = vsel %vm902, %v9914, %v9918
      %v9920 = vshrl.u32 %v9733, 16
      %v9922 = vrot.slane %v9920, 4
      %v9923 = vor.u32 %v9922, %v9918
      %v9924 = vrot.slane %v9923, 4
      %v9926 = vshll.u32 %v9734, 16
      %v9928 = vrot.slane %v9926, 5
      %v9929 = vsel %vm902, %v9924, %v9928
      %v9931 = vshrl.u32 %v9735, 16
      %v9933 = vrot.slane %v9931, 4
      %v9934 = vshll.u32 %v9735, 16
      %v9936 = vrot.slane %v9934, 5
      %v9937 = vor.u32 %v9933, %v9936
      %v9938 = vrot.slane %v9937, 4
      %v9940 = vshll.u32 %v9736, 16
      %v9942 = vrot.slane %v9940, 5
      %v9943 = vsel %vm902, %v9938, %v9942
      %v9944 = vshrl.u32 %v9736, 16
      %v9946 = vrot.slane %v9944, 4
      %v9947 = vor.u32 %v9946, %v9942
      %v9948 = vrot.slane %v9947, 4
      %v9950 = vshll.u32 %v9737, 16
      %v9952 = vrot.slane %v9950, 5
      %v9953 = vsel %vm902, %v9948, %v9952
      %v9955 = vshrl.u32 %v9738, 16
      %v9957 = vrot.slane %v9955, 4
      %v9958 = vshll.u32 %v9738, 16
      %v9960 = vrot.slane %v9958, 5
      %v9961 = vor.u32 %v9957, %v9960
      %v9962 = vrot.slane %v9961, 4
      %v9964 = vshll.u32 %v9739, 16
      %v9966 = vrot.slane %v9964, 5
      %v9967 = vsel %vm902, %v9962, %v9966
      %v9968 = vshrl.u32 %v9739, 16
      %v9970 = vrot.slane %v9968, 4
      %v9971 = vor.u32 %v9970, %v9966
      %v9972 = vrot.slane %v9971, 4
      %v9974 = vshll.u32 %v9740, 16
      %v9976 = vrot.slane %v9974, 5
      %v9977 = vsel %vm902, %v9972, %v9976
      %v9979 = vshrl.u32 %v9741, 16
      %v9981 = vrot.slane %v9979, 4
      %v9982 = vshll.u32 %v9741, 16
      %v9984 = vrot.slane %v9982, 5
      %v9985 = vor.u32 %v9981, %v9984
      %v9986 = vrot.slane %v9985, 4
      %v9988 = vshll.u32 %v9742, 16
      %v9990 = vrot.slane %v9988, 5
      %v9991 = vsel %vm902, %v9986, %v9990
      %v9992 = vshrl.u32 %v9742, 16
      %v9994 = vrot.slane %v9992, 4
      %v9995 = vor.u32 %v9994, %v9990
      %v9996 = vrot.slane %v9995, 4
      %v9998 = vshll.u32 %v9743, 16
      %v10000 = vrot.slane %v9998, 5
      %v10001 = vsel %vm902, %v9996, %v10000
      %v10003 = vshrl.u32 %v9744, 16
      %v10005 = vrot.slane %v10003, 4
      %v10006 = vshll.u32 %v9744, 16
      %v10008 = vrot.slane %v10006, 5
      %v10009 = vor.u32 %v10005, %v10008
      %v10010 = vrot.slane %v10009, 4
      %v10012 = vshll.u32 %v9745, 16
      %v10014 = vrot.slane %v10012, 5
      %v10015 = vsel %vm902, %v10010, %v10014
      %v10016 = vshrl.u32 %v9745, 16
      %v10018 = vrot.slane %v10016, 4
      %v10019 = vor.u32 %v10018, %v10014
      %v10020 = vrot.slane %v10019, 4
      %v10022 = vshll.u32 %v9746, 16
      %v10024 = vrot.slane %v10022, 5
      %v10025 = vsel %vm902, %v10020, %v10024
      %v10027 = vshrl.u32 %v9747, 16
      %v10029 = vrot.slane %v10027, 4
      %v10030 = vshll.u32 %v9747, 16
      %v10032 = vrot.slane %v10030, 5
      %v10033 = vor.u32 %v10029, %v10032
      %v10034 = vrot.slane %v10033, 4
      %v10036 = vshll.u32 %v9748, 16
      %v10038 = vrot.slane %v10036, 5
      %v10039 = vsel %vm902, %v10034, %v10038
      %v10040 = vshrl.u32 %v9748, 16
      %v10042 = vrot.slane %v10040, 4
      %v10043 = vor.u32 %v10042, %v10038
      %v10044 = vrot.slane %v10043, 4
      %v10046 = vshll.u32 %v9749, 16
      %v10048 = vrot.slane %v10046, 5
      %v10049 = vsel %vm902, %v10044, %v10048
      %v10051 = vshrl.u32 %v9750, 16
      %v10053 = vrot.slane %v10051, 4
      %v10054 = vshll.u32 %v9750, 16
      %v10056 = vrot.slane %v10054, 5
      %v10057 = vor.u32 %v10053, %v10056
      %v10058 = vrot.slane %v10057, 4
      %v10060 = vshll.u32 %v9751, 16
      %v10062 = vrot.slane %v10060, 5
      %v10063 = vsel %vm902, %v10058, %v10062
      %v10064 = vshrl.u32 %v9751, 16
      %v10066 = vrot.slane %v10064, 4
      %v10067 = vor.u32 %v10066, %v10062
      %v10068 = vrot.slane %v10067, 4
      %v10070 = vshll.u32 %v9752, 16
      %v10072 = vrot.slane %v10070, 5
      %v10073 = vsel %vm902, %v10068, %v10072
      %v10075 = vshrl.u32 %v9753, 16
      %v10077 = vrot.slane %v10075, 4
      %v10078 = vshll.u32 %v9753, 16
      %v10080 = vrot.slane %v10078, 5
      %v10081 = vor.u32 %v10077, %v10080
      %v10082 = vrot.slane %v10081, 4
      %v10084 = vshll.u32 %v9754, 16
      %v10086 = vrot.slane %v10084, 5
      %v10087 = vsel %vm902, %v10082, %v10086
      %v10088 = vshrl.u32 %v9754, 16
      %v10090 = vrot.slane %v10088, 4
      %v10091 = vor.u32 %v10090, %v10086
      %v10092 = vrot.slane %v10091, 4
      %v10094 = vshll.u32 %v9755, 16
      %v10096 = vrot.slane %v10094, 5
      %v10097 = vsel %vm902, %v10092, %v10096
      %v10099 = vshrl.u32 %v9756, 16
      %v10101 = vrot.slane %v10099, 4
      %v10102 = vshll.u32 %v9756, 16
      %v10104 = vrot.slane %v10102, 5
      %v10105 = vor.u32 %v10101, %v10104
      %v10106 = vrot.slane %v10105, 4
      %v10108 = vshll.u32 %v9757, 16
      %v10110 = vrot.slane %v10108, 5
      %v10111 = vsel %vm902, %v10106, %v10110
      %v10112 = vshrl.u32 %v9757, 16
      %v10114 = vrot.slane %v10112, 4
      %v10115 = vor.u32 %v10114, %v10110
      %v10116 = vrot.slane %v10115, 4
      %v10118 = vshll.u32 %v9758, 16
      %v10120 = vrot.slane %v10118, 5
      %v10121 = vsel %vm902, %v10116, %v10120
      %v10123 = vshrl.u32 %v9759, 16
      %v10125 = vrot.slane %v10123, 4
      %v10126 = vshll.u32 %v9759, 16
      %v10128 = vrot.slane %v10126, 5
      %v10129 = vor.u32 %v10125, %v10128
      %v10130 = vrot.slane %v10129, 4
      %v10132 = vshll.u32 %v9760, 16
      %v10134 = vrot.slane %v10132, 5
      %v10135 = vsel %vm902, %v10130, %v10134
      %v10136 = vshrl.u32 %v9760, 16
      %v10138 = vrot.slane %v10136, 4
      %v10139 = vor.u32 %v10138, %v10134
      %v10140 = vrot.slane %v10139, 4
      %v10142 = vshll.u32 %v9761, 16
      %v10144 = vrot.slane %v10142, 5
      %v10145 = vsel %vm902, %v10140, %v10144
      %s10146 = scalar_lea.vmem %s3, 28
      %v10147 = vld [vmem:[%s10146] sm:$0xf]
      %v10148 = vunpack.c.l.b16 %v9775
      %v10149 = vunpack.c.l.b16 %v9785
      %v10150 = vunpack.c.l.b16 %v9799
      %v10151 = vunpack.c.l.b16 %v9809
      %v10152 = vunpack.c.l.b16 %v9823
      %v10153 = vunpack.c.l.b16 %v9833
      %v10154 = vunpack.c.l.b16 %v9847
      %v10155 = vunpack.c.l.b16 %v9857
      %v10156 = vunpack.c.l.b16 %v9871
      %v10157 = vunpack.c.l.b16 %v9881
      %v10158 = vunpack.c.l.b16 %v9895
      %v10159 = vunpack.c.l.b16 %v9905
      %v10160 = vunpack.c.l.b16 %v9919
      %v10161 = vunpack.c.l.b16 %v9929
      %v10162 = vunpack.c.l.b16 %v9943
      %v10163 = vunpack.c.l.b16 %v9953
      %v10164 = vunpack.c.l.b16 %v9967
      %v10165 = vunpack.c.l.b16 %v9977
      %v10166 = vunpack.c.l.b16 %v9991
      %v10167 = vunpack.c.l.b16 %v10001
      %v10168 = vunpack.c.l.b16 %v10015
      %v10169 = vunpack.c.l.b16 %v10025
      %v10170 = vunpack.c.l.b16 %v10039
      %v10171 = vunpack.c.l.b16 %v10049
      %v10172 = vunpack.c.l.b16 %v10063
      %v10173 = vunpack.c.l.b16 %v10073
      %v10174 = vunpack.c.l.b16 %v10087
      %v10175 = vunpack.c.l.b16 %v10097
      %v10176 = vunpack.c.l.b16 %v10111
      %v10177 = vunpack.c.l.b16 %v10121
      %v10178 = vunpack.c.l.b16 %v10135
      %v10179 = vunpack.c.l.b16 %v10145
      %v10180 = vpack.c.b16 %v10149, %v10148
      %v10181 = vpack.c.b16 %v10151, %v10150
      %v10182 = vpack.c.b16 %v10153, %v10152
      %v10183 = vpack.c.b16 %v10155, %v10154
      %v10184 = vpack.c.b16 %v10157, %v10156
      %v10185 = vpack.c.b16 %v10159, %v10158
      %v10186 = vpack.c.b16 %v10161, %v10160
      %v10187 = vpack.c.b16 %v10163, %v10162
      %v10188 = vpack.c.b16 %v10165, %v10164
      %v10189 = vpack.c.b16 %v10167, %v10166
      %v10190 = vpack.c.b16 %v10169, %v10168
      %v10191 = vpack.c.b16 %v10171, %v10170
      %v10192 = vpack.c.b16 %v10173, %v10172
      %v10193 = vpack.c.b16 %v10175, %v10174
      %v10194 = vpack.c.b16 %v10177, %v10176
      %v10195 = vpack.c.b16 %v10179, %v10178
      %v10197 = vsel %vm5480, %v10180, 0
      %v10200 = vsel %vm5480, %v10181, 0
      %v10203 = vsel %vm5480, %v10182, 0
      %v10206 = vsel %vm5480, %v10183, 0
      %v10209 = vsel %vm5480, %v10184, 0
      %v10212 = vsel %vm5480, %v10185, 0
      %v10215 = vsel %vm5480, %v10186, 0
      %v10218 = vsel %vm5480, %v10187, 0
      %v10221 = vsel %vm5480, %v10188, 0
      %v10224 = vsel %vm5480, %v10189, 0
      %v10227 = vsel %vm5480, %v10190, 0
      %v10230 = vsel %vm5480, %v10191, 0
      %v10233 = vsel %vm5480, %v10192, 0
      %v10236 = vsel %vm5480, %v10193, 0
      %v10239 = vsel %vm5480, %v10194, 0
      %v10242 = vsel %vm5480, %v10195, 0
      %v10245 = vsel %vm6890, %v10147, 0
      %10247 = vmatprep.subr.bf16.mxu0 0
      %10248 = vmatpush1.bf16.msra.mxu0 %v10245
      %10249 = vmatprep.subr.bf16.mxu0 0
      %10250 = vmatpush1.bf16.msra.mxu0 0
      %10251 = vmatprep.subr.bf16.mxu0 0
      %10252 = vmatpush1.bf16.msra.mxu0 0
      %10253 = vmatprep.subr.bf16.mxu0 0
      %10254 = vmatpush1.bf16.msra.mxu0 0
      %10255 = vmatprep.subr.bf16.mxu0 0
      %10256 = vmatpush1.bf16.msra.mxu0 0
      %10257 = vmatprep.subr.bf16.mxu0 0
      %10258 = vmatpush1.bf16.msra.mxu0 0
      %10259 = vmatprep.subr.bf16.mxu0 0
      %10260 = vmatpush1.bf16.msra.mxu0 0
      %10261 = vmatprep.subr.bf16.mxu0 0
      %10262 = vmatpush1.bf16.msra.mxu0 0
      %10263 = vmatprep.subr.bf16.mxu0 0
      %10264 = vmatpush1.bf16.msra.mxu0 0
      %10265 = vmatprep.subr.bf16.mxu0 0
      %10266 = vmatpush1.bf16.msra.mxu0 0
      %10267 = vmatprep.subr.bf16.mxu0 0
      %10268 = vmatpush1.bf16.msra.mxu0 0
      %10269 = vmatprep.subr.bf16.mxu0 0
      %10270 = vmatpush1.bf16.msra.mxu0 0
      %10271 = vmatprep.subr.bf16.mxu0 0
      %10272 = vmatpush1.bf16.msra.mxu0 0
      %10273 = vmatprep.subr.bf16.mxu0 0
      %10274 = vmatpush1.bf16.msra.mxu0 0
      %10275 = vmatprep.subr.bf16.mxu0 0
      %10276 = vmatpush1.bf16.msra.mxu0 0
      %10277 = vmatprep.subr.bf16.mxu0 0
      %10278 = vmatpush1.bf16.msra.mxu0 0
      %10279 = vmatprep.mubr.bf16.mxu0 0
      %10280 = vmatmul.mubr.bf16.gmra.mrb[0].mxu0 %v10197
      %v10281 = vpop.f32.mrb[0].mxu0
      %v10282 = vadd.f32 0.0, %v10281
      %v10283 = vpop.f32.mrb[0].mxu0
      %v10284 = vpop.f32.mrb[0].mxu0
      %v10285 = vadd.f32 0.0, %v10284
      %v10286 = vpop.f32.mrb[0].mxu0
      %10287 = vmatprep.mubr.bf16.mxu0 0
      %10288 = vmatmul.mubr.bf16.gmra.mrb[0].mxu0 %v10200
      %v10289 = vpop.f32.mrb[0].mxu0
      %v10290 = vadd.f32 0.0, %v10289
      %v10291 = vpop.f32.mrb[0].mxu0
      %v10292 = vpop.f32.mrb[0].mxu0
      %v10293 = vadd.f32 0.0, %v10292
      %v10294 = vpop.f32.mrb[0].mxu0
      %10295 = vmatprep.mubr.bf16.mxu0 0
      %10296 = vmatmul.mubr.bf16.gmra.mrb[0].mxu0 %v10203
      %v10297 = vpop.f32.mrb[0].mxu0
      %v10298 = vadd.f32 0.0, %v10297
      %v10299 = vpop.f32.mrb[0].mxu0
      %v10300 = vpop.f32.mrb[0].mxu0
      %v10301 = vadd.f32 0.0, %v10300
      %v10302 = vpop.f32.mrb[0].mxu0
      %10303 = vmatprep.mubr.bf16.mxu0 0
      %10304 = vmatmul.mubr.bf16.gmra.mrb[0].mxu0 %v10206
      %v10305 = vpop.f32.mrb[0].mxu0
      %v10306 = vadd.f32 0.0, %v10305
      %v10307 = vpop.f32.mrb[0].mxu0
      %v10308 = vpop.f32.mrb[0].mxu0
      %v10309 = vadd.f32 0.0, %v10308
      %v10310 = vpop.f32.mrb[0].mxu0
      %10311 = vmatprep.mubr.bf16.mxu0 0
      %10312 = vmatmul.mubr.bf16.gmra.mrb[0].mxu0 %v10209
      %v10313 = vpop.f32.mrb[0].mxu0
      %v10314 = vadd.f32 0.0, %v10313
      %v10315 = vpop.f32.mrb[0].mxu0
      %v10316 = vpop.f32.mrb[0].mxu0
      %v10317 = vadd.f32 0.0, %v10316
      %v10318 = vpop.f32.mrb[0].mxu0
      %10319 = vmatprep.mubr.bf16.mxu0 0
      %10320 = vmatmul.mubr.bf16.gmra.mrb[0].mxu0 %v10212
      %v10321 = vpop.f32.mrb[0].mxu0
      %v10322 = vadd.f32 0.0, %v10321
      %v10323 = vpop.f32.mrb[0].mxu0
      %v10324 = vpop.f32.mrb[0].mxu0
      %v10325 = vadd.f32 0.0, %v10324
      %v10326 = vpop.f32.mrb[0].mxu0
      %10327 = vmatprep.mubr.bf16.mxu0 0
      %10328 = vmatmul.mubr.bf16.gmra.mrb[0].mxu0 %v10215
      %v10329 = vpop.f32.mrb[0].mxu0
      %v10330 = vadd.f32 0.0, %v10329
      %v10331 = vpop.f32.mrb[0].mxu0
      %v10332 = vpop.f32.mrb[0].mxu0
      %v10333 = vadd.f32 0.0, %v10332
      %v10334 = vpop.f32.mrb[0].mxu0
      %10335 = vmatprep.mubr.bf16.mxu0 0
      %10336 = vmatmul.mubr.bf16.gmra.mrb[0].mxu0 %v10218
      %v10337 = vpop.f32.mrb[0].mxu0
      %v10338 = vadd.f32 0.0, %v10337
      %v10339 = vpop.f32.mrb[0].mxu0
      %v10340 = vpop.f32.mrb[0].mxu0
      %v10341 = vadd.f32 0.0, %v10340
      %v10342 = vpop.f32.mrb[0].mxu0
      %10343 = vmatprep.mubr.bf16.mxu0 0
      %10344 = vmatmul.mubr.bf16.gmra.mrb[0].mxu0 %v10221
      %v10345 = vpop.f32.mrb[0].mxu0
      %v10346 = vadd.f32 0.0, %v10345
      %v10347 = vpop.f32.mrb[0].mxu0
      %v10348 = vpop.f32.mrb[0].mxu0
      %v10349 = vadd.f32 0.0, %v10348
      %v10350 = vpop.f32.mrb[0].mxu0
      %10351 = vmatprep.mubr.bf16.mxu0 0
      %10352 = vmatmul.mubr.bf16.gmra.mrb[0].mxu0 %v10224
      %v10353 = vpop.f32.mrb[0].mxu0
      %v10354 = vadd.f32 0.0, %v10353
      %v10355 = vpop.f32.mrb[0].mxu0
      %v10356 = vpop.f32.mrb[0].mxu0
      %v10357 = vadd.f32 0.0, %v10356
      %v10358 = vpop.f32.mrb[0].mxu0
      %10359 = vmatprep.mubr.bf16.mxu0 0
      %10360 = vmatmul.mubr.bf16.gmra.mrb[0].mxu0 %v10227
      %v10361 = vpop.f32.mrb[0].mxu0
      %v10362 = vadd.f32 0.0, %v10361
      %v10363 = vpop.f32.mrb[0].mxu0
      %v10364 = vpop.f32.mrb[0].mxu0
      %v10365 = vadd.f32 0.0, %v10364
      %v10366 = vpop.f32.mrb[0].mxu0
      %10367 = vmatprep.mubr.bf16.mxu0 0
      %10368 = vmatmul.mubr.bf16.gmra.mrb[0].mxu0 %v10230
      %v10369 = vpop.f32.mrb[0].mxu0
      %v10370 = vadd.f32 0.0, %v10369
      %v10371 = vpop.f32.mrb[0].mxu0
      %v10372 = vpop.f32.mrb[0].mxu0
      %v10373 = vadd.f32 0.0, %v10372
      %v10374 = vpop.f32.mrb[0].mxu0
      %10375 = vmatprep.mubr.bf16.mxu0 0
      %10376 = vmatmul.mubr.bf16.gmra.mrb[0].mxu0 %v10233
      %v10377 = vpop.f32.mrb[0].mxu0
      %v10378 = vadd.f32 0.0, %v10377
      %v10379 = vpop.f32.mrb[0].mxu0
      %v10380 = vpop.f32.mrb[0].mxu0
      %v10381 = vadd.f32 0.0, %v10380
      %v10382 = vpop.f32.mrb[0].mxu0
      %10383 = vmatprep.mubr.bf16.mxu0 0
      %10384 = vmatmul.mubr.bf16.gmra.mrb[0].mxu0 %v10236
      %v10385 = vpop.f32.mrb[0].mxu0
      %v10386 = vadd.f32 0.0, %v10385
      %v10387 = vpop.f32.mrb[0].mxu0
      %v10388 = vpop.f32.mrb[0].mxu0
      %v10389 = vadd.f32 0.0, %v10388
      %v10390 = vpop.f32.mrb[0].mxu0
      %10391 = vmatprep.mubr.bf16.mxu0 0
      %10392 = vmatmul.mubr.bf16.gmra.mrb[0].mxu0 %v10239
      %v10393 = vpop.f32.mrb[0].mxu0
      %v10394 = vadd.f32 0.0, %v10393
      %v10395 = vpop.f32.mrb[0].mxu0
      %v10396 = vpop.f32.mrb[0].mxu0
      %v10397 = vadd.f32 0.0, %v10396
      %v10398 = vpop.f32.mrb[0].mxu0
      %10399 = vmatprep.mubr.bf16.mxu0 0
      %10400 = vmatmul.mubr.bf16.gmra.mrb[0].mxu0 %v10242
      %v10401 = vpop.f32.mrb[0].mxu0
      %v10402 = vadd.f32 0.0, %v10401
      %v10403 = vpop.f32.mrb[0].mxu0
      %v10404 = vpop.f32.mrb[0].mxu0
      %v10405 = vadd.f32 0.0, %v10404
      %v10406 = vpop.f32.mrb[0].mxu0
      %10407 = vdwg.mxu0
      %v10408 = vadd.f32 %v9682, %v10282
      %v10409 = vadd.f32 %v9683, %v10285
      %v10410 = vadd.f32 %v9684, %v10290
      %v10411 = vadd.f32 %v9685, %v10293
      %v10412 = vadd.f32 %v9686, %v10298
      %v10413 = vadd.f32 %v9687, %v10301
      %v10414 = vadd.f32 %v9688, %v10306
      %v10415 = vadd.f32 %v9689, %v10309
      %v10416 = vadd.f32 %v9690, %v10314
      %v10417 = vadd.f32 %v9691, %v10317
      %v10418 = vadd.f32 %v9692, %v10322
      %v10419 = vadd.f32 %v9693, %v10325
      %v10420 = vadd.f32 %v9694, %v10330
      %v10421 = vadd.f32 %v9695, %v10333
      %v10422 = vadd.f32 %v9696, %v10338
      %v10423 = vadd.f32 %v9697, %v10341
      %v10424 = vadd.f32 %v9698, %v10346
      %v10425 = vadd.f32 %v9699, %v10349
      %v10426 = vadd.f32 %v9700, %v10354
      %v10427 = vadd.f32 %v9701, %v10357
      %v10428 = vadd.f32 %v9702, %v10362
      %v10429 = vadd.f32 %v9703, %v10365
      %v10430 = vadd.f32 %v9704, %v10370
      %v10431 = vadd.f32 %v9705, %v10373
      %v10432 = vadd.f32 %v9706, %v10378
      %v10433 = vadd.f32 %v9707, %v10381
      %v10434 = vadd.f32 %v9708, %v10386
      %v10435 = vadd.f32 %v9709, %v10389
      %v10436 = vadd.f32 %v9710, %v10394
      %v10437 = vadd.f32 %v9711, %v10397
      %v10438 = vadd.f32 %v9712, %v10402
      %v10439 = vadd.f32 %v9713, %v10405
      %v10440 = vld [vmem:[%s9355] sm:$0xe]
      %v10441 = vld [vmem:[%s9355 + $0xc] sm:$0xe]
      %v10442 = vld [vmem:[%s9355 + $0x18] sm:$0xe]
      %v10443 = vld [vmem:[%s9355 + $0x24] sm:$0xe]
      %v10444 = vld [vmem:[%s9355 + $0x30] sm:$0xe]
      %v10445 = vld [vmem:[%s9355 + $0x3c] sm:$0xe]
      %v10446 = vld [vmem:[%s9355 + $0x48] sm:$0xe]
      %v10447 = vld [vmem:[%s9355 + $0x54] sm:$0xe]
      %v10448 = vld [vmem:[%s9355 + $0x60] sm:$0xe]
      %v10449 = vld [vmem:[%s9355 + $0x6c] sm:$0xe]
      %v10450 = vld [vmem:[%s9355 + $0x78] sm:$0xe]
      %v10451 = vld [vmem:[%s9355 + $0x84] sm:$0xe]
      %v10452 = vld [vmem:[%s9355 + $0x90] sm:$0xe]
      %v10453 = vld [vmem:[%s9355 + $0x9c] sm:$0xe]
      %v10454 = vld [vmem:[%s9355 + $0xa8] sm:$0xe]
      %v10455 = vld [vmem:[%s9355 + $0xb4] sm:$0xe]
      %v10504 = vrot.slane %v10440, 5
      %v10505 = vrot.slane %v10504, 4
      %v10506 = vrot.slane %v9715, 5
      %v10507 = vsel %vm1893, %v10505, %v10506
      %v10508 = vrot.slane %v10506, 4
      %v10509 = vrot.slane %v9716, 5
      %v10510 = vsel %vm1893, %v10508, %v10509
      %v10511 = vrot.slane %v10441, 5
      %v10512 = vrot.slane %v10511, 4
      %v10513 = vrot.slane %v9718, 5
      %v10514 = vsel %vm1893, %v10512, %v10513
      %v10515 = vrot.slane %v10513, 4
      %v10516 = vrot.slane %v9719, 5
      %v10517 = vsel %vm1893, %v10515, %v10516
      %v10518 = vrot.slane %v10442, 5
      %v10519 = vrot.slane %v10518, 4
      %v10520 = vrot.slane %v9721, 5
      %v10521 = vsel %vm1893, %v10519, %v10520
      %v10522 = vrot.slane %v10520, 4
      %v10523 = vrot.slane %v9722, 5
      %v10524 = vsel %vm1893, %v10522, %v10523
      %v10525 = vrot.slane %v10443, 5
      %v10526 = vrot.slane %v10525, 4
      %v10527 = vrot.slane %v9724, 5
      %v10528 = vsel %vm1893, %v10526, %v10527
      %v10529 = vrot.slane %v10527, 4
      %v10530 = vrot.slane %v9725, 5
      %v10531 = vsel %vm1893, %v10529, %v10530
      %v10532 = vrot.slane %v10444, 5
      %v10533 = vrot.slane %v10532, 4
      %v10534 = vrot.slane %v9727, 5
      %v10535 = vsel %vm1893, %v10533, %v10534
      %v10536 = vrot.slane %v10534, 4
      %v10537 = vrot.slane %v9728, 5
      %v10538 = vsel %vm1893, %v10536, %v10537
      %v10539 = vrot.slane %v10445, 5
      %v10540 = vrot.slane %v10539, 4
      %v10541 = vrot.slane %v9730, 5
      %v10542 = vsel %vm1893, %v10540, %v10541
      %v10543 = vrot.slane %v10541, 4
      %v10544 = vrot.slane %v9731, 5
      %v10545 = vsel %vm1893, %v10543, %v10544
      %v10546 = vrot.slane %v10446, 5
      %v10547 = vrot.slane %v10546, 4
      %v10548 = vrot.slane %v9733, 5
      %v10549 = vsel %vm1893, %v10547, %v10548
      %v10550 = vrot.slane %v10548, 4
      %v10551 = vrot.slane %v9734, 5
      %v10552 = vsel %vm1893, %v10550, %v10551
      %v10553 = vrot.slane %v10447, 5
      %v10554 = vrot.slane %v10553, 4
      %v10555 = vrot.slane %v9736, 5
      %v10556 = vsel %vm1893, %v10554, %v10555
      %v10557 = vrot.slane %v10555, 4
      %v10558 = vrot.slane %v9737, 5
      %v10559 = vsel %vm1893, %v10557, %v10558
      %v10560 = vrot.slane %v10448, 5
      %v10561 = vrot.slane %v10560, 4
      %v10562 = vrot.slane %v9739, 5
      %v10563 = vsel %vm1893, %v10561, %v10562
      %v10564 = vrot.slane %v10562, 4
      %v10565 = vrot.slane %v9740, 5
      %v10566 = vsel %vm1893, %v10564, %v10565
      %v10567 = vrot.slane %v10449, 5
      %v10568 = vrot.slane %v10567, 4
      %v10569 = vrot.slane %v9742, 5
      %v10570 = vsel %vm1893, %v10568, %v10569
      %v10571 = vrot.slane %v10569, 4
      %v10572 = vrot.slane %v9743, 5
      %v10573 = vsel %vm1893, %v10571, %v10572
      %v10574 = vrot.slane %v10450, 5
      %v10575 = vrot.slane %v10574, 4
      %v10576 = vrot.slane %v9745, 5
      %v10577 = vsel %vm1893, %v10575, %v10576
      %v10578 = vrot.slane %v10576, 4
      %v10579 = vrot.slane %v9746, 5
      %v10580 = vsel %vm1893, %v10578, %v10579
      %v10581 = vrot.slane %v10451, 5
      %v10582 = vrot.slane %v10581, 4
      %v10583 = vrot.slane %v9748, 5
      %v10584 = vsel %vm1893, %v10582, %v10583
      %v10585 = vrot.slane %v10583, 4
      %v10586 = vrot.slane %v9749, 5
      %v10587 = vsel %vm1893, %v10585, %v10586
      %v10588 = vrot.slane %v10452, 5
      %v10589 = vrot.slane %v10588, 4
      %v10590 = vrot.slane %v9751, 5
      %v10591 = vsel %vm1893, %v10589, %v10590
      %v10592 = vrot.slane %v10590, 4
      %v10593 = vrot.slane %v9752, 5
      %v10594 = vsel %vm1893, %v10592, %v10593
      %v10595 = vrot.slane %v10453, 5
      %v10596 = vrot.slane %v10595, 4
      %v10597 = vrot.slane %v9754, 5
      %v10598 = vsel %vm1893, %v10596, %v10597
      %v10599 = vrot.slane %v10597, 4
      %v10600 = vrot.slane %v9755, 5
      %v10601 = vsel %vm1893, %v10599, %v10600
      %v10602 = vrot.slane %v10454, 5
      %v10603 = vrot.slane %v10602, 4
      %v10604 = vrot.slane %v9757, 5
      %v10605 = vsel %vm1893, %v10603, %v10604
      %v10606 = vrot.slane %v10604, 4
      %v10607 = vrot.slane %v9758, 5
      %v10608 = vsel %vm1893, %v10606, %v10607
      %v10609 = vrot.slane %v10455, 5
      %v10610 = vrot.slane %v10609, 4
      %v10611 = vrot.slane %v9760, 5
      %v10612 = vsel %vm1893, %v10610, %v10611
      %v10613 = vrot.slane %v10611, 4
      %v10614 = vrot.slane %v9761, 5
      %v10615 = vsel %vm1893, %v10613, %v10614
      %s10616 = scalar_lea.vmem %s3, 32
      %v10617 = vld [vmem:[%s10616] sm:$0xf]
      %v10618 = vunpack.c.l.b16 %v10507
      %v10619 = vunpack.c.l.b16 %v10510
      %v10620 = vunpack.c.l.b16 %v10514
      %v10621 = vunpack.c.l.b16 %v10517
      %v10622 = vunpack.c.l.b16 %v10521
      %v10623 = vunpack.c.l.b16 %v10524
      %v10624 = vunpack.c.l.b16 %v10528
      %v10625 = vunpack.c.l.b16 %v10531
      %v10626 = vunpack.c.l.b16 %v10535
      %v10627 = vunpack.c.l.b16 %v10538
      %v10628 = vunpack.c.l.b16 %v10542
      %v10629 = vunpack.c.l.b16 %v10545
      %v10630 = vunpack.c.l.b16 %v10549
      %v10631 = vunpack.c.l.b16 %v10552
      %v10632 = vunpack.c.l.b16 %v10556
      %v10633 = vunpack.c.l.b16 %v10559
      %v10634 = vunpack.c.l.b16 %v10563
      %v10635 = vunpack.c.l.b16 %v10566
      %v10636 = vunpack.c.l.b16 %v10570
      %v10637 = vunpack.c.l.b16 %v10573
      %v10638 = vunpack.c.l.b16 %v10577
      %v10639 = vunpack.c.l.b16 %v10580
      %v10640 = vunpack.c.l.b16 %v10584
      %v10641 = vunpack.c.l.b16 %v10587
      %v10642 = vunpack.c.l.b16 %v10591
      %v10643 = vunpack.c.l.b16 %v10594
      %v10644 = vunpack.c.l.b16 %v10598
      %v10645 = vunpack.c.l.b16 %v10601
      %v10646 = vunpack.c.l.b16 %v10605
      %v10647 = vunpack.c.l.b16 %v10608
      %v10648 = vunpack.c.l.b16 %v10612
      %v10649 = vunpack.c.l.b16 %v10615
      %v10650 = vpack.c.b16 %v10619, %v10618
      %v10651 = vpack.c.b16 %v10621, %v10620
      %v10652 = vpack.c.b16 %v10623, %v10622
      %v10653 = vpack.c.b16 %v10625, %v10624
      %v10654 = vpack.c.b16 %v10627, %v10626
      %v10655 = vpack.c.b16 %v10629, %v10628
      %v10656 = vpack.c.b16 %v10631, %v10630
      %v10657 = vpack.c.b16 %v10633, %v10632
      %v10658 = vpack.c.b16 %v10635, %v10634
      %v10659 = vpack.c.b16 %v10637, %v10636
      %v10660 = vpack.c.b16 %v10639, %v10638
      %v10661 = vpack.c.b16 %v10641, %v10640
      %v10662 = vpack.c.b16 %v10643, %v10642
      %v10663 = vpack.c.b16 %v10645, %v10644
      %v10664 = vpack.c.b16 %v10647, %v10646
      %v10665 = vpack.c.b16 %v10649, %v10648
      %v10667 = vsel %vm5480, %v10650, 0
      %v10670 = vsel %vm5480, %v10651, 0
      %v10673 = vsel %vm5480, %v10652, 0
      %v10676 = vsel %vm5480, %v10653, 0
      %v10679 = vsel %vm5480, %v10654, 0
      %v10682 = vsel %vm5480, %v10655, 0
      %v10685 = vsel %vm5480, %v10656, 0
      %v10688 = vsel %vm5480, %v10657, 0
      %v10691 = vsel %vm5480, %v10658, 0
      %v10694 = vsel %vm5480, %v10659, 0
      %v10697 = vsel %vm5480, %v10660, 0
      %v10700 = vsel %vm5480, %v10661, 0
      %v10703 = vsel %vm5480, %v10662, 0
      %v10706 = vsel %vm5480, %v10663, 0
      %v10709 = vsel %vm5480, %v10664, 0
      %v10712 = vsel %vm5480, %v10665, 0
      %v10715 = vsel %vm6890, %v10617, 0
      %10717 = vmatprep.subr.bf16.mxu0 0
      %10718 = vmatpush1.bf16.msra.mxu0 %v10715
      %10719 = vmatprep.subr.bf16.mxu0 0
      %10720 = vmatpush1.bf16.msra.mxu0 0
      %10721 = vmatprep.subr.bf16.mxu0 0
      %10722 = vmatpush1.bf16.msra.mxu0 0
      %10723 = vmatprep.subr.bf16.mxu0 0
      %10724 = vmatpush1.bf16.msra.mxu0 0
      %10725 = vmatprep.subr.bf16.mxu0 0
      %10726 = vmatpush1.bf16.msra.mxu0 0
      %10727 = vmatprep.subr.bf16.mxu0 0
      %10728 = vmatpush1.bf16.msra.mxu0 0
      %10729 = vmatprep.subr.bf16.mxu0 0
      %10730 = vmatpush1.bf16.msra.mxu0 0
      %10731 = vmatprep.subr.bf16.mxu0 0
      %10732 = vmatpush1.bf16.msra.mxu0 0
      %10733 = vmatprep.subr.bf16.mxu0 0
      %10734 = vmatpush1.bf16.msra.mxu0 0
      %10735 = vmatprep.subr.bf16.mxu0 0
      %10736 = vmatpush1.bf16.msra.mxu0 0
      %10737 = vmatprep.subr.bf16.mxu0 0
      %10738 = vmatpush1.bf16.msra.mxu0 0
      %10739 = vmatprep.subr.bf16.mxu0 0
      %10740 = vmatpush1.bf16.msra.mxu0 0
      %10741 = vmatprep.subr.bf16.mxu0 0
      %10742 = vmatpush1.bf16.msra.mxu0 0
      %10743 = vmatprep.subr.bf16.mxu0 0
      %10744 = vmatpush1.bf16.msra.mxu0 0
      %10745 = vmatprep.subr.bf16.mxu0 0
      %10746 = vmatpush1.bf16.msra.mxu0 0
      %10747 = vmatprep.subr.bf16.mxu0 0
      %10748 = vmatpush1.bf16.msra.mxu0 0
      %10749 = vmatprep.mubr.bf16.mxu0 0
      %10750 = vmatmul.mubr.bf16.gmra.mrb[0].mxu0 %v10667
      %v10751 = vpop.f32.mrb[0].mxu0
      %v10752 = vadd.f32 0.0, %v10751
      %v10753 = vpop.f32.mrb[0].mxu0
      %v10754 = vpop.f32.mrb[0].mxu0
      %v10755 = vadd.f32 0.0, %v10754
      %v10756 = vpop.f32.mrb[0].mxu0
      %10757 = vmatprep.mubr.bf16.mxu0 0
      %10758 = vmatmul.mubr.bf16.gmra.mrb[0].mxu0 %v10670
      %v10759 = vpop.f32.mrb[0].mxu0
      %v10760 = vadd.f32 0.0, %v10759
      %v10761 = vpop.f32.mrb[0].mxu0
      %v10762 = vpop.f32.mrb[0].mxu0
      %v10763 = vadd.f32 0.0, %v10762
      %v10764 = vpop.f32.mrb[0].mxu0
      %10765 = vmatprep.mubr.bf16.mxu0 0
      %10766 = vmatmul.mubr.bf16.gmra.mrb[0].mxu0 %v10673
      %v10767 = vpop.f32.mrb[0].mxu0
      %v10768 = vadd.f32 0.0, %v10767
      %v10769 = vpop.f32.mrb[0].mxu0
      %v10770 = vpop.f32.mrb[0].mxu0
      %v10771 = vadd.f32 0.0, %v10770
      %v10772 = vpop.f32.mrb[0].mxu0
      %10773 = vmatprep.mubr.bf16.mxu0 0
      %10774 = vmatmul.mubr.bf16.gmra.mrb[0].mxu0 %v10676
      %v10775 = vpop.f32.mrb[0].mxu0
      %v10776 = vadd.f32 0.0, %v10775
      %v10777 = vpop.f32.mrb[0].mxu0
      %v10778 = vpop.f32.mrb[0].mxu0
      %v10779 = vadd.f32 0.0, %v10778
      %v10780 = vpop.f32.mrb[0].mxu0
      %10781 = vmatprep.mubr.bf16.mxu0 0
      %10782 = vmatmul.mubr.bf16.gmra.mrb[0].mxu0 %v10679
      %v10783 = vpop.f32.mrb[0].mxu0
      %v10784 = vadd.f32 0.0, %v10783
      %v10785 = vpop.f32.mrb[0].mxu0
      %v10786 = vpop.f32.mrb[0].mxu0
      %v10787 = vadd.f32 0.0, %v10786
      %v10788 = vpop.f32.mrb[0].mxu0
      %10789 = vmatprep.mubr.bf16.mxu0 0
      %10790 = vmatmul.mubr.bf16.gmra.mrb[0].mxu0 %v10682
      %v10791 = vpop.f32.mrb[0].mxu0
      %v10792 = vadd.f32 0.0, %v10791
      %v10793 = vpop.f32.mrb[0].mxu0
      %v10794 = vpop.f32.mrb[0].mxu0
      %v10795 = vadd.f32 0.0, %v10794
      %v10796 = vpop.f32.mrb[0].mxu0
      %10797 = vmatprep.mubr.bf16.mxu0 0
      %10798 = vmatmul.mubr.bf16.gmra.mrb[0].mxu0 %v10685
      %v10799 = vpop.f32.mrb[0].mxu0
      %v10800 = vadd.f32 0.0, %v10799
      %v10801 = vpop.f32.mrb[0].mxu0
      %v10802 = vpop.f32.mrb[0].mxu0
      %v10803 = vadd.f32 0.0, %v10802
      %v10804 = vpop.f32.mrb[0].mxu0
      %10805 = vmatprep.mubr.bf16.mxu0 0
      %10806 = vmatmul.mubr.bf16.gmra.mrb[0].mxu0 %v10688
      %v10807 = vpop.f32.mrb[0].mxu0
      %v10808 = vadd.f32 0.0, %v10807
      %v10809 = vpop.f32.mrb[0].mxu0
      %v10810 = vpop.f32.mrb[0].mxu0
      %v10811 = vadd.f32 0.0, %v10810
      %v10812 = vpop.f32.mrb[0].mxu0
      %10813 = vmatprep.mubr.bf16.mxu0 0
      %10814 = vmatmul.mubr.bf16.gmra.mrb[0].mxu0 %v10691
      %v10815 = vpop.f32.mrb[0].mxu0
      %v10816 = vadd.f32 0.0, %v10815
      %v10817 = vpop.f32.mrb[0].mxu0
      %v10818 = vpop.f32.mrb[0].mxu0
      %v10819 = vadd.f32 0.0, %v10818
      %v10820 = vpop.f32.mrb[0].mxu0
      %10821 = vmatprep.mubr.bf16.mxu0 0
      %10822 = vmatmul.mubr.bf16.gmra.mrb[0].mxu0 %v10694
      %v10823 = vpop.f32.mrb[0].mxu0
      %v10824 = vadd.f32 0.0, %v10823
      %v10825 = vpop.f32.mrb[0].mxu0
      %v10826 = vpop.f32.mrb[0].mxu0
      %v10827 = vadd.f32 0.0, %v10826
      %v10828 = vpop.f32.mrb[0].mxu0
      %10829 = vmatprep.mubr.bf16.mxu0 0
      %10830 = vmatmul.mubr.bf16.gmra.mrb[0].mxu0 %v10697
      %v10831 = vpop.f32.mrb[0].mxu0
      %v10832 = vadd.f32 0.0, %v10831
      %v10833 = vpop.f32.mrb[0].mxu0
      %v10834 = vpop.f32.mrb[0].mxu0
      %v10835 = vadd.f32 0.0, %v10834
      %v10836 = vpop.f32.mrb[0].mxu0
      %10837 = vmatprep.mubr.bf16.mxu0 0
      %10838 = vmatmul.mubr.bf16.gmra.mrb[0].mxu0 %v10700
      %v10839 = vpop.f32.mrb[0].mxu0
      %v10840 = vadd.f32 0.0, %v10839
      %v10841 = vpop.f32.mrb[0].mxu0
      %v10842 = vpop.f32.mrb[0].mxu0
      %v10843 = vadd.f32 0.0, %v10842
      %v10844 = vpop.f32.mrb[0].mxu0
      %10845 = vmatprep.mubr.bf16.mxu0 0
      %10846 = vmatmul.mubr.bf16.gmra.mrb[0].mxu0 %v10703
      %v10847 = vpop.f32.mrb[0].mxu0
      %v10848 = vadd.f32 0.0, %v10847
      %v10849 = vpop.f32.mrb[0].mxu0
      %v10850 = vpop.f32.mrb[0].mxu0
      %v10851 = vadd.f32 0.0, %v10850
      %v10852 = vpop.f32.mrb[0].mxu0
      %10853 = vmatprep.mubr.bf16.mxu0 0
      %10854 = vmatmul.mubr.bf16.gmra.mrb[0].mxu0 %v10706
      %v10855 = vpop.f32.mrb[0].mxu0
      %v10856 = vadd.f32 0.0, %v10855
      %v10857 = vpop.f32.mrb[0].mxu0
      %v10858 = vpop.f32.mrb[0].mxu0
      %v10859 = vadd.f32 0.0, %v10858
      %v10860 = vpop.f32.mrb[0].mxu0
      %10861 = vmatprep.mubr.bf16.mxu0 0
      %10862 = vmatmul.mubr.bf16.gmra.mrb[0].mxu0 %v10709
      %v10863 = vpop.f32.mrb[0].mxu0
      %v10864 = vadd.f32 0.0, %v10863
      %v10865 = vpop.f32.mrb[0].mxu0
      %v10866 = vpop.f32.mrb[0].mxu0
      %v10867 = vadd.f32 0.0, %v10866
      %v10868 = vpop.f32.mrb[0].mxu0
      %10869 = vmatprep.mubr.bf16.mxu0 0
      %10870 = vmatmul.mubr.bf16.gmra.mrb[0].mxu0 %v10712
      %v10871 = vpop.f32.mrb[0].mxu0
      %v10872 = vadd.f32 0.0, %v10871
      %v10873 = vpop.f32.mrb[0].mxu0
      %v10874 = vpop.f32.mrb[0].mxu0
      %v10875 = vadd.f32 0.0, %v10874
      %v10876 = vpop.f32.mrb[0].mxu0
      %10877 = vdwg.mxu0
      %v10878 = vadd.f32 %v10408, %v10752
      %v10879 = vadd.f32 %v10409, %v10755
      %v10880 = vadd.f32 %v10410, %v10760
      %v10881 = vadd.f32 %v10411, %v10763
      %v10882 = vadd.f32 %v10412, %v10768
      %v10883 = vadd.f32 %v10413, %v10771
      %v10884 = vadd.f32 %v10414, %v10776
      %v10885 = vadd.f32 %v10415, %v10779
      %v10886 = vadd.f32 %v10416, %v10784
      %v10887 = vadd.f32 %v10417, %v10787
      %v10888 = vadd.f32 %v10418, %v10792
      %v10889 = vadd.f32 %v10419, %v10795
      %v10890 = vadd.f32 %v10420, %v10800
      %v10891 = vadd.f32 %v10421, %v10803
      %v10892 = vadd.f32 %v10422, %v10808
      %v10893 = vadd.f32 %v10423, %v10811
      %v10894 = vadd.f32 %v10424, %v10816
      %v10895 = vadd.f32 %v10425, %v10819
      %v10896 = vadd.f32 %v10426, %v10824
      %v10897 = vadd.f32 %v10427, %v10827
      %v10898 = vadd.f32 %v10428, %v10832
      %v10899 = vadd.f32 %v10429, %v10835
      %v10900 = vadd.f32 %v10430, %v10840
      %v10901 = vadd.f32 %v10431, %v10843
      %v10902 = vadd.f32 %v10432, %v10848
      %v10903 = vadd.f32 %v10433, %v10851
      %v10904 = vadd.f32 %v10434, %v10856
      %v10905 = vadd.f32 %v10435, %v10859
      %v10906 = vadd.f32 %v10436, %v10864
      %v10907 = vadd.f32 %v10437, %v10867
      %v10908 = vadd.f32 %v10438, %v10872
      %v10909 = vadd.f32 %v10439, %v10875
      %v10910 = vld [vmem:[%s4] sm:$0x1]
      %v10912 = vlaneseq
      %v10913 = vshrl.u32 %v10912, 7
      %v10914 = vsub.s32 0, %v10913
      %v10915 = vrot.slane %v10910, %v10914
      %v10917 = vadd.f32 %v10878, %v10915
      %v10918 = vadd.f32 %v10879, %v10915
      %v10919 = vadd.f32 %v10880, %v10915
      %v10920 = vadd.f32 %v10881, %v10915
      %v10921 = vadd.f32 %v10882, %v10915
      %v10922 = vadd.f32 %v10883, %v10915
      %v10923 = vadd.f32 %v10884, %v10915
      %v10924 = vadd.f32 %v10885, %v10915
      %v10925 = vadd.f32 %v10886, %v10915
      %v10926 = vadd.f32 %v10887, %v10915
      %v10927 = vadd.f32 %v10888, %v10915
      %v10928 = vadd.f32 %v10889, %v10915
      %v10929 = vadd.f32 %v10890, %v10915
      %v10930 = vadd.f32 %v10891, %v10915
      %v10931 = vadd.f32 %v10892, %v10915
      %v10932 = vadd.f32 %v10893, %v10915
      %v10933 = vadd.f32 %v10894, %v10915
      %v10934 = vadd.f32 %v10895, %v10915
      %v10935 = vadd.f32 %v10896, %v10915
      %v10936 = vadd.f32 %v10897, %v10915
      %v10937 = vadd.f32 %v10898, %v10915
      %v10938 = vadd.f32 %v10899, %v10915
      %v10939 = vadd.f32 %v10900, %v10915
      %v10940 = vadd.f32 %v10901, %v10915
      %v10941 = vadd.f32 %v10902, %v10915
      %v10942 = vadd.f32 %v10903, %v10915
      %v10943 = vadd.f32 %v10904, %v10915
      %v10944 = vadd.f32 %v10905, %v10915
      %v10945 = vadd.f32 %v10906, %v10915
      %v10946 = vadd.f32 %v10907, %v10915
      %v10947 = vadd.f32 %v10908, %v10915
      %v10948 = vadd.f32 %v10909, %v10915
      %v10949 = vmul.f32 %v10917, %v10917
      %v10950 = vmul.f32 %v10918, %v10918
      %v10951 = vmul.f32 %v10919, %v10919
      %v10952 = vmul.f32 %v10920, %v10920
      %v10953 = vmul.f32 %v10921, %v10921
      %v10954 = vmul.f32 %v10922, %v10922
      %v10955 = vmul.f32 %v10923, %v10923
      %v10956 = vmul.f32 %v10924, %v10924
      %v10957 = vmul.f32 %v10925, %v10925
      %v10958 = vmul.f32 %v10926, %v10926
      %v10959 = vmul.f32 %v10927, %v10927
      %v10960 = vmul.f32 %v10928, %v10928
      %v10961 = vmul.f32 %v10929, %v10929
      %v10962 = vmul.f32 %v10930, %v10930
      %v10963 = vmul.f32 %v10931, %v10931
      %v10964 = vmul.f32 %v10932, %v10932
      %v10965 = vmul.f32 %v10933, %v10933
      %v10966 = vmul.f32 %v10934, %v10934
      %v10967 = vmul.f32 %v10935, %v10935
      %v10968 = vmul.f32 %v10936, %v10936
      %v10969 = vmul.f32 %v10937, %v10937
      %v10970 = vmul.f32 %v10938, %v10938
      %v10971 = vmul.f32 %v10939, %v10939
      %v10972 = vmul.f32 %v10940, %v10940
      %v10973 = vmul.f32 %v10941, %v10941
      %v10974 = vmul.f32 %v10942, %v10942
      %v10975 = vmul.f32 %v10943, %v10943
      %v10976 = vmul.f32 %v10944, %v10944
      %v10977 = vmul.f32 %v10945, %v10945
      %v10978 = vmul.f32 %v10946, %v10946
      %v10979 = vmul.f32 %v10947, %v10947
      %v10980 = vmul.f32 %v10948, %v10948
      %v10981 = vsel %vm5480, %v10949, 0.0
      %10982 = vadd.xlane.f32.xlu0 %v10981
      %v10983 = vpop.xlane.xlu0 %10982
      %v10984 = vsel %vm5480, %v10950, 0.0
      %10985 = vadd.xlane.f32.xlu0 %v10984
      %v10986 = vpop.xlane.xlu0 %10985
      %v10987 = vsel %vm5480, %v10951, 0.0
      %10988 = vadd.xlane.f32.xlu0 %v10987
      %v10989 = vpop.xlane.xlu0 %10988
      %v10990 = vsel %vm5480, %v10952, 0.0
      %10991 = vadd.xlane.f32.xlu0 %v10990
      %v10992 = vpop.xlane.xlu0 %10991
      %v10993 = vsel %vm5480, %v10953, 0.0
      %10994 = vadd.xlane.f32.xlu0 %v10993
      %v10995 = vpop.xlane.xlu0 %10994
      %v10996 = vsel %vm5480, %v10954, 0.0
      %10997 = vadd.xlane.f32.xlu0 %v10996
      %v10998 = vpop.xlane.xlu0 %10997
      %v10999 = vsel %vm5480, %v10955, 0.0
      %11000 = vadd.xlane.f32.xlu0 %v10999
      %v11001 = vpop.xlane.xlu0 %11000
      %v11002 = vsel %vm5480, %v10956, 0.0
      %11003 = vadd.xlane.f32.xlu0 %v11002
      %v11004 = vpop.xlane.xlu0 %11003
      %v11005 = vsel %vm5480, %v10957, 0.0
      %11006 = vadd.xlane.f32.xlu0 %v11005
      %v11007 = vpop.xlane.xlu0 %11006
      %v11008 = vsel %vm5480, %v10958, 0.0
      %11009 = vadd.xlane.f32.xlu0 %v11008
      %v11010 = vpop.xlane.xlu0 %11009
      %v11011 = vsel %vm5480, %v10959, 0.0
      %11012 = vadd.xlane.f32.xlu0 %v11011
      %v11013 = vpop.xlane.xlu0 %11012
      %v11014 = vsel %vm5480, %v10960, 0.0
      %11015 = vadd.xlane.f32.xlu0 %v11014
      %v11016 = vpop.xlane.xlu0 %11015
      %v11017 = vsel %vm5480, %v10961, 0.0
      %11018 = vadd.xlane.f32.xlu0 %v11017
      %v11019 = vpop.xlane.xlu0 %11018
      %v11020 = vsel %vm5480, %v10962, 0.0
      %11021 = vadd.xlane.f32.xlu0 %v11020
      %v11022 = vpop.xlane.xlu0 %11021
      %v11023 = vsel %vm5480, %v10963, 0.0
      %11024 = vadd.xlane.f32.xlu0 %v11023
      %v11025 = vpop.xlane.xlu0 %11024
      %v11026 = vsel %vm5480, %v10964, 0.0
      %11027 = vadd.xlane.f32.xlu0 %v11026
      %v11028 = vpop.xlane.xlu0 %11027
      %v11029 = vsel %vm5480, %v10965, 0.0
      %11030 = vadd.xlane.f32.xlu0 %v11029
      %v11031 = vpop.xlane.xlu0 %11030
      %v11032 = vsel %vm5480, %v10966, 0.0
      %11033 = vadd.xlane.f32.xlu0 %v11032
      %v11034 = vpop.xlane.xlu0 %11033
      %v11035 = vsel %vm5480, %v10967, 0.0
      %11036 = vadd.xlane.f32.xlu0 %v11035
      %v11037 = vpop.xlane.xlu0 %11036
      %v11038 = vsel %vm5480, %v10968, 0.0
      %11039 = vadd.xlane.f32.xlu0 %v11038
      %v11040 = vpop.xlane.xlu0 %11039
      %v11041 = vsel %vm5480, %v10969, 0.0
      %11042 = vadd.xlane.f32.xlu0 %v11041
      %v11043 = vpop.xlane.xlu0 %11042
      %v11044 = vsel %vm5480, %v10970, 0.0
      %11045 = vadd.xlane.f32.xlu0 %v11044
      %v11046 = vpop.xlane.xlu0 %11045
      %v11047 = vsel %vm5480, %v10971, 0.0
      %11048 = vadd.xlane.f32.xlu0 %v11047
      %v11049 = vpop.xlane.xlu0 %11048
      %v11050 = vsel %vm5480, %v10972, 0.0
      %11051 = vadd.xlane.f32.xlu0 %v11050
      %v11052 = vpop.xlane.xlu0 %11051
      %v11053 = vsel %vm5480, %v10973, 0.0
      %11054 = vadd.xlane.f32.xlu0 %v11053
      %v11055 = vpop.xlane.xlu0 %11054
      %v11056 = vsel %vm5480, %v10974, 0.0
      %11057 = vadd.xlane.f32.xlu0 %v11056
      %v11058 = vpop.xlane.xlu0 %11057
      %v11059 = vsel %vm5480, %v10975, 0.0
      %11060 = vadd.xlane.f32.xlu0 %v11059
      %v11061 = vpop.xlane.xlu0 %11060
      %v11062 = vsel %vm5480, %v10976, 0.0
      %11063 = vadd.xlane.f32.xlu0 %v11062
      %v11064 = vpop.xlane.xlu0 %11063
      %v11065 = vsel %vm5480, %v10977, 0.0
      %11066 = vadd.xlane.f32.xlu0 %v11065
      %v11067 = vpop.xlane.xlu0 %11066
      %v11068 = vsel %vm5480, %v10978, 0.0
      %11069 = vadd.xlane.f32.xlu0 %v11068
      %v11070 = vpop.xlane.xlu0 %11069
      %v11071 = vsel %vm5480, %v10979, 0.0
      %11072 = vadd.xlane.f32.xlu0 %v11071
      %v11073 = vpop.xlane.xlu0 %11072
      %v11074 = vsel %vm5480, %v10980, 0.0
      %11075 = vadd.xlane.f32.xlu0 %v11074
      %v11076 = vpop.xlane.xlu0 %11075
      %v11077 = vmul.f32 %v10983, %v5577
      %v11078 = vmul.f32 %v10986, %v5577
      %v11079 = vmul.f32 %v10989, %v5577
      %v11080 = vmul.f32 %v10992, %v5577
      %v11081 = vmul.f32 %v10995, %v5577
      %v11082 = vmul.f32 %v10998, %v5577
      %v11083 = vmul.f32 %v11001, %v5577
      %v11084 = vmul.f32 %v11004, %v5577
      %v11085 = vmul.f32 %v11007, %v5577
      %v11086 = vmul.f32 %v11010, %v5577
      %v11087 = vmul.f32 %v11013, %v5577
      %v11088 = vmul.f32 %v11016, %v5577
      %v11089 = vmul.f32 %v11019, %v5577
      %v11090 = vmul.f32 %v11022, %v5577
      %v11091 = vmul.f32 %v11025, %v5577
      %v11092 = vmul.f32 %v11028, %v5577
      %v11093 = vmul.f32 %v11031, %v5577
      %v11094 = vmul.f32 %v11034, %v5577
      %v11095 = vmul.f32 %v11037, %v5577
      %v11096 = vmul.f32 %v11040, %v5577
      %v11097 = vmul.f32 %v11043, %v5577
      %v11098 = vmul.f32 %v11046, %v5577
      %v11099 = vmul.f32 %v11049, %v5577
      %v11100 = vmul.f32 %v11052, %v5577
      %v11101 = vmul.f32 %v11055, %v5577
      %v11102 = vmul.f32 %v11058, %v5577
      %v11103 = vmul.f32 %v11061, %v5577
      %v11104 = vmul.f32 %v11064, %v5577
      %v11105 = vmul.f32 %v11067, %v5577
      %v11106 = vmul.f32 %v11070, %v5577
      %v11107 = vmul.f32 %v11073, %v5577
      %v11108 = vmul.f32 %v11076, %v5577
      %v11109 = vadd.f32 %v11077, 1e-08
      %v11110 = vadd.f32 %v11078, 1e-08
      %v11111 = vadd.f32 %v11079, 1e-08
      %v11112 = vadd.f32 %v11080, 1e-08
      %v11113 = vadd.f32 %v11081, 1e-08
      %v11114 = vadd.f32 %v11082, 1e-08
      %v11115 = vadd.f32 %v11083, 1e-08
      %v11116 = vadd.f32 %v11084, 1e-08
      %v11117 = vadd.f32 %v11085, 1e-08
      %v11118 = vadd.f32 %v11086, 1e-08
      %v11119 = vadd.f32 %v11087, 1e-08
      %v11120 = vadd.f32 %v11088, 1e-08
      %v11121 = vadd.f32 %v11089, 1e-08
      %v11122 = vadd.f32 %v11090, 1e-08
      %v11123 = vadd.f32 %v11091, 1e-08
      %v11124 = vadd.f32 %v11092, 1e-08
      %v11125 = vadd.f32 %v11093, 1e-08
      %v11126 = vadd.f32 %v11094, 1e-08
      %v11127 = vadd.f32 %v11095, 1e-08
      %v11128 = vadd.f32 %v11096, 1e-08
      %v11129 = vadd.f32 %v11097, 1e-08
      %v11130 = vadd.f32 %v11098, 1e-08
      %v11131 = vadd.f32 %v11099, 1e-08
      %v11132 = vadd.f32 %v11100, 1e-08
      %v11133 = vadd.f32 %v11101, 1e-08
      %v11134 = vadd.f32 %v11102, 1e-08
      %v11135 = vadd.f32 %v11103, 1e-08
      %v11136 = vadd.f32 %v11104, 1e-08
      %v11137 = vadd.f32 %v11105, 1e-08
      %v11138 = vadd.f32 %v11106, 1e-08
      %v11139 = vadd.f32 %v11107, 1e-08
      %v11140 = vadd.f32 %v11108, 1e-08
      %v11141 = vrsqrt.pop %v11109
      %v11142 = vrsqrt.pop %v11110
      %v11143 = vrsqrt.pop %v11111
      %v11144 = vrsqrt.pop %v11112
      %v11145 = vrsqrt.pop %v11113
      %v11146 = vrsqrt.pop %v11114
      %v11147 = vrsqrt.pop %v11115
      %v11148 = vrsqrt.pop %v11116
      %v11149 = vrsqrt.pop %v11117
      %v11150 = vrsqrt.pop %v11118
      %v11151 = vrsqrt.pop %v11119
      %v11152 = vrsqrt.pop %v11120
      %v11153 = vrsqrt.pop %v11121
      %v11154 = vrsqrt.pop %v11122
      %v11155 = vrsqrt.pop %v11123
      %v11156 = vrsqrt.pop %v11124
      %v11157 = vrsqrt.pop %v11125
      %v11158 = vrsqrt.pop %v11126
      %v11159 = vrsqrt.pop %v11127
      %v11160 = vrsqrt.pop %v11128
      %v11161 = vrsqrt.pop %v11129
      %v11162 = vrsqrt.pop %v11130
      %v11163 = vrsqrt.pop %v11131
      %v11164 = vrsqrt.pop %v11132
      %v11165 = vrsqrt.pop %v11133
      %v11166 = vrsqrt.pop %v11134
      %v11167 = vrsqrt.pop %v11135
      %v11168 = vrsqrt.pop %v11136
      %v11169 = vrsqrt.pop %v11137
      %v11170 = vrsqrt.pop %v11138
      %v11171 = vrsqrt.pop %v11139
      %v11172 = vrsqrt.pop %v11140
      %v11173 = vmul.f32 %v10917, %v11141
      %v11174 = vmul.f32 %v10918, %v11142
      %v11175 = vmul.f32 %v10919, %v11143
      %v11176 = vmul.f32 %v10920, %v11144
      %v11177 = vmul.f32 %v10921, %v11145
      %v11178 = vmul.f32 %v10922, %v11146
      %v11179 = vmul.f32 %v10923, %v11147
      %v11180 = vmul.f32 %v10924, %v11148
      %v11181 = vmul.f32 %v10925, %v11149
      %v11182 = vmul.f32 %v10926, %v11150
      %v11183 = vmul.f32 %v10927, %v11151
      %v11184 = vmul.f32 %v10928, %v11152
      %v11185 = vmul.f32 %v10929, %v11153
      %v11186 = vmul.f32 %v10930, %v11154
      %v11187 = vmul.f32 %v10931, %v11155
      %v11188 = vmul.f32 %v10932, %v11156
      %v11189 = vmul.f32 %v10933, %v11157
      %v11190 = vmul.f32 %v10934, %v11158
      %v11191 = vmul.f32 %v10935, %v11159
      %v11192 = vmul.f32 %v10936, %v11160
      %v11193 = vmul.f32 %v10937, %v11161
      %v11194 = vmul.f32 %v10938, %v11162
      %v11195 = vmul.f32 %v10939, %v11163
      %v11196 = vmul.f32 %v10940, %v11164
      %v11197 = vmul.f32 %v10941, %v11165
      %v11198 = vmul.f32 %v10942, %v11166
      %v11199 = vmul.f32 %v10943, %v11167
      %v11200 = vmul.f32 %v10944, %v11168
      %v11201 = vmul.f32 %v10945, %v11169
      %v11202 = vmul.f32 %v10946, %v11170
      %v11203 = vmul.f32 %v10947, %v11171
      %v11204 = vmul.f32 %v10948, %v11172
      %v11205 = vmul.f32 %v11173, 0.1
      %v11206 = vmul.f32 %v11174, 0.1
      %v11207 = vmul.f32 %v11175, 0.1
      %v11208 = vmul.f32 %v11176, 0.1
      %v11209 = vmul.f32 %v11177, 0.1
      %v11210 = vmul.f32 %v11178, 0.1
      %v11211 = vmul.f32 %v11179, 0.1
      %v11212 = vmul.f32 %v11180, 0.1
      %v11213 = vmul.f32 %v11181, 0.1
      %v11214 = vmul.f32 %v11182, 0.1
      %v11215 = vmul.f32 %v11183, 0.1
      %v11216 = vmul.f32 %v11184, 0.1
      %v11217 = vmul.f32 %v11185, 0.1
      %v11218 = vmul.f32 %v11186, 0.1
      %v11219 = vmul.f32 %v11187, 0.1
      %v11220 = vmul.f32 %v11188, 0.1
      %v11221 = vmul.f32 %v11189, 0.1
      %v11222 = vmul.f32 %v11190, 0.1
      %v11223 = vmul.f32 %v11191, 0.1
      %v11224 = vmul.f32 %v11192, 0.1
      %v11225 = vmul.f32 %v11193, 0.1
      %v11226 = vmul.f32 %v11194, 0.1
      %v11227 = vmul.f32 %v11195, 0.1
      %v11228 = vmul.f32 %v11196, 0.1
      %v11229 = vmul.f32 %v11197, 0.1
      %v11230 = vmul.f32 %v11198, 0.1
      %v11231 = vmul.f32 %v11199, 0.1
      %v11232 = vmul.f32 %v11200, 0.1
      %v11233 = vmul.f32 %v11201, 0.1
      %v11234 = vmul.f32 %v11202, 0.1
      %v11235 = vmul.f32 %v11203, 0.1
      %v11236 = vmul.f32 %v11204, 0.1
      %v11237 = vmax.f32 %v11173, %v11205
      %v11238 = vmax.f32 %v11174, %v11206
      %v11239 = vmax.f32 %v11175, %v11207
      %v11240 = vmax.f32 %v11176, %v11208
      %v11241 = vmax.f32 %v11177, %v11209
      %v11242 = vmax.f32 %v11178, %v11210
      %v11243 = vmax.f32 %v11179, %v11211
      %v11244 = vmax.f32 %v11180, %v11212
      %v11245 = vmax.f32 %v11181, %v11213
      %v11246 = vmax.f32 %v11182, %v11214
      %v11247 = vmax.f32 %v11183, %v11215
      %v11248 = vmax.f32 %v11184, %v11216
      %v11249 = vmax.f32 %v11185, %v11217
      %v11250 = vmax.f32 %v11186, %v11218
      %v11251 = vmax.f32 %v11187, %v11219
      %v11252 = vmax.f32 %v11188, %v11220
      %v11253 = vmax.f32 %v11189, %v11221
      %v11254 = vmax.f32 %v11190, %v11222
      %v11255 = vmax.f32 %v11191, %v11223
      %v11256 = vmax.f32 %v11192, %v11224
      %v11257 = vmax.f32 %v11193, %v11225
      %v11258 = vmax.f32 %v11194, %v11226
      %v11259 = vmax.f32 %v11195, %v11227
      %v11260 = vmax.f32 %v11196, %v11228
      %v11261 = vmax.f32 %v11197, %v11229
      %v11262 = vmax.f32 %v11198, %v11230
      %v11263 = vmax.f32 %v11199, %v11231
      %v11264 = vmax.f32 %v11200, %v11232
      %v11265 = vmax.f32 %v11201, %v11233
      %v11266 = vmax.f32 %v11202, %v11234
      %v11267 = vmax.f32 %v11203, %v11235
      %v11268 = vmax.f32 %v11204, %v11236
      %11269 = vst.msk [vmem:[%s224] sm:$0xff] %vm5480, %v11237
      %11270 = vst.msk [vmem:[%s224 + $0x8] sm:$0xff] %vm5480, %v11238
      %11271 = vst.msk [vmem:[%s224 + $0x10] sm:$0xff] %vm5480, %v11239
      %11272 = vst.msk [vmem:[%s224 + $0x18] sm:$0xff] %vm5480, %v11240
      %11273 = vst.msk [vmem:[%s224 + $0x20] sm:$0xff] %vm5480, %v11241
      %11274 = vst.msk [vmem:[%s224 + $0x28] sm:$0xff] %vm5480, %v11242
      %11275 = vst.msk [vmem:[%s224 + $0x30] sm:$0xff] %vm5480, %v11243
      %11276 = vst.msk [vmem:[%s224 + $0x38] sm:$0xff] %vm5480, %v11244
      %11277 = vst.msk [vmem:[%s224 + $0x40] sm:$0xff] %vm5480, %v11245
      %11278 = vst.msk [vmem:[%s224 + $0x48] sm:$0xff] %vm5480, %v11246
      %11279 = vst.msk [vmem:[%s224 + $0x50] sm:$0xff] %vm5480, %v11247
      %11280 = vst.msk [vmem:[%s224 + $0x58] sm:$0xff] %vm5480, %v11248
      %11281 = vst.msk [vmem:[%s224 + $0x60] sm:$0xff] %vm5480, %v11249
      %11282 = vst.msk [vmem:[%s224 + $0x68] sm:$0xff] %vm5480, %v11250
      %11283 = vst.msk [vmem:[%s224 + $0x70] sm:$0xff] %vm5480, %v11251
      %11284 = vst.msk [vmem:[%s224 + $0x78] sm:$0xff] %vm5480, %v11252
      %11285 = vst.msk [vmem:[%s224 + $0x80] sm:$0xff] %vm5480, %v11253
      %11286 = vst.msk [vmem:[%s224 + $0x88] sm:$0xff] %vm5480, %v11254
      %11287 = vst.msk [vmem:[%s224 + $0x90] sm:$0xff] %vm5480, %v11255
      %11288 = vst.msk [vmem:[%s224 + $0x98] sm:$0xff] %vm5480, %v11256
      %11289 = vst.msk [vmem:[%s224 + $0xa0] sm:$0xff] %vm5480, %v11257
      %11290 = vst.msk [vmem:[%s224 + $0xa8] sm:$0xff] %vm5480, %v11258
      %11291 = vst.msk [vmem:[%s224 + $0xb0] sm:$0xff] %vm5480, %v11259
      %11292 = vst.msk [vmem:[%s224 + $0xb8] sm:$0xff] %vm5480, %v11260
      %11293 = vst.msk [vmem:[%s224 + $0xc0] sm:$0xff] %vm5480, %v11261
      %11294 = vst.msk [vmem:[%s224 + $0xc8] sm:$0xff] %vm5480, %v11262
      %11295 = vst.msk [vmem:[%s224 + $0xd0] sm:$0xff] %vm5480, %v11263
      %11296 = vst.msk [vmem:[%s224 + $0xd8] sm:$0xff] %vm5480, %v11264
      %11297 = vst.msk [vmem:[%s224 + $0xe0] sm:$0xff] %vm5480, %v11265
      %11298 = vst.msk [vmem:[%s224 + $0xe8] sm:$0xff] %vm5480, %v11266
      %11299 = vst.msk [vmem:[%s224 + $0xf0] sm:$0xff] %vm5480, %v11267
      %11300 = vst.msk [vmem:[%s224 + $0xf8] sm:$0xff] %vm5480, %v11268
      %p11301 = scmp.lt.s32.totalorder %s16, 1
      %s11302 = scalar_select %p11301, %s16, 1
      %s11303 = smul.addr %s11302, 32
      %s11304 = smul.addr %s11303, 8
      %s11305 = scalar_lea.vmem %s5, %s11304
      // Predicated region
      $region41: #{tpu_custom_call.1} parent=39 // pred_check
        %p11306 = pneg %p144
      $region42: #{tpu_custom_call.1} parent=39 // pred_check_branch
        %11308 = sbr.rel (%p11306) target = $region44
      $region43: #{tpu_custom_call.1} parent=39 // pred_region
        _
      $region44: #{tpu_custom_call.1} parent=39 // pred_fallthru
        _
    $region40: #{tpu_custom_call.1} parent=5 // pred_fallthru
      _
    %p11309 = scmp.le.s32.totalorder 2, %s11
    // Predicated region
    $region45: #{tpu_custom_call.1} parent=5 // pred_check
      %p11310 = pneg %p11309
    $region46: #{tpu_custom_call.1} parent=5 // pred_check_branch
      %11312 = sbr.rel (%p11310) target = $region48
    $region47: #{tpu_custom_call.1} parent=5 // pred_region
      %s11313 = ssub.s32 %s11, 2
      // Predicated region
      $region49: #{tpu_custom_call.1} parent=47 // pred_check
        %p11314 = pneg %p150
      $region50: #{tpu_custom_call.1} parent=47 // pred_check_branch
        %11316 = sbr.rel (%p11314) target = $region52
      $region51: #{tpu_custom_call.1} parent=47 // pred_region
        %p11317 = scmp.lt.s32.totalorder %s17, 1
        %s11318 = scalar_select %p11317, %s17, 1
        %s11319 = smul.addr %s11318, 32
        %s11320 = smul.addr %s11319, 8
        %s11321 = scalar_lea.vmem %s5, %s11320
      $region52: #{tpu_custom_call.1} parent=47 // pred_fallthru
        _
    $region48: #{tpu_custom_call.1} parent=5 // pred_fallthru
      _
  $region6: #{tpu_custom_call.1} parent=0 // loop_footer
    %s15 = sadd.s32 1, %s11
  $region7: #{tpu_custom_call.1} parent=0 // loop_footer_branch
    %10 = sbr.rel target = $region3
  $region8: #{tpu_custom_call.1} parent=0 // loop_exit
    _

</llo_original>
